<compile_context>
chip_gen: v6e
topology: v6e:2x2x1
jax: 0.10.0
libtpu: 0.0.40
codegen_flags: <defaults>
</compile_context>

<pallas_src>
import jax
import jax.numpy as jnp
from jax import lax
from jax.experimental import pallas as pl
from jax.experimental.pallas import tpu as pltpu

# ---------------- model dimensions (small, deterministic) ----------------
B = 16             # graphs per batch  (BN = 256 so MXU rows are filled)
N = 16             # nodes per graph
BN = B * N         # 256 flattened nodes
G = 8              # graphs per grid step (group)
GN = G * N         # 128 rows per grid step
NG = B // G        # number of grid steps (graph groups)
IN_DIM = 8         # raw node feature dim
D = 32             # hidden dim
NH = 4             # attention heads
DK = D // NH       # per-head dim
FF = 4 * D         # FFN hidden dim (128, lane dense)
L = 2              # number of transformer layers
RD = D // 2        # readout hidden dim
OUT_DIM = 1        # regression output
EPS = 1e-5
NEG_INF = -1e9
SCALE = 1.0 / float(DK) ** 0.5


def _mm(a, b):
    """MXU matmul: bf16 operands, f32 accumulation."""
    return jnp.dot(a.astype(jnp.bfloat16), b.astype(jnp.bfloat16),
                   preferred_element_type=jnp.float32)


def _mm_nt(a, b):
    """a @ b.T with bf16 operands, f32 accumulation (attention scores)."""
    return lax.dot_general(a.astype(jnp.bfloat16), b.astype(jnp.bfloat16),
                           dimension_numbers=(((1,), (1,)), ((), ())),
                           preferred_element_type=jnp.float32)


def _layer_norm(x, gamma, beta):
    mu = jnp.mean(x, axis=-1, keepdims=True)
    var = jnp.mean((x - mu) ** 2, axis=-1, keepdims=True)
    return (x - mu) * lax.rsqrt(var + EPS) * gamma + beta


# ------------------------------ fused kernel ------------------------------
# One grid step = one group of G graphs (GN = G*N rows), full network.
def fused_gt_kernel(x_ref, bias_ref, pool_ref,
                    emb_w_ref, emb_b_ref,
                    wq_ref, wk_ref, wv_ref, wo_ref,
                    g1_ref, be1_ref, w1_ref, bb1_ref, w2_ref, bb2_ref,
                    g2_ref, be2_ref,
                    ro_w1_ref, ro_b1_ref, ro_w2_ref, ro_b2_ref,
                    o_ref):
    # ---- embedding: [GN, IN_DIM] @ [IN_DIM, D] ----
    h = _mm(x_ref[...], emb_w_ref[...]) + emb_b_ref[...]          # [GN, D] f32

    bias = bias_ref[0]                                            # [GN, GN] f32

    # ---- L transformer layers, statically unrolled ----
    for l in range(L):
        hb = h.astype(jnp.bfloat16)
        attn = jnp.zeros((GN, D), jnp.float32)
        for hd in range(NH):
            # per-head weights -> Q/K/V at lane offset 0 (no lane slicing)
            q = _mm(hb, wq_ref[l, hd])                            # [GN, DK]
            k = _mm(hb, wk_ref[l, hd])                            # [GN, DK]
            v = _mm(hb, wv_ref[l, hd])                            # [GN, DK]
            s = _mm_nt(q, k) * SCALE + bias                       # [GN, GN]
            s = s - jnp.max(s, axis=-1, keepdims=True)
            p = jnp.exp(s)
            p = p / jnp.sum(p, axis=-1, keepdims=True)            # exact divide
            ho = _mm(p, v)                                        # [GN, DK]
            attn = attn + _mm(ho, wo_ref[l, hd])                  # [GN, D]

        h1 = _layer_norm(h + attn, g1_ref[l], be1_ref[l])
        z = jnp.maximum(_mm(h1, w1_ref[l]) + bb1_ref[l], 0.0)     # [GN, FF]
        ffn = _mm(z, w2_ref[l]) + bb2_ref[l]                      # [GN, D]
        h = _layer_norm(h1 + ffn, g2_ref[l], be2_ref[l])

    # ---- mean node pooling per graph via precomputed pooling matrix ----
    hg = _mm(pool_ref[...], h)                                    # [G, D]

    # ---- MLP readout ----
    z = jnp.maximum(_mm(hg, ro_w1_ref[...]) + ro_b1_ref[...], 0.0)
    o_ref[...] = _mm(z, ro_w2_ref[...]) + ro_b2_ref[...]          # [G, 1]


# ----------------------------- forward wrapper -----------------------------
def _const_spec(shape):
    nd = len(shape)
    return pl.BlockSpec(shape, lambda g, _nd=nd: (0,) * _nd)


@jax.jit
def graph_transformer_forward(x, adj, step_count, params):
    # step_count is threaded through by the PyTorch wrapper but does not
    # change the forward math; accepted and ignored here.
    del step_count
    x_flat = x.reshape(BN, IN_DIM)

    # --- hoisted out of the kernel: group-local block-diagonal additive
    # --- attention bias, [NG, GN, GN] ---
    adj_g = adj.reshape(NG, G, N, N)
    blk = jnp.zeros((NG, GN, GN), jnp.float32)
    for i in range(G):
        blk = blk.at[:, i * N:(i + 1) * N, i * N:(i + 1) * N].set(adj_g[:, i])
    bias = jnp.where(blk > 0, 0.0, NEG_INF).astype(jnp.float32)

    # --- hoisted: mean-pool matrix for one group of G graphs, [G, GN] ---
    row = lax.broadcasted_iota(jnp.int32, (G, GN), 0)
    col = lax.broadcasted_iota(jnp.int32, (G, GN), 1) // N
    pool = jnp.where(row == col, 1.0 / N, 0.0).astype(jnp.float32)

    in_specs = [
        pl.BlockSpec((GN, IN_DIM), lambda g: (g, 0)),        # node features
        pl.BlockSpec((1, GN, GN), lambda g: (g, 0, 0)),      # attention bias
        _const_spec((G, GN)),                                # pooling matrix
        _const_spec(params["embed_w"].shape),
        _const_spec(params["embed_b"].shape),
        _const_spec(params["wq"].shape), _const_spec(params["wk"].shape),
        _const_spec(params["wv"].shape), _const_spec(params["wo"].shape),
        _const_spec(params["g1"].shape), _const_spec(params["be1"].shape),
        _const_spec(params["w1"].shape), _const_spec(params["bb1"].shape),
        _const_spec(params["w2"].shape), _const_spec(params["bb2"].shape),
        _const_spec(params["g2"].shape), _const_spec(params["be2"].shape),
        _const_spec(params["ro_w1"].shape), _const_spec(params["ro_b1"].shape),
        _const_spec(params["ro_w2"].shape), _const_spec(params["ro_b2"].shape),
    ]

    return pl.pallas_call(
        fused_gt_kernel,
        out_shape=jax.ShapeDtypeStruct((B, OUT_DIM), jnp.float32),
        grid=(NG,),
        in_specs=in_specs,
        out_specs=pl.BlockSpec((G, OUT_DIM), lambda g: (g, 0)),
        compiler_params=pltpu.CompilerParams(
            dimension_semantics=("parallel",)),   # both TensorCores on v7x
    )(x_flat, bias, pool,
      params["embed_w"], params["embed_b"],
      params["wq"], params["wk"], params["wv"], params["wo"],
      params["g1"], params["be1"], params["w1"], params["bb1"],
      params["w2"], params["bb2"], params["g2"], params["be2"],
      params["ro_w1"], params["ro_b1"], params["ro_w2"], params["ro_b2"])


# ------------------------ parameters (stacked layers) ------------------------
def init_params(key):
    ks = iter(jax.random.split(key, 16))

    def dense(shape, fan_in):
        w = jax.random.normal(next(ks), shape, jnp.float32) / jnp.sqrt(
            jnp.float32(fan_in))
        return w.astype(jnp.bfloat16)   # matmul weights stored in bf16

    return {
        "embed_w": dense((IN_DIM, D), IN_DIM),
        "embed_b": jnp.zeros((1, D), jnp.float32),
        # per-layer, per-head weights: no lane slicing needed in the kernel
        "wq": dense((L, NH, D, DK), D),
        "wk": dense((L, NH, D, DK), D),
        "wv": dense((L, NH, D, DK), D),
        "wo": dense((L, NH, DK, D), D),
        "g1": jnp.ones((L, 1, D), jnp.float32),
        "be1": jnp.zeros((L, 1, D), jnp.float32),
        "w1": dense((L, D, FF), D),
        "bb1": jnp.zeros((L, 1, FF), jnp.float32),
        "w2": dense((L, FF, D), FF),
        "bb2": jnp.zeros((L, 1, D), jnp.float32),
        "g2": jnp.ones((L, 1, D), jnp.float32),
        "be2": jnp.zeros((L, 1, D), jnp.float32),
        "ro_w1": dense((D, RD), D),
        "ro_b1": jnp.zeros((1, RD), jnp.float32),
        "ro_w2": dense((RD, OUT_DIM), RD),
        "ro_b2": jnp.zeros((1, OUT_DIM), jnp.float32),
    }


# ----------------------------- pure-JAX reference -----------------------------
def _ref_forward(x, adj, params):
    """Per-graph reference; mirrors the kernel's bf16 MXU operand casts."""
    def bmm(pat, a, b):
        return jnp.einsum(pat, a.astype(jnp.bfloat16), b.astype(jnp.bfloat16),
                          preferred_element_type=jnp.float32)

    h = bmm("bni,id->bnd", x, params["embed_w"]) + params["embed_b"]
    for l in range(L):
        attn = jnp.zeros((B, N, D), jnp.float32)
        for hd in range(NH):
            q = bmm("bnd,de->bne", h, params["wq"][l, hd])
            k = bmm("bnd,de->bne", h, params["wk"][l, hd])
            v = bmm("bnd,de->bne", h, params["wv"][l, hd])
            s = bmm("bnd,bmd->bnm", q, k) * SCALE
            s = jnp.where(adj > 0, s, NEG_INF)
            s = s - jnp.max(s, axis=-1, keepdims=True)
            p = jnp.exp(s)
            p = p / jnp.sum(p, axis=-1, keepdims=True)
            ho = bmm("bnm,bmd->bnd", p, v)
            attn = attn + bmm("bnd,de->bne", ho, params["wo"][l, hd])
        h1 = _layer_norm(h + attn, params["g1"][l], params["be1"][l])
        z = jnp.maximum(bmm("bnd,df->bnf", h1, params["w1"][l])
                        + params["bb1"][l], 0.0)
        ffn = bmm("bnf,fd->bnd", z, params["w2"][l]) + params["bb2"][l]
        h = _layer_norm(h1 + ffn, params["g2"][l], params["be2"][l])
    hg = jnp.mean(h.astype(jnp.bfloat16).astype(jnp.float32), axis=1)
    z = jnp.maximum(bmm("bd,dr->br", hg, params["ro_w1"])
                    + params["ro_b1"], 0.0)
    return bmm("br,rk->bk", z, params["ro_w2"]) + params["ro_b2"]


# ------------------------------------- main -------------------------------------
if __name__ == "__main__":
    key = jax.random.PRNGKey(0)
    k_x, k_a, k_p = jax.random.split(key, 3)

    # deterministic inputs: node features + per-graph dense adjacency with
    # guaranteed self-loops (see NOTE at top about fully-masked rows).
    x = jax.random.normal(k_x, (B, N, IN_DIM), jnp.float32)
    rnd = jax.random.bernoulli(k_a, 0.25, (B, N, N)).astype(jnp.float32)
    adj = jnp.maximum(jnp.maximum(rnd, jnp.transpose(rnd, (0, 2, 1))),
                      jnp.eye(N, dtype=jnp.float32))

    params = init_params(k_p)
    step_count = 0

    out = graph_transformer_forward(x, adj, step_count, params)
    out = jax.block_until_ready(out)

    ref = _ref_forward(x, adj, params)
    assert out.shape == (B, OUT_DIM)
    assert jnp.all(jnp.isfinite(out))
    # Kernel and reference both use bf16 MXU operands with f32 accumulation
    # and an exact softmax divide; the residual gap is reduction-order x bf16
    # rounding only (typically ~1e-4).
    assert jnp.allclose(out, ref, rtol=5e-3, atol=5e-3), (out, ref)
    print("KERNEL_OK")
</pallas_src>

<mosaic_0001>
module attributes {stable_mosaic.version = 11 : i64} {
  func.func @fused_gt_kernel(%arg0: i32, %arg1: memref<128x8xf32, #tpu.memory_space<vmem>>, %arg2: memref<1x128x128xf32, #tpu.memory_space<vmem>>, %arg3: memref<8x128xf32, #tpu.memory_space<vmem>>, %arg4: memref<8x32xbf16, #tpu.memory_space<vmem>>, %arg5: memref<1x32xf32, #tpu.memory_space<vmem>>, %arg6: memref<2x4x32x8xbf16, #tpu.memory_space<vmem>>, %arg7: memref<2x4x32x8xbf16, #tpu.memory_space<vmem>>, %arg8: memref<2x4x32x8xbf16, #tpu.memory_space<vmem>>, %arg9: memref<2x4x8x32xbf16, #tpu.memory_space<vmem>>, %arg10: memref<2x1x32xf32, #tpu.memory_space<vmem>>, %arg11: memref<2x1x32xf32, #tpu.memory_space<vmem>>, %arg12: memref<2x32x128xbf16, #tpu.memory_space<vmem>>, %arg13: memref<2x1x128xf32, #tpu.memory_space<vmem>>, %arg14: memref<2x128x32xbf16, #tpu.memory_space<vmem>>, %arg15: memref<2x1x32xf32, #tpu.memory_space<vmem>>, %arg16: memref<2x1x32xf32, #tpu.memory_space<vmem>>, %arg17: memref<2x1x32xf32, #tpu.memory_space<vmem>>, %arg18: memref<32x16xbf16, #tpu.memory_space<vmem>>, %arg19: memref<1x16xf32, #tpu.memory_space<vmem>>, %arg20: memref<16x1xbf16, #tpu.memory_space<vmem>>, %arg21: memref<1x1xf32, #tpu.memory_space<vmem>>, %arg22: memref<8x1xf32, #tpu.memory_space<vmem>>) attributes {dimension_semantics = [#tpu.dimension_semantics<parallel>], iteration_bounds = array<i64: 2>, scalar_prefetch = 0 : i64, scratch_operands = 0 : i64, tpu.core_type = #tpu.core_type<tc>, window_params = [{transform_indices = @transform_0, window_bounds = array<i64: 128, 8>}, {transform_indices = @transform_1, window_bounds = array<i64: 1, 128, 128>}, {pipeline_mode = #tpu.pipeline_mode<synchronous>, transform_indices = @transform_2, window_bounds = array<i64: 8, 128>}, {pipeline_mode = #tpu.pipeline_mode<synchronous>, transform_indices = @transform_3, window_bounds = array<i64: 8, 32>}, {pipeline_mode = #tpu.pipeline_mode<synchronous>, transform_indices = @transform_4, window_bounds = array<i64: 1, 32>}, {pipeline_mode = #tpu.pipeline_mode<synchronous>, transform_indices = @transform_5, window_bounds = array<i64: 2, 4, 32, 8>}, {pipeline_mode = #tpu.pipeline_mode<synchronous>, transform_indices = @transform_6, window_bounds = array<i64: 2, 4, 32, 8>}, {pipeline_mode = #tpu.pipeline_mode<synchronous>, transform_indices = @transform_7, window_bounds = array<i64: 2, 4, 32, 8>}, {pipeline_mode = #tpu.pipeline_mode<synchronous>, transform_indices = @transform_8, window_bounds = array<i64: 2, 4, 8, 32>}, {pipeline_mode = #tpu.pipeline_mode<synchronous>, transform_indices = @transform_9, window_bounds = array<i64: 2, 1, 32>}, {pipeline_mode = #tpu.pipeline_mode<synchronous>, transform_indices = @transform_10, window_bounds = array<i64: 2, 1, 32>}, {pipeline_mode = #tpu.pipeline_mode<synchronous>, transform_indices = @transform_11, window_bounds = array<i64: 2, 32, 128>}, {pipeline_mode = #tpu.pipeline_mode<synchronous>, transform_indices = @transform_12, window_bounds = array<i64: 2, 1, 128>}, {pipeline_mode = #tpu.pipeline_mode<synchronous>, transform_indices = @transform_13, window_bounds = array<i64: 2, 128, 32>}, {pipeline_mode = #tpu.pipeline_mode<synchronous>, transform_indices = @transform_14, window_bounds = array<i64: 2, 1, 32>}, {pipeline_mode = #tpu.pipeline_mode<synchronous>, transform_indices = @transform_15, window_bounds = array<i64: 2, 1, 32>}, {pipeline_mode = #tpu.pipeline_mode<synchronous>, transform_indices = @transform_16, window_bounds = array<i64: 2, 1, 32>}, {pipeline_mode = #tpu.pipeline_mode<synchronous>, transform_indices = @transform_17, window_bounds = array<i64: 32, 16>}, {pipeline_mode = #tpu.pipeline_mode<synchronous>, transform_indices = @transform_18, window_bounds = array<i64: 1, 16>}, {pipeline_mode = #tpu.pipeline_mode<synchronous>, transform_indices = @transform_19, window_bounds = array<i64: 16, 1>}, {pipeline_mode = #tpu.pipeline_mode<synchronous>, transform_indices = @transform_20, window_bounds = array<i64: 1, 1>}, {transform_indices = @transform_21, window_bounds = array<i64: 8, 1>}]} {
    %c0 = arith.constant 0 : index
    %c0_0 = arith.constant 0 : index
    %0 = vector.load %arg1[%c0, %c0_0] : memref<128x8xf32, #tpu.memory_space<vmem>>, vector<128x8xf32>
    %c0_1 = arith.constant 0 : index
    %c0_2 = arith.constant 0 : index
    %1 = vector.load %arg4[%c0_1, %c0_2] : memref<8x32xbf16, #tpu.memory_space<vmem>>, vector<8x32xbf16>
    %2 = arith.truncf %0 : vector<128x8xf32> to vector<128x8xbf16>
    %cst = arith.constant dense<0.000000e+00> : vector<128x32xf32>
    %3 = tpu.matmul %2, %1, %cst {dimension_numbers = #tpu.dot_dimension_numbers<[1], [0], [0], [1], [0, 0, 1, 1], [], []>} : vector<128x8xbf16>, vector<8x32xbf16>, vector<128x32xf32> -> vector<128x32xf32>
    %c0_3 = arith.constant 0 : index
    %c0_4 = arith.constant 0 : index
    %4 = vector.load %arg5[%c0_3, %c0_4] : memref<1x32xf32, #tpu.memory_space<vmem>>, vector<1x32xf32>
    %5 = vector.broadcast %4 : vector<1x32xf32> to vector<128x32xf32>
    %6 = arith.addf %3, %5 : vector<128x32xf32>
    %c0_5 = arith.constant 0 : index
    %c0_6 = arith.constant 0 : index
    %c0_7 = arith.constant 0 : index
    %7 = vector.load %arg2[%c0_5, %c0_6, %c0_7] : memref<1x128x128xf32, #tpu.memory_space<vmem>>, vector<1x128x128xf32>
    %8 = vector.shape_cast %7 : vector<1x128x128xf32> to vector<128x128xf32>
    %9 = arith.truncf %6 : vector<128x32xf32> to vector<128x32xbf16>
    %cst_8 = arith.constant 0.000000e+00 : f32
    %10 = vector.broadcast %cst_8 : f32 to vector<128x32xf32>
    %c0_9 = arith.constant 0 : index
    %c0_10 = arith.constant 0 : index
    %c0_11 = arith.constant 0 : index
    %c0_12 = arith.constant 0 : index
    %11 = vector.load %arg6[%c0_9, %c0_10, %c0_11, %c0_12] : memref<2x4x32x8xbf16, #tpu.memory_space<vmem>>, vector<1x1x32x8xbf16>
    %12 = vector.shape_cast %11 : vector<1x1x32x8xbf16> to vector<32x8xbf16>
    %cst_13 = arith.constant dense<0.000000e+00> : vector<128x8xf32>
    %13 = tpu.matmul %9, %12, %cst_13 {dimension_numbers = #tpu.dot_dimension_numbers<[1], [0], [0], [1], [0, 0, 1, 1], [], []>} : vector<128x32xbf16>, vector<32x8xbf16>, vector<128x8xf32> -> vector<128x8xf32>
    %c0_14 = arith.constant 0 : index
    %c0_15 = arith.constant 0 : index
    %c0_16 = arith.constant 0 : index
    %c0_17 = arith.constant 0 : index
    %14 = vector.load %arg7[%c0_14, %c0_15, %c0_16, %c0_17] : memref<2x4x32x8xbf16, #tpu.memory_space<vmem>>, vector<1x1x32x8xbf16>
    %15 = vector.shape_cast %14 : vector<1x1x32x8xbf16> to vector<32x8xbf16>
    %cst_18 = arith.constant dense<0.000000e+00> : vector<128x8xf32>
    %16 = tpu.matmul %9, %15, %cst_18 {dimension_numbers = #tpu.dot_dimension_numbers<[1], [0], [0], [1], [0, 0, 1, 1], [], []>} : vector<128x32xbf16>, vector<32x8xbf16>, vector<128x8xf32> -> vector<128x8xf32>
    %c0_19 = arith.constant 0 : index
    %c0_20 = arith.constant 0 : index
    %c0_21 = arith.constant 0 : index
    %c0_22 = arith.constant 0 : index
    %17 = vector.load %arg8[%c0_19, %c0_20, %c0_21, %c0_22] : memref<2x4x32x8xbf16, #tpu.memory_space<vmem>>, vector<1x1x32x8xbf16>
    %18 = vector.shape_cast %17 : vector<1x1x32x8xbf16> to vector<32x8xbf16>
    %cst_23 = arith.constant dense<0.000000e+00> : vector<128x8xf32>
    %19 = tpu.matmul %9, %18, %cst_23 {dimension_numbers = #tpu.dot_dimension_numbers<[1], [0], [0], [1], [0, 0, 1, 1], [], []>} : vector<128x32xbf16>, vector<32x8xbf16>, vector<128x8xf32> -> vector<128x8xf32>
    %20 = arith.truncf %13 : vector<128x8xf32> to vector<128x8xbf16>
    %21 = arith.truncf %16 : vector<128x8xf32> to vector<128x8xbf16>
    %cst_24 = arith.constant dense<0.000000e+00> : vector<128x128xf32>
    %22 = tpu.matmul %20, %21, %cst_24 {dimension_numbers = #tpu.dot_dimension_numbers<[1], [1], [0], [0], [0, 0, 1, 0], [], []>} : vector<128x8xbf16>, vector<128x8xbf16>, vector<128x128xf32> -> vector<128x128xf32>
    %cst_25 = arith.constant 0.353553385 : f32
    %23 = vector.broadcast %cst_25 : f32 to vector<128x128xf32>
    %24 = arith.mulf %22, %23 : vector<128x128xf32>
    %25 = arith.addf %24, %8 : vector<128x128xf32>
    %cst_26 = arith.constant dense<0xFF800000> : vector<128xf32>
    %26 = vector.multi_reduction <maximumf>, %25, %cst_26 [1] : vector<128x128xf32> to vector<128xf32>
    %27 = vector.shape_cast %26 : vector<128xf32> to vector<128x1xf32>
    %28 = vector.broadcast %27 : vector<128x1xf32> to vector<128x128xf32>
    %29 = arith.subf %25, %28 : vector<128x128xf32>
    %30 = math.exp %29 : vector<128x128xf32>
    %cst_27 = arith.constant dense<0.000000e+00> : vector<128xf32>
    %31 = vector.multi_reduction <add>, %30, %cst_27 [1] : vector<128x128xf32> to vector<128xf32>
    %32 = vector.shape_cast %31 : vector<128xf32> to vector<128x1xf32>
    %33 = vector.broadcast %32 : vector<128x1xf32> to vector<128x128xf32>
    %34 = arith.divf %30, %33 : vector<128x128xf32>
    %35 = arith.truncf %34 : vector<128x128xf32> to vector<128x128xbf16>
    %36 = arith.truncf %19 : vector<128x8xf32> to vector<128x8xbf16>
    %cst_28 = arith.constant dense<0.000000e+00> : vector<128x8xf32>
    %37 = tpu.matmul %35, %36, %cst_28 {dimension_numbers = #tpu.dot_dimension_numbers<[1], [0], [0], [1], [0, 0, 1, 1], [], []>} : vector<128x128xbf16>, vector<128x8xbf16>, vector<128x8xf32> -> vector<128x8xf32>
    %c0_29 = arith.constant 0 : index
    %c0_30 = arith.constant 0 : index
    %c0_31 = arith.constant 0 : index
    %c0_32 = arith.constant 0 : index
    %38 = vector.load %arg9[%c0_29, %c0_30, %c0_31, %c0_32] : memref<2x4x8x32xbf16, #tpu.memory_space<vmem>>, vector<1x1x8x32xbf16>
    %39 = vector.shape_cast %38 : vector<1x1x8x32xbf16> to vector<8x32xbf16>
    %40 = arith.truncf %37 : vector<128x8xf32> to vector<128x8xbf16>
    %cst_33 = arith.constant dense<0.000000e+00> : vector<128x32xf32>
    %41 = tpu.matmul %40, %39, %cst_33 {dimension_numbers = #tpu.dot_dimension_numbers<[1], [0], [0], [1], [0, 0, 1, 1], [], []>} : vector<128x8xbf16>, vector<8x32xbf16>, vector<128x32xf32> -> vector<128x32xf32>
    %42 = arith.addf %10, %41 : vector<128x32xf32>
    %c0_34 = arith.constant 0 : index
    %c1 = arith.constant 1 : index
    %c0_35 = arith.constant 0 : index
    %c0_36 = arith.constant 0 : index
    %43 = vector.load %arg6[%c0_34, %c1, %c0_35, %c0_36] : memref<2x4x32x8xbf16, #tpu.memory_space<vmem>>, vector<1x1x32x8xbf16>
    %44 = vector.shape_cast %43 : vector<1x1x32x8xbf16> to vector<32x8xbf16>
    %cst_37 = arith.constant dense<0.000000e+00> : vector<128x8xf32>
    %45 = tpu.matmul %9, %44, %cst_37 {dimension_numbers = #tpu.dot_dimension_numbers<[1], [0], [0], [1], [0, 0, 1, 1], [], []>} : vector<128x32xbf16>, vector<32x8xbf16>, vector<128x8xf32> -> vector<128x8xf32>
    %c0_38 = arith.constant 0 : index
    %c1_39 = arith.constant 1 : index
    %c0_40 = arith.constant 0 : index
    %c0_41 = arith.constant 0 : index
    %46 = vector.load %arg7[%c0_38, %c1_39, %c0_40, %c0_41] : memref<2x4x32x8xbf16, #tpu.memory_space<vmem>>, vector<1x1x32x8xbf16>
    %47 = vector.shape_cast %46 : vector<1x1x32x8xbf16> to vector<32x8xbf16>
    %cst_42 = arith.constant dense<0.000000e+00> : vector<128x8xf32>
    %48 = tpu.matmul %9, %47, %cst_42 {dimension_numbers = #tpu.dot_dimension_numbers<[1], [0], [0], [1], [0, 0, 1, 1], [], []>} : vector<128x32xbf16>, vector<32x8xbf16>, vector<128x8xf32> -> vector<128x8xf32>
    %c0_43 = arith.constant 0 : index
    %c1_44 = arith.constant 1 : index
    %c0_45 = arith.constant 0 : index
    %c0_46 = arith.constant 0 : index
    %49 = vector.load %arg8[%c0_43, %c1_44, %c0_45, %c0_46] : memref<2x4x32x8xbf16, #tpu.memory_space<vmem>>, vector<1x1x32x8xbf16>
    %50 = vector.shape_cast %49 : vector<1x1x32x8xbf16> to vector<32x8xbf16>
    %cst_47 = arith.constant dense<0.000000e+00> : vector<128x8xf32>
    %51 = tpu.matmul %9, %50, %cst_47 {dimension_numbers = #tpu.dot_dimension_numbers<[1], [0], [0], [1], [0, 0, 1, 1], [], []>} : vector<128x32xbf16>, vector<32x8xbf16>, vector<128x8xf32> -> vector<128x8xf32>
    %52 = arith.truncf %45 : vector<128x8xf32> to vector<128x8xbf16>
    %53 = arith.truncf %48 : vector<128x8xf32> to vector<128x8xbf16>
    %cst_48 = arith.constant dense<0.000000e+00> : vector<128x128xf32>
    %54 = tpu.matmul %52, %53, %cst_48 {dimension_numbers = #tpu.dot_dimension_numbers<[1], [1], [0], [0], [0, 0, 1, 0], [], []>} : vector<128x8xbf16>, vector<128x8xbf16>, vector<128x128xf32> -> vector<128x128xf32>
    %cst_49 = arith.constant 0.353553385 : f32
    %55 = vector.broadcast %cst_49 : f32 to vector<128x128xf32>
    %56 = arith.mulf %54, %55 : vector<128x128xf32>
    %57 = arith.addf %56, %8 : vector<128x128xf32>
    %cst_50 = arith.constant dense<0xFF800000> : vector<128xf32>
    %58 = vector.multi_reduction <maximumf>, %57, %cst_50 [1] : vector<128x128xf32> to vector<128xf32>
    %59 = vector.shape_cast %58 : vector<128xf32> to vector<128x1xf32>
    %60 = vector.broadcast %59 : vector<128x1xf32> to vector<128x128xf32>
    %61 = arith.subf %57, %60 : vector<128x128xf32>
    %62 = math.exp %61 : vector<128x128xf32>
    %cst_51 = arith.constant dense<0.000000e+00> : vector<128xf32>
    %63 = vector.multi_reduction <add>, %62, %cst_51 [1] : vector<128x128xf32> to vector<128xf32>
    %64 = vector.shape_cast %63 : vector<128xf32> to vector<128x1xf32>
    %65 = vector.broadcast %64 : vector<128x1xf32> to vector<128x128xf32>
    %66 = arith.divf %62, %65 : vector<128x128xf32>
    %67 = arith.truncf %66 : vector<128x128xf32> to vector<128x128xbf16>
    %68 = arith.truncf %51 : vector<128x8xf32> to vector<128x8xbf16>
    %cst_52 = arith.constant dense<0.000000e+00> : vector<128x8xf32>
    %69 = tpu.matmul %67, %68, %cst_52 {dimension_numbers = #tpu.dot_dimension_numbers<[1], [0], [0], [1], [0, 0, 1, 1], [], []>} : vector<128x128xbf16>, vector<128x8xbf16>, vector<128x8xf32> -> vector<128x8xf32>
    %c0_53 = arith.constant 0 : index
    %c1_54 = arith.constant 1 : index
    %c0_55 = arith.constant 0 : index
    %c0_56 = arith.constant 0 : index
    %70 = vector.load %arg9[%c0_53, %c1_54, %c0_55, %c0_56] : memref<2x4x8x32xbf16, #tpu.memory_space<vmem>>, vector<1x1x8x32xbf16>
    %71 = vector.shape_cast %70 : vector<1x1x8x32xbf16> to vector<8x32xbf16>
    %72 = arith.truncf %69 : vector<128x8xf32> to vector<128x8xbf16>
    %cst_57 = arith.constant dense<0.000000e+00> : vector<128x32xf32>
    %73 = tpu.matmul %72, %71, %cst_57 {dimension_numbers = #tpu.dot_dimension_numbers<[1], [0], [0], [1], [0, 0, 1, 1], [], []>} : vector<128x8xbf16>, vector<8x32xbf16>, vector<128x32xf32> -> vector<128x32xf32>
    %74 = arith.addf %42, %73 : vector<128x32xf32>
    %c0_58 = arith.constant 0 : index
    %c2 = arith.constant 2 : index
    %c0_59 = arith.constant 0 : index
    %c0_60 = arith.constant 0 : index
    %75 = vector.load %arg6[%c0_58, %c2, %c0_59, %c0_60] : memref<2x4x32x8xbf16, #tpu.memory_space<vmem>>, vector<1x1x32x8xbf16>
    %76 = vector.shape_cast %75 : vector<1x1x32x8xbf16> to vector<32x8xbf16>
    %cst_61 = arith.constant dense<0.000000e+00> : vector<128x8xf32>
    %77 = tpu.matmul %9, %76, %cst_61 {dimension_numbers = #tpu.dot_dimension_numbers<[1], [0], [0], [1], [0, 0, 1, 1], [], []>} : vector<128x32xbf16>, vector<32x8xbf16>, vector<128x8xf32> -> vector<128x8xf32>
    %c0_62 = arith.constant 0 : index
    %c2_63 = arith.constant 2 : index
    %c0_64 = arith.constant 0 : index
    %c0_65 = arith.constant 0 : index
    %78 = vector.load %arg7[%c0_62, %c2_63, %c0_64, %c0_65] : memref<2x4x32x8xbf16, #tpu.memory_space<vmem>>, vector<1x1x32x8xbf16>
    %79 = vector.shape_cast %78 : vector<1x1x32x8xbf16> to vector<32x8xbf16>
    %cst_66 = arith.constant dense<0.000000e+00> : vector<128x8xf32>
    %80 = tpu.matmul %9, %79, %cst_66 {dimension_numbers = #tpu.dot_dimension_numbers<[1], [0], [0], [1], [0, 0, 1, 1], [], []>} : vector<128x32xbf16>, vector<32x8xbf16>, vector<128x8xf32> -> vector<128x8xf32>
    %c0_67 = arith.constant 0 : index
    %c2_68 = arith.constant 2 : index
    %c0_69 = arith.constant 0 : index
    %c0_70 = arith.constant 0 : index
    %81 = vector.load %arg8[%c0_67, %c2_68, %c0_69, %c0_70] : memref<2x4x32x8xbf16, #tpu.memory_space<vmem>>, vector<1x1x32x8xbf16>
    %82 = vector.shape_cast %81 : vector<1x1x32x8xbf16> to vector<32x8xbf16>
    %cst_71 = arith.constant dense<0.000000e+00> : vector<128x8xf32>
    %83 = tpu.matmul %9, %82, %cst_71 {dimension_numbers = #tpu.dot_dimension_numbers<[1], [0], [0], [1], [0, 0, 1, 1], [], []>} : vector<128x32xbf16>, vector<32x8xbf16>, vector<128x8xf32> -> vector<128x8xf32>
    %84 = arith.truncf %77 : vector<128x8xf32> to vector<128x8xbf16>
    %85 = arith.truncf %80 : vector<128x8xf32> to vector<128x8xbf16>
    %cst_72 = arith.constant dense<0.000000e+00> : vector<128x128xf32>
    %86 = tpu.matmul %84, %85, %cst_72 {dimension_numbers = #tpu.dot_dimension_numbers<[1], [1], [0], [0], [0, 0, 1, 0], [], []>} : vector<128x8xbf16>, vector<128x8xbf16>, vector<128x128xf32> -> vector<128x128xf32>
    %cst_73 = arith.constant 0.353553385 : f32
    %87 = vector.broadcast %cst_73 : f32 to vector<128x128xf32>
    %88 = arith.mulf %86, %87 : vector<128x128xf32>
    %89 = arith.addf %88, %8 : vector<128x128xf32>
    %cst_74 = arith.constant dense<0xFF800000> : vector<128xf32>
    %90 = vector.multi_reduction <maximumf>, %89, %cst_74 [1] : vector<128x128xf32> to vector<128xf32>
    %91 = vector.shape_cast %90 : vector<128xf32> to vector<128x1xf32>
    %92 = vector.broadcast %91 : vector<128x1xf32> to vector<128x128xf32>
    %93 = arith.subf %89, %92 : vector<128x128xf32>
    %94 = math.exp %93 : vector<128x128xf32>
    %cst_75 = arith.constant dense<0.000000e+00> : vector<128xf32>
    %95 = vector.multi_reduction <add>, %94, %cst_75 [1] : vector<128x128xf32> to vector<128xf32>
    %96 = vector.shape_cast %95 : vector<128xf32> to vector<128x1xf32>
    %97 = vector.broadcast %96 : vector<128x1xf32> to vector<128x128xf32>
    %98 = arith.divf %94, %97 : vector<128x128xf32>
    %99 = arith.truncf %98 : vector<128x128xf32> to vector<128x128xbf16>
    %100 = arith.truncf %83 : vector<128x8xf32> to vector<128x8xbf16>
    %cst_76 = arith.constant dense<0.000000e+00> : vector<128x8xf32>
    %101 = tpu.matmul %99, %100, %cst_76 {dimension_numbers = #tpu.dot_dimension_numbers<[1], [0], [0], [1], [0, 0, 1, 1], [], []>} : vector<128x128xbf16>, vector<128x8xbf16>, vector<128x8xf32> -> vector<128x8xf32>
    %c0_77 = arith.constant 0 : index
    %c2_78 = arith.constant 2 : index
    %c0_79 = arith.constant 0 : index
    %c0_80 = arith.constant 0 : index
    %102 = vector.load %arg9[%c0_77, %c2_78, %c0_79, %c0_80] : memref<2x4x8x32xbf16, #tpu.memory_space<vmem>>, vector<1x1x8x32xbf16>
    %103 = vector.shape_cast %102 : vector<1x1x8x32xbf16> to vector<8x32xbf16>
    %104 = arith.truncf %101 : vector<128x8xf32> to vector<128x8xbf16>
    %cst_81 = arith.constant dense<0.000000e+00> : vector<128x32xf32>
    %105 = tpu.matmul %104, %103, %cst_81 {dimension_numbers = #tpu.dot_dimension_numbers<[1], [0], [0], [1], [0, 0, 1, 1], [], []>} : vector<128x8xbf16>, vector<8x32xbf16>, vector<128x32xf32> -> vector<128x32xf32>
    %106 = arith.addf %74, %105 : vector<128x32xf32>
    %c0_82 = arith.constant 0 : index
    %c3 = arith.constant 3 : index
    %c0_83 = arith.constant 0 : index
    %c0_84 = arith.constant 0 : index
    %107 = vector.load %arg6[%c0_82, %c3, %c0_83, %c0_84] : memref<2x4x32x8xbf16, #tpu.memory_space<vmem>>, vector<1x1x32x8xbf16>
    %108 = vector.shape_cast %107 : vector<1x1x32x8xbf16> to vector<32x8xbf16>
    %cst_85 = arith.constant dense<0.000000e+00> : vector<128x8xf32>
    %109 = tpu.matmul %9, %108, %cst_85 {dimension_numbers = #tpu.dot_dimension_numbers<[1], [0], [0], [1], [0, 0, 1, 1], [], []>} : vector<128x32xbf16>, vector<32x8xbf16>, vector<128x8xf32> -> vector<128x8xf32>
    %c0_86 = arith.constant 0 : index
    %c3_87 = arith.constant 3 : index
    %c0_88 = arith.constant 0 : index
    %c0_89 = arith.constant 0 : index
    %110 = vector.load %arg7[%c0_86, %c3_87, %c0_88, %c0_89] : memref<2x4x32x8xbf16, #tpu.memory_space<vmem>>, vector<1x1x32x8xbf16>
    %111 = vector.shape_cast %110 : vector<1x1x32x8xbf16> to vector<32x8xbf16>
    %cst_90 = arith.constant dense<0.000000e+00> : vector<128x8xf32>
    %112 = tpu.matmul %9, %111, %cst_90 {dimension_numbers = #tpu.dot_dimension_numbers<[1], [0], [0], [1], [0, 0, 1, 1], [], []>} : vector<128x32xbf16>, vector<32x8xbf16>, vector<128x8xf32> -> vector<128x8xf32>
    %c0_91 = arith.constant 0 : index
    %c3_92 = arith.constant 3 : index
    %c0_93 = arith.constant 0 : index
    %c0_94 = arith.constant 0 : index
    %113 = vector.load %arg8[%c0_91, %c3_92, %c0_93, %c0_94] : memref<2x4x32x8xbf16, #tpu.memory_space<vmem>>, vector<1x1x32x8xbf16>
    %114 = vector.shape_cast %113 : vector<1x1x32x8xbf16> to vector<32x8xbf16>
    %cst_95 = arith.constant dense<0.000000e+00> : vector<128x8xf32>
    %115 = tpu.matmul %9, %114, %cst_95 {dimension_numbers = #tpu.dot_dimension_numbers<[1], [0], [0], [1], [0, 0, 1, 1], [], []>} : vector<128x32xbf16>, vector<32x8xbf16>, vector<128x8xf32> -> vector<128x8xf32>
    %116 = arith.truncf %109 : vector<128x8xf32> to vector<128x8xbf16>
    %117 = arith.truncf %112 : vector<128x8xf32> to vector<128x8xbf16>
    %cst_96 = arith.constant dense<0.000000e+00> : vector<128x128xf32>
    %118 = tpu.matmul %116, %117, %cst_96 {dimension_numbers = #tpu.dot_dimension_numbers<[1], [1], [0], [0], [0, 0, 1, 0], [], []>} : vector<128x8xbf16>, vector<128x8xbf16>, vector<128x128xf32> -> vector<128x128xf32>
    %cst_97 = arith.constant 0.353553385 : f32
    %119 = vector.broadcast %cst_97 : f32 to vector<128x128xf32>
    %120 = arith.mulf %118, %119 : vector<128x128xf32>
    %121 = arith.addf %120, %8 : vector<128x128xf32>
    %cst_98 = arith.constant dense<0xFF800000> : vector<128xf32>
    %122 = vector.multi_reduction <maximumf>, %121, %cst_98 [1] : vector<128x128xf32> to vector<128xf32>
    %123 = vector.shape_cast %122 : vector<128xf32> to vector<128x1xf32>
    %124 = vector.broadcast %123 : vector<128x1xf32> to vector<128x128xf32>
    %125 = arith.subf %121, %124 : vector<128x128xf32>
    %126 = math.exp %125 : vector<128x128xf32>
    %cst_99 = arith.constant dense<0.000000e+00> : vector<128xf32>
    %127 = vector.multi_reduction <add>, %126, %cst_99 [1] : vector<128x128xf32> to vector<128xf32>
    %128 = vector.shape_cast %127 : vector<128xf32> to vector<128x1xf32>
    %129 = vector.broadcast %128 : vector<128x1xf32> to vector<128x128xf32>
    %130 = arith.divf %126, %129 : vector<128x128xf32>
    %131 = arith.truncf %130 : vector<128x128xf32> to vector<128x128xbf16>
    %132 = arith.truncf %115 : vector<128x8xf32> to vector<128x8xbf16>
    %cst_100 = arith.constant dense<0.000000e+00> : vector<128x8xf32>
    %133 = tpu.matmul %131, %132, %cst_100 {dimension_numbers = #tpu.dot_dimension_numbers<[1], [0], [0], [1], [0, 0, 1, 1], [], []>} : vector<128x128xbf16>, vector<128x8xbf16>, vector<128x8xf32> -> vector<128x8xf32>
    %c0_101 = arith.constant 0 : index
    %c3_102 = arith.constant 3 : index
    %c0_103 = arith.constant 0 : index
    %c0_104 = arith.constant 0 : index
    %134 = vector.load %arg9[%c0_101, %c3_102, %c0_103, %c0_104] : memref<2x4x8x32xbf16, #tpu.memory_space<vmem>>, vector<1x1x8x32xbf16>
    %135 = vector.shape_cast %134 : vector<1x1x8x32xbf16> to vector<8x32xbf16>
    %136 = arith.truncf %133 : vector<128x8xf32> to vector<128x8xbf16>
    %cst_105 = arith.constant dense<0.000000e+00> : vector<128x32xf32>
    %137 = tpu.matmul %136, %135, %cst_105 {dimension_numbers = #tpu.dot_dimension_numbers<[1], [0], [0], [1], [0, 0, 1, 1], [], []>} : vector<128x8xbf16>, vector<8x32xbf16>, vector<128x32xf32> -> vector<128x32xf32>
    %138 = arith.addf %106, %137 : vector<128x32xf32>
    %139 = arith.addf %6, %138 : vector<128x32xf32>
    %c0_106 = arith.constant 0 : index
    %c0_107 = arith.constant 0 : index
    %c0_108 = arith.constant 0 : index
    %140 = vector.load %arg10[%c0_106, %c0_107, %c0_108] : memref<2x1x32xf32, #tpu.memory_space<vmem>>, vector<1x1x32xf32>
    %141 = vector.shape_cast %140 : vector<1x1x32xf32> to vector<1x32xf32>
    %c0_109 = arith.constant 0 : index
    %c0_110 = arith.constant 0 : index
    %c0_111 = arith.constant 0 : index
    %142 = vector.load %arg11[%c0_109, %c0_110, %c0_111] : memref<2x1x32xf32, #tpu.memory_space<vmem>>, vector<1x1x32xf32>
    %143 = vector.shape_cast %142 : vector<1x1x32xf32> to vector<1x32xf32>
    %cst_112 = arith.constant dense<0.000000e+00> : vector<128xf32>
    %144 = vector.multi_reduction <add>, %139, %cst_112 [1] : vector<128x32xf32> to vector<128xf32>
    %145 = vector.shape_cast %144 : vector<128xf32> to vector<128x1xf32>
    %cst_113 = arith.constant 3.200000e+01 : f32
    %146 = vector.broadcast %cst_113 : f32 to vector<128x1xf32>
    %147 = arith.divf %145, %146 : vector<128x1xf32>
    %148 = vector.broadcast %147 : vector<128x1xf32> to vector<128x32xf32>
    %149 = arith.subf %139, %148 : vector<128x32xf32>
    %150 = arith.mulf %149, %149 : vector<128x32xf32>
    %cst_114 = arith.constant dense<0.000000e+00> : vector<128xf32>
    %151 = vector.multi_reduction <add>, %150, %cst_114 [1] : vector<128x32xf32> to vector<128xf32>
    %152 = vector.shape_cast %151 : vector<128xf32> to vector<128x1xf32>
    %cst_115 = arith.constant 3.200000e+01 : f32
    %153 = vector.broadcast %cst_115 : f32 to vector<128x1xf32>
    %154 = arith.divf %152, %153 : vector<128x1xf32>
    %155 = vector.broadcast %147 : vector<128x1xf32> to vector<128x32xf32>
    %156 = arith.subf %139, %155 : vector<128x32xf32>
    %cst_116 = arith.constant 9.99999974E-6 : f32
    %157 = vector.broadcast %cst_116 : f32 to vector<128x1xf32>
    %158 = arith.addf %154, %157 : vector<128x1xf32>
    %159 = math.rsqrt %158 : vector<128x1xf32>
    %160 = vector.broadcast %159 : vector<128x1xf32> to vector<128x32xf32>
    %161 = arith.mulf %156, %160 : vector<128x32xf32>
    %162 = vector.broadcast %141 : vector<1x32xf32> to vector<128x32xf32>
    %163 = arith.mulf %161, %162 : vector<128x32xf32>
    %164 = vector.broadcast %143 : vector<1x32xf32> to vector<128x32xf32>
    %165 = arith.addf %163, %164 : vector<128x32xf32>
    %c0_117 = arith.constant 0 : index
    %c0_118 = arith.constant 0 : index
    %c0_119 = arith.constant 0 : index
    %166 = vector.load %arg12[%c0_117, %c0_118, %c0_119] : memref<2x32x128xbf16, #tpu.memory_space<vmem>>, vector<1x32x128xbf16>
    %167 = vector.shape_cast %166 : vector<1x32x128xbf16> to vector<32x128xbf16>
    %168 = arith.truncf %165 : vector<128x32xf32> to vector<128x32xbf16>
    %cst_120 = arith.constant dense<0.000000e+00> : vector<128x128xf32>
    %169 = tpu.matmul %168, %167, %cst_120 {dimension_numbers = #tpu.dot_dimension_numbers<[1], [0], [0], [1], [0, 0, 1, 1], [], []>} : vector<128x32xbf16>, vector<32x128xbf16>, vector<128x128xf32> -> vector<128x128xf32>
    %c0_121 = arith.constant 0 : index
    %c0_122 = arith.constant 0 : index
    %c0_123 = arith.constant 0 : index
    %170 = vector.load %arg13[%c0_121, %c0_122, %c0_123] : memref<2x1x128xf32, #tpu.memory_space<vmem>>, vector<1x1x128xf32>
    %171 = vector.shape_cast %170 : vector<1x1x128xf32> to vector<1x128xf32>
    %172 = vector.broadcast %171 : vector<1x128xf32> to vector<128x128xf32>
    %173 = arith.addf %169, %172 : vector<128x128xf32>
    %cst_124 = arith.constant 0.000000e+00 : f32
    %174 = vector.broadcast %cst_124 : f32 to vector<128x128xf32>
    %175 = arith.maximumf %173, %174 : vector<128x128xf32>
    %c0_125 = arith.constant 0 : index
    %c0_126 = arith.constant 0 : index
    %c0_127 = arith.constant 0 : index
    %176 = vector.load %arg14[%c0_125, %c0_126, %c0_127] : memref<2x128x32xbf16, #tpu.memory_space<vmem>>, vector<1x128x32xbf16>
    %177 = vector.shape_cast %176 : vector<1x128x32xbf16> to vector<128x32xbf16>
    %178 = arith.truncf %175 : vector<128x128xf32> to vector<128x128xbf16>
    %cst_128 = arith.constant dense<0.000000e+00> : vector<128x32xf32>
    %179 = tpu.matmul %178, %177, %cst_128 {dimension_numbers = #tpu.dot_dimension_numbers<[1], [0], [0], [1], [0, 0, 1, 1], [], []>} : vector<128x128xbf16>, vector<128x32xbf16>, vector<128x32xf32> -> vector<128x32xf32>
    %c0_129 = arith.constant 0 : index
    %c0_130 = arith.constant 0 : index
    %c0_131 = arith.constant 0 : index
    %180 = vector.load %arg15[%c0_129, %c0_130, %c0_131] : memref<2x1x32xf32, #tpu.memory_space<vmem>>, vector<1x1x32xf32>
    %181 = vector.shape_cast %180 : vector<1x1x32xf32> to vector<1x32xf32>
    %182 = vector.broadcast %181 : vector<1x32xf32> to vector<128x32xf32>
    %183 = arith.addf %179, %182 : vector<128x32xf32>
    %184 = arith.addf %165, %183 : vector<128x32xf32>
    %c0_132 = arith.constant 0 : index
    %c0_133 = arith.constant 0 : index
    %c0_134 = arith.constant 0 : index
    %185 = vector.load %arg16[%c0_132, %c0_133, %c0_134] : memref<2x1x32xf32, #tpu.memory_space<vmem>>, vector<1x1x32xf32>
    %186 = vector.shape_cast %185 : vector<1x1x32xf32> to vector<1x32xf32>
    %c0_135 = arith.constant 0 : index
    %c0_136 = arith.constant 0 : index
    %c0_137 = arith.constant 0 : index
    %187 = vector.load %arg17[%c0_135, %c0_136, %c0_137] : memref<2x1x32xf32, #tpu.memory_space<vmem>>, vector<1x1x32xf32>
    %188 = vector.shape_cast %187 : vector<1x1x32xf32> to vector<1x32xf32>
    %cst_138 = arith.constant dense<0.000000e+00> : vector<128xf32>
    %189 = vector.multi_reduction <add>, %184, %cst_138 [1] : vector<128x32xf32> to vector<128xf32>
    %190 = vector.shape_cast %189 : vector<128xf32> to vector<128x1xf32>
    %cst_139 = arith.constant 3.200000e+01 : f32
    %191 = vector.broadcast %cst_139 : f32 to vector<128x1xf32>
    %192 = arith.divf %190, %191 : vector<128x1xf32>
    %193 = vector.broadcast %192 : vector<128x1xf32> to vector<128x32xf32>
    %194 = arith.subf %184, %193 : vector<128x32xf32>
    %195 = arith.mulf %194, %194 : vector<128x32xf32>
    %cst_140 = arith.constant dense<0.000000e+00> : vector<128xf32>
    %196 = vector.multi_reduction <add>, %195, %cst_140 [1] : vector<128x32xf32> to vector<128xf32>
    %197 = vector.shape_cast %196 : vector<128xf32> to vector<128x1xf32>
    %cst_141 = arith.constant 3.200000e+01 : f32
    %198 = vector.broadcast %cst_141 : f32 to vector<128x1xf32>
    %199 = arith.divf %197, %198 : vector<128x1xf32>
    %200 = vector.broadcast %192 : vector<128x1xf32> to vector<128x32xf32>
    %201 = arith.subf %184, %200 : vector<128x32xf32>
    %cst_142 = arith.constant 9.99999974E-6 : f32
    %202 = vector.broadcast %cst_142 : f32 to vector<128x1xf32>
    %203 = arith.addf %199, %202 : vector<128x1xf32>
    %204 = math.rsqrt %203 : vector<128x1xf32>
    %205 = vector.broadcast %204 : vector<128x1xf32> to vector<128x32xf32>
    %206 = arith.mulf %201, %205 : vector<128x32xf32>
    %207 = vector.broadcast %186 : vector<1x32xf32> to vector<128x32xf32>
    %208 = arith.mulf %206, %207 : vector<128x32xf32>
    %209 = vector.broadcast %188 : vector<1x32xf32> to vector<128x32xf32>
    %210 = arith.addf %208, %209 : vector<128x32xf32>
    %211 = arith.truncf %210 : vector<128x32xf32> to vector<128x32xbf16>
    %cst_143 = arith.constant 0.000000e+00 : f32
    %212 = vector.broadcast %cst_143 : f32 to vector<128x32xf32>
    %c1_144 = arith.constant 1 : index
    %c0_145 = arith.constant 0 : index
    %c0_146 = arith.constant 0 : index
    %c0_147 = arith.constant 0 : index
    %213 = vector.load %arg6[%c1_144, %c0_145, %c0_146, %c0_147] : memref<2x4x32x8xbf16, #tpu.memory_space<vmem>>, vector<1x1x32x8xbf16>
    %214 = vector.shape_cast %213 : vector<1x1x32x8xbf16> to vector<32x8xbf16>
    %cst_148 = arith.constant dense<0.000000e+00> : vector<128x8xf32>
    %215 = tpu.matmul %211, %214, %cst_148 {dimension_numbers = #tpu.dot_dimension_numbers<[1], [0], [0], [1], [0, 0, 1, 1], [], []>} : vector<128x32xbf16>, vector<32x8xbf16>, vector<128x8xf32> -> vector<128x8xf32>
    %c1_149 = arith.constant 1 : index
    %c0_150 = arith.constant 0 : index
    %c0_151 = arith.constant 0 : index
    %c0_152 = arith.constant 0 : index
    %216 = vector.load %arg7[%c1_149, %c0_150, %c0_151, %c0_152] : memref<2x4x32x8xbf16, #tpu.memory_space<vmem>>, vector<1x1x32x8xbf16>
    %217 = vector.shape_cast %216 : vector<1x1x32x8xbf16> to vector<32x8xbf16>
    %cst_153 = arith.constant dense<0.000000e+00> : vector<128x8xf32>
    %218 = tpu.matmul %211, %217, %cst_153 {dimension_numbers = #tpu.dot_dimension_numbers<[1], [0], [0], [1], [0, 0, 1, 1], [], []>} : vector<128x32xbf16>, vector<32x8xbf16>, vector<128x8xf32> -> vector<128x8xf32>
    %c1_154 = arith.constant 1 : index
    %c0_155 = arith.constant 0 : index
    %c0_156 = arith.constant 0 : index
    %c0_157 = arith.constant 0 : index
    %219 = vector.load %arg8[%c1_154, %c0_155, %c0_156, %c0_157] : memref<2x4x32x8xbf16, #tpu.memory_space<vmem>>, vector<1x1x32x8xbf16>
    %220 = vector.shape_cast %219 : vector<1x1x32x8xbf16> to vector<32x8xbf16>
    %cst_158 = arith.constant dense<0.000000e+00> : vector<128x8xf32>
    %221 = tpu.matmul %211, %220, %cst_158 {dimension_numbers = #tpu.dot_dimension_numbers<[1], [0], [0], [1], [0, 0, 1, 1], [], []>} : vector<128x32xbf16>, vector<32x8xbf16>, vector<128x8xf32> -> vector<128x8xf32>
    %222 = arith.truncf %215 : vector<128x8xf32> to vector<128x8xbf16>
    %223 = arith.truncf %218 : vector<128x8xf32> to vector<128x8xbf16>
    %cst_159 = arith.constant dense<0.000000e+00> : vector<128x128xf32>
    %224 = tpu.matmul %222, %223, %cst_159 {dimension_numbers = #tpu.dot_dimension_numbers<[1], [1], [0], [0], [0, 0, 1, 0], [], []>} : vector<128x8xbf16>, vector<128x8xbf16>, vector<128x128xf32> -> vector<128x128xf32>
    %cst_160 = arith.constant 0.353553385 : f32
    %225 = vector.broadcast %cst_160 : f32 to vector<128x128xf32>
    %226 = arith.mulf %224, %225 : vector<128x128xf32>
    %227 = arith.addf %226, %8 : vector<128x128xf32>
    %cst_161 = arith.constant dense<0xFF800000> : vector<128xf32>
    %228 = vector.multi_reduction <maximumf>, %227, %cst_161 [1] : vector<128x128xf32> to vector<128xf32>
    %229 = vector.shape_cast %228 : vector<128xf32> to vector<128x1xf32>
    %230 = vector.broadcast %229 : vector<128x1xf32> to vector<128x128xf32>
    %231 = arith.subf %227, %230 : vector<128x128xf32>
    %232 = math.exp %231 : vector<128x128xf32>
    %cst_162 = arith.constant dense<0.000000e+00> : vector<128xf32>
    %233 = vector.multi_reduction <add>, %232, %cst_162 [1] : vector<128x128xf32> to vector<128xf32>
    %234 = vector.shape_cast %233 : vector<128xf32> to vector<128x1xf32>
    %235 = vector.broadcast %234 : vector<128x1xf32> to vector<128x128xf32>
    %236 = arith.divf %232, %235 : vector<128x128xf32>
    %237 = arith.truncf %236 : vector<128x128xf32> to vector<128x128xbf16>
    %238 = arith.truncf %221 : vector<128x8xf32> to vector<128x8xbf16>
    %cst_163 = arith.constant dense<0.000000e+00> : vector<128x8xf32>
    %239 = tpu.matmul %237, %238, %cst_163 {dimension_numbers = #tpu.dot_dimension_numbers<[1], [0], [0], [1], [0, 0, 1, 1], [], []>} : vector<128x128xbf16>, vector<128x8xbf16>, vector<128x8xf32> -> vector<128x8xf32>
    %c1_164 = arith.constant 1 : index
    %c0_165 = arith.constant 0 : index
    %c0_166 = arith.constant 0 : index
    %c0_167 = arith.constant 0 : index
    %240 = vector.load %arg9[%c1_164, %c0_165, %c0_166, %c0_167] : memref<2x4x8x32xbf16, #tpu.memory_space<vmem>>, vector<1x1x8x32xbf16>
    %241 = vector.shape_cast %240 : vector<1x1x8x32xbf16> to vector<8x32xbf16>
    %242 = arith.truncf %239 : vector<128x8xf32> to vector<128x8xbf16>
    %cst_168 = arith.constant dense<0.000000e+00> : vector<128x32xf32>
    %243 = tpu.matmul %242, %241, %cst_168 {dimension_numbers = #tpu.dot_dimension_numbers<[1], [0], [0], [1], [0, 0, 1, 1], [], []>} : vector<128x8xbf16>, vector<8x32xbf16>, vector<128x32xf32> -> vector<128x32xf32>
    %244 = arith.addf %212, %243 : vector<128x32xf32>
    %c1_169 = arith.constant 1 : index
    %c1_170 = arith.constant 1 : index
    %c0_171 = arith.constant 0 : index
    %c0_172 = arith.constant 0 : index
    %245 = vector.load %arg6[%c1_169, %c1_170, %c0_171, %c0_172] : memref<2x4x32x8xbf16, #tpu.memory_space<vmem>>, vector<1x1x32x8xbf16>
    %246 = vector.shape_cast %245 : vector<1x1x32x8xbf16> to vector<32x8xbf16>
    %cst_173 = arith.constant dense<0.000000e+00> : vector<128x8xf32>
    %247 = tpu.matmul %211, %246, %cst_173 {dimension_numbers = #tpu.dot_dimension_numbers<[1], [0], [0], [1], [0, 0, 1, 1], [], []>} : vector<128x32xbf16>, vector<32x8xbf16>, vector<128x8xf32> -> vector<128x8xf32>
    %c1_174 = arith.constant 1 : index
    %c1_175 = arith.constant 1 : index
    %c0_176 = arith.constant 0 : index
    %c0_177 = arith.constant 0 : index
    %248 = vector.load %arg7[%c1_174, %c1_175, %c0_176, %c0_177] : memref<2x4x32x8xbf16, #tpu.memory_space<vmem>>, vector<1x1x32x8xbf16>
    %249 = vector.shape_cast %248 : vector<1x1x32x8xbf16> to vector<32x8xbf16>
    %cst_178 = arith.constant dense<0.000000e+00> : vector<128x8xf32>
    %250 = tpu.matmul %211, %249, %cst_178 {dimension_numbers = #tpu.dot_dimension_numbers<[1], [0], [0], [1], [0, 0, 1, 1], [], []>} : vector<128x32xbf16>, vector<32x8xbf16>, vector<128x8xf32> -> vector<128x8xf32>
    %c1_179 = arith.constant 1 : index
    %c1_180 = arith.constant 1 : index
    %c0_181 = arith.constant 0 : index
    %c0_182 = arith.constant 0 : index
    %251 = vector.load %arg8[%c1_179, %c1_180, %c0_181, %c0_182] : memref<2x4x32x8xbf16, #tpu.memory_space<vmem>>, vector<1x1x32x8xbf16>
    %252 = vector.shape_cast %251 : vector<1x1x32x8xbf16> to vector<32x8xbf16>
    %cst_183 = arith.constant dense<0.000000e+00> : vector<128x8xf32>
    %253 = tpu.matmul %211, %252, %cst_183 {dimension_numbers = #tpu.dot_dimension_numbers<[1], [0], [0], [1], [0, 0, 1, 1], [], []>} : vector<128x32xbf16>, vector<32x8xbf16>, vector<128x8xf32> -> vector<128x8xf32>
    %254 = arith.truncf %247 : vector<128x8xf32> to vector<128x8xbf16>
    %255 = arith.truncf %250 : vector<128x8xf32> to vector<128x8xbf16>
    %cst_184 = arith.constant dense<0.000000e+00> : vector<128x128xf32>
    %256 = tpu.matmul %254, %255, %cst_184 {dimension_numbers = #tpu.dot_dimension_numbers<[1], [1], [0], [0], [0, 0, 1, 0], [], []>} : vector<128x8xbf16>, vector<128x8xbf16>, vector<128x128xf32> -> vector<128x128xf32>
    %cst_185 = arith.constant 0.353553385 : f32
    %257 = vector.broadcast %cst_185 : f32 to vector<128x128xf32>
    %258 = arith.mulf %256, %257 : vector<128x128xf32>
    %259 = arith.addf %258, %8 : vector<128x128xf32>
    %cst_186 = arith.constant dense<0xFF800000> : vector<128xf32>
    %260 = vector.multi_reduction <maximumf>, %259, %cst_186 [1] : vector<128x128xf32> to vector<128xf32>
    %261 = vector.shape_cast %260 : vector<128xf32> to vector<128x1xf32>
    %262 = vector.broadcast %261 : vector<128x1xf32> to vector<128x128xf32>
    %263 = arith.subf %259, %262 : vector<128x128xf32>
    %264 = math.exp %263 : vector<128x128xf32>
    %cst_187 = arith.constant dense<0.000000e+00> : vector<128xf32>
    %265 = vector.multi_reduction <add>, %264, %cst_187 [1] : vector<128x128xf32> to vector<128xf32>
    %266 = vector.shape_cast %265 : vector<128xf32> to vector<128x1xf32>
    %267 = vector.broadcast %266 : vector<128x1xf32> to vector<128x128xf32>
    %268 = arith.divf %264, %267 : vector<128x128xf32>
    %269 = arith.truncf %268 : vector<128x128xf32> to vector<128x128xbf16>
    %270 = arith.truncf %253 : vector<128x8xf32> to vector<128x8xbf16>
    %cst_188 = arith.constant dense<0.000000e+00> : vector<128x8xf32>
    %271 = tpu.matmul %269, %270, %cst_188 {dimension_numbers = #tpu.dot_dimension_numbers<[1], [0], [0], [1], [0, 0, 1, 1], [], []>} : vector<128x128xbf16>, vector<128x8xbf16>, vector<128x8xf32> -> vector<128x8xf32>
    %c1_189 = arith.constant 1 : index
    %c1_190 = arith.constant 1 : index
    %c0_191 = arith.constant 0 : index
    %c0_192 = arith.constant 0 : index
    %272 = vector.load %arg9[%c1_189, %c1_190, %c0_191, %c0_192] : memref<2x4x8x32xbf16, #tpu.memory_space<vmem>>, vector<1x1x8x32xbf16>
    %273 = vector.shape_cast %272 : vector<1x1x8x32xbf16> to vector<8x32xbf16>
    %274 = arith.truncf %271 : vector<128x8xf32> to vector<128x8xbf16>
    %cst_193 = arith.constant dense<0.000000e+00> : vector<128x32xf32>
    %275 = tpu.matmul %274, %273, %cst_193 {dimension_numbers = #tpu.dot_dimension_numbers<[1], [0], [0], [1], [0, 0, 1, 1], [], []>} : vector<128x8xbf16>, vector<8x32xbf16>, vector<128x32xf32> -> vector<128x32xf32>
    %276 = arith.addf %244, %275 : vector<128x32xf32>
    %c1_194 = arith.constant 1 : index
    %c2_195 = arith.constant 2 : index
    %c0_196 = arith.constant 0 : index
    %c0_197 = arith.constant 0 : index
    %277 = vector.load %arg6[%c1_194, %c2_195, %c0_196, %c0_197] : memref<2x4x32x8xbf16, #tpu.memory_space<vmem>>, vector<1x1x32x8xbf16>
    %278 = vector.shape_cast %277 : vector<1x1x32x8xbf16> to vector<32x8xbf16>
    %cst_198 = arith.constant dense<0.000000e+00> : vector<128x8xf32>
    %279 = tpu.matmul %211, %278, %cst_198 {dimension_numbers = #tpu.dot_dimension_numbers<[1], [0], [0], [1], [0, 0, 1, 1], [], []>} : vector<128x32xbf16>, vector<32x8xbf16>, vector<128x8xf32> -> vector<128x8xf32>
    %c1_199 = arith.constant 1 : index
    %c2_200 = arith.constant 2 : index
    %c0_201 = arith.constant 0 : index
    %c0_202 = arith.constant 0 : index
    %280 = vector.load %arg7[%c1_199, %c2_200, %c0_201, %c0_202] : memref<2x4x32x8xbf16, #tpu.memory_space<vmem>>, vector<1x1x32x8xbf16>
    %281 = vector.shape_cast %280 : vector<1x1x32x8xbf16> to vector<32x8xbf16>
    %cst_203 = arith.constant dense<0.000000e+00> : vector<128x8xf32>
    %282 = tpu.matmul %211, %281, %cst_203 {dimension_numbers = #tpu.dot_dimension_numbers<[1], [0], [0], [1], [0, 0, 1, 1], [], []>} : vector<128x32xbf16>, vector<32x8xbf16>, vector<128x8xf32> -> vector<128x8xf32>
    %c1_204 = arith.constant 1 : index
    %c2_205 = arith.constant 2 : index
    %c0_206 = arith.constant 0 : index
    %c0_207 = arith.constant 0 : index
    %283 = vector.load %arg8[%c1_204, %c2_205, %c0_206, %c0_207] : memref<2x4x32x8xbf16, #tpu.memory_space<vmem>>, vector<1x1x32x8xbf16>
    %284 = vector.shape_cast %283 : vector<1x1x32x8xbf16> to vector<32x8xbf16>
    %cst_208 = arith.constant dense<0.000000e+00> : vector<128x8xf32>
    %285 = tpu.matmul %211, %284, %cst_208 {dimension_numbers = #tpu.dot_dimension_numbers<[1], [0], [0], [1], [0, 0, 1, 1], [], []>} : vector<128x32xbf16>, vector<32x8xbf16>, vector<128x8xf32> -> vector<128x8xf32>
    %286 = arith.truncf %279 : vector<128x8xf32> to vector<128x8xbf16>
    %287 = arith.truncf %282 : vector<128x8xf32> to vector<128x8xbf16>
    %cst_209 = arith.constant dense<0.000000e+00> : vector<128x128xf32>
    %288 = tpu.matmul %286, %287, %cst_209 {dimension_numbers = #tpu.dot_dimension_numbers<[1], [1], [0], [0], [0, 0, 1, 0], [], []>} : vector<128x8xbf16>, vector<128x8xbf16>, vector<128x128xf32> -> vector<128x128xf32>
    %cst_210 = arith.constant 0.353553385 : f32
    %289 = vector.broadcast %cst_210 : f32 to vector<128x128xf32>
    %290 = arith.mulf %288, %289 : vector<128x128xf32>
    %291 = arith.addf %290, %8 : vector<128x128xf32>
    %cst_211 = arith.constant dense<0xFF800000> : vector<128xf32>
    %292 = vector.multi_reduction <maximumf>, %291, %cst_211 [1] : vector<128x128xf32> to vector<128xf32>
    %293 = vector.shape_cast %292 : vector<128xf32> to vector<128x1xf32>
    %294 = vector.broadcast %293 : vector<128x1xf32> to vector<128x128xf32>
    %295 = arith.subf %291, %294 : vector<128x128xf32>
    %296 = math.exp %295 : vector<128x128xf32>
    %cst_212 = arith.constant dense<0.000000e+00> : vector<128xf32>
    %297 = vector.multi_reduction <add>, %296, %cst_212 [1] : vector<128x128xf32> to vector<128xf32>
    %298 = vector.shape_cast %297 : vector<128xf32> to vector<128x1xf32>
    %299 = vector.broadcast %298 : vector<128x1xf32> to vector<128x128xf32>
    %300 = arith.divf %296, %299 : vector<128x128xf32>
    %301 = arith.truncf %300 : vector<128x128xf32> to vector<128x128xbf16>
    %302 = arith.truncf %285 : vector<128x8xf32> to vector<128x8xbf16>
    %cst_213 = arith.constant dense<0.000000e+00> : vector<128x8xf32>
    %303 = tpu.matmul %301, %302, %cst_213 {dimension_numbers = #tpu.dot_dimension_numbers<[1], [0], [0], [1], [0, 0, 1, 1], [], []>} : vector<128x128xbf16>, vector<128x8xbf16>, vector<128x8xf32> -> vector<128x8xf32>
    %c1_214 = arith.constant 1 : index
    %c2_215 = arith.constant 2 : index
    %c0_216 = arith.constant 0 : index
    %c0_217 = arith.constant 0 : index
    %304 = vector.load %arg9[%c1_214, %c2_215, %c0_216, %c0_217] : memref<2x4x8x32xbf16, #tpu.memory_space<vmem>>, vector<1x1x8x32xbf16>
    %305 = vector.shape_cast %304 : vector<1x1x8x32xbf16> to vector<8x32xbf16>
    %306 = arith.truncf %303 : vector<128x8xf32> to vector<128x8xbf16>
    %cst_218 = arith.constant dense<0.000000e+00> : vector<128x32xf32>
    %307 = tpu.matmul %306, %305, %cst_218 {dimension_numbers = #tpu.dot_dimension_numbers<[1], [0], [0], [1], [0, 0, 1, 1], [], []>} : vector<128x8xbf16>, vector<8x32xbf16>, vector<128x32xf32> -> vector<128x32xf32>
    %308 = arith.addf %276, %307 : vector<128x32xf32>
    %c1_219 = arith.constant 1 : index
    %c3_220 = arith.constant 3 : index
    %c0_221 = arith.constant 0 : index
    %c0_222 = arith.constant 0 : index
    %309 = vector.load %arg6[%c1_219, %c3_220, %c0_221, %c0_222] : memref<2x4x32x8xbf16, #tpu.memory_space<vmem>>, vector<1x1x32x8xbf16>
    %310 = vector.shape_cast %309 : vector<1x1x32x8xbf16> to vector<32x8xbf16>
    %cst_223 = arith.constant dense<0.000000e+00> : vector<128x8xf32>
    %311 = tpu.matmul %211, %310, %cst_223 {dimension_numbers = #tpu.dot_dimension_numbers<[1], [0], [0], [1], [0, 0, 1, 1], [], []>} : vector<128x32xbf16>, vector<32x8xbf16>, vector<128x8xf32> -> vector<128x8xf32>
    %c1_224 = arith.constant 1 : index
    %c3_225 = arith.constant 3 : index
    %c0_226 = arith.constant 0 : index
    %c0_227 = arith.constant 0 : index
    %312 = vector.load %arg7[%c1_224, %c3_225, %c0_226, %c0_227] : memref<2x4x32x8xbf16, #tpu.memory_space<vmem>>, vector<1x1x32x8xbf16>
    %313 = vector.shape_cast %312 : vector<1x1x32x8xbf16> to vector<32x8xbf16>
    %cst_228 = arith.constant dense<0.000000e+00> : vector<128x8xf32>
    %314 = tpu.matmul %211, %313, %cst_228 {dimension_numbers = #tpu.dot_dimension_numbers<[1], [0], [0], [1], [0, 0, 1, 1], [], []>} : vector<128x32xbf16>, vector<32x8xbf16>, vector<128x8xf32> -> vector<128x8xf32>
    %c1_229 = arith.constant 1 : index
    %c3_230 = arith.constant 3 : index
    %c0_231 = arith.constant 0 : index
    %c0_232 = arith.constant 0 : index
    %315 = vector.load %arg8[%c1_229, %c3_230, %c0_231, %c0_232] : memref<2x4x32x8xbf16, #tpu.memory_space<vmem>>, vector<1x1x32x8xbf16>
    %316 = vector.shape_cast %315 : vector<1x1x32x8xbf16> to vector<32x8xbf16>
    %cst_233 = arith.constant dense<0.000000e+00> : vector<128x8xf32>
    %317 = tpu.matmul %211, %316, %cst_233 {dimension_numbers = #tpu.dot_dimension_numbers<[1], [0], [0], [1], [0, 0, 1, 1], [], []>} : vector<128x32xbf16>, vector<32x8xbf16>, vector<128x8xf32> -> vector<128x8xf32>
    %318 = arith.truncf %311 : vector<128x8xf32> to vector<128x8xbf16>
    %319 = arith.truncf %314 : vector<128x8xf32> to vector<128x8xbf16>
    %cst_234 = arith.constant dense<0.000000e+00> : vector<128x128xf32>
    %320 = tpu.matmul %318, %319, %cst_234 {dimension_numbers = #tpu.dot_dimension_numbers<[1], [1], [0], [0], [0, 0, 1, 0], [], []>} : vector<128x8xbf16>, vector<128x8xbf16>, vector<128x128xf32> -> vector<128x128xf32>
    %cst_235 = arith.constant 0.353553385 : f32
    %321 = vector.broadcast %cst_235 : f32 to vector<128x128xf32>
    %322 = arith.mulf %320, %321 : vector<128x128xf32>
    %323 = arith.addf %322, %8 : vector<128x128xf32>
    %cst_236 = arith.constant dense<0xFF800000> : vector<128xf32>
    %324 = vector.multi_reduction <maximumf>, %323, %cst_236 [1] : vector<128x128xf32> to vector<128xf32>
    %325 = vector.shape_cast %324 : vector<128xf32> to vector<128x1xf32>
    %326 = vector.broadcast %325 : vector<128x1xf32> to vector<128x128xf32>
    %327 = arith.subf %323, %326 : vector<128x128xf32>
    %328 = math.exp %327 : vector<128x128xf32>
    %cst_237 = arith.constant dense<0.000000e+00> : vector<128xf32>
    %329 = vector.multi_reduction <add>, %328, %cst_237 [1] : vector<128x128xf32> to vector<128xf32>
    %330 = vector.shape_cast %329 : vector<128xf32> to vector<128x1xf32>
    %331 = vector.broadcast %330 : vector<128x1xf32> to vector<128x128xf32>
    %332 = arith.divf %328, %331 : vector<128x128xf32>
    %333 = arith.truncf %332 : vector<128x128xf32> to vector<128x128xbf16>
    %334 = arith.truncf %317 : vector<128x8xf32> to vector<128x8xbf16>
    %cst_238 = arith.constant dense<0.000000e+00> : vector<128x8xf32>
    %335 = tpu.matmul %333, %334, %cst_238 {dimension_numbers = #tpu.dot_dimension_numbers<[1], [0], [0], [1], [0, 0, 1, 1], [], []>} : vector<128x128xbf16>, vector<128x8xbf16>, vector<128x8xf32> -> vector<128x8xf32>
    %c1_239 = arith.constant 1 : index
    %c3_240 = arith.constant 3 : index
    %c0_241 = arith.constant 0 : index
    %c0_242 = arith.constant 0 : index
    %336 = vector.load %arg9[%c1_239, %c3_240, %c0_241, %c0_242] : memref<2x4x8x32xbf16, #tpu.memory_space<vmem>>, vector<1x1x8x32xbf16>
    %337 = vector.shape_cast %336 : vector<1x1x8x32xbf16> to vector<8x32xbf16>
    %338 = arith.truncf %335 : vector<128x8xf32> to vector<128x8xbf16>
    %cst_243 = arith.constant dense<0.000000e+00> : vector<128x32xf32>
    %339 = tpu.matmul %338, %337, %cst_243 {dimension_numbers = #tpu.dot_dimension_numbers<[1], [0], [0], [1], [0, 0, 1, 1], [], []>} : vector<128x8xbf16>, vector<8x32xbf16>, vector<128x32xf32> -> vector<128x32xf32>
    %340 = arith.addf %308, %339 : vector<128x32xf32>
    %341 = arith.addf %210, %340 : vector<128x32xf32>
    %c1_244 = arith.constant 1 : index
    %c0_245 = arith.constant 0 : index
    %c0_246 = arith.constant 0 : index
    %342 = vector.load %arg10[%c1_244, %c0_245, %c0_246] : memref<2x1x32xf32, #tpu.memory_space<vmem>>, vector<1x1x32xf32>
    %343 = vector.shape_cast %342 : vector<1x1x32xf32> to vector<1x32xf32>
    %c1_247 = arith.constant 1 : index
    %c0_248 = arith.constant 0 : index
    %c0_249 = arith.constant 0 : index
    %344 = vector.load %arg11[%c1_247, %c0_248, %c0_249] : memref<2x1x32xf32, #tpu.memory_space<vmem>>, vector<1x1x32xf32>
    %345 = vector.shape_cast %344 : vector<1x1x32xf32> to vector<1x32xf32>
    %cst_250 = arith.constant dense<0.000000e+00> : vector<128xf32>
    %346 = vector.multi_reduction <add>, %341, %cst_250 [1] : vector<128x32xf32> to vector<128xf32>
    %347 = vector.shape_cast %346 : vector<128xf32> to vector<128x1xf32>
    %cst_251 = arith.constant 3.200000e+01 : f32
    %348 = vector.broadcast %cst_251 : f32 to vector<128x1xf32>
    %349 = arith.divf %347, %348 : vector<128x1xf32>
    %350 = vector.broadcast %349 : vector<128x1xf32> to vector<128x32xf32>
    %351 = arith.subf %341, %350 : vector<128x32xf32>
    %352 = arith.mulf %351, %351 : vector<128x32xf32>
    %cst_252 = arith.constant dense<0.000000e+00> : vector<128xf32>
    %353 = vector.multi_reduction <add>, %352, %cst_252 [1] : vector<128x32xf32> to vector<128xf32>
    %354 = vector.shape_cast %353 : vector<128xf32> to vector<128x1xf32>
    %cst_253 = arith.constant 3.200000e+01 : f32
    %355 = vector.broadcast %cst_253 : f32 to vector<128x1xf32>
    %356 = arith.divf %354, %355 : vector<128x1xf32>
    %357 = vector.broadcast %349 : vector<128x1xf32> to vector<128x32xf32>
    %358 = arith.subf %341, %357 : vector<128x32xf32>
    %cst_254 = arith.constant 9.99999974E-6 : f32
    %359 = vector.broadcast %cst_254 : f32 to vector<128x1xf32>
    %360 = arith.addf %356, %359 : vector<128x1xf32>
    %361 = math.rsqrt %360 : vector<128x1xf32>
    %362 = vector.broadcast %361 : vector<128x1xf32> to vector<128x32xf32>
    %363 = arith.mulf %358, %362 : vector<128x32xf32>
    %364 = vector.broadcast %343 : vector<1x32xf32> to vector<128x32xf32>
    %365 = arith.mulf %363, %364 : vector<128x32xf32>
    %366 = vector.broadcast %345 : vector<1x32xf32> to vector<128x32xf32>
    %367 = arith.addf %365, %366 : vector<128x32xf32>
    %c1_255 = arith.constant 1 : index
    %c0_256 = arith.constant 0 : index
    %c0_257 = arith.constant 0 : index
    %368 = vector.load %arg12[%c1_255, %c0_256, %c0_257] : memref<2x32x128xbf16, #tpu.memory_space<vmem>>, vector<1x32x128xbf16>
    %369 = vector.shape_cast %368 : vector<1x32x128xbf16> to vector<32x128xbf16>
    %370 = arith.truncf %367 : vector<128x32xf32> to vector<128x32xbf16>
    %cst_258 = arith.constant dense<0.000000e+00> : vector<128x128xf32>
    %371 = tpu.matmul %370, %369, %cst_258 {dimension_numbers = #tpu.dot_dimension_numbers<[1], [0], [0], [1], [0, 0, 1, 1], [], []>} : vector<128x32xbf16>, vector<32x128xbf16>, vector<128x128xf32> -> vector<128x128xf32>
    %c1_259 = arith.constant 1 : index
    %c0_260 = arith.constant 0 : index
    %c0_261 = arith.constant 0 : index
    %372 = vector.load %arg13[%c1_259, %c0_260, %c0_261] : memref<2x1x128xf32, #tpu.memory_space<vmem>>, vector<1x1x128xf32>
    %373 = vector.shape_cast %372 : vector<1x1x128xf32> to vector<1x128xf32>
    %374 = vector.broadcast %373 : vector<1x128xf32> to vector<128x128xf32>
    %375 = arith.addf %371, %374 : vector<128x128xf32>
    %cst_262 = arith.constant 0.000000e+00 : f32
    %376 = vector.broadcast %cst_262 : f32 to vector<128x128xf32>
    %377 = arith.maximumf %375, %376 : vector<128x128xf32>
    %c1_263 = arith.constant 1 : index
    %c0_264 = arith.constant 0 : index
    %c0_265 = arith.constant 0 : index
    %378 = vector.load %arg14[%c1_263, %c0_264, %c0_265] : memref<2x128x32xbf16, #tpu.memory_space<vmem>>, vector<1x128x32xbf16>
    %379 = vector.shape_cast %378 : vector<1x128x32xbf16> to vector<128x32xbf16>
    %380 = arith.truncf %377 : vector<128x128xf32> to vector<128x128xbf16>
    %cst_266 = arith.constant dense<0.000000e+00> : vector<128x32xf32>
    %381 = tpu.matmul %380, %379, %cst_266 {dimension_numbers = #tpu.dot_dimension_numbers<[1], [0], [0], [1], [0, 0, 1, 1], [], []>} : vector<128x128xbf16>, vector<128x32xbf16>, vector<128x32xf32> -> vector<128x32xf32>
    %c1_267 = arith.constant 1 : index
    %c0_268 = arith.constant 0 : index
    %c0_269 = arith.constant 0 : index
    %382 = vector.load %arg15[%c1_267, %c0_268, %c0_269] : memref<2x1x32xf32, #tpu.memory_space<vmem>>, vector<1x1x32xf32>
    %383 = vector.shape_cast %382 : vector<1x1x32xf32> to vector<1x32xf32>
    %384 = vector.broadcast %383 : vector<1x32xf32> to vector<128x32xf32>
    %385 = arith.addf %381, %384 : vector<128x32xf32>
    %386 = arith.addf %367, %385 : vector<128x32xf32>
    %c1_270 = arith.constant 1 : index
    %c0_271 = arith.constant 0 : index
    %c0_272 = arith.constant 0 : index
    %387 = vector.load %arg16[%c1_270, %c0_271, %c0_272] : memref<2x1x32xf32, #tpu.memory_space<vmem>>, vector<1x1x32xf32>
    %388 = vector.shape_cast %387 : vector<1x1x32xf32> to vector<1x32xf32>
    %c1_273 = arith.constant 1 : index
    %c0_274 = arith.constant 0 : index
    %c0_275 = arith.constant 0 : index
    %389 = vector.load %arg17[%c1_273, %c0_274, %c0_275] : memref<2x1x32xf32, #tpu.memory_space<vmem>>, vector<1x1x32xf32>
    %390 = vector.shape_cast %389 : vector<1x1x32xf32> to vector<1x32xf32>
    %cst_276 = arith.constant dense<0.000000e+00> : vector<128xf32>
    %391 = vector.multi_reduction <add>, %386, %cst_276 [1] : vector<128x32xf32> to vector<128xf32>
    %392 = vector.shape_cast %391 : vector<128xf32> to vector<128x1xf32>
    %cst_277 = arith.constant 3.200000e+01 : f32
    %393 = vector.broadcast %cst_277 : f32 to vector<128x1xf32>
    %394 = arith.divf %392, %393 : vector<128x1xf32>
    %395 = vector.broadcast %394 : vector<128x1xf32> to vector<128x32xf32>
    %396 = arith.subf %386, %395 : vector<128x32xf32>
    %397 = arith.mulf %396, %396 : vector<128x32xf32>
    %cst_278 = arith.constant dense<0.000000e+00> : vector<128xf32>
    %398 = vector.multi_reduction <add>, %397, %cst_278 [1] : vector<128x32xf32> to vector<128xf32>
    %399 = vector.shape_cast %398 : vector<128xf32> to vector<128x1xf32>
    %cst_279 = arith.constant 3.200000e+01 : f32
    %400 = vector.broadcast %cst_279 : f32 to vector<128x1xf32>
    %401 = arith.divf %399, %400 : vector<128x1xf32>
    %402 = vector.broadcast %394 : vector<128x1xf32> to vector<128x32xf32>
    %403 = arith.subf %386, %402 : vector<128x32xf32>
    %cst_280 = arith.constant 9.99999974E-6 : f32
    %404 = vector.broadcast %cst_280 : f32 to vector<128x1xf32>
    %405 = arith.addf %401, %404 : vector<128x1xf32>
    %406 = math.rsqrt %405 : vector<128x1xf32>
    %407 = vector.broadcast %406 : vector<128x1xf32> to vector<128x32xf32>
    %408 = arith.mulf %403, %407 : vector<128x32xf32>
    %409 = vector.broadcast %388 : vector<1x32xf32> to vector<128x32xf32>
    %410 = arith.mulf %408, %409 : vector<128x32xf32>
    %411 = vector.broadcast %390 : vector<1x32xf32> to vector<128x32xf32>
    %412 = arith.addf %410, %411 : vector<128x32xf32>
    %c0_281 = arith.constant 0 : index
    %c0_282 = arith.constant 0 : index
    %413 = vector.load %arg3[%c0_281, %c0_282] : memref<8x128xf32, #tpu.memory_space<vmem>>, vector<8x128xf32>
    %414 = arith.truncf %413 : vector<8x128xf32> to vector<8x128xbf16>
    %415 = arith.truncf %412 : vector<128x32xf32> to vector<128x32xbf16>
    %cst_283 = arith.constant dense<0.000000e+00> : vector<8x32xf32>
    %416 = tpu.matmul %414, %415, %cst_283 {dimension_numbers = #tpu.dot_dimension_numbers<[1], [0], [0], [1], [0, 0, 1, 1], [], []>} : vector<8x128xbf16>, vector<128x32xbf16>, vector<8x32xf32> -> vector<8x32xf32>
    %c0_284 = arith.constant 0 : index
    %c0_285 = arith.constant 0 : index
    %417 = vector.load %arg18[%c0_284, %c0_285] : memref<32x16xbf16, #tpu.memory_space<vmem>>, vector<32x16xbf16>
    %418 = arith.truncf %416 : vector<8x32xf32> to vector<8x32xbf16>
    %cst_286 = arith.constant dense<0.000000e+00> : vector<8x16xf32>
    %419 = tpu.matmul %418, %417, %cst_286 {dimension_numbers = #tpu.dot_dimension_numbers<[1], [0], [0], [1], [0, 0, 1, 1], [], []>} : vector<8x32xbf16>, vector<32x16xbf16>, vector<8x16xf32> -> vector<8x16xf32>
    %c0_287 = arith.constant 0 : index
    %c0_288 = arith.constant 0 : index
    %420 = vector.load %arg19[%c0_287, %c0_288] : memref<1x16xf32, #tpu.memory_space<vmem>>, vector<1x16xf32>
    %421 = vector.broadcast %420 : vector<1x16xf32> to vector<8x16xf32>
    %422 = arith.addf %419, %421 : vector<8x16xf32>
    %cst_289 = arith.constant 0.000000e+00 : f32
    %423 = vector.broadcast %cst_289 : f32 to vector<8x16xf32>
    %424 = arith.maximumf %422, %423 : vector<8x16xf32>
    %c0_290 = arith.constant 0 : index
    %c0_291 = arith.constant 0 : index
    %425 = vector.load %arg20[%c0_290, %c0_291] : memref<16x1xbf16, #tpu.memory_space<vmem>>, vector<16x1xbf16>
    %426 = arith.truncf %424 : vector<8x16xf32> to vector<8x16xbf16>
    %cst_292 = arith.constant dense<0.000000e+00> : vector<8x1xf32>
    %427 = tpu.matmul %426, %425, %cst_292 {dimension_numbers = #tpu.dot_dimension_numbers<[1], [0], [0], [1], [0, 0, 1, 1], [], []>} : vector<8x16xbf16>, vector<16x1xbf16>, vector<8x1xf32> -> vector<8x1xf32>
    %c0_293 = arith.constant 0 : index
    %c0_294 = arith.constant 0 : index
    %428 = vector.load %arg21[%c0_293, %c0_294] : memref<1x1xf32, #tpu.memory_space<vmem>>, vector<1x1xf32>
    %429 = vector.broadcast %428 : vector<1x1xf32> to vector<8x1xf32>
    %430 = arith.addf %427, %429 : vector<8x1xf32>
    %c0_295 = arith.constant 0 : index
    %c0_296 = arith.constant 0 : index
    %431 = vector.load %arg22[%c0_295, %c0_296] : memref<8x1xf32, #tpu.memory_space<vmem>>, vector<8x1xf32>
    tpu.vector_store %arg22[%c0_295, %c0_296], %430 {strides = array<i32>} : memref<8x1xf32, #tpu.memory_space<vmem>>, vector<8x1xf32>,
    return
  }
  func.func @transform_0(%arg0: i32) -> (i32, i32) {
    %c0_i32 = arith.constant 0 : i32
    %c0_i32_0 = arith.constant 0 : i32
    return %arg0, %c0_i32 : i32, i32
  }
  func.func @transform_1(%arg0: i32) -> (i32, i32, i32) {
    %c0_i32 = arith.constant 0 : i32
    %c0_i32_0 = arith.constant 0 : i32
    %c0_i32_1 = arith.constant 0 : i32
    return %arg0, %c0_i32, %c0_i32_0 : i32, i32, i32
  }
  func.func @transform_2(%arg0: i32) -> (i32, i32) {
    %c0_i32 = arith.constant 0 : i32
    %c0_i32_0 = arith.constant 0 : i32
    %c0_i32_1 = arith.constant 0 : i32
    return %c0_i32, %c0_i32_0 : i32, i32
  }
  func.func @transform_3(%arg0: i32) -> (i32, i32) {
    %c0_i32 = arith.constant 0 : i32
    %c0_i32_0 = arith.constant 0 : i32
    %c0_i32_1 = arith.constant 0 : i32
    return %c0_i32, %c0_i32_0 : i32, i32
  }
  func.func @transform_4(%arg0: i32) -> (i32, i32) {
    %c0_i32 = arith.constant 0 : i32
    %c0_i32_0 = arith.constant 0 : i32
    %c0_i32_1 = arith.constant 0 : i32
    return %c0_i32, %c0_i32_0 : i32, i32
  }
  func.func @transform_5(%arg0: i32) -> (i32, i32, i32, i32) {
    %c0_i32 = arith.constant 0 : i32
    %c0_i32_0 = arith.constant 0 : i32
    %c0_i32_1 = arith.constant 0 : i32
    %c0_i32_2 = arith.constant 0 : i32
    %c0_i32_3 = arith.constant 0 : i32
    return %c0_i32, %c0_i32_0, %c0_i32_1, %c0_i32_2 : i32, i32, i32, i32
  }
  func.func @transform_6(%arg0: i32) -> (i32, i32, i32, i32) {
    %c0_i32 = arith.constant 0 : i32
    %c0_i32_0 = arith.constant 0 : i32
    %c0_i32_1 = arith.constant 0 : i32
    %c0_i32_2 = arith.constant 0 : i32
    %c0_i32_3 = arith.constant 0 : i32
    return %c0_i32, %c0_i32_0, %c0_i32_1, %c0_i32_2 : i32, i32, i32, i32
  }
  func.func @transform_7(%arg0: i32) -> (i32, i32, i32, i32) {
    %c0_i32 = arith.constant 0 : i32
    %c0_i32_0 = arith.constant 0 : i32
    %c0_i32_1 = arith.constant 0 : i32
    %c0_i32_2 = arith.constant 0 : i32
    %c0_i32_3 = arith.constant 0 : i32
    return %c0_i32, %c0_i32_0, %c0_i32_1, %c0_i32_2 : i32, i32, i32, i32
  }
  func.func @transform_8(%arg0: i32) -> (i32, i32, i32, i32) {
    %c0_i32 = arith.constant 0 : i32
    %c0_i32_0 = arith.constant 0 : i32
    %c0_i32_1 = arith.constant 0 : i32
    %c0_i32_2 = arith.constant 0 : i32
    %c0_i32_3 = arith.constant 0 : i32
    return %c0_i32, %c0_i32_0, %c0_i32_1, %c0_i32_2 : i32, i32, i32, i32
  }
  func.func @transform_9(%arg0: i32) -> (i32, i32, i32) {
    %c0_i32 = arith.constant 0 : i32
    %c0_i32_0 = arith.constant 0 : i32
    %c0_i32_1 = arith.constant 0 : i32
    %c0_i32_2 = arith.constant 0 : i32
    return %c0_i32, %c0_i32_0, %c0_i32_1 : i32, i32, i32
  }
  func.func @transform_10(%arg0: i32) -> (i32, i32, i32) {
    %c0_i32 = arith.constant 0 : i32
    %c0_i32_0 = arith.constant 0 : i32
    %c0_i32_1 = arith.constant 0 : i32
    %c0_i32_2 = arith.constant 0 : i32
    return %c0_i32, %c0_i32_0, %c0_i32_1 : i32, i32, i32
  }
  func.func @transform_11(%arg0: i32) -> (i32, i32, i32) {
    %c0_i32 = arith.constant 0 : i32
    %c0_i32_0 = arith.constant 0 : i32
    %c0_i32_1 = arith.constant 0 : i32
    %c0_i32_2 = arith.constant 0 : i32
    return %c0_i32, %c0_i32_0, %c0_i32_1 : i32, i32, i32
  }
  func.func @transform_12(%arg0: i32) -> (i32, i32, i32) {
    %c0_i32 = arith.constant 0 : i32
    %c0_i32_0 = arith.constant 0 : i32
    %c0_i32_1 = arith.constant 0 : i32
    %c0_i32_2 = arith.constant 0 : i32
    return %c0_i32, %c0_i32_0, %c0_i32_1 : i32, i32, i32
  }
  func.func @transform_13(%arg0: i32) -> (i32, i32, i32) {
    %c0_i32 = arith.constant 0 : i32
    %c0_i32_0 = arith.constant 0 : i32
    %c0_i32_1 = arith.constant 0 : i32
    %c0_i32_2 = arith.constant 0 : i32
    return %c0_i32, %c0_i32_0, %c0_i32_1 : i32, i32, i32
  }
  func.func @transform_14(%arg0: i32) -> (i32, i32, i32) {
    %c0_i32 = arith.constant 0 : i32
    %c0_i32_0 = arith.constant 0 : i32
    %c0_i32_1 = arith.constant 0 : i32
    %c0_i32_2 = arith.constant 0 : i32
    return %c0_i32, %c0_i32_0, %c0_i32_1 : i32, i32, i32
  }
  func.func @transform_15(%arg0: i32) -> (i32, i32, i32) {
    %c0_i32 = arith.constant 0 : i32
    %c0_i32_0 = arith.constant 0 : i32
    %c0_i32_1 = arith.constant 0 : i32
    %c0_i32_2 = arith.constant 0 : i32
    return %c0_i32, %c0_i32_0, %c0_i32_1 : i32, i32, i32
  }
  func.func @transform_16(%arg0: i32) -> (i32, i32, i32) {
    %c0_i32 = arith.constant 0 : i32
    %c0_i32_0 = arith.constant 0 : i32
    %c0_i32_1 = arith.constant 0 : i32
    %c0_i32_2 = arith.constant 0 : i32
    return %c0_i32, %c0_i32_0, %c0_i32_1 : i32, i32, i32
  }
  func.func @transform_17(%arg0: i32) -> (i32, i32) {
    %c0_i32 = arith.constant 0 : i32
    %c0_i32_0 = arith.constant 0 : i32
    %c0_i32_1 = arith.constant 0 : i32
    return %c0_i32, %c0_i32_0 : i32, i32
  }
  func.func @transform_18(%arg0: i32) -> (i32, i32) {
    %c0_i32 = arith.constant 0 : i32
    %c0_i32_0 = arith.constant 0 : i32
    %c0_i32_1 = arith.constant 0 : i32
    return %c0_i32, %c0_i32_0 : i32, i32
  }
  func.func @transform_19(%arg0: i32) -> (i32, i32) {
    %c0_i32 = arith.constant 0 : i32
    %c0_i32_0 = arith.constant 0 : i32
    %c0_i32_1 = arith.constant 0 : i32
    return %c0_i32, %c0_i32_0 : i32, i32
  }
  func.func @transform_20(%arg0: i32) -> (i32, i32) {
    %c0_i32 = arith.constant 0 : i32
    %c0_i32_0 = arith.constant 0 : i32
    %c0_i32_1 = arith.constant 0 : i32
    return %c0_i32, %c0_i32_0 : i32, i32
  }
  func.func @transform_21(%arg0: i32) -> (i32, i32) {
    %c0_i32 = arith.constant 0 : i32
    %c0_i32_0 = arith.constant 0 : i32
    return %arg0, %c0_i32 : i32, i32
  }
}

</mosaic_0001>

<llo_original>
// kernel: graph_transformer_forward.1
$region0: #{graph_transformer_forward.1}
  #allocation0 [shape = 'u32[]', space=smem, size = 0x4, offset = 0x4, fixed_abs, tag = 'smem constant byte address 0x4 - core index']
  #allocation1 [shape = 'u32[144,128]{1,0:T(1,128)}', space=vmem, size = 0x12000, scoped, tag = 'internal scratch']
  #allocation2 [shape = 'f32[1,1]{1,0:T(1,128)S(1)}', space=vmem, size = 0x200, scoped, tag = 'scoped memory for graph_transformer_forward.1']
  %s0 = inlined_call_operand.vmem [shape: f32[256,8], index: 0, kind: input, shape index: {}]
  %s1 = inlined_call_operand.vmem [shape: f32[2,128,128], index: 1, kind: input, shape index: {}]
  %s2 = inlined_call_operand.vmem [shape: f32[8,128], index: 2, kind: input, shape index: {}]
  %s3 = inlined_call_operand.vmem [shape: bf16[8,32], index: 3, kind: input, shape index: {}]
  %s4 = inlined_call_operand.vmem [shape: f32[1,32], index: 4, kind: input, shape index: {}]
  %s5 = inlined_call_operand.vmem [shape: bf16[2,4,32,8], index: 5, kind: input, shape index: {}]
  %s6 = inlined_call_operand.vmem [shape: bf16[2,4,32,8], index: 6, kind: input, shape index: {}]
  %s7 = inlined_call_operand.vmem [shape: bf16[2,4,32,8], index: 7, kind: input, shape index: {}]
  %s8 = inlined_call_operand.vmem [shape: bf16[2,4,8,32], index: 8, kind: input, shape index: {}]
  %s9 = inlined_call_operand.vmem [shape: f32[2,1,32], index: 9, kind: input, shape index: {}]
  %s10 = inlined_call_operand.vmem [shape: f32[2,1,32], index: 10, kind: input, shape index: {}]
  %s11 = inlined_call_operand.vmem [shape: bf16[2,32,128], index: 11, kind: input, shape index: {}]
  %s12 = inlined_call_operand.vmem [shape: f32[2,1,128], index: 12, kind: input, shape index: {}]
  %s13 = inlined_call_operand.vmem [shape: bf16[2,128,32], index: 13, kind: input, shape index: {}]
  %s14 = inlined_call_operand.vmem [shape: f32[2,1,32], index: 14, kind: input, shape index: {}]
  %s15 = inlined_call_operand.vmem [shape: f32[2,1,32], index: 15, kind: input, shape index: {}]
  %s16 = inlined_call_operand.vmem [shape: f32[2,1,32], index: 16, kind: input, shape index: {}]
  %s17 = inlined_call_operand.vmem [shape: bf16[32,16], index: 17, kind: input, shape index: {}]
  %s18 = inlined_call_operand.vmem [shape: f32[1,16], index: 18, kind: input, shape index: {}]
  %s19 = inlined_call_operand.vmem [shape: bf16[16,1], index: 19, kind: input, shape index: {}]
  %s20 = inlined_call_operand.<no memory space> [shape: f32[1,1], index: 20, kind: input, shape index: {}]
  %s21 = inlined_call_operand.vmem [shape: f32[16,1], index: 21, kind: output, shape index: {}]
  %s22 = sld [smem:[#allocation0]]
  $region117: #{graph_transformer_forward.1} parent=0
    _
  %s24 = ssub.s32 1, %s22
  %s25 = scalar_select 0, %s24, %s22
  %v26 = vstv %s20
  %27 = vst [vmem:[#allocation2] sm:$0x1] %v26
  loop: start=0, step=1, limit=4
  $region2: #{graph_transformer_forward.1} parent=0 // loop_pre_header
    _
  $region3: #{graph_transformer_forward.1} parent=0 // loop_header
    %s29 = sphi 0, %s33
    %p30 = scmp.ge.s32.totalorder %s29, 4
    %s39 = sphi 0, %s41
    %s42 = sphi 0, %s39
    %s43 = sphi 0, %s42
    %s59 = sphi 0, %s43
    %s65 = sphi 0, %s67
    %s68 = sphi 0, %s65
    %s69 = sphi 0, %s68
    %s85 = sphi 0, %s69
    %s89 = sphi 0, %s89
    %s91 = sphi 0, %s89
    %s92 = sphi 0, %s91
    %s106 = sphi 0, %s92
    %s110 = sphi 0, %s110
    %s112 = sphi 0, %s110
    %s113 = sphi 0, %s112
    %s127 = sphi 0, %s113
    %s131 = sphi 0, %s131
    %s133 = sphi 0, %s131
    %s134 = sphi 0, %s133
    %s148 = sphi 0, %s134
    %s152 = sphi 0, %s152
    %s154 = sphi 0, %s152
    %s155 = sphi 0, %s154
    %s169 = sphi 0, %s155
    %s173 = sphi 0, %s173
    %s175 = sphi 0, %s173
    %s176 = sphi 0, %s175
    %s190 = sphi 0, %s176
    %s194 = sphi 0, %s194
    %s196 = sphi 0, %s194
    %s197 = sphi 0, %s196
    %s211 = sphi 0, %s197
    %s215 = sphi 0, %s215
    %s217 = sphi 0, %s215
    %s218 = sphi 0, %s217
    %s232 = sphi 0, %s218
    %s236 = sphi 0, %s236
    %s238 = sphi 0, %s236
    %s239 = sphi 0, %s238
    %s253 = sphi 0, %s239
    %s257 = sphi 0, %s257
    %s259 = sphi 0, %s257
    %s260 = sphi 0, %s259
    %s274 = sphi 0, %s260
    %s278 = sphi 0, %s278
    %s280 = sphi 0, %s278
    %s281 = sphi 0, %s280
    %s295 = sphi 0, %s281
    %s299 = sphi 0, %s299
    %s301 = sphi 0, %s299
    %s302 = sphi 0, %s301
    %s316 = sphi 0, %s302
    %s320 = sphi 0, %s320
    %s322 = sphi 0, %s320
    %s323 = sphi 0, %s322
    %s337 = sphi 0, %s323
    %s341 = sphi 0, %s341
    %s343 = sphi 0, %s341
    %s344 = sphi 0, %s343
    %s358 = sphi 0, %s344
    %s362 = sphi 0, %s362
    %s364 = sphi 0, %s362
    %s365 = sphi 0, %s364
    %s379 = sphi 0, %s365
    %s383 = sphi 0, %s383
    %s385 = sphi 0, %s383
    %s386 = sphi 0, %s385
    %s400 = sphi 0, %s386
    %s404 = sphi 0, %s404
    %s406 = sphi 0, %s404
    %s407 = sphi 0, %s406
    %s421 = sphi 0, %s407
    %s425 = sphi 0, %s425
    %s427 = sphi 0, %s425
    %s428 = sphi 0, %s427
    %s442 = sphi 0, %s428
    %s446 = sphi 0, %s446
    %s448 = sphi 0, %s446
    %s449 = sphi 0, %s448
    %s463 = sphi 0, %s449
    %s467 = sphi 0, %s467
    %s469 = sphi 0, %s467
    %s470 = sphi 0, %s469
    %s484 = sphi 0, %s470
    %s490 = sphi 0, %s492
    %s493 = sphi 0, %s490
    %s494 = sphi 0, %s493
    %s510 = sphi 0, %s494
  $region4: #{graph_transformer_forward.1} parent=0 // loop_header_branch
    %32 = sbr.rel (%p30) target = $region8
  $region5: #{graph_transformer_forward.1} parent=0 // loop_body
    %s34 = ssub.s32 %s29, 1
    %s35 = ssub.s32 %s29, 2
    %s36 = sadd.s32 %s29, 1
    %s37 = ssub.s32 %s29, %s36
    %p38 = scmp.eq.s32.totalorder %s37, 0
    %s40 = sadd.s32 %s39, 1
    %s41 = scalar_select %p38, %s39, %s40
    %p44 = pneg %p38
    %p45 = scmp.eq.s32.totalorder %s29, 1
    %p46 = por %p44, %p45
    %p47 = scmp.ne.s32.totalorder %s39, %s42
    %p48 = scmp.eq.s32.totalorder %s29, 0
    %p49 = por %p47, %p48
    %p50 = scmp.ne.s32.totalorder %s39, %s42
    %p51 = scmp.eq.s32.totalorder %s34, 1
    %p52 = por %p50, %p51
    %p53 = scmp.ne.s32.totalorder %s42, %s43
    %p54 = scmp.eq.s32.totalorder %s34, 0
    %p55 = por %p53, %p54
    %p56 = scmp.ne.s32.totalorder %s42, %s43
    %p57 = scmp.eq.s32.totalorder %s35, 1
    %p58 = por %p56, %p57
    %p60 = scmp.ne.s32.totalorder %s43, %s59
    %p61 = scmp.eq.s32.totalorder %s35, 0
    %p62 = por %p60, %p61
    %s63 = ssub.s32 %s29, %s36
    %p64 = scmp.eq.s32.totalorder %s63, 0
    %s66 = sadd.s32 %s65, 1
    %s67 = scalar_select %p64, %s65, %s66
    %p70 = pneg %p64
    %p71 = scmp.eq.s32.totalorder %s29, 1
    %p72 = por %p70, %p71
    %p73 = scmp.ne.s32.totalorder %s65, %s68
    %p74 = scmp.eq.s32.totalorder %s29, 0
    %p75 = por %p73, %p74
    %p76 = scmp.ne.s32.totalorder %s65, %s68
    %p77 = scmp.eq.s32.totalorder %s34, 1
    %p78 = por %p76, %p77
    %p79 = scmp.ne.s32.totalorder %s68, %s69
    %p80 = scmp.eq.s32.totalorder %s34, 0
    %p81 = por %p79, %p80
    %p82 = scmp.ne.s32.totalorder %s68, %s69
    %p83 = scmp.eq.s32.totalorder %s35, 1
    %p84 = por %p82, %p83
    %p86 = scmp.ne.s32.totalorder %s69, %s85
    %p87 = scmp.eq.s32.totalorder %s35, 0
    %p88 = por %p86, %p87
    %s90 = sadd.s32 %s89, 1
    %p93 = scmp.eq.s32.totalorder %s29, 1
    %p94 = scmp.ne.s32.totalorder %s89, %s91
    %p95 = scmp.eq.s32.totalorder %s29, 0
    %p96 = por %p94, %p95
    %p97 = scmp.ne.s32.totalorder %s89, %s91
    %p98 = scmp.eq.s32.totalorder %s34, 1
    %p99 = por %p97, %p98
    %p100 = scmp.ne.s32.totalorder %s91, %s92
    %p101 = scmp.eq.s32.totalorder %s34, 0
    %p102 = por %p100, %p101
    %p103 = scmp.ne.s32.totalorder %s91, %s92
    %p104 = scmp.eq.s32.totalorder %s35, 1
    %p105 = por %p103, %p104
    %p107 = scmp.ne.s32.totalorder %s92, %s106
    %p108 = scmp.eq.s32.totalorder %s35, 0
    %p109 = por %p107, %p108
    %s111 = sadd.s32 %s110, 1
    %p114 = scmp.eq.s32.totalorder %s29, 1
    %p115 = scmp.ne.s32.totalorder %s110, %s112
    %p116 = scmp.eq.s32.totalorder %s29, 0
    %p117 = por %p115, %p116
    %p118 = scmp.ne.s32.totalorder %s110, %s112
    %p119 = scmp.eq.s32.totalorder %s34, 1
    %p120 = por %p118, %p119
    %p121 = scmp.ne.s32.totalorder %s112, %s113
    %p122 = scmp.eq.s32.totalorder %s34, 0
    %p123 = por %p121, %p122
    %p124 = scmp.ne.s32.totalorder %s112, %s113
    %p125 = scmp.eq.s32.totalorder %s35, 1
    %p126 = por %p124, %p125
    %p128 = scmp.ne.s32.totalorder %s113, %s127
    %p129 = scmp.eq.s32.totalorder %s35, 0
    %p130 = por %p128, %p129
    %s132 = sadd.s32 %s131, 1
    %p135 = scmp.eq.s32.totalorder %s29, 1
    %p136 = scmp.ne.s32.totalorder %s131, %s133
    %p137 = scmp.eq.s32.totalorder %s29, 0
    %p138 = por %p136, %p137
    %p139 = scmp.ne.s32.totalorder %s131, %s133
    %p140 = scmp.eq.s32.totalorder %s34, 1
    %p141 = por %p139, %p140
    %p142 = scmp.ne.s32.totalorder %s133, %s134
    %p143 = scmp.eq.s32.totalorder %s34, 0
    %p144 = por %p142, %p143
    %p145 = scmp.ne.s32.totalorder %s133, %s134
    %p146 = scmp.eq.s32.totalorder %s35, 1
    %p147 = por %p145, %p146
    %p149 = scmp.ne.s32.totalorder %s134, %s148
    %p150 = scmp.eq.s32.totalorder %s35, 0
    %p151 = por %p149, %p150
    %s153 = sadd.s32 %s152, 1
    %p156 = scmp.eq.s32.totalorder %s29, 1
    %p157 = scmp.ne.s32.totalorder %s152, %s154
    %p158 = scmp.eq.s32.totalorder %s29, 0
    %p159 = por %p157, %p158
    %p160 = scmp.ne.s32.totalorder %s152, %s154
    %p161 = scmp.eq.s32.totalorder %s34, 1
    %p162 = por %p160, %p161
    %p163 = scmp.ne.s32.totalorder %s154, %s155
    %p164 = scmp.eq.s32.totalorder %s34, 0
    %p165 = por %p163, %p164
    %p166 = scmp.ne.s32.totalorder %s154, %s155
    %p167 = scmp.eq.s32.totalorder %s35, 1
    %p168 = por %p166, %p167
    %p170 = scmp.ne.s32.totalorder %s155, %s169
    %p171 = scmp.eq.s32.totalorder %s35, 0
    %p172 = por %p170, %p171
    %s174 = sadd.s32 %s173, 1
    %p177 = scmp.eq.s32.totalorder %s29, 1
    %p178 = scmp.ne.s32.totalorder %s173, %s175
    %p179 = scmp.eq.s32.totalorder %s29, 0
    %p180 = por %p178, %p179
    %p181 = scmp.ne.s32.totalorder %s173, %s175
    %p182 = scmp.eq.s32.totalorder %s34, 1
    %p183 = por %p181, %p182
    %p184 = scmp.ne.s32.totalorder %s175, %s176
    %p185 = scmp.eq.s32.totalorder %s34, 0
    %p186 = por %p184, %p185
    %p187 = scmp.ne.s32.totalorder %s175, %s176
    %p188 = scmp.eq.s32.totalorder %s35, 1
    %p189 = por %p187, %p188
    %p191 = scmp.ne.s32.totalorder %s176, %s190
    %p192 = scmp.eq.s32.totalorder %s35, 0
    %p193 = por %p191, %p192
    %s195 = sadd.s32 %s194, 1
    %p198 = scmp.eq.s32.totalorder %s29, 1
    %p199 = scmp.ne.s32.totalorder %s194, %s196
    %p200 = scmp.eq.s32.totalorder %s29, 0
    %p201 = por %p199, %p200
    %p202 = scmp.ne.s32.totalorder %s194, %s196
    %p203 = scmp.eq.s32.totalorder %s34, 1
    %p204 = por %p202, %p203
    %p205 = scmp.ne.s32.totalorder %s196, %s197
    %p206 = scmp.eq.s32.totalorder %s34, 0
    %p207 = por %p205, %p206
    %p208 = scmp.ne.s32.totalorder %s196, %s197
    %p209 = scmp.eq.s32.totalorder %s35, 1
    %p210 = por %p208, %p209
    %p212 = scmp.ne.s32.totalorder %s197, %s211
    %p213 = scmp.eq.s32.totalorder %s35, 0
    %p214 = por %p212, %p213
    %s216 = sadd.s32 %s215, 1
    %p219 = scmp.eq.s32.totalorder %s29, 1
    %p220 = scmp.ne.s32.totalorder %s215, %s217
    %p221 = scmp.eq.s32.totalorder %s29, 0
    %p222 = por %p220, %p221
    %p223 = scmp.ne.s32.totalorder %s215, %s217
    %p224 = scmp.eq.s32.totalorder %s34, 1
    %p225 = por %p223, %p224
    %p226 = scmp.ne.s32.totalorder %s217, %s218
    %p227 = scmp.eq.s32.totalorder %s34, 0
    %p228 = por %p226, %p227
    %p229 = scmp.ne.s32.totalorder %s217, %s218
    %p230 = scmp.eq.s32.totalorder %s35, 1
    %p231 = por %p229, %p230
    %p233 = scmp.ne.s32.totalorder %s218, %s232
    %p234 = scmp.eq.s32.totalorder %s35, 0
    %p235 = por %p233, %p234
    %s237 = sadd.s32 %s236, 1
    %p240 = scmp.eq.s32.totalorder %s29, 1
    %p241 = scmp.ne.s32.totalorder %s236, %s238
    %p242 = scmp.eq.s32.totalorder %s29, 0
    %p243 = por %p241, %p242
    %p244 = scmp.ne.s32.totalorder %s236, %s238
    %p245 = scmp.eq.s32.totalorder %s34, 1
    %p246 = por %p244, %p245
    %p247 = scmp.ne.s32.totalorder %s238, %s239
    %p248 = scmp.eq.s32.totalorder %s34, 0
    %p249 = por %p247, %p248
    %p250 = scmp.ne.s32.totalorder %s238, %s239
    %p251 = scmp.eq.s32.totalorder %s35, 1
    %p252 = por %p250, %p251
    %p254 = scmp.ne.s32.totalorder %s239, %s253
    %p255 = scmp.eq.s32.totalorder %s35, 0
    %p256 = por %p254, %p255
    %s258 = sadd.s32 %s257, 1
    %p261 = scmp.eq.s32.totalorder %s29, 1
    %p262 = scmp.ne.s32.totalorder %s257, %s259
    %p263 = scmp.eq.s32.totalorder %s29, 0
    %p264 = por %p262, %p263
    %p265 = scmp.ne.s32.totalorder %s257, %s259
    %p266 = scmp.eq.s32.totalorder %s34, 1
    %p267 = por %p265, %p266
    %p268 = scmp.ne.s32.totalorder %s259, %s260
    %p269 = scmp.eq.s32.totalorder %s34, 0
    %p270 = por %p268, %p269
    %p271 = scmp.ne.s32.totalorder %s259, %s260
    %p272 = scmp.eq.s32.totalorder %s35, 1
    %p273 = por %p271, %p272
    %p275 = scmp.ne.s32.totalorder %s260, %s274
    %p276 = scmp.eq.s32.totalorder %s35, 0
    %p277 = por %p275, %p276
    %s279 = sadd.s32 %s278, 1
    %p282 = scmp.eq.s32.totalorder %s29, 1
    %p283 = scmp.ne.s32.totalorder %s278, %s280
    %p284 = scmp.eq.s32.totalorder %s29, 0
    %p285 = por %p283, %p284
    %p286 = scmp.ne.s32.totalorder %s278, %s280
    %p287 = scmp.eq.s32.totalorder %s34, 1
    %p288 = por %p286, %p287
    %p289 = scmp.ne.s32.totalorder %s280, %s281
    %p290 = scmp.eq.s32.totalorder %s34, 0
    %p291 = por %p289, %p290
    %p292 = scmp.ne.s32.totalorder %s280, %s281
    %p293 = scmp.eq.s32.totalorder %s35, 1
    %p294 = por %p292, %p293
    %p296 = scmp.ne.s32.totalorder %s281, %s295
    %p297 = scmp.eq.s32.totalorder %s35, 0
    %p298 = por %p296, %p297
    %s300 = sadd.s32 %s299, 1
    %p303 = scmp.eq.s32.totalorder %s29, 1
    %p304 = scmp.ne.s32.totalorder %s299, %s301
    %p305 = scmp.eq.s32.totalorder %s29, 0
    %p306 = por %p304, %p305
    %p307 = scmp.ne.s32.totalorder %s299, %s301
    %p308 = scmp.eq.s32.totalorder %s34, 1
    %p309 = por %p307, %p308
    %p310 = scmp.ne.s32.totalorder %s301, %s302
    %p311 = scmp.eq.s32.totalorder %s34, 0
    %p312 = por %p310, %p311
    %p313 = scmp.ne.s32.totalorder %s301, %s302
    %p314 = scmp.eq.s32.totalorder %s35, 1
    %p315 = por %p313, %p314
    %p317 = scmp.ne.s32.totalorder %s302, %s316
    %p318 = scmp.eq.s32.totalorder %s35, 0
    %p319 = por %p317, %p318
    %s321 = sadd.s32 %s320, 1
    %p324 = scmp.eq.s32.totalorder %s29, 1
    %p325 = scmp.ne.s32.totalorder %s320, %s322
    %p326 = scmp.eq.s32.totalorder %s29, 0
    %p327 = por %p325, %p326
    %p328 = scmp.ne.s32.totalorder %s320, %s322
    %p329 = scmp.eq.s32.totalorder %s34, 1
    %p330 = por %p328, %p329
    %p331 = scmp.ne.s32.totalorder %s322, %s323
    %p332 = scmp.eq.s32.totalorder %s34, 0
    %p333 = por %p331, %p332
    %p334 = scmp.ne.s32.totalorder %s322, %s323
    %p335 = scmp.eq.s32.totalorder %s35, 1
    %p336 = por %p334, %p335
    %p338 = scmp.ne.s32.totalorder %s323, %s337
    %p339 = scmp.eq.s32.totalorder %s35, 0
    %p340 = por %p338, %p339
    %s342 = sadd.s32 %s341, 1
    %p345 = scmp.eq.s32.totalorder %s29, 1
    %p346 = scmp.ne.s32.totalorder %s341, %s343
    %p347 = scmp.eq.s32.totalorder %s29, 0
    %p348 = por %p346, %p347
    %p349 = scmp.ne.s32.totalorder %s341, %s343
    %p350 = scmp.eq.s32.totalorder %s34, 1
    %p351 = por %p349, %p350
    %p352 = scmp.ne.s32.totalorder %s343, %s344
    %p353 = scmp.eq.s32.totalorder %s34, 0
    %p354 = por %p352, %p353
    %p355 = scmp.ne.s32.totalorder %s343, %s344
    %p356 = scmp.eq.s32.totalorder %s35, 1
    %p357 = por %p355, %p356
    %p359 = scmp.ne.s32.totalorder %s344, %s358
    %p360 = scmp.eq.s32.totalorder %s35, 0
    %p361 = por %p359, %p360
    %s363 = sadd.s32 %s362, 1
    %p366 = scmp.eq.s32.totalorder %s29, 1
    %p367 = scmp.ne.s32.totalorder %s362, %s364
    %p368 = scmp.eq.s32.totalorder %s29, 0
    %p369 = por %p367, %p368
    %p370 = scmp.ne.s32.totalorder %s362, %s364
    %p371 = scmp.eq.s32.totalorder %s34, 1
    %p372 = por %p370, %p371
    %p373 = scmp.ne.s32.totalorder %s364, %s365
    %p374 = scmp.eq.s32.totalorder %s34, 0
    %p375 = por %p373, %p374
    %p376 = scmp.ne.s32.totalorder %s364, %s365
    %p377 = scmp.eq.s32.totalorder %s35, 1
    %p378 = por %p376, %p377
    %p380 = scmp.ne.s32.totalorder %s365, %s379
    %p381 = scmp.eq.s32.totalorder %s35, 0
    %p382 = por %p380, %p381
    %s384 = sadd.s32 %s383, 1
    %p387 = scmp.eq.s32.totalorder %s29, 1
    %p388 = scmp.ne.s32.totalorder %s383, %s385
    %p389 = scmp.eq.s32.totalorder %s29, 0
    %p390 = por %p388, %p389
    %p391 = scmp.ne.s32.totalorder %s383, %s385
    %p392 = scmp.eq.s32.totalorder %s34, 1
    %p393 = por %p391, %p392
    %p394 = scmp.ne.s32.totalorder %s385, %s386
    %p395 = scmp.eq.s32.totalorder %s34, 0
    %p396 = por %p394, %p395
    %p397 = scmp.ne.s32.totalorder %s385, %s386
    %p398 = scmp.eq.s32.totalorder %s35, 1
    %p399 = por %p397, %p398
    %p401 = scmp.ne.s32.totalorder %s386, %s400
    %p402 = scmp.eq.s32.totalorder %s35, 0
    %p403 = por %p401, %p402
    %s405 = sadd.s32 %s404, 1
    %p408 = scmp.eq.s32.totalorder %s29, 1
    %p409 = scmp.ne.s32.totalorder %s404, %s406
    %p410 = scmp.eq.s32.totalorder %s29, 0
    %p411 = por %p409, %p410
    %p412 = scmp.ne.s32.totalorder %s404, %s406
    %p413 = scmp.eq.s32.totalorder %s34, 1
    %p414 = por %p412, %p413
    %p415 = scmp.ne.s32.totalorder %s406, %s407
    %p416 = scmp.eq.s32.totalorder %s34, 0
    %p417 = por %p415, %p416
    %p418 = scmp.ne.s32.totalorder %s406, %s407
    %p419 = scmp.eq.s32.totalorder %s35, 1
    %p420 = por %p418, %p419
    %p422 = scmp.ne.s32.totalorder %s407, %s421
    %p423 = scmp.eq.s32.totalorder %s35, 0
    %p424 = por %p422, %p423
    %s426 = sadd.s32 %s425, 1
    %p429 = scmp.eq.s32.totalorder %s29, 1
    %p430 = scmp.ne.s32.totalorder %s425, %s427
    %p431 = scmp.eq.s32.totalorder %s29, 0
    %p432 = por %p430, %p431
    %p433 = scmp.ne.s32.totalorder %s425, %s427
    %p434 = scmp.eq.s32.totalorder %s34, 1
    %p435 = por %p433, %p434
    %p436 = scmp.ne.s32.totalorder %s427, %s428
    %p437 = scmp.eq.s32.totalorder %s34, 0
    %p438 = por %p436, %p437
    %p439 = scmp.ne.s32.totalorder %s427, %s428
    %p440 = scmp.eq.s32.totalorder %s35, 1
    %p441 = por %p439, %p440
    %p443 = scmp.ne.s32.totalorder %s428, %s442
    %p444 = scmp.eq.s32.totalorder %s35, 0
    %p445 = por %p443, %p444
    %s447 = sadd.s32 %s446, 1
    %p450 = scmp.eq.s32.totalorder %s29, 1
    %p451 = scmp.ne.s32.totalorder %s446, %s448
    %p452 = scmp.eq.s32.totalorder %s29, 0
    %p453 = por %p451, %p452
    %p454 = scmp.ne.s32.totalorder %s446, %s448
    %p455 = scmp.eq.s32.totalorder %s34, 1
    %p456 = por %p454, %p455
    %p457 = scmp.ne.s32.totalorder %s448, %s449
    %p458 = scmp.eq.s32.totalorder %s34, 0
    %p459 = por %p457, %p458
    %p460 = scmp.ne.s32.totalorder %s448, %s449
    %p461 = scmp.eq.s32.totalorder %s35, 1
    %p462 = por %p460, %p461
    %p464 = scmp.ne.s32.totalorder %s449, %s463
    %p465 = scmp.eq.s32.totalorder %s35, 0
    %p466 = por %p464, %p465
    %s468 = sadd.s32 %s467, 1
    %p471 = scmp.eq.s32.totalorder %s29, 1
    %p472 = scmp.ne.s32.totalorder %s467, %s469
    %p473 = scmp.eq.s32.totalorder %s29, 0
    %p474 = por %p472, %p473
    %p475 = scmp.ne.s32.totalorder %s467, %s469
    %p476 = scmp.eq.s32.totalorder %s34, 1
    %p477 = por %p475, %p476
    %p478 = scmp.ne.s32.totalorder %s469, %s470
    %p479 = scmp.eq.s32.totalorder %s34, 0
    %p480 = por %p478, %p479
    %p481 = scmp.ne.s32.totalorder %s469, %s470
    %p482 = scmp.eq.s32.totalorder %s35, 1
    %p483 = por %p481, %p482
    %p485 = scmp.ne.s32.totalorder %s470, %s484
    %p486 = scmp.eq.s32.totalorder %s35, 0
    %p487 = por %p485, %p486
    %s488 = ssub.s32 %s29, %s36
    %p489 = scmp.eq.s32.totalorder %s488, 0
    %s491 = sadd.s32 %s490, 1
    %s492 = scalar_select %p489, %s490, %s491
    %p495 = pneg %p489
    %p496 = scmp.eq.s32.totalorder %s29, 1
    %p497 = por %p495, %p496
    %p498 = scmp.ne.s32.totalorder %s490, %s493
    %p499 = scmp.eq.s32.totalorder %s29, 0
    %p500 = por %p498, %p499
    %p501 = scmp.ne.s32.totalorder %s490, %s493
    %p502 = scmp.eq.s32.totalorder %s34, 1
    %p503 = por %p501, %p502
    %p504 = scmp.ne.s32.totalorder %s493, %s494
    %p505 = scmp.eq.s32.totalorder %s34, 0
    %p506 = por %p504, %p505
    %p507 = scmp.ne.s32.totalorder %s493, %s494
    %p508 = scmp.eq.s32.totalorder %s35, 1
    %p509 = por %p507, %p508
    %p511 = scmp.ne.s32.totalorder %s494, %s510
    %p512 = scmp.eq.s32.totalorder %s35, 0
    %p513 = por %p511, %p512
    %p514 = scmp.le.s32.totalorder 1, %s29
    %p515 = scmp.lt.s32.totalorder %s29, 3
    %p516 = pnand %p514, %p515
    %p517 = pneg %p516
    // Predicated region
    $region9: #{graph_transformer_forward.1} parent=5 // pred_check
      _
    $region10: #{graph_transformer_forward.1} parent=5 // pred_check_branch
      %519 = sbr.rel (%p516) target = $region12
    $region11: #{graph_transformer_forward.1} parent=5 // pred_region
      %s520 = ssub.s32 %s29, 1
      // Predicated region
      $region13: #{graph_transformer_forward.1} parent=11 // pred_check
        %p521 = pneg %p102
      $region14: #{graph_transformer_forward.1} parent=11 // pred_check_branch
        %523 = sbr.rel (%p521) target = $region16
      $region15: #{graph_transformer_forward.1} parent=11 // pred_region
        _
      $region16: #{graph_transformer_forward.1} parent=11 // pred_fallthru
        _
      // Predicated region
      $region17: #{graph_transformer_forward.1} parent=11 // pred_check
        %p524 = pneg %p123
      $region18: #{graph_transformer_forward.1} parent=11 // pred_check_branch
        %526 = sbr.rel (%p524) target = $region20
      $region19: #{graph_transformer_forward.1} parent=11 // pred_region
        _
      $region20: #{graph_transformer_forward.1} parent=11 // pred_fallthru
        _
      // Predicated region
      $region21: #{graph_transformer_forward.1} parent=11 // pred_check
        %p527 = pneg %p144
      $region22: #{graph_transformer_forward.1} parent=11 // pred_check_branch
        %529 = sbr.rel (%p527) target = $region24
      $region23: #{graph_transformer_forward.1} parent=11 // pred_region
        _
      $region24: #{graph_transformer_forward.1} parent=11 // pred_fallthru
        _
      // Predicated region
      $region25: #{graph_transformer_forward.1} parent=11 // pred_check
        %p530 = pneg %p165
      $region26: #{graph_transformer_forward.1} parent=11 // pred_check_branch
        %532 = sbr.rel (%p530) target = $region28
      $region27: #{graph_transformer_forward.1} parent=11 // pred_region
        _
      $region28: #{graph_transformer_forward.1} parent=11 // pred_fallthru
        _
      // Predicated region
      $region29: #{graph_transformer_forward.1} parent=11 // pred_check
        %p533 = pneg %p186
      $region30: #{graph_transformer_forward.1} parent=11 // pred_check_branch
        %535 = sbr.rel (%p533) target = $region32
      $region31: #{graph_transformer_forward.1} parent=11 // pred_region
        _
      $region32: #{graph_transformer_forward.1} parent=11 // pred_fallthru
        _
      // Predicated region
      $region33: #{graph_transformer_forward.1} parent=11 // pred_check
        %p536 = pneg %p207
      $region34: #{graph_transformer_forward.1} parent=11 // pred_check_branch
        %538 = sbr.rel (%p536) target = $region36
      $region35: #{graph_transformer_forward.1} parent=11 // pred_region
        _
      $region36: #{graph_transformer_forward.1} parent=11 // pred_fallthru
        _
      // Predicated region
      $region37: #{graph_transformer_forward.1} parent=11 // pred_check
        %p539 = pneg %p228
      $region38: #{graph_transformer_forward.1} parent=11 // pred_check_branch
        %541 = sbr.rel (%p539) target = $region40
      $region39: #{graph_transformer_forward.1} parent=11 // pred_region
        _
      $region40: #{graph_transformer_forward.1} parent=11 // pred_fallthru
        _
      // Predicated region
      $region41: #{graph_transformer_forward.1} parent=11 // pred_check
        %p542 = pneg %p249
      $region42: #{graph_transformer_forward.1} parent=11 // pred_check_branch
        %544 = sbr.rel (%p542) target = $region44
      $region43: #{graph_transformer_forward.1} parent=11 // pred_region
        _
      $region44: #{graph_transformer_forward.1} parent=11 // pred_fallthru
        _
      // Predicated region
      $region45: #{graph_transformer_forward.1} parent=11 // pred_check
        %p545 = pneg %p270
      $region46: #{graph_transformer_forward.1} parent=11 // pred_check_branch
        %547 = sbr.rel (%p545) target = $region48
      $region47: #{graph_transformer_forward.1} parent=11 // pred_region
        _
      $region48: #{graph_transformer_forward.1} parent=11 // pred_fallthru
        _
      // Predicated region
      $region49: #{graph_transformer_forward.1} parent=11 // pred_check
        %p548 = pneg %p291
      $region50: #{graph_transformer_forward.1} parent=11 // pred_check_branch
        %550 = sbr.rel (%p548) target = $region52
      $region51: #{graph_transformer_forward.1} parent=11 // pred_region
        _
      $region52: #{graph_transformer_forward.1} parent=11 // pred_fallthru
        _
      // Predicated region
      $region53: #{graph_transformer_forward.1} parent=11 // pred_check
        %p551 = pneg %p312
      $region54: #{graph_transformer_forward.1} parent=11 // pred_check_branch
        %553 = sbr.rel (%p551) target = $region56
      $region55: #{graph_transformer_forward.1} parent=11 // pred_region
        _
      $region56: #{graph_transformer_forward.1} parent=11 // pred_fallthru
        _
      // Predicated region
      $region57: #{graph_transformer_forward.1} parent=11 // pred_check
        %p554 = pneg %p333
      $region58: #{graph_transformer_forward.1} parent=11 // pred_check_branch
        %556 = sbr.rel (%p554) target = $region60
      $region59: #{graph_transformer_forward.1} parent=11 // pred_region
        _
      $region60: #{graph_transformer_forward.1} parent=11 // pred_fallthru
        _
      // Predicated region
      $region61: #{graph_transformer_forward.1} parent=11 // pred_check
        %p557 = pneg %p354
      $region62: #{graph_transformer_forward.1} parent=11 // pred_check_branch
        %559 = sbr.rel (%p557) target = $region64
      $region63: #{graph_transformer_forward.1} parent=11 // pred_region
        _
      $region64: #{graph_transformer_forward.1} parent=11 // pred_fallthru
        _
      // Predicated region
      $region65: #{graph_transformer_forward.1} parent=11 // pred_check
        %p560 = pneg %p375
      $region66: #{graph_transformer_forward.1} parent=11 // pred_check_branch
        %562 = sbr.rel (%p560) target = $region68
      $region67: #{graph_transformer_forward.1} parent=11 // pred_region
        _
      $region68: #{graph_transformer_forward.1} parent=11 // pred_fallthru
        _
      // Predicated region
      $region69: #{graph_transformer_forward.1} parent=11 // pred_check
        %p563 = pneg %p396
      $region70: #{graph_transformer_forward.1} parent=11 // pred_check_branch
        %565 = sbr.rel (%p563) target = $region72
      $region71: #{graph_transformer_forward.1} parent=11 // pred_region
        _
      $region72: #{graph_transformer_forward.1} parent=11 // pred_fallthru
        _
      // Predicated region
      $region73: #{graph_transformer_forward.1} parent=11 // pred_check
        %p566 = pneg %p417
      $region74: #{graph_transformer_forward.1} parent=11 // pred_check_branch
        %568 = sbr.rel (%p566) target = $region76
      $region75: #{graph_transformer_forward.1} parent=11 // pred_region
        _
      $region76: #{graph_transformer_forward.1} parent=11 // pred_fallthru
        _
      // Predicated region
      $region77: #{graph_transformer_forward.1} parent=11 // pred_check
        %p569 = pneg %p438
      $region78: #{graph_transformer_forward.1} parent=11 // pred_check_branch
        %571 = sbr.rel (%p569) target = $region80
      $region79: #{graph_transformer_forward.1} parent=11 // pred_region
        _
      $region80: #{graph_transformer_forward.1} parent=11 // pred_fallthru
        _
      // Predicated region
      $region81: #{graph_transformer_forward.1} parent=11 // pred_check
        %p572 = pneg %p459
      $region82: #{graph_transformer_forward.1} parent=11 // pred_check_branch
        %574 = sbr.rel (%p572) target = $region84
      $region83: #{graph_transformer_forward.1} parent=11 // pred_region
        _
      $region84: #{graph_transformer_forward.1} parent=11 // pred_fallthru
        _
      // Predicated region
      $region85: #{graph_transformer_forward.1} parent=11 // pred_check
        %p575 = pneg %p480
      $region86: #{graph_transformer_forward.1} parent=11 // pred_check_branch
        %577 = sbr.rel (%p575) target = $region88
      $region87: #{graph_transformer_forward.1} parent=11 // pred_region
        _
      $region88: #{graph_transformer_forward.1} parent=11 // pred_fallthru
        _
    $region12: #{graph_transformer_forward.1} parent=5 // pred_fallthru
      _
    %p578 = scmp.lt.s32.totalorder %s29, 2
    // Predicated region
    $region89: #{graph_transformer_forward.1} parent=5 // pred_check
      %p579 = pneg %p578
    $region90: #{graph_transformer_forward.1} parent=5 // pred_check_branch
      %581 = sbr.rel (%p579) target = $region92
    $region91: #{graph_transformer_forward.1} parent=5 // pred_region
      // Predicated region
      $region93: #{graph_transformer_forward.1} parent=91 // pred_check
        %p582 = pneg %p49
      $region94: #{graph_transformer_forward.1} parent=91 // pred_check_branch
        %584 = sbr.rel (%p582) target = $region96
      $region95: #{graph_transformer_forward.1} parent=91 // pred_region
        %s585 = smul.u32 16, %s29
        %p586 = scmp.lt.s32.totalorder %s585, 31
        %s587 = scalar_select %p586, %s585, 31
        %s588 = smul.addr %s587, 8
        %s589 = scalar_lea.vmem %s0, %s588
        %s590 = smul.u32 16, %s29
      $region96: #{graph_transformer_forward.1} parent=91 // pred_fallthru
        _
      // Predicated region
      $region97: #{graph_transformer_forward.1} parent=91 // pred_check
        %p591 = pneg %p75
      $region98: #{graph_transformer_forward.1} parent=91 // pred_check_branch
        %593 = sbr.rel (%p591) target = $region100
      $region99: #{graph_transformer_forward.1} parent=91 // pred_region
        %p594 = scmp.lt.s32.totalorder %s29, 1
        %s595 = scalar_select %p594, %s29, 1
        %s596 = smul.addr %s595, 16
        %s597 = smul.addr %s596, 8
        %s598 = scalar_lea.vmem %s1, %s597
      $region100: #{graph_transformer_forward.1} parent=91 // pred_fallthru
        _
    $region92: #{graph_transformer_forward.1} parent=5 // pred_fallthru
      _
    %p599 = scmp.le.s32.totalorder 1, %s29
    %p600 = scmp.lt.s32.totalorder %s29, 3
    %p601 = pnand %p599, %p600
    %p602 = pneg %p601
    // Predicated region
    $region101: #{graph_transformer_forward.1} parent=5 // pred_check
      _
    $region102: #{graph_transformer_forward.1} parent=5 // pred_check_branch
      %604 = sbr.rel (%p601) target = $region104
    $region103: #{graph_transformer_forward.1} parent=5 // pred_region
      %s605 = ssub.s32 %s29, 1
      %s606 = smul.u32 16, %s34
      %p607 = scmp.lt.s32.totalorder %s606, 31
      %s608 = scalar_select %p607, %s606, 31
      %s609 = smul.addr %s608, 8
      %s610 = scalar_lea.vmem %s0, %s609
      %p611 = pneg %p55
      %p612 = pneg %p52
      %p613 = scmp.lt.s32.totalorder %s34, 1
      %s614 = scalar_select %p613, %s34, 1
      %s615 = smul.addr %s614, 16
      %s616 = smul.addr %s615, 8
      %s617 = scalar_lea.vmem %s1, %s616
      %p618 = pneg %p81
      %p619 = pneg %p78
      %p620 = pneg %p102
      %p621 = pneg %p99
      %p622 = pneg %p123
      %p623 = pneg %p120
      %p624 = pneg %p144
      %p625 = pneg %p141
      %p626 = pneg %p165
      %p627 = pneg %p162
      %p628 = pneg %p186
      %p629 = pneg %p183
      %p630 = pneg %p207
      %p631 = pneg %p204
      %p632 = pneg %p228
      %p633 = pneg %p225
      %p634 = pneg %p249
      %p635 = pneg %p246
      %p636 = pneg %p270
      %p637 = pneg %p267
      %p638 = pneg %p291
      %p639 = pneg %p288
      %p640 = pneg %p312
      %p641 = pneg %p309
      %p642 = pneg %p333
      %p643 = pneg %p330
      %p644 = pneg %p354
      %p645 = pneg %p351
      %p646 = pneg %p375
      %p647 = pneg %p372
      %p648 = pneg %p396
      %p649 = pneg %p393
      %p650 = pneg %p417
      %p651 = pneg %p414
      %p652 = pneg %p438
      %p653 = pneg %p435
      %p654 = pneg %p459
      %p655 = pneg %p456
      %p656 = pneg %p480
      %p657 = pneg %p477
      %p658 = pneg %p506
      %p659 = pneg %p503
      %p660 = scmp.lt.s32.totalorder %s34, 1
      %s661 = scalar_select %p660, %s34, 1
      %s662 = smul.addr %s661, 8
      %s663 = scalar_lea.vmem %s21, %s662
      %s664 = smul.u32 16, %s34
      %p665 = scmp.lt.s32.totalorder %s664, 31
      %s666 = scalar_select %p665, %s664, 31
      %s667 = smul.addr %s666, 8
      %s668 = scalar_lea.vmem %s0, %s667
      %s669 = smul.u32 16, %s34
      %p670 = scmp.lt.s32.totalorder %s34, 1
      %s671 = scalar_select %p670, %s34, 1
      %s672 = smul.addr %s671, 16
      %s673 = smul.addr %s672, 8
      %s674 = scalar_lea.vmem %s1, %s673
      %p675 = scmp.lt.s32.totalorder %s34, 1
      %s676 = scalar_select %p675, %s34, 1
      %s677 = smul.addr %s676, 8
      %s678 = scalar_lea.vmem %s21, %s677
      %v680 = vld [vmem:[%s668] sm:$0xff]
      %v681 = vld [vmem:[%s668 + $0x8] sm:$0xff]
      %v682 = vld [vmem:[%s668 + $0x10] sm:$0xff]
      %v683 = vld [vmem:[%s668 + $0x18] sm:$0xff]
      %v684 = vld [vmem:[%s668 + $0x20] sm:$0xff]
      %v685 = vld [vmem:[%s668 + $0x28] sm:$0xff]
      %v686 = vld [vmem:[%s668 + $0x30] sm:$0xff]
      %v687 = vld [vmem:[%s668 + $0x38] sm:$0xff]
      %v688 = vld [vmem:[%s668 + $0x40] sm:$0xff]
      %v689 = vld [vmem:[%s668 + $0x48] sm:$0xff]
      %v690 = vld [vmem:[%s668 + $0x50] sm:$0xff]
      %v691 = vld [vmem:[%s668 + $0x58] sm:$0xff]
      %v692 = vld [vmem:[%s668 + $0x60] sm:$0xff]
      %v693 = vld [vmem:[%s668 + $0x68] sm:$0xff]
      %v694 = vld [vmem:[%s668 + $0x70] sm:$0xff]
      %v695 = vld [vmem:[%s668 + $0x78] sm:$0xff]
      %v696 = vld [vmem:[%s3] sm:$0xf]
      %v697 = vpack.c.bf16 %v681, %v680
      %v698 = vpack.c.bf16 %v683, %v682
      %v699 = vpack.c.bf16 %v685, %v684
      %v700 = vpack.c.bf16 %v687, %v686
      %v701 = vpack.c.bf16 %v689, %v688
      %v702 = vpack.c.bf16 %v691, %v690
      %v703 = vpack.c.bf16 %v693, %v692
      %v704 = vpack.c.bf16 %v695, %v694
      %v705 = vld [vmem:[%s4] sm:$0x1]
      %v707 = vlaneseq
      %v708 = vshrl.u32 %v707, 7
      %v709 = vsub.s32 0, %v708
      %v710 = vrot.slane %v705, %v709
      %vm712 = vcmask 64512
      %v714 = vsel %vm712, %v697, 0
      %v717 = vsel %vm712, %v698, 0
      %v720 = vsel %vm712, %v699, 0
      %v723 = vsel %vm712, %v700, 0
      %v726 = vsel %vm712, %v701, 0
      %v729 = vsel %vm712, %v702, 0
      %v732 = vsel %vm712, %v703, 0
      %v735 = vsel %vm712, %v704, 0
      %vm737 = vcmask 1043456
      %v739 = vsel %vm737, %v696, 0
      %741 = vmatprep.subr.bf16.mxu0 0
      %742 = vmatpush1.bf16.msra.mxu0 0
      %743 = vmatprep.subr.bf16.mxu0 0
      %744 = vmatpush1.bf16.msra.mxu0 0
      %745 = vmatprep.subr.bf16.mxu0 0
      %746 = vmatpush1.bf16.msra.mxu0 0
      %747 = vmatprep.subr.bf16.mxu0 0
      %748 = vmatpush1.bf16.msra.mxu0 0
      %749 = vmatprep.subr.bf16.mxu0 0
      %750 = vmatpush1.bf16.msra.mxu0 0
      %751 = vmatprep.subr.bf16.mxu0 0
      %752 = vmatpush1.bf16.msra.mxu0 0
      %753 = vmatprep.subr.bf16.mxu0 0
      %754 = vmatpush1.bf16.msra.mxu0 0
      %755 = vmatprep.subr.bf16.mxu0 0
      %756 = vmatpush1.bf16.msra.mxu0 %v739
      %757 = vmatprep.subr.bf16.mxu0 0
      %758 = vmatpush2.bf16.msra.mxu0 0
      %759 = vmatprep.subr.bf16.mxu0 0
      %760 = vmatpush2.bf16.msra.mxu0 0
      %761 = vmatprep.subr.bf16.mxu0 0
      %762 = vmatpush2.bf16.msra.mxu0 0
      %763 = vmatprep.subr.bf16.mxu0 0
      %764 = vmatpush2.bf16.msra.mxu0 0
      %765 = vmatprep.subr.bf16.mxu0 0
      %766 = vmatpush2.bf16.msra.mxu0 0
      %767 = vmatprep.subr.bf16.mxu0 0
      %768 = vmatpush2.bf16.msra.mxu0 0
      %769 = vmatprep.subr.bf16.mxu0 0
      %770 = vmatpush2.bf16.msra.mxu0 0
      %771 = vmatprep.subr.bf16.mxu0 0
      %772 = vmatpush2.bf16.msra.mxu0 0
      %773 = vmatprep.mubr.bf16.mxu0 0
      %774 = vmatmul.mubr.bf16.gmra.mxu0 %v714
      %v775 = vpop.f32.mrf.mxu0
      %v776 = vadd.f32 %v710, %v775
      %v777 = vpop.f32.mrf.mxu0
      %v778 = vpop.f32.mrf.mxu0
      %v779 = vadd.f32 %v710, %v778
      %v780 = vpop.f32.mrf.mxu0
      %781 = vmatprep.mubr.bf16.mxu0 0
      %782 = vmatmul.mubr.bf16.gmra.mxu0 %v717
      %v783 = vpop.f32.mrf.mxu0
      %v784 = vadd.f32 %v710, %v783
      %v785 = vpop.f32.mrf.mxu0
      %v786 = vpop.f32.mrf.mxu0
      %v787 = vadd.f32 %v710, %v786
      %v788 = vpop.f32.mrf.mxu0
      %789 = vmatprep.mubr.bf16.mxu0 0
      %790 = vmatmul.mubr.bf16.gmra.mxu0 %v720
      %v791 = vpop.f32.mrf.mxu0
      %v792 = vadd.f32 %v710, %v791
      %v793 = vpop.f32.mrf.mxu0
      %v794 = vpop.f32.mrf.mxu0
      %v795 = vadd.f32 %v710, %v794
      %v796 = vpop.f32.mrf.mxu0
      %797 = vmatprep.mubr.bf16.mxu0 0
      %798 = vmatmul.mubr.bf16.gmra.mxu0 %v723
      %v799 = vpop.f32.mrf.mxu0
      %v800 = vadd.f32 %v710, %v799
      %v801 = vpop.f32.mrf.mxu0
      %v802 = vpop.f32.mrf.mxu0
      %v803 = vadd.f32 %v710, %v802
      %v804 = vpop.f32.mrf.mxu0
      %805 = vmatprep.mubr.bf16.mxu0 0
      %806 = vmatmul.mubr.bf16.gmra.mxu0 %v726
      %v807 = vpop.f32.mrf.mxu0
      %v808 = vadd.f32 %v710, %v807
      %v809 = vpop.f32.mrf.mxu0
      %v810 = vpop.f32.mrf.mxu0
      %v811 = vadd.f32 %v710, %v810
      %v812 = vpop.f32.mrf.mxu0
      %813 = vmatprep.mubr.bf16.mxu0 0
      %814 = vmatmul.mubr.bf16.gmra.mxu0 %v729
      %v815 = vpop.f32.mrf.mxu0
      %v816 = vadd.f32 %v710, %v815
      %v817 = vpop.f32.mrf.mxu0
      %v818 = vpop.f32.mrf.mxu0
      %v819 = vadd.f32 %v710, %v818
      %v820 = vpop.f32.mrf.mxu0
      %821 = vmatprep.mubr.bf16.mxu0 0
      %822 = vmatmul.mubr.bf16.gmra.mxu0 %v732
      %v823 = vpop.f32.mrf.mxu0
      %v824 = vadd.f32 %v710, %v823
      %v825 = vpop.f32.mrf.mxu0
      %v826 = vpop.f32.mrf.mxu0
      %v827 = vadd.f32 %v710, %v826
      %v828 = vpop.f32.mrf.mxu0
      %829 = vmatprep.mubr.bf16.mxu0 0
      %830 = vmatmul.mubr.bf16.gmra.mxu0 %v735
      %v831 = vpop.f32.mrf.mxu0
      %v832 = vadd.f32 %v710, %v831
      %v833 = vpop.f32.mrf.mxu0
      %v834 = vpop.f32.mrf.mxu0
      %v835 = vadd.f32 %v710, %v834
      %v836 = vpop.f32.mrf.mxu0
      %837 = vdwg.mxu0
      %v838 = vld [vmem:[%s674] sm:$0xff]
      %v839 = vld [vmem:[%s674 + $0x8] sm:$0xff]
      %v840 = vld [vmem:[%s674 + $0x10] sm:$0xff]
      %v841 = vld [vmem:[%s674 + $0x18] sm:$0xff]
      %v842 = vld [vmem:[%s674 + $0x20] sm:$0xff]
      %v843 = vld [vmem:[%s674 + $0x28] sm:$0xff]
      %v844 = vld [vmem:[%s674 + $0x30] sm:$0xff]
      %v845 = vld [vmem:[%s674 + $0x38] sm:$0xff]
      %v846 = vld [vmem:[%s674 + $0x40] sm:$0xff]
      %v847 = vld [vmem:[%s674 + $0x48] sm:$0xff]
      %v848 = vld [vmem:[%s674 + $0x50] sm:$0xff]
      %v849 = vld [vmem:[%s674 + $0x58] sm:$0xff]
      %v850 = vld [vmem:[%s674 + $0x60] sm:$0xff]
      %v851 = vld [vmem:[%s674 + $0x68] sm:$0xff]
      %v852 = vld [vmem:[%s674 + $0x70] sm:$0xff]
      %v853 = vld [vmem:[%s674 + $0x78] sm:$0xff]
      %v854 = vpack.c.bf16 %v779, %v776
      %v855 = vpack.c.bf16 %v787, %v784
      %v856 = vpack.c.bf16 %v795, %v792
      %v857 = vpack.c.bf16 %v803, %v800
      %v858 = vpack.c.bf16 %v811, %v808
      %v859 = vpack.c.bf16 %v819, %v816
      %v860 = vpack.c.bf16 %v827, %v824
      %v861 = vpack.c.bf16 %v835, %v832
      %v862 = vld [vmem:[%s5] sm:$0xf]
      %v863 = vld [vmem:[%s5 + $0x4] sm:$0xf]
      %v864 = vld [vmem:[%s5 + $0x8] sm:$0xf]
      %v865 = vld [vmem:[%s5 + $0xc] sm:$0xf]
      %v870 = vunpack.c.l.b16 %v862
      %v871 = vunpack.c.l.b16 %v863
      %v872 = vunpack.c.l.b16 %v864
      %v873 = vunpack.c.l.b16 %v865
      %v874 = vpack.c.b16 %v871, %v870
      %v875 = vpack.c.b16 %v873, %v872
      %vm878 = vcmask 261120
      %v880 = vsel %vm878, %v854, 0
      %v883 = vsel %vm878, %v855, 0
      %v886 = vsel %vm878, %v856, 0
      %v889 = vsel %vm878, %v857, 0
      %v892 = vsel %vm878, %v858, 0
      %v895 = vsel %vm878, %v859, 0
      %v898 = vsel %vm878, %v860, 0
      %v901 = vsel %vm878, %v861, 0
      %903 = vmatprep.subr.bf16.mxu0 0
      %904 = vmatpush1.bf16.msra.mxu0 0
      %905 = vmatprep.subr.bf16.mxu0 0
      %906 = vmatpush1.bf16.msra.mxu0 0
      %907 = vmatprep.subr.bf16.mxu0 0
      %908 = vmatpush1.bf16.msra.mxu0 0
      %909 = vmatprep.subr.bf16.mxu0 0
      %910 = vmatpush1.bf16.msra.mxu0 0
      %911 = vmatprep.subr.bf16.mxu0 0
      %912 = vmatpush1.bf16.msra.mxu0 0
      %913 = vmatprep.subr.bf16.mxu0 0
      %914 = vmatpush1.bf16.msra.mxu0 0
      %915 = vmatprep.subr.bf16.mxu0 0
      %916 = vmatpush1.bf16.msra.mxu0 %v875
      %917 = vmatprep.subr.bf16.mxu0 0
      %918 = vmatpush1.bf16.msra.mxu0 %v874
      %919 = vmatprep.subr.bf16.mxu0 0
      %920 = vmatpush2.bf16.msra.mxu0 0
      %921 = vmatprep.subr.bf16.mxu0 0
      %922 = vmatpush2.bf16.msra.mxu0 0
      %923 = vmatprep.subr.bf16.mxu0 0
      %924 = vmatpush2.bf16.msra.mxu0 0
      %925 = vmatprep.subr.bf16.mxu0 0
      %926 = vmatpush2.bf16.msra.mxu0 0
      %927 = vmatprep.subr.bf16.mxu0 0
      %928 = vmatpush2.bf16.msra.mxu0 0
      %929 = vmatprep.subr.bf16.mxu0 0
      %930 = vmatpush2.bf16.msra.mxu0 0
      %931 = vmatprep.subr.bf16.mxu0 0
      %932 = vmatpush2.bf16.msra.mxu0 0
      %933 = vmatprep.subr.bf16.mxu0 0
      %934 = vmatpush2.bf16.msra.mxu0 0
      %935 = vmatprep.mubr.bf16.mxu0 0
      %936 = vmatmul.mubr.bf16.gmra.mxu0 %v880
      %v937 = vpop.f32.mrf.mxu0
      %v938 = vadd.f32 0.0, %v937
      %v939 = vpop.f32.mrf.mxu0
      %v940 = vpop.f32.mrf.mxu0
      %v941 = vadd.f32 0.0, %v940
      %v942 = vpop.f32.mrf.mxu0
      %943 = vmatprep.mubr.bf16.mxu0 0
      %944 = vmatmul.mubr.bf16.gmra.mxu0 %v883
      %v945 = vpop.f32.mrf.mxu0
      %v946 = vadd.f32 0.0, %v945
      %v947 = vpop.f32.mrf.mxu0
      %v948 = vpop.f32.mrf.mxu0
      %v949 = vadd.f32 0.0, %v948
      %v950 = vpop.f32.mrf.mxu0
      %951 = vmatprep.mubr.bf16.mxu0 0
      %952 = vmatmul.mubr.bf16.gmra.mxu0 %v886
      %v953 = vpop.f32.mrf.mxu0
      %v954 = vadd.f32 0.0, %v953
      %v955 = vpop.f32.mrf.mxu0
      %v956 = vpop.f32.mrf.mxu0
      %v957 = vadd.f32 0.0, %v956
      %v958 = vpop.f32.mrf.mxu0
      %959 = vmatprep.mubr.bf16.mxu0 0
      %960 = vmatmul.mubr.bf16.gmra.mxu0 %v889
      %v961 = vpop.f32.mrf.mxu0
      %v962 = vadd.f32 0.0, %v961
      %v963 = vpop.f32.mrf.mxu0
      %v964 = vpop.f32.mrf.mxu0
      %v965 = vadd.f32 0.0, %v964
      %v966 = vpop.f32.mrf.mxu0
      %967 = vmatprep.mubr.bf16.mxu0 0
      %968 = vmatmul.mubr.bf16.gmra.mxu0 %v892
      %v969 = vpop.f32.mrf.mxu0
      %v970 = vadd.f32 0.0, %v969
      %v971 = vpop.f32.mrf.mxu0
      %v972 = vpop.f32.mrf.mxu0
      %v973 = vadd.f32 0.0, %v972
      %v974 = vpop.f32.mrf.mxu0
      %975 = vmatprep.mubr.bf16.mxu0 0
      %976 = vmatmul.mubr.bf16.gmra.mxu0 %v895
      %v977 = vpop.f32.mrf.mxu0
      %v978 = vadd.f32 0.0, %v977
      %v979 = vpop.f32.mrf.mxu0
      %v980 = vpop.f32.mrf.mxu0
      %v981 = vadd.f32 0.0, %v980
      %v982 = vpop.f32.mrf.mxu0
      %983 = vmatprep.mubr.bf16.mxu0 0
      %984 = vmatmul.mubr.bf16.gmra.mxu0 %v898
      %v985 = vpop.f32.mrf.mxu0
      %v986 = vadd.f32 0.0, %v985
      %v987 = vpop.f32.mrf.mxu0
      %v988 = vpop.f32.mrf.mxu0
      %v989 = vadd.f32 0.0, %v988
      %v990 = vpop.f32.mrf.mxu0
      %991 = vmatprep.mubr.bf16.mxu0 0
      %992 = vmatmul.mubr.bf16.gmra.mxu0 %v901
      %v993 = vpop.f32.mrf.mxu0
      %v994 = vadd.f32 0.0, %v993
      %v995 = vpop.f32.mrf.mxu0
      %v996 = vpop.f32.mrf.mxu0
      %v997 = vadd.f32 0.0, %v996
      %v998 = vpop.f32.mrf.mxu0
      %999 = vdwg.mxu0
      %v1000 = vld [vmem:[%s6] sm:$0xf]
      %v1001 = vld [vmem:[%s6 + $0x4] sm:$0xf]
      %v1002 = vld [vmem:[%s6 + $0x8] sm:$0xf]
      %v1003 = vld [vmem:[%s6 + $0xc] sm:$0xf]
      %v1008 = vunpack.c.l.b16 %v1000
      %v1009 = vunpack.c.l.b16 %v1001
      %v1010 = vunpack.c.l.b16 %v1002
      %v1011 = vunpack.c.l.b16 %v1003
      %v1012 = vpack.c.b16 %v1009, %v1008
      %v1013 = vpack.c.b16 %v1011, %v1010
      %1016 = vmatprep.subr.bf16.mxu0 0
      %1017 = vmatpush1.bf16.msra.mxu0 0
      %1018 = vmatprep.subr.bf16.mxu0 0
      %1019 = vmatpush1.bf16.msra.mxu0 0
      %1020 = vmatprep.subr.bf16.mxu0 0
      %1021 = vmatpush1.bf16.msra.mxu0 0
      %1022 = vmatprep.subr.bf16.mxu0 0
      %1023 = vmatpush1.bf16.msra.mxu0 0
      %1024 = vmatprep.subr.bf16.mxu0 0
      %1025 = vmatpush1.bf16.msra.mxu0 0
      %1026 = vmatprep.subr.bf16.mxu0 0
      %1027 = vmatpush1.bf16.msra.mxu0 0
      %1028 = vmatprep.subr.bf16.mxu0 0
      %1029 = vmatpush1.bf16.msra.mxu0 %v1013
      %1030 = vmatprep.subr.bf16.mxu0 0
      %1031 = vmatpush1.bf16.msra.mxu0 %v1012
      %1032 = vmatprep.subr.bf16.mxu0 0
      %1033 = vmatpush2.bf16.msra.mxu0 0
      %1034 = vmatprep.subr.bf16.mxu0 0
      %1035 = vmatpush2.bf16.msra.mxu0 0
      %1036 = vmatprep.subr.bf16.mxu0 0
      %1037 = vmatpush2.bf16.msra.mxu0 0
      %1038 = vmatprep.subr.bf16.mxu0 0
      %1039 = vmatpush2.bf16.msra.mxu0 0
      %1040 = vmatprep.subr.bf16.mxu0 0
      %1041 = vmatpush2.bf16.msra.mxu0 0
      %1042 = vmatprep.subr.bf16.mxu0 0
      %1043 = vmatpush2.bf16.msra.mxu0 0
      %1044 = vmatprep.subr.bf16.mxu0 0
      %1045 = vmatpush2.bf16.msra.mxu0 0
      %1046 = vmatprep.subr.bf16.mxu0 0
      %1047 = vmatpush2.bf16.msra.mxu0 0
      %1048 = vmatprep.mubr.bf16.mxu0 0
      %1049 = vmatmul.mubr.bf16.gmra.mxu0 %v880
      %v1050 = vpop.f32.mrf.mxu0
      %v1051 = vadd.f32 0.0, %v1050
      %v1052 = vpop.f32.mrf.mxu0
      %v1053 = vpop.f32.mrf.mxu0
      %v1054 = vadd.f32 0.0, %v1053
      %v1055 = vpop.f32.mrf.mxu0
      %1056 = vmatprep.mubr.bf16.mxu0 0
      %1057 = vmatmul.mubr.bf16.gmra.mxu0 %v883
      %v1058 = vpop.f32.mrf.mxu0
      %v1059 = vadd.f32 0.0, %v1058
      %v1060 = vpop.f32.mrf.mxu0
      %v1061 = vpop.f32.mrf.mxu0
      %v1062 = vadd.f32 0.0, %v1061
      %v1063 = vpop.f32.mrf.mxu0
      %1064 = vmatprep.mubr.bf16.mxu0 0
      %1065 = vmatmul.mubr.bf16.gmra.mxu0 %v886
      %v1066 = vpop.f32.mrf.mxu0
      %v1067 = vadd.f32 0.0, %v1066
      %v1068 = vpop.f32.mrf.mxu0
      %v1069 = vpop.f32.mrf.mxu0
      %v1070 = vadd.f32 0.0, %v1069
      %v1071 = vpop.f32.mrf.mxu0
      %1072 = vmatprep.mubr.bf16.mxu0 0
      %1073 = vmatmul.mubr.bf16.gmra.mxu0 %v889
      %v1074 = vpop.f32.mrf.mxu0
      %v1075 = vadd.f32 0.0, %v1074
      %v1076 = vpop.f32.mrf.mxu0
      %v1077 = vpop.f32.mrf.mxu0
      %v1078 = vadd.f32 0.0, %v1077
      %v1079 = vpop.f32.mrf.mxu0
      %1080 = vmatprep.mubr.bf16.mxu0 0
      %1081 = vmatmul.mubr.bf16.gmra.mxu0 %v892
      %v1082 = vpop.f32.mrf.mxu0
      %v1083 = vadd.f32 0.0, %v1082
      %v1084 = vpop.f32.mrf.mxu0
      %v1085 = vpop.f32.mrf.mxu0
      %v1086 = vadd.f32 0.0, %v1085
      %v1087 = vpop.f32.mrf.mxu0
      %1088 = vmatprep.mubr.bf16.mxu0 0
      %1089 = vmatmul.mubr.bf16.gmra.mxu0 %v895
      %v1090 = vpop.f32.mrf.mxu0
      %v1091 = vadd.f32 0.0, %v1090
      %v1092 = vpop.f32.mrf.mxu0
      %v1093 = vpop.f32.mrf.mxu0
      %v1094 = vadd.f32 0.0, %v1093
      %v1095 = vpop.f32.mrf.mxu0
      %1096 = vmatprep.mubr.bf16.mxu0 0
      %1097 = vmatmul.mubr.bf16.gmra.mxu0 %v898
      %v1098 = vpop.f32.mrf.mxu0
      %v1099 = vadd.f32 0.0, %v1098
      %v1100 = vpop.f32.mrf.mxu0
      %v1101 = vpop.f32.mrf.mxu0
      %v1102 = vadd.f32 0.0, %v1101
      %v1103 = vpop.f32.mrf.mxu0
      %1104 = vmatprep.mubr.bf16.mxu0 0
      %1105 = vmatmul.mubr.bf16.gmra.mxu0 %v901
      %v1106 = vpop.f32.mrf.mxu0
      %v1107 = vadd.f32 0.0, %v1106
      %v1108 = vpop.f32.mrf.mxu0
      %v1109 = vpop.f32.mrf.mxu0
      %v1110 = vadd.f32 0.0, %v1109
      %v1111 = vpop.f32.mrf.mxu0
      %1112 = vdwg.mxu0
      %v1113 = vld [vmem:[%s7] sm:$0xf]
      %v1114 = vld [vmem:[%s7 + $0x4] sm:$0xf]
      %v1115 = vld [vmem:[%s7 + $0x8] sm:$0xf]
      %v1116 = vld [vmem:[%s7 + $0xc] sm:$0xf]
      %v1121 = vunpack.c.l.b16 %v1113
      %v1122 = vunpack.c.l.b16 %v1114
      %v1123 = vunpack.c.l.b16 %v1115
      %v1124 = vunpack.c.l.b16 %v1116
      %v1125 = vpack.c.b16 %v1122, %v1121
      %v1126 = vpack.c.b16 %v1124, %v1123
      %1129 = vmatprep.subr.bf16.mxu0 0
      %1130 = vmatpush1.bf16.msra.mxu0 0
      %1131 = vmatprep.subr.bf16.mxu0 0
      %1132 = vmatpush1.bf16.msra.mxu0 0
      %1133 = vmatprep.subr.bf16.mxu0 0
      %1134 = vmatpush1.bf16.msra.mxu0 0
      %1135 = vmatprep.subr.bf16.mxu0 0
      %1136 = vmatpush1.bf16.msra.mxu0 0
      %1137 = vmatprep.subr.bf16.mxu0 0
      %1138 = vmatpush1.bf16.msra.mxu0 0
      %1139 = vmatprep.subr.bf16.mxu0 0
      %1140 = vmatpush1.bf16.msra.mxu0 0
      %1141 = vmatprep.subr.bf16.mxu0 0
      %1142 = vmatpush1.bf16.msra.mxu0 %v1126
      %1143 = vmatprep.subr.bf16.mxu0 0
      %1144 = vmatpush1.bf16.msra.mxu0 %v1125
      %1145 = vmatprep.subr.bf16.mxu0 0
      %1146 = vmatpush2.bf16.msra.mxu0 0
      %1147 = vmatprep.subr.bf16.mxu0 0
      %1148 = vmatpush2.bf16.msra.mxu0 0
      %1149 = vmatprep.subr.bf16.mxu0 0
      %1150 = vmatpush2.bf16.msra.mxu0 0
      %1151 = vmatprep.subr.bf16.mxu0 0
      %1152 = vmatpush2.bf16.msra.mxu0 0
      %1153 = vmatprep.subr.bf16.mxu0 0
      %1154 = vmatpush2.bf16.msra.mxu0 0
      %1155 = vmatprep.subr.bf16.mxu0 0
      %1156 = vmatpush2.bf16.msra.mxu0 0
      %1157 = vmatprep.subr.bf16.mxu0 0
      %1158 = vmatpush2.bf16.msra.mxu0 0
      %1159 = vmatprep.subr.bf16.mxu0 0
      %1160 = vmatpush2.bf16.msra.mxu0 0
      %1161 = vmatprep.mubr.bf16.mxu0 0
      %1162 = vmatmul.mubr.bf16.gmra.mxu0 %v880
      %v1163 = vpop.f32.mrf.mxu0
      %v1164 = vadd.f32 0.0, %v1163
      %v1165 = vpop.f32.mrf.mxu0
      %v1166 = vpop.f32.mrf.mxu0
      %v1167 = vadd.f32 0.0, %v1166
      %v1168 = vpop.f32.mrf.mxu0
      %1169 = vmatprep.mubr.bf16.mxu0 0
      %1170 = vmatmul.mubr.bf16.gmra.mxu0 %v883
      %v1171 = vpop.f32.mrf.mxu0
      %v1172 = vadd.f32 0.0, %v1171
      %v1173 = vpop.f32.mrf.mxu0
      %v1174 = vpop.f32.mrf.mxu0
      %v1175 = vadd.f32 0.0, %v1174
      %v1176 = vpop.f32.mrf.mxu0
      %1177 = vmatprep.mubr.bf16.mxu0 0
      %1178 = vmatmul.mubr.bf16.gmra.mxu0 %v886
      %v1179 = vpop.f32.mrf.mxu0
      %v1180 = vadd.f32 0.0, %v1179
      %v1181 = vpop.f32.mrf.mxu0
      %v1182 = vpop.f32.mrf.mxu0
      %v1183 = vadd.f32 0.0, %v1182
      %v1184 = vpop.f32.mrf.mxu0
      %1185 = vmatprep.mubr.bf16.mxu0 0
      %1186 = vmatmul.mubr.bf16.gmra.mxu0 %v889
      %v1187 = vpop.f32.mrf.mxu0
      %v1188 = vadd.f32 0.0, %v1187
      %v1189 = vpop.f32.mrf.mxu0
      %v1190 = vpop.f32.mrf.mxu0
      %v1191 = vadd.f32 0.0, %v1190
      %v1192 = vpop.f32.mrf.mxu0
      %1193 = vmatprep.mubr.bf16.mxu0 0
      %1194 = vmatmul.mubr.bf16.gmra.mxu0 %v892
      %v1195 = vpop.f32.mrf.mxu0
      %v1196 = vadd.f32 0.0, %v1195
      %v1197 = vpop.f32.mrf.mxu0
      %v1198 = vpop.f32.mrf.mxu0
      %v1199 = vadd.f32 0.0, %v1198
      %v1200 = vpop.f32.mrf.mxu0
      %1201 = vmatprep.mubr.bf16.mxu0 0
      %1202 = vmatmul.mubr.bf16.gmra.mxu0 %v895
      %v1203 = vpop.f32.mrf.mxu0
      %v1204 = vadd.f32 0.0, %v1203
      %v1205 = vpop.f32.mrf.mxu0
      %v1206 = vpop.f32.mrf.mxu0
      %v1207 = vadd.f32 0.0, %v1206
      %v1208 = vpop.f32.mrf.mxu0
      %1209 = vmatprep.mubr.bf16.mxu0 0
      %1210 = vmatmul.mubr.bf16.gmra.mxu0 %v898
      %v1211 = vpop.f32.mrf.mxu0
      %v1212 = vadd.f32 0.0, %v1211
      %v1213 = vpop.f32.mrf.mxu0
      %v1214 = vpop.f32.mrf.mxu0
      %v1215 = vadd.f32 0.0, %v1214
      %v1216 = vpop.f32.mrf.mxu0
      %1217 = vmatprep.mubr.bf16.mxu0 0
      %1218 = vmatmul.mubr.bf16.gmra.mxu0 %v901
      %v1219 = vpop.f32.mrf.mxu0
      %v1220 = vadd.f32 0.0, %v1219
      %v1221 = vpop.f32.mrf.mxu0
      %v1222 = vpop.f32.mrf.mxu0
      %v1223 = vadd.f32 0.0, %v1222
      %v1224 = vpop.f32.mrf.mxu0
      %1225 = vdwg.mxu0
      %v1226 = vpack.c.bf16 %v941, %v938
      %v1227 = vpack.c.bf16 %v949, %v946
      %v1228 = vpack.c.bf16 %v957, %v954
      %v1229 = vpack.c.bf16 %v965, %v962
      %v1230 = vpack.c.bf16 %v973, %v970
      %v1231 = vpack.c.bf16 %v981, %v978
      %v1232 = vpack.c.bf16 %v989, %v986
      %v1233 = vpack.c.bf16 %v997, %v994
      %v1234 = vpack.c.bf16 %v1054, %v1051
      %v1235 = vpack.c.bf16 %v1062, %v1059
      %v1236 = vpack.c.bf16 %v1070, %v1067
      %v1237 = vpack.c.bf16 %v1078, %v1075
      %v1238 = vpack.c.bf16 %v1086, %v1083
      %v1239 = vpack.c.bf16 %v1094, %v1091
      %v1240 = vpack.c.bf16 %v1102, %v1099
      %v1241 = vpack.c.bf16 %v1110, %v1107
      %v1243 = vsel %vm712, %v1226, 0
      %v1246 = vsel %vm712, %v1227, 0
      %v1249 = vsel %vm712, %v1228, 0
      %v1252 = vsel %vm712, %v1229, 0
      %v1255 = vsel %vm712, %v1230, 0
      %v1258 = vsel %vm712, %v1231, 0
      %v1261 = vsel %vm712, %v1232, 0
      %v1264 = vsel %vm712, %v1233, 0
      %v1267 = vsel %vm712, %v1234, 0
      %v1270 = vsel %vm712, %v1235, 0
      %v1273 = vsel %vm712, %v1236, 0
      %v1276 = vsel %vm712, %v1237, 0
      %v1279 = vsel %vm712, %v1238, 0
      %v1282 = vsel %vm712, %v1239, 0
      %v1285 = vsel %vm712, %v1240, 0
      %v1288 = vsel %vm712, %v1241, 0
      %1290 = vmatprep.subr.bf16.mxu0 0
      %1291 = vmatpush1.bf16.xpose.msra.mxu0 %v1288
      %1292 = vmatprep.subr.bf16.mxu0 0
      %1293 = vmatpush1.bf16.xpose.msra.mxu0 %v1285
      %1294 = vmatprep.subr.bf16.mxu0 0
      %1295 = vmatpush1.bf16.xpose.msra.mxu0 %v1282
      %1296 = vmatprep.subr.bf16.mxu0 0
      %1297 = vmatpush1.bf16.xpose.msra.mxu0 %v1279
      %1298 = vmatprep.subr.bf16.mxu0 0
      %1299 = vmatpush1.bf16.xpose.msra.mxu0 %v1276
      %1300 = vmatprep.subr.bf16.mxu0 0
      %1301 = vmatpush1.bf16.xpose.msra.mxu0 %v1273
      %1302 = vmatprep.subr.bf16.mxu0 0
      %1303 = vmatpush1.bf16.xpose.msra.mxu0 %v1270
      %1304 = vmatprep.subr.bf16.mxu0 0
      %1305 = vmatpush1.bf16.xpose.msra.mxu0 %v1267
      %1306 = vmatprep.subr.bf16.mxu0 0
      %1307 = vmatpush2.bf16.xpose.msra.mxu0 0
      %1308 = vmatprep.subr.bf16.mxu0 0
      %1309 = vmatpush2.bf16.xpose.msra.mxu0 0
      %1310 = vmatprep.subr.bf16.mxu0 0
      %1311 = vmatpush2.bf16.xpose.msra.mxu0 0
      %1312 = vmatprep.subr.bf16.mxu0 0
      %1313 = vmatpush2.bf16.xpose.msra.mxu0 0
      %1314 = vmatprep.subr.bf16.mxu0 0
      %1315 = vmatpush2.bf16.xpose.msra.mxu0 0
      %1316 = vmatprep.subr.bf16.mxu0 0
      %1317 = vmatpush2.bf16.xpose.msra.mxu0 0
      %1318 = vmatprep.subr.bf16.mxu0 0
      %1319 = vmatpush2.bf16.xpose.msra.mxu0 0
      %1320 = vmatprep.subr.bf16.mxu0 0
      %1321 = vmatpush2.bf16.xpose.msra.mxu0 0
      %1322 = vmatprep.mubr.bf16.mxu0 0
      %1323 = vmatmul.mubr.bf16.gmra.mxu0 %v1243
      %v1324 = vpop.f32.mrf.mxu0
      %v1325 = vadd.f32 0.0, %v1324
      %v1326 = vpop.f32.mrf.mxu0
      %v1327 = vpop.f32.mrf.mxu0
      %v1328 = vadd.f32 0.0, %v1327
      %v1329 = vpop.f32.mrf.mxu0
      %1330 = vmatprep.mubr.bf16.mxu0 0
      %1331 = vmatmul.mubr.bf16.gmra.mxu0 %v1246
      %v1332 = vpop.f32.mrf.mxu0
      %v1333 = vadd.f32 0.0, %v1332
      %v1334 = vpop.f32.mrf.mxu0
      %v1335 = vpop.f32.mrf.mxu0
      %v1336 = vadd.f32 0.0, %v1335
      %v1337 = vpop.f32.mrf.mxu0
      %1338 = vmatprep.mubr.bf16.mxu0 0
      %1339 = vmatmul.mubr.bf16.gmra.mxu0 %v1249
      %v1340 = vpop.f32.mrf.mxu0
      %v1341 = vadd.f32 0.0, %v1340
      %v1342 = vpop.f32.mrf.mxu0
      %v1343 = vpop.f32.mrf.mxu0
      %v1344 = vadd.f32 0.0, %v1343
      %v1345 = vpop.f32.mrf.mxu0
      %1346 = vmatprep.mubr.bf16.mxu0 0
      %1347 = vmatmul.mubr.bf16.gmra.mxu0 %v1252
      %v1348 = vpop.f32.mrf.mxu0
      %v1349 = vadd.f32 0.0, %v1348
      %v1350 = vpop.f32.mrf.mxu0
      %v1351 = vpop.f32.mrf.mxu0
      %v1352 = vadd.f32 0.0, %v1351
      %v1353 = vpop.f32.mrf.mxu0
      %1354 = vmatprep.mubr.bf16.mxu0 0
      %1355 = vmatmul.mubr.bf16.gmra.mxu0 %v1255
      %v1356 = vpop.f32.mrf.mxu0
      %v1357 = vadd.f32 0.0, %v1356
      %v1358 = vpop.f32.mrf.mxu0
      %v1359 = vpop.f32.mrf.mxu0
      %v1360 = vadd.f32 0.0, %v1359
      %v1361 = vpop.f32.mrf.mxu0
      %1362 = vmatprep.mubr.bf16.mxu0 0
      %1363 = vmatmul.mubr.bf16.gmra.mxu0 %v1258
      %v1364 = vpop.f32.mrf.mxu0
      %v1365 = vadd.f32 0.0, %v1364
      %v1366 = vpop.f32.mrf.mxu0
      %v1367 = vpop.f32.mrf.mxu0
      %v1368 = vadd.f32 0.0, %v1367
      %v1369 = vpop.f32.mrf.mxu0
      %1370 = vmatprep.mubr.bf16.mxu0 0
      %1371 = vmatmul.mubr.bf16.gmra.mxu0 %v1261
      %v1372 = vpop.f32.mrf.mxu0
      %v1373 = vadd.f32 0.0, %v1372
      %v1374 = vpop.f32.mrf.mxu0
      %v1375 = vpop.f32.mrf.mxu0
      %v1376 = vadd.f32 0.0, %v1375
      %v1377 = vpop.f32.mrf.mxu0
      %1378 = vmatprep.mubr.bf16.mxu0 0
      %1379 = vmatmul.mubr.bf16.gmra.mxu0 %v1264
      %v1380 = vpop.f32.mrf.mxu0
      %v1381 = vadd.f32 0.0, %v1380
      %v1382 = vpop.f32.mrf.mxu0
      %v1383 = vpop.f32.mrf.mxu0
      %v1384 = vadd.f32 0.0, %v1383
      %v1385 = vpop.f32.mrf.mxu0
      %1386 = vdwg.mxu0
      %v1387 = vmul.f32 %v1325, 0.35355338
      %v1388 = vmul.f32 %v1328, 0.35355338
      %v1389 = vmul.f32 %v1333, 0.35355338
      %v1390 = vmul.f32 %v1336, 0.35355338
      %v1391 = vmul.f32 %v1341, 0.35355338
      %v1392 = vmul.f32 %v1344, 0.35355338
      %v1393 = vmul.f32 %v1349, 0.35355338
      %v1394 = vmul.f32 %v1352, 0.35355338
      %v1395 = vmul.f32 %v1357, 0.35355338
      %v1396 = vmul.f32 %v1360, 0.35355338
      %v1397 = vmul.f32 %v1365, 0.35355338
      %v1398 = vmul.f32 %v1368, 0.35355338
      %v1399 = vmul.f32 %v1373, 0.35355338
      %v1400 = vmul.f32 %v1376, 0.35355338
      %v1401 = vmul.f32 %v1381, 0.35355338
      %v1402 = vmul.f32 %v1384, 0.35355338
      %v1403 = vadd.f32 %v1387, %v838
      %v1404 = vadd.f32 %v1388, %v839
      %v1405 = vadd.f32 %v1389, %v840
      %v1406 = vadd.f32 %v1390, %v841
      %v1407 = vadd.f32 %v1391, %v842
      %v1408 = vadd.f32 %v1392, %v843
      %v1409 = vadd.f32 %v1393, %v844
      %v1410 = vadd.f32 %v1394, %v845
      %v1411 = vadd.f32 %v1395, %v846
      %v1412 = vadd.f32 %v1396, %v847
      %v1413 = vadd.f32 %v1397, %v848
      %v1414 = vadd.f32 %v1398, %v849
      %v1415 = vadd.f32 %v1399, %v850
      %v1416 = vadd.f32 %v1400, %v851
      %v1417 = vadd.f32 %v1401, %v852
      %v1418 = vadd.f32 %v1402, %v853
      %1419 = vmax.xlane.f32.xlu0 %v1403
      %v1420 = vpop.xlane.xlu0 %1419
      %1421 = vmax.xlane.f32.xlu0 %v1404
      %v1422 = vpop.xlane.xlu0 %1421
      %1423 = vmax.xlane.f32.xlu0 %v1405
      %v1424 = vpop.xlane.xlu0 %1423
      %1425 = vmax.xlane.f32.xlu0 %v1406
      %v1426 = vpop.xlane.xlu0 %1425
      %1427 = vmax.xlane.f32.xlu0 %v1407
      %v1428 = vpop.xlane.xlu0 %1427
      %1429 = vmax.xlane.f32.xlu0 %v1408
      %v1430 = vpop.xlane.xlu0 %1429
      %1431 = vmax.xlane.f32.xlu0 %v1409
      %v1432 = vpop.xlane.xlu0 %1431
      %1433 = vmax.xlane.f32.xlu0 %v1410
      %v1434 = vpop.xlane.xlu0 %1433
      %1435 = vmax.xlane.f32.xlu0 %v1411
      %v1436 = vpop.xlane.xlu0 %1435
      %1437 = vmax.xlane.f32.xlu0 %v1412
      %v1438 = vpop.xlane.xlu0 %1437
      %1439 = vmax.xlane.f32.xlu0 %v1413
      %v1440 = vpop.xlane.xlu0 %1439
      %1441 = vmax.xlane.f32.xlu0 %v1414
      %v1442 = vpop.xlane.xlu0 %1441
      %1443 = vmax.xlane.f32.xlu0 %v1415
      %v1444 = vpop.xlane.xlu0 %1443
      %1445 = vmax.xlane.f32.xlu0 %v1416
      %v1446 = vpop.xlane.xlu0 %1445
      %1447 = vmax.xlane.f32.xlu0 %v1417
      %v1448 = vpop.xlane.xlu0 %1447
      %1449 = vmax.xlane.f32.xlu0 %v1418
      %v1450 = vpop.xlane.xlu0 %1449
      %v1451 = vsub.f32 %v1403, %v1420
      %v1452 = vsub.f32 %v1404, %v1422
      %v1453 = vsub.f32 %v1405, %v1424
      %v1454 = vsub.f32 %v1406, %v1426
      %v1455 = vsub.f32 %v1407, %v1428
      %v1456 = vsub.f32 %v1408, %v1430
      %v1457 = vsub.f32 %v1409, %v1432
      %v1458 = vsub.f32 %v1410, %v1434
      %v1459 = vsub.f32 %v1411, %v1436
      %v1460 = vsub.f32 %v1412, %v1438
      %v1461 = vsub.f32 %v1413, %v1440
      %v1462 = vsub.f32 %v1414, %v1442
      %v1463 = vsub.f32 %v1415, %v1444
      %v1464 = vsub.f32 %v1416, %v1446
      %v1465 = vsub.f32 %v1417, %v1448
      %v1466 = vsub.f32 %v1418, %v1450
      %v1467 = vmul.f32 %v1451, 1.442695
      %v1468 = vpow.pop %v1467
      %v1469 = vmul.f32 %v1452, 1.442695
      %v1470 = vpow.pop %v1469
      %v1471 = vmul.f32 %v1453, 1.442695
      %v1472 = vpow.pop %v1471
      %v1473 = vmul.f32 %v1454, 1.442695
      %v1474 = vpow.pop %v1473
      %v1475 = vmul.f32 %v1455, 1.442695
      %v1476 = vpow.pop %v1475
      %v1477 = vmul.f32 %v1456, 1.442695
      %v1478 = vpow.pop %v1477
      %v1479 = vmul.f32 %v1457, 1.442695
      %v1480 = vpow.pop %v1479
      %v1481 = vmul.f32 %v1458, 1.442695
      %v1482 = vpow.pop %v1481
      %v1483 = vmul.f32 %v1459, 1.442695
      %v1484 = vpow.pop %v1483
      %v1485 = vmul.f32 %v1460, 1.442695
      %v1486 = vpow.pop %v1485
      %v1487 = vmul.f32 %v1461, 1.442695
      %v1488 = vpow.pop %v1487
      %v1489 = vmul.f32 %v1462, 1.442695
      %v1490 = vpow.pop %v1489
      %v1491 = vmul.f32 %v1463, 1.442695
      %v1492 = vpow.pop %v1491
      %v1493 = vmul.f32 %v1464, 1.442695
      %v1494 = vpow.pop %v1493
      %v1495 = vmul.f32 %v1465, 1.442695
      %v1496 = vpow.pop %v1495
      %v1497 = vmul.f32 %v1466, 1.442695
      %v1498 = vpow.pop %v1497
      %1499 = vadd.xlane.f32.xlu0 %v1468
      %v1500 = vpop.xlane.xlu0 %1499
      %1501 = vadd.xlane.f32.xlu0 %v1470
      %v1502 = vpop.xlane.xlu0 %1501
      %1503 = vadd.xlane.f32.xlu0 %v1472
      %v1504 = vpop.xlane.xlu0 %1503
      %1505 = vadd.xlane.f32.xlu0 %v1474
      %v1506 = vpop.xlane.xlu0 %1505
      %1507 = vadd.xlane.f32.xlu0 %v1476
      %v1508 = vpop.xlane.xlu0 %1507
      %1509 = vadd.xlane.f32.xlu0 %v1478
      %v1510 = vpop.xlane.xlu0 %1509
      %1511 = vadd.xlane.f32.xlu0 %v1480
      %v1512 = vpop.xlane.xlu0 %1511
      %1513 = vadd.xlane.f32.xlu0 %v1482
      %v1514 = vpop.xlane.xlu0 %1513
      %1515 = vadd.xlane.f32.xlu0 %v1484
      %v1516 = vpop.xlane.xlu0 %1515
      %1517 = vadd.xlane.f32.xlu0 %v1486
      %v1518 = vpop.xlane.xlu0 %1517
      %1519 = vadd.xlane.f32.xlu0 %v1488
      %v1520 = vpop.xlane.xlu0 %1519
      %1521 = vadd.xlane.f32.xlu0 %v1490
      %v1522 = vpop.xlane.xlu0 %1521
      %1523 = vadd.xlane.f32.xlu0 %v1492
      %v1524 = vpop.xlane.xlu0 %1523
      %1525 = vadd.xlane.f32.xlu0 %v1494
      %v1526 = vpop.xlane.xlu0 %1525
      %1527 = vadd.xlane.f32.xlu0 %v1496
      %v1528 = vpop.xlane.xlu0 %1527
      %1529 = vadd.xlane.f32.xlu0 %v1498
      %v1530 = vpop.xlane.xlu0 %1529
      %v1531 = vrcp.pop %v1500
      %v1532 = vmul.f32 %v1468, %v1531
      %v1533 = vrcp.pop %v1502
      %v1534 = vmul.f32 %v1470, %v1533
      %v1535 = vrcp.pop %v1504
      %v1536 = vmul.f32 %v1472, %v1535
      %v1537 = vrcp.pop %v1506
      %v1538 = vmul.f32 %v1474, %v1537
      %v1539 = vrcp.pop %v1508
      %v1540 = vmul.f32 %v1476, %v1539
      %v1541 = vrcp.pop %v1510
      %v1542 = vmul.f32 %v1478, %v1541
      %v1543 = vrcp.pop %v1512
      %v1544 = vmul.f32 %v1480, %v1543
      %v1545 = vrcp.pop %v1514
      %v1546 = vmul.f32 %v1482, %v1545
      %v1547 = vrcp.pop %v1516
      %v1548 = vmul.f32 %v1484, %v1547
      %v1549 = vrcp.pop %v1518
      %v1550 = vmul.f32 %v1486, %v1549
      %v1551 = vrcp.pop %v1520
      %v1552 = vmul.f32 %v1488, %v1551
      %v1553 = vrcp.pop %v1522
      %v1554 = vmul.f32 %v1490, %v1553
      %v1555 = vrcp.pop %v1524
      %v1556 = vmul.f32 %v1492, %v1555
      %v1557 = vrcp.pop %v1526
      %v1558 = vmul.f32 %v1494, %v1557
      %v1559 = vrcp.pop %v1528
      %v1560 = vmul.f32 %v1496, %v1559
      %v1561 = vrcp.pop %v1530
      %v1562 = vmul.f32 %v1498, %v1561
      %v1563 = vpack.c.bf16 %v1534, %v1532
      %v1564 = vpack.c.bf16 %v1538, %v1536
      %v1565 = vpack.c.bf16 %v1542, %v1540
      %v1566 = vpack.c.bf16 %v1546, %v1544
      %v1567 = vpack.c.bf16 %v1550, %v1548
      %v1568 = vpack.c.bf16 %v1554, %v1552
      %v1569 = vpack.c.bf16 %v1558, %v1556
      %v1570 = vpack.c.bf16 %v1562, %v1560
      %v1571 = vpack.c.bf16 %v1167, %v1164
      %v1572 = vpack.c.bf16 %v1175, %v1172
      %v1573 = vpack.c.bf16 %v1183, %v1180
      %v1574 = vpack.c.bf16 %v1191, %v1188
      %v1575 = vpack.c.bf16 %v1199, %v1196
      %v1576 = vpack.c.bf16 %v1207, %v1204
      %v1577 = vpack.c.bf16 %v1215, %v1212
      %v1578 = vpack.c.bf16 %v1223, %v1220
      %1579 = vmatprep.subr.bf16.mxu0 0
      %1580 = vmatpush1.bf16.msra.mxu0 %v1578
      %1581 = vmatprep.subr.bf16.mxu0 0
      %1582 = vmatpush1.bf16.msra.mxu0 %v1577
      %1583 = vmatprep.subr.bf16.mxu0 0
      %1584 = vmatpush1.bf16.msra.mxu0 %v1576
      %1585 = vmatprep.subr.bf16.mxu0 0
      %1586 = vmatpush1.bf16.msra.mxu0 %v1575
      %1587 = vmatprep.subr.bf16.mxu0 0
      %1588 = vmatpush1.bf16.msra.mxu0 %v1574
      %1589 = vmatprep.subr.bf16.mxu0 0
      %1590 = vmatpush1.bf16.msra.mxu0 %v1573
      %1591 = vmatprep.subr.bf16.mxu0 0
      %1592 = vmatpush1.bf16.msra.mxu0 %v1572
      %1593 = vmatprep.subr.bf16.mxu0 0
      %1594 = vmatpush1.bf16.msra.mxu0 %v1571
      %1595 = vmatprep.subr.bf16.mxu0 0
      %1596 = vmatpush2.bf16.msra.mxu0 0
      %1597 = vmatprep.subr.bf16.mxu0 0
      %1598 = vmatpush2.bf16.msra.mxu0 0
      %1599 = vmatprep.subr.bf16.mxu0 0
      %1600 = vmatpush2.bf16.msra.mxu0 0
      %1601 = vmatprep.subr.bf16.mxu0 0
      %1602 = vmatpush2.bf16.msra.mxu0 0
      %1603 = vmatprep.subr.bf16.mxu0 0
      %1604 = vmatpush2.bf16.msra.mxu0 0
      %1605 = vmatprep.subr.bf16.mxu0 0
      %1606 = vmatpush2.bf16.msra.mxu0 0
      %1607 = vmatprep.subr.bf16.mxu0 0
      %1608 = vmatpush2.bf16.msra.mxu0 0
      %1609 = vmatprep.subr.bf16.mxu0 0
      %1610 = vmatpush2.bf16.msra.mxu0 0
      %1611 = vmatprep.mubr.bf16.mxu0 0
      %1612 = vmatmul.mubr.bf16.gmra.mxu0 %v1563
      %v1613 = vpop.f32.mrf.mxu0
      %v1614 = vadd.f32 0.0, %v1613
      %v1615 = vpop.f32.mrf.mxu0
      %v1616 = vpop.f32.mrf.mxu0
      %v1617 = vadd.f32 0.0, %v1616
      %v1618 = vpop.f32.mrf.mxu0
      %1619 = vmatprep.mubr.bf16.mxu0 0
      %1620 = vmatmul.mubr.bf16.gmra.mxu0 %v1564
      %v1621 = vpop.f32.mrf.mxu0
      %v1622 = vadd.f32 0.0, %v1621
      %v1623 = vpop.f32.mrf.mxu0
      %v1624 = vpop.f32.mrf.mxu0
      %v1625 = vadd.f32 0.0, %v1624
      %v1626 = vpop.f32.mrf.mxu0
      %1627 = vmatprep.mubr.bf16.mxu0 0
      %1628 = vmatmul.mubr.bf16.gmra.mxu0 %v1565
      %v1629 = vpop.f32.mrf.mxu0
      %v1630 = vadd.f32 0.0, %v1629
      %v1631 = vpop.f32.mrf.mxu0
      %v1632 = vpop.f32.mrf.mxu0
      %v1633 = vadd.f32 0.0, %v1632
      %v1634 = vpop.f32.mrf.mxu0
      %1635 = vmatprep.mubr.bf16.mxu0 0
      %1636 = vmatmul.mubr.bf16.gmra.mxu0 %v1566
      %v1637 = vpop.f32.mrf.mxu0
      %v1638 = vadd.f32 0.0, %v1637
      %v1639 = vpop.f32.mrf.mxu0
      %v1640 = vpop.f32.mrf.mxu0
      %v1641 = vadd.f32 0.0, %v1640
      %v1642 = vpop.f32.mrf.mxu0
      %1643 = vmatprep.mubr.bf16.mxu0 0
      %1644 = vmatmul.mubr.bf16.gmra.mxu0 %v1567
      %v1645 = vpop.f32.mrf.mxu0
      %v1646 = vadd.f32 0.0, %v1645
      %v1647 = vpop.f32.mrf.mxu0
      %v1648 = vpop.f32.mrf.mxu0
      %v1649 = vadd.f32 0.0, %v1648
      %v1650 = vpop.f32.mrf.mxu0
      %1651 = vmatprep.mubr.bf16.mxu0 0
      %1652 = vmatmul.mubr.bf16.gmra.mxu0 %v1568
      %v1653 = vpop.f32.mrf.mxu0
      %v1654 = vadd.f32 0.0, %v1653
      %v1655 = vpop.f32.mrf.mxu0
      %v1656 = vpop.f32.mrf.mxu0
      %v1657 = vadd.f32 0.0, %v1656
      %v1658 = vpop.f32.mrf.mxu0
      %1659 = vmatprep.mubr.bf16.mxu0 0
      %1660 = vmatmul.mubr.bf16.gmra.mxu0 %v1569
      %v1661 = vpop.f32.mrf.mxu0
      %v1662 = vadd.f32 0.0, %v1661
      %v1663 = vpop.f32.mrf.mxu0
      %v1664 = vpop.f32.mrf.mxu0
      %v1665 = vadd.f32 0.0, %v1664
      %v1666 = vpop.f32.mrf.mxu0
      %1667 = vmatprep.mubr.bf16.mxu0 0
      %1668 = vmatmul.mubr.bf16.gmra.mxu0 %v1570
      %v1669 = vpop.f32.mrf.mxu0
      %v1670 = vadd.f32 0.0, %v1669
      %v1671 = vpop.f32.mrf.mxu0
      %v1672 = vpop.f32.mrf.mxu0
      %v1673 = vadd.f32 0.0, %v1672
      %v1674 = vpop.f32.mrf.mxu0
      %1675 = vdwg.mxu0
      %v1676 = vld [vmem:[%s8] sm:$0xf]
      %v1677 = vpack.c.bf16 %v1617, %v1614
      %v1678 = vpack.c.bf16 %v1625, %v1622
      %v1679 = vpack.c.bf16 %v1633, %v1630
      %v1680 = vpack.c.bf16 %v1641, %v1638
      %v1681 = vpack.c.bf16 %v1649, %v1646
      %v1682 = vpack.c.bf16 %v1657, %v1654
      %v1683 = vpack.c.bf16 %v1665, %v1662
      %v1684 = vpack.c.bf16 %v1673, %v1670
      %s1685 = scalar_lea.vmem %s5, 16
      %v1686 = vld [vmem:[%s1685] sm:$0xf]
      %v1687 = vld [vmem:[%s1685 + $0x4] sm:$0xf]
      %v1688 = vld [vmem:[%s1685 + $0x8] sm:$0xf]
      %v1689 = vld [vmem:[%s1685 + $0xc] sm:$0xf]
      %v1694 = vunpack.c.l.b16 %v1686
      %v1695 = vunpack.c.l.b16 %v1687
      %v1696 = vunpack.c.l.b16 %v1688
      %v1697 = vunpack.c.l.b16 %v1689
      %v1698 = vpack.c.b16 %v1695, %v1694
      %v1699 = vpack.c.b16 %v1697, %v1696
      %1702 = vmatprep.subr.bf16.mxu0 0
      %1703 = vmatpush1.bf16.msra.mxu0 0
      %1704 = vmatprep.subr.bf16.mxu0 0
      %1705 = vmatpush1.bf16.msra.mxu0 0
      %1706 = vmatprep.subr.bf16.mxu0 0
      %1707 = vmatpush1.bf16.msra.mxu0 0
      %1708 = vmatprep.subr.bf16.mxu0 0
      %1709 = vmatpush1.bf16.msra.mxu0 0
      %1710 = vmatprep.subr.bf16.mxu0 0
      %1711 = vmatpush1.bf16.msra.mxu0 0
      %1712 = vmatprep.subr.bf16.mxu0 0
      %1713 = vmatpush1.bf16.msra.mxu0 0
      %1714 = vmatprep.subr.bf16.mxu0 0
      %1715 = vmatpush1.bf16.msra.mxu0 %v1699
      %1716 = vmatprep.subr.bf16.mxu0 0
      %1717 = vmatpush1.bf16.msra.mxu0 %v1698
      %1718 = vmatprep.subr.bf16.mxu0 0
      %1719 = vmatpush2.bf16.msra.mxu0 0
      %1720 = vmatprep.subr.bf16.mxu0 0
      %1721 = vmatpush2.bf16.msra.mxu0 0
      %1722 = vmatprep.subr.bf16.mxu0 0
      %1723 = vmatpush2.bf16.msra.mxu0 0
      %1724 = vmatprep.subr.bf16.mxu0 0
      %1725 = vmatpush2.bf16.msra.mxu0 0
      %1726 = vmatprep.subr.bf16.mxu0 0
      %1727 = vmatpush2.bf16.msra.mxu0 0
      %1728 = vmatprep.subr.bf16.mxu0 0
      %1729 = vmatpush2.bf16.msra.mxu0 0
      %1730 = vmatprep.subr.bf16.mxu0 0
      %1731 = vmatpush2.bf16.msra.mxu0 0
      %1732 = vmatprep.subr.bf16.mxu0 0
      %1733 = vmatpush2.bf16.msra.mxu0 0
      %1734 = vmatprep.mubr.bf16.mxu0 0
      %1735 = vmatmul.mubr.bf16.gmra.mxu0 %v880
      %v1736 = vpop.f32.mrf.mxu0
      %v1737 = vadd.f32 0.0, %v1736
      %v1738 = vpop.f32.mrf.mxu0
      %v1739 = vpop.f32.mrf.mxu0
      %v1740 = vadd.f32 0.0, %v1739
      %v1741 = vpop.f32.mrf.mxu0
      %1742 = vmatprep.mubr.bf16.mxu0 0
      %1743 = vmatmul.mubr.bf16.gmra.mxu0 %v883
      %v1744 = vpop.f32.mrf.mxu0
      %v1745 = vadd.f32 0.0, %v1744
      %v1746 = vpop.f32.mrf.mxu0
      %v1747 = vpop.f32.mrf.mxu0
      %v1748 = vadd.f32 0.0, %v1747
      %v1749 = vpop.f32.mrf.mxu0
      %1750 = vmatprep.mubr.bf16.mxu0 0
      %1751 = vmatmul.mubr.bf16.gmra.mxu0 %v886
      %v1752 = vpop.f32.mrf.mxu0
      %v1753 = vadd.f32 0.0, %v1752
      %v1754 = vpop.f32.mrf.mxu0
      %v1755 = vpop.f32.mrf.mxu0
      %v1756 = vadd.f32 0.0, %v1755
      %v1757 = vpop.f32.mrf.mxu0
      %1758 = vmatprep.mubr.bf16.mxu0 0
      %1759 = vmatmul.mubr.bf16.gmra.mxu0 %v889
      %v1760 = vpop.f32.mrf.mxu0
      %v1761 = vadd.f32 0.0, %v1760
      %v1762 = vpop.f32.mrf.mxu0
      %v1763 = vpop.f32.mrf.mxu0
      %v1764 = vadd.f32 0.0, %v1763
      %v1765 = vpop.f32.mrf.mxu0
      %1766 = vmatprep.mubr.bf16.mxu0 0
      %1767 = vmatmul.mubr.bf16.gmra.mxu0 %v892
      %v1768 = vpop.f32.mrf.mxu0
      %v1769 = vadd.f32 0.0, %v1768
      %v1770 = vpop.f32.mrf.mxu0
      %v1771 = vpop.f32.mrf.mxu0
      %v1772 = vadd.f32 0.0, %v1771
      %v1773 = vpop.f32.mrf.mxu0
      %1774 = vmatprep.mubr.bf16.mxu0 0
      %1775 = vmatmul.mubr.bf16.gmra.mxu0 %v895
      %v1776 = vpop.f32.mrf.mxu0
      %v1777 = vadd.f32 0.0, %v1776
      %v1778 = vpop.f32.mrf.mxu0
      %v1779 = vpop.f32.mrf.mxu0
      %v1780 = vadd.f32 0.0, %v1779
      %v1781 = vpop.f32.mrf.mxu0
      %1782 = vmatprep.mubr.bf16.mxu0 0
      %1783 = vmatmul.mubr.bf16.gmra.mxu0 %v898
      %v1784 = vpop.f32.mrf.mxu0
      %v1785 = vadd.f32 0.0, %v1784
      %v1786 = vpop.f32.mrf.mxu0
      %v1787 = vpop.f32.mrf.mxu0
      %v1788 = vadd.f32 0.0, %v1787
      %v1789 = vpop.f32.mrf.mxu0
      %1790 = vmatprep.mubr.bf16.mxu0 0
      %1791 = vmatmul.mubr.bf16.gmra.mxu0 %v901
      %v1792 = vpop.f32.mrf.mxu0
      %v1793 = vadd.f32 0.0, %v1792
      %v1794 = vpop.f32.mrf.mxu0
      %v1795 = vpop.f32.mrf.mxu0
      %v1796 = vadd.f32 0.0, %v1795
      %v1797 = vpop.f32.mrf.mxu0
      %1798 = vdwg.mxu0
      %s1799 = scalar_lea.vmem %s6, 16
      %v1800 = vld [vmem:[%s1799] sm:$0xf]
      %v1801 = vld [vmem:[%s1799 + $0x4] sm:$0xf]
      %v1802 = vld [vmem:[%s1799 + $0x8] sm:$0xf]
      %v1803 = vld [vmem:[%s1799 + $0xc] sm:$0xf]
      %v1808 = vunpack.c.l.b16 %v1800
      %v1809 = vunpack.c.l.b16 %v1801
      %v1810 = vunpack.c.l.b16 %v1802
      %v1811 = vunpack.c.l.b16 %v1803
      %v1812 = vpack.c.b16 %v1809, %v1808
      %v1813 = vpack.c.b16 %v1811, %v1810
      %1816 = vmatprep.subr.bf16.mxu0 0
      %1817 = vmatpush1.bf16.msra.mxu0 0
      %1818 = vmatprep.subr.bf16.mxu0 0
      %1819 = vmatpush1.bf16.msra.mxu0 0
      %1820 = vmatprep.subr.bf16.mxu0 0
      %1821 = vmatpush1.bf16.msra.mxu0 0
      %1822 = vmatprep.subr.bf16.mxu0 0
      %1823 = vmatpush1.bf16.msra.mxu0 0
      %1824 = vmatprep.subr.bf16.mxu0 0
      %1825 = vmatpush1.bf16.msra.mxu0 0
      %1826 = vmatprep.subr.bf16.mxu0 0
      %1827 = vmatpush1.bf16.msra.mxu0 0
      %1828 = vmatprep.subr.bf16.mxu0 0
      %1829 = vmatpush1.bf16.msra.mxu0 %v1813
      %1830 = vmatprep.subr.bf16.mxu0 0
      %1831 = vmatpush1.bf16.msra.mxu0 %v1812
      %1832 = vmatprep.subr.bf16.mxu0 0
      %1833 = vmatpush2.bf16.msra.mxu0 0
      %1834 = vmatprep.subr.bf16.mxu0 0
      %1835 = vmatpush2.bf16.msra.mxu0 0
      %1836 = vmatprep.subr.bf16.mxu0 0
      %1837 = vmatpush2.bf16.msra.mxu0 0
      %1838 = vmatprep.subr.bf16.mxu0 0
      %1839 = vmatpush2.bf16.msra.mxu0 0
      %1840 = vmatprep.subr.bf16.mxu0 0
      %1841 = vmatpush2.bf16.msra.mxu0 0
      %1842 = vmatprep.subr.bf16.mxu0 0
      %1843 = vmatpush2.bf16.msra.mxu0 0
      %1844 = vmatprep.subr.bf16.mxu0 0
      %1845 = vmatpush2.bf16.msra.mxu0 0
      %1846 = vmatprep.subr.bf16.mxu0 0
      %1847 = vmatpush2.bf16.msra.mxu0 0
      %1848 = vmatprep.mubr.bf16.mxu0 0
      %1849 = vmatmul.mubr.bf16.gmra.mxu0 %v880
      %v1850 = vpop.f32.mrf.mxu0
      %v1851 = vadd.f32 0.0, %v1850
      %v1852 = vpop.f32.mrf.mxu0
      %v1853 = vpop.f32.mrf.mxu0
      %v1854 = vadd.f32 0.0, %v1853
      %v1855 = vpop.f32.mrf.mxu0
      %1856 = vmatprep.mubr.bf16.mxu0 0
      %1857 = vmatmul.mubr.bf16.gmra.mxu0 %v883
      %v1858 = vpop.f32.mrf.mxu0
      %v1859 = vadd.f32 0.0, %v1858
      %v1860 = vpop.f32.mrf.mxu0
      %v1861 = vpop.f32.mrf.mxu0
      %v1862 = vadd.f32 0.0, %v1861
      %v1863 = vpop.f32.mrf.mxu0
      %1864 = vmatprep.mubr.bf16.mxu0 0
      %1865 = vmatmul.mubr.bf16.gmra.mxu0 %v886
      %v1866 = vpop.f32.mrf.mxu0
      %v1867 = vadd.f32 0.0, %v1866
      %v1868 = vpop.f32.mrf.mxu0
      %v1869 = vpop.f32.mrf.mxu0
      %v1870 = vadd.f32 0.0, %v1869
      %v1871 = vpop.f32.mrf.mxu0
      %1872 = vmatprep.mubr.bf16.mxu0 0
      %1873 = vmatmul.mubr.bf16.gmra.mxu0 %v889
      %v1874 = vpop.f32.mrf.mxu0
      %v1875 = vadd.f32 0.0, %v1874
      %v1876 = vpop.f32.mrf.mxu0
      %v1877 = vpop.f32.mrf.mxu0
      %v1878 = vadd.f32 0.0, %v1877
      %v1879 = vpop.f32.mrf.mxu0
      %1880 = vmatprep.mubr.bf16.mxu0 0
      %1881 = vmatmul.mubr.bf16.gmra.mxu0 %v892
      %v1882 = vpop.f32.mrf.mxu0
      %v1883 = vadd.f32 0.0, %v1882
      %v1884 = vpop.f32.mrf.mxu0
      %v1885 = vpop.f32.mrf.mxu0
      %v1886 = vadd.f32 0.0, %v1885
      %v1887 = vpop.f32.mrf.mxu0
      %1888 = vmatprep.mubr.bf16.mxu0 0
      %1889 = vmatmul.mubr.bf16.gmra.mxu0 %v895
      %v1890 = vpop.f32.mrf.mxu0
      %v1891 = vadd.f32 0.0, %v1890
      %v1892 = vpop.f32.mrf.mxu0
      %v1893 = vpop.f32.mrf.mxu0
      %v1894 = vadd.f32 0.0, %v1893
      %v1895 = vpop.f32.mrf.mxu0
      %1896 = vmatprep.mubr.bf16.mxu0 0
      %1897 = vmatmul.mubr.bf16.gmra.mxu0 %v898
      %v1898 = vpop.f32.mrf.mxu0
      %v1899 = vadd.f32 0.0, %v1898
      %v1900 = vpop.f32.mrf.mxu0
      %v1901 = vpop.f32.mrf.mxu0
      %v1902 = vadd.f32 0.0, %v1901
      %v1903 = vpop.f32.mrf.mxu0
      %1904 = vmatprep.mubr.bf16.mxu0 0
      %1905 = vmatmul.mubr.bf16.gmra.mxu0 %v901
      %v1906 = vpop.f32.mrf.mxu0
      %v1907 = vadd.f32 0.0, %v1906
      %v1908 = vpop.f32.mrf.mxu0
      %v1909 = vpop.f32.mrf.mxu0
      %v1910 = vadd.f32 0.0, %v1909
      %v1911 = vpop.f32.mrf.mxu0
      %1912 = vdwg.mxu0
      %s1913 = scalar_lea.vmem %s7, 16
      %v1914 = vld [vmem:[%s1913] sm:$0xf]
      %v1915 = vld [vmem:[%s1913 + $0x4] sm:$0xf]
      %v1916 = vld [vmem:[%s1913 + $0x8] sm:$0xf]
      %v1917 = vld [vmem:[%s1913 + $0xc] sm:$0xf]
      %v1922 = vunpack.c.l.b16 %v1914
      %v1923 = vunpack.c.l.b16 %v1915
      %v1924 = vunpack.c.l.b16 %v1916
      %v1925 = vunpack.c.l.b16 %v1917
      %v1926 = vpack.c.b16 %v1923, %v1922
      %v1927 = vpack.c.b16 %v1925, %v1924
      %1930 = vmatprep.subr.bf16.mxu0 0
      %1931 = vmatpush1.bf16.msra.mxu0 0
      %1932 = vmatprep.subr.bf16.mxu0 0
      %1933 = vmatpush1.bf16.msra.mxu0 0
      %1934 = vmatprep.subr.bf16.mxu0 0
      %1935 = vmatpush1.bf16.msra.mxu0 0
      %1936 = vmatprep.subr.bf16.mxu0 0
      %1937 = vmatpush1.bf16.msra.mxu0 0
      %1938 = vmatprep.subr.bf16.mxu0 0
      %1939 = vmatpush1.bf16.msra.mxu0 0
      %1940 = vmatprep.subr.bf16.mxu0 0
      %1941 = vmatpush1.bf16.msra.mxu0 0
      %1942 = vmatprep.subr.bf16.mxu0 0
      %1943 = vmatpush1.bf16.msra.mxu0 %v1927
      %1944 = vmatprep.subr.bf16.mxu0 0
      %1945 = vmatpush1.bf16.msra.mxu0 %v1926
      %1946 = vmatprep.subr.bf16.mxu0 0
      %1947 = vmatpush2.bf16.msra.mxu0 0
      %1948 = vmatprep.subr.bf16.mxu0 0
      %1949 = vmatpush2.bf16.msra.mxu0 0
      %1950 = vmatprep.subr.bf16.mxu0 0
      %1951 = vmatpush2.bf16.msra.mxu0 0
      %1952 = vmatprep.subr.bf16.mxu0 0
      %1953 = vmatpush2.bf16.msra.mxu0 0
      %1954 = vmatprep.subr.bf16.mxu0 0
      %1955 = vmatpush2.bf16.msra.mxu0 0
      %1956 = vmatprep.subr.bf16.mxu0 0
      %1957 = vmatpush2.bf16.msra.mxu0 0
      %1958 = vmatprep.subr.bf16.mxu0 0
      %1959 = vmatpush2.bf16.msra.mxu0 0
      %1960 = vmatprep.subr.bf16.mxu0 0
      %1961 = vmatpush2.bf16.msra.mxu0 0
      %1962 = vmatprep.mubr.bf16.mxu0 0
      %1963 = vmatmul.mubr.bf16.gmra.mxu0 %v880
      %v1964 = vpop.f32.mrf.mxu0
      %v1965 = vadd.f32 0.0, %v1964
      %v1966 = vpop.f32.mrf.mxu0
      %v1967 = vpop.f32.mrf.mxu0
      %v1968 = vadd.f32 0.0, %v1967
      %v1969 = vpop.f32.mrf.mxu0
      %1970 = vmatprep.mubr.bf16.mxu0 0
      %1971 = vmatmul.mubr.bf16.gmra.mxu0 %v883
      %v1972 = vpop.f32.mrf.mxu0
      %v1973 = vadd.f32 0.0, %v1972
      %v1974 = vpop.f32.mrf.mxu0
      %v1975 = vpop.f32.mrf.mxu0
      %v1976 = vadd.f32 0.0, %v1975
      %v1977 = vpop.f32.mrf.mxu0
      %1978 = vmatprep.mubr.bf16.mxu0 0
      %1979 = vmatmul.mubr.bf16.gmra.mxu0 %v886
      %v1980 = vpop.f32.mrf.mxu0
      %v1981 = vadd.f32 0.0, %v1980
      %v1982 = vpop.f32.mrf.mxu0
      %v1983 = vpop.f32.mrf.mxu0
      %v1984 = vadd.f32 0.0, %v1983
      %v1985 = vpop.f32.mrf.mxu0
      %1986 = vmatprep.mubr.bf16.mxu0 0
      %1987 = vmatmul.mubr.bf16.gmra.mxu0 %v889
      %v1988 = vpop.f32.mrf.mxu0
      %v1989 = vadd.f32 0.0, %v1988
      %v1990 = vpop.f32.mrf.mxu0
      %v1991 = vpop.f32.mrf.mxu0
      %v1992 = vadd.f32 0.0, %v1991
      %v1993 = vpop.f32.mrf.mxu0
      %1994 = vmatprep.mubr.bf16.mxu0 0
      %1995 = vmatmul.mubr.bf16.gmra.mxu0 %v892
      %v1996 = vpop.f32.mrf.mxu0
      %v1997 = vadd.f32 0.0, %v1996
      %v1998 = vpop.f32.mrf.mxu0
      %v1999 = vpop.f32.mrf.mxu0
      %v2000 = vadd.f32 0.0, %v1999
      %v2001 = vpop.f32.mrf.mxu0
      %2002 = vmatprep.mubr.bf16.mxu0 0
      %2003 = vmatmul.mubr.bf16.gmra.mxu0 %v895
      %v2004 = vpop.f32.mrf.mxu0
      %v2005 = vadd.f32 0.0, %v2004
      %v2006 = vpop.f32.mrf.mxu0
      %v2007 = vpop.f32.mrf.mxu0
      %v2008 = vadd.f32 0.0, %v2007
      %v2009 = vpop.f32.mrf.mxu0
      %2010 = vmatprep.mubr.bf16.mxu0 0
      %2011 = vmatmul.mubr.bf16.gmra.mxu0 %v898
      %v2012 = vpop.f32.mrf.mxu0
      %v2013 = vadd.f32 0.0, %v2012
      %v2014 = vpop.f32.mrf.mxu0
      %v2015 = vpop.f32.mrf.mxu0
      %v2016 = vadd.f32 0.0, %v2015
      %v2017 = vpop.f32.mrf.mxu0
      %2018 = vmatprep.mubr.bf16.mxu0 0
      %2019 = vmatmul.mubr.bf16.gmra.mxu0 %v901
      %v2020 = vpop.f32.mrf.mxu0
      %v2021 = vadd.f32 0.0, %v2020
      %v2022 = vpop.f32.mrf.mxu0
      %v2023 = vpop.f32.mrf.mxu0
      %v2024 = vadd.f32 0.0, %v2023
      %v2025 = vpop.f32.mrf.mxu0
      %2026 = vdwg.mxu0
      %v2027 = vpack.c.bf16 %v1740, %v1737
      %v2028 = vpack.c.bf16 %v1748, %v1745
      %v2029 = vpack.c.bf16 %v1756, %v1753
      %v2030 = vpack.c.bf16 %v1764, %v1761
      %v2031 = vpack.c.bf16 %v1772, %v1769
      %v2032 = vpack.c.bf16 %v1780, %v1777
      %v2033 = vpack.c.bf16 %v1788, %v1785
      %v2034 = vpack.c.bf16 %v1796, %v1793
      %v2035 = vpack.c.bf16 %v1854, %v1851
      %v2036 = vpack.c.bf16 %v1862, %v1859
      %v2037 = vpack.c.bf16 %v1870, %v1867
      %v2038 = vpack.c.bf16 %v1878, %v1875
      %v2039 = vpack.c.bf16 %v1886, %v1883
      %v2040 = vpack.c.bf16 %v1894, %v1891
      %v2041 = vpack.c.bf16 %v1902, %v1899
      %v2042 = vpack.c.bf16 %v1910, %v1907
      %v2044 = vsel %vm712, %v2027, 0
      %v2047 = vsel %vm712, %v2028, 0
      %v2050 = vsel %vm712, %v2029, 0
      %v2053 = vsel %vm712, %v2030, 0
      %v2056 = vsel %vm712, %v2031, 0
      %v2059 = vsel %vm712, %v2032, 0
      %v2062 = vsel %vm712, %v2033, 0
      %v2065 = vsel %vm712, %v2034, 0
      %v2068 = vsel %vm712, %v2035, 0
      %v2071 = vsel %vm712, %v2036, 0
      %v2074 = vsel %vm712, %v2037, 0
      %v2077 = vsel %vm712, %v2038, 0
      %v2080 = vsel %vm712, %v2039, 0
      %v2083 = vsel %vm712, %v2040, 0
      %v2086 = vsel %vm712, %v2041, 0
      %v2089 = vsel %vm712, %v2042, 0
      %2091 = vmatprep.subr.bf16.mxu0 0
      %2092 = vmatpush1.bf16.xpose.msra.mxu0 %v2089
      %2093 = vmatprep.subr.bf16.mxu0 0
      %2094 = vmatpush1.bf16.xpose.msra.mxu0 %v2086
      %2095 = vmatprep.subr.bf16.mxu0 0
      %2096 = vmatpush1.bf16.xpose.msra.mxu0 %v2083
      %2097 = vmatprep.subr.bf16.mxu0 0
      %2098 = vmatpush1.bf16.xpose.msra.mxu0 %v2080
      %2099 = vmatprep.subr.bf16.mxu0 0
      %2100 = vmatpush1.bf16.xpose.msra.mxu0 %v2077
      %2101 = vmatprep.subr.bf16.mxu0 0
      %2102 = vmatpush1.bf16.xpose.msra.mxu0 %v2074
      %2103 = vmatprep.subr.bf16.mxu0 0
      %2104 = vmatpush1.bf16.xpose.msra.mxu0 %v2071
      %2105 = vmatprep.subr.bf16.mxu0 0
      %2106 = vmatpush1.bf16.xpose.msra.mxu0 %v2068
      %2107 = vmatprep.subr.bf16.mxu0 0
      %2108 = vmatpush2.bf16.xpose.msra.mxu0 0
      %2109 = vmatprep.subr.bf16.mxu0 0
      %2110 = vmatpush2.bf16.xpose.msra.mxu0 0
      %2111 = vmatprep.subr.bf16.mxu0 0
      %2112 = vmatpush2.bf16.xpose.msra.mxu0 0
      %2113 = vmatprep.subr.bf16.mxu0 0
      %2114 = vmatpush2.bf16.xpose.msra.mxu0 0
      %2115 = vmatprep.subr.bf16.mxu0 0
      %2116 = vmatpush2.bf16.xpose.msra.mxu0 0
      %2117 = vmatprep.subr.bf16.mxu0 0
      %2118 = vmatpush2.bf16.xpose.msra.mxu0 0
      %2119 = vmatprep.subr.bf16.mxu0 0
      %2120 = vmatpush2.bf16.xpose.msra.mxu0 0
      %2121 = vmatprep.subr.bf16.mxu0 0
      %2122 = vmatpush2.bf16.xpose.msra.mxu0 0
      %2123 = vmatprep.mubr.bf16.mxu0 0
      %2124 = vmatmul.mubr.bf16.gmra.mxu0 %v2044
      %v2125 = vpop.f32.mrf.mxu0
      %v2126 = vadd.f32 0.0, %v2125
      %v2127 = vpop.f32.mrf.mxu0
      %v2128 = vpop.f32.mrf.mxu0
      %v2129 = vadd.f32 0.0, %v2128
      %v2130 = vpop.f32.mrf.mxu0
      %2131 = vmatprep.mubr.bf16.mxu0 0
      %2132 = vmatmul.mubr.bf16.gmra.mxu0 %v2047
      %v2133 = vpop.f32.mrf.mxu0
      %v2134 = vadd.f32 0.0, %v2133
      %v2135 = vpop.f32.mrf.mxu0
      %v2136 = vpop.f32.mrf.mxu0
      %v2137 = vadd.f32 0.0, %v2136
      %v2138 = vpop.f32.mrf.mxu0
      %2139 = vmatprep.mubr.bf16.mxu0 0
      %2140 = vmatmul.mubr.bf16.gmra.mxu0 %v2050
      %v2141 = vpop.f32.mrf.mxu0
      %v2142 = vadd.f32 0.0, %v2141
      %v2143 = vpop.f32.mrf.mxu0
      %v2144 = vpop.f32.mrf.mxu0
      %v2145 = vadd.f32 0.0, %v2144
      %v2146 = vpop.f32.mrf.mxu0
      %2147 = vmatprep.mubr.bf16.mxu0 0
      %2148 = vmatmul.mubr.bf16.gmra.mxu0 %v2053
      %v2149 = vpop.f32.mrf.mxu0
      %v2150 = vadd.f32 0.0, %v2149
      %v2151 = vpop.f32.mrf.mxu0
      %v2152 = vpop.f32.mrf.mxu0
      %v2153 = vadd.f32 0.0, %v2152
      %v2154 = vpop.f32.mrf.mxu0
      %2155 = vmatprep.mubr.bf16.mxu0 0
      %2156 = vmatmul.mubr.bf16.gmra.mxu0 %v2056
      %v2157 = vpop.f32.mrf.mxu0
      %v2158 = vadd.f32 0.0, %v2157
      %v2159 = vpop.f32.mrf.mxu0
      %v2160 = vpop.f32.mrf.mxu0
      %v2161 = vadd.f32 0.0, %v2160
      %v2162 = vpop.f32.mrf.mxu0
      %2163 = vmatprep.mubr.bf16.mxu0 0
      %2164 = vmatmul.mubr.bf16.gmra.mxu0 %v2059
      %v2165 = vpop.f32.mrf.mxu0
      %v2166 = vadd.f32 0.0, %v2165
      %v2167 = vpop.f32.mrf.mxu0
      %v2168 = vpop.f32.mrf.mxu0
      %v2169 = vadd.f32 0.0, %v2168
      %v2170 = vpop.f32.mrf.mxu0
      %2171 = vmatprep.mubr.bf16.mxu0 0
      %2172 = vmatmul.mubr.bf16.gmra.mxu0 %v2062
      %v2173 = vpop.f32.mrf.mxu0
      %v2174 = vadd.f32 0.0, %v2173
      %v2175 = vpop.f32.mrf.mxu0
      %v2176 = vpop.f32.mrf.mxu0
      %v2177 = vadd.f32 0.0, %v2176
      %v2178 = vpop.f32.mrf.mxu0
      %2179 = vmatprep.mubr.bf16.mxu0 0
      %2180 = vmatmul.mubr.bf16.gmra.mxu0 %v2065
      %v2181 = vpop.f32.mrf.mxu0
      %v2182 = vadd.f32 0.0, %v2181
      %v2183 = vpop.f32.mrf.mxu0
      %v2184 = vpop.f32.mrf.mxu0
      %v2185 = vadd.f32 0.0, %v2184
      %v2186 = vpop.f32.mrf.mxu0
      %2187 = vdwg.mxu0
      %v2188 = vmul.f32 %v2126, 0.35355338
      %v2189 = vmul.f32 %v2129, 0.35355338
      %v2190 = vmul.f32 %v2134, 0.35355338
      %v2191 = vmul.f32 %v2137, 0.35355338
      %v2192 = vmul.f32 %v2142, 0.35355338
      %v2193 = vmul.f32 %v2145, 0.35355338
      %v2194 = vmul.f32 %v2150, 0.35355338
      %v2195 = vmul.f32 %v2153, 0.35355338
      %v2196 = vmul.f32 %v2158, 0.35355338
      %v2197 = vmul.f32 %v2161, 0.35355338
      %v2198 = vmul.f32 %v2166, 0.35355338
      %v2199 = vmul.f32 %v2169, 0.35355338
      %v2200 = vmul.f32 %v2174, 0.35355338
      %v2201 = vmul.f32 %v2177, 0.35355338
      %v2202 = vmul.f32 %v2182, 0.35355338
      %v2203 = vmul.f32 %v2185, 0.35355338
      %v2204 = vadd.f32 %v2188, %v838
      %v2205 = vadd.f32 %v2189, %v839
      %v2206 = vadd.f32 %v2190, %v840
      %v2207 = vadd.f32 %v2191, %v841
      %v2208 = vadd.f32 %v2192, %v842
      %v2209 = vadd.f32 %v2193, %v843
      %v2210 = vadd.f32 %v2194, %v844
      %v2211 = vadd.f32 %v2195, %v845
      %v2212 = vadd.f32 %v2196, %v846
      %v2213 = vadd.f32 %v2197, %v847
      %v2214 = vadd.f32 %v2198, %v848
      %v2215 = vadd.f32 %v2199, %v849
      %v2216 = vadd.f32 %v2200, %v850
      %v2217 = vadd.f32 %v2201, %v851
      %v2218 = vadd.f32 %v2202, %v852
      %v2219 = vadd.f32 %v2203, %v853
      %2220 = vmax.xlane.f32.xlu0 %v2204
      %v2221 = vpop.xlane.xlu0 %2220
      %2222 = vmax.xlane.f32.xlu0 %v2205
      %v2223 = vpop.xlane.xlu0 %2222
      %2224 = vmax.xlane.f32.xlu0 %v2206
      %v2225 = vpop.xlane.xlu0 %2224
      %2226 = vmax.xlane.f32.xlu0 %v2207
      %v2227 = vpop.xlane.xlu0 %2226
      %2228 = vmax.xlane.f32.xlu0 %v2208
      %v2229 = vpop.xlane.xlu0 %2228
      %2230 = vmax.xlane.f32.xlu0 %v2209
      %v2231 = vpop.xlane.xlu0 %2230
      %2232 = vmax.xlane.f32.xlu0 %v2210
      %v2233 = vpop.xlane.xlu0 %2232
      %2234 = vmax.xlane.f32.xlu0 %v2211
      %v2235 = vpop.xlane.xlu0 %2234
      %2236 = vmax.xlane.f32.xlu0 %v2212
      %v2237 = vpop.xlane.xlu0 %2236
      %2238 = vmax.xlane.f32.xlu0 %v2213
      %v2239 = vpop.xlane.xlu0 %2238
      %2240 = vmax.xlane.f32.xlu0 %v2214
      %v2241 = vpop.xlane.xlu0 %2240
      %2242 = vmax.xlane.f32.xlu0 %v2215
      %v2243 = vpop.xlane.xlu0 %2242
      %2244 = vmax.xlane.f32.xlu0 %v2216
      %v2245 = vpop.xlane.xlu0 %2244
      %2246 = vmax.xlane.f32.xlu0 %v2217
      %v2247 = vpop.xlane.xlu0 %2246
      %2248 = vmax.xlane.f32.xlu0 %v2218
      %v2249 = vpop.xlane.xlu0 %2248
      %2250 = vmax.xlane.f32.xlu0 %v2219
      %v2251 = vpop.xlane.xlu0 %2250
      %v2252 = vsub.f32 %v2204, %v2221
      %v2253 = vsub.f32 %v2205, %v2223
      %v2254 = vsub.f32 %v2206, %v2225
      %v2255 = vsub.f32 %v2207, %v2227
      %v2256 = vsub.f32 %v2208, %v2229
      %v2257 = vsub.f32 %v2209, %v2231
      %v2258 = vsub.f32 %v2210, %v2233
      %v2259 = vsub.f32 %v2211, %v2235
      %v2260 = vsub.f32 %v2212, %v2237
      %v2261 = vsub.f32 %v2213, %v2239
      %v2262 = vsub.f32 %v2214, %v2241
      %v2263 = vsub.f32 %v2215, %v2243
      %v2264 = vsub.f32 %v2216, %v2245
      %v2265 = vsub.f32 %v2217, %v2247
      %v2266 = vsub.f32 %v2218, %v2249
      %v2267 = vsub.f32 %v2219, %v2251
      %v2268 = vmul.f32 %v2252, 1.442695
      %v2269 = vpow.pop %v2268
      %v2270 = vmul.f32 %v2253, 1.442695
      %v2271 = vpow.pop %v2270
      %v2272 = vmul.f32 %v2254, 1.442695
      %v2273 = vpow.pop %v2272
      %v2274 = vmul.f32 %v2255, 1.442695
      %v2275 = vpow.pop %v2274
      %v2276 = vmul.f32 %v2256, 1.442695
      %v2277 = vpow.pop %v2276
      %v2278 = vmul.f32 %v2257, 1.442695
      %v2279 = vpow.pop %v2278
      %v2280 = vmul.f32 %v2258, 1.442695
      %v2281 = vpow.pop %v2280
      %v2282 = vmul.f32 %v2259, 1.442695
      %v2283 = vpow.pop %v2282
      %v2284 = vmul.f32 %v2260, 1.442695
      %v2285 = vpow.pop %v2284
      %v2286 = vmul.f32 %v2261, 1.442695
      %v2287 = vpow.pop %v2286
      %v2288 = vmul.f32 %v2262, 1.442695
      %v2289 = vpow.pop %v2288
      %v2290 = vmul.f32 %v2263, 1.442695
      %v2291 = vpow.pop %v2290
      %v2292 = vmul.f32 %v2264, 1.442695
      %v2293 = vpow.pop %v2292
      %v2294 = vmul.f32 %v2265, 1.442695
      %v2295 = vpow.pop %v2294
      %v2296 = vmul.f32 %v2266, 1.442695
      %v2297 = vpow.pop %v2296
      %v2298 = vmul.f32 %v2267, 1.442695
      %v2299 = vpow.pop %v2298
      %2300 = vadd.xlane.f32.xlu0 %v2269
      %v2301 = vpop.xlane.xlu0 %2300
      %2302 = vadd.xlane.f32.xlu0 %v2271
      %v2303 = vpop.xlane.xlu0 %2302
      %2304 = vadd.xlane.f32.xlu0 %v2273
      %v2305 = vpop.xlane.xlu0 %2304
      %2306 = vadd.xlane.f32.xlu0 %v2275
      %v2307 = vpop.xlane.xlu0 %2306
      %2308 = vadd.xlane.f32.xlu0 %v2277
      %v2309 = vpop.xlane.xlu0 %2308
      %2310 = vadd.xlane.f32.xlu0 %v2279
      %v2311 = vpop.xlane.xlu0 %2310
      %2312 = vadd.xlane.f32.xlu0 %v2281
      %v2313 = vpop.xlane.xlu0 %2312
      %2314 = vadd.xlane.f32.xlu0 %v2283
      %v2315 = vpop.xlane.xlu0 %2314
      %2316 = vadd.xlane.f32.xlu0 %v2285
      %v2317 = vpop.xlane.xlu0 %2316
      %2318 = vadd.xlane.f32.xlu0 %v2287
      %v2319 = vpop.xlane.xlu0 %2318
      %2320 = vadd.xlane.f32.xlu0 %v2289
      %v2321 = vpop.xlane.xlu0 %2320
      %2322 = vadd.xlane.f32.xlu0 %v2291
      %v2323 = vpop.xlane.xlu0 %2322
      %2324 = vadd.xlane.f32.xlu0 %v2293
      %v2325 = vpop.xlane.xlu0 %2324
      %2326 = vadd.xlane.f32.xlu0 %v2295
      %v2327 = vpop.xlane.xlu0 %2326
      %2328 = vadd.xlane.f32.xlu0 %v2297
      %v2329 = vpop.xlane.xlu0 %2328
      %2330 = vadd.xlane.f32.xlu0 %v2299
      %v2331 = vpop.xlane.xlu0 %2330
      %v2332 = vrcp.pop %v2301
      %v2333 = vmul.f32 %v2269, %v2332
      %v2334 = vrcp.pop %v2303
      %v2335 = vmul.f32 %v2271, %v2334
      %v2336 = vrcp.pop %v2305
      %v2337 = vmul.f32 %v2273, %v2336
      %v2338 = vrcp.pop %v2307
      %v2339 = vmul.f32 %v2275, %v2338
      %v2340 = vrcp.pop %v2309
      %v2341 = vmul.f32 %v2277, %v2340
      %v2342 = vrcp.pop %v2311
      %v2343 = vmul.f32 %v2279, %v2342
      %v2344 = vrcp.pop %v2313
      %v2345 = vmul.f32 %v2281, %v2344
      %v2346 = vrcp.pop %v2315
      %v2347 = vmul.f32 %v2283, %v2346
      %v2348 = vrcp.pop %v2317
      %v2349 = vmul.f32 %v2285, %v2348
      %v2350 = vrcp.pop %v2319
      %v2351 = vmul.f32 %v2287, %v2350
      %v2352 = vrcp.pop %v2321
      %v2353 = vmul.f32 %v2289, %v2352
      %v2354 = vrcp.pop %v2323
      %v2355 = vmul.f32 %v2291, %v2354
      %v2356 = vrcp.pop %v2325
      %v2357 = vmul.f32 %v2293, %v2356
      %v2358 = vrcp.pop %v2327
      %v2359 = vmul.f32 %v2295, %v2358
      %v2360 = vrcp.pop %v2329
      %v2361 = vmul.f32 %v2297, %v2360
      %v2362 = vrcp.pop %v2331
      %v2363 = vmul.f32 %v2299, %v2362
      %v2364 = vpack.c.bf16 %v2335, %v2333
      %v2365 = vpack.c.bf16 %v2339, %v2337
      %v2366 = vpack.c.bf16 %v2343, %v2341
      %v2367 = vpack.c.bf16 %v2347, %v2345
      %v2368 = vpack.c.bf16 %v2351, %v2349
      %v2369 = vpack.c.bf16 %v2355, %v2353
      %v2370 = vpack.c.bf16 %v2359, %v2357
      %v2371 = vpack.c.bf16 %v2363, %v2361
      %v2372 = vpack.c.bf16 %v1968, %v1965
      %v2373 = vpack.c.bf16 %v1976, %v1973
      %v2374 = vpack.c.bf16 %v1984, %v1981
      %v2375 = vpack.c.bf16 %v1992, %v1989
      %v2376 = vpack.c.bf16 %v2000, %v1997
      %v2377 = vpack.c.bf16 %v2008, %v2005
      %v2378 = vpack.c.bf16 %v2016, %v2013
      %v2379 = vpack.c.bf16 %v2024, %v2021
      %2380 = vmatprep.subr.bf16.mxu0 0
      %2381 = vmatpush1.bf16.msra.mxu0 %v2379
      %2382 = vmatprep.subr.bf16.mxu0 0
      %2383 = vmatpush1.bf16.msra.mxu0 %v2378
      %2384 = vmatprep.subr.bf16.mxu0 0
      %2385 = vmatpush1.bf16.msra.mxu0 %v2377
      %2386 = vmatprep.subr.bf16.mxu0 0
      %2387 = vmatpush1.bf16.msra.mxu0 %v2376
      %2388 = vmatprep.subr.bf16.mxu0 0
      %2389 = vmatpush1.bf16.msra.mxu0 %v2375
      %2390 = vmatprep.subr.bf16.mxu0 0
      %2391 = vmatpush1.bf16.msra.mxu0 %v2374
      %2392 = vmatprep.subr.bf16.mxu0 0
      %2393 = vmatpush1.bf16.msra.mxu0 %v2373
      %2394 = vmatprep.subr.bf16.mxu0 0
      %2395 = vmatpush1.bf16.msra.mxu0 %v2372
      %2396 = vmatprep.subr.bf16.mxu0 0
      %2397 = vmatpush2.bf16.msra.mxu0 0
      %2398 = vmatprep.subr.bf16.mxu0 0
      %2399 = vmatpush2.bf16.msra.mxu0 0
      %2400 = vmatprep.subr.bf16.mxu0 0
      %2401 = vmatpush2.bf16.msra.mxu0 0
      %2402 = vmatprep.subr.bf16.mxu0 0
      %2403 = vmatpush2.bf16.msra.mxu0 0
      %2404 = vmatprep.subr.bf16.mxu0 0
      %2405 = vmatpush2.bf16.msra.mxu0 0
      %2406 = vmatprep.subr.bf16.mxu0 0
      %2407 = vmatpush2.bf16.msra.mxu0 0
      %2408 = vmatprep.subr.bf16.mxu0 0
      %2409 = vmatpush2.bf16.msra.mxu0 0
      %2410 = vmatprep.subr.bf16.mxu0 0
      %2411 = vmatpush2.bf16.msra.mxu0 0
      %2412 = vmatprep.mubr.bf16.mxu0 0
      %2413 = vmatmul.mubr.bf16.gmra.mxu0 %v2364
      %v2414 = vpop.f32.mrf.mxu0
      %v2415 = vadd.f32 0.0, %v2414
      %v2416 = vpop.f32.mrf.mxu0
      %v2417 = vpop.f32.mrf.mxu0
      %v2418 = vadd.f32 0.0, %v2417
      %v2419 = vpop.f32.mrf.mxu0
      %2420 = vmatprep.mubr.bf16.mxu0 0
      %2421 = vmatmul.mubr.bf16.gmra.mxu0 %v2365
      %v2422 = vpop.f32.mrf.mxu0
      %v2423 = vadd.f32 0.0, %v2422
      %v2424 = vpop.f32.mrf.mxu0
      %v2425 = vpop.f32.mrf.mxu0
      %v2426 = vadd.f32 0.0, %v2425
      %v2427 = vpop.f32.mrf.mxu0
      %2428 = vmatprep.mubr.bf16.mxu0 0
      %2429 = vmatmul.mubr.bf16.gmra.mxu0 %v2366
      %v2430 = vpop.f32.mrf.mxu0
      %v2431 = vadd.f32 0.0, %v2430
      %v2432 = vpop.f32.mrf.mxu0
      %v2433 = vpop.f32.mrf.mxu0
      %v2434 = vadd.f32 0.0, %v2433
      %v2435 = vpop.f32.mrf.mxu0
      %2436 = vmatprep.mubr.bf16.mxu0 0
      %2437 = vmatmul.mubr.bf16.gmra.mxu0 %v2367
      %v2438 = vpop.f32.mrf.mxu0
      %v2439 = vadd.f32 0.0, %v2438
      %v2440 = vpop.f32.mrf.mxu0
      %v2441 = vpop.f32.mrf.mxu0
      %v2442 = vadd.f32 0.0, %v2441
      %v2443 = vpop.f32.mrf.mxu0
      %2444 = vmatprep.mubr.bf16.mxu0 0
      %2445 = vmatmul.mubr.bf16.gmra.mxu0 %v2368
      %v2446 = vpop.f32.mrf.mxu0
      %v2447 = vadd.f32 0.0, %v2446
      %v2448 = vpop.f32.mrf.mxu0
      %v2449 = vpop.f32.mrf.mxu0
      %v2450 = vadd.f32 0.0, %v2449
      %v2451 = vpop.f32.mrf.mxu0
      %2452 = vmatprep.mubr.bf16.mxu0 0
      %2453 = vmatmul.mubr.bf16.gmra.mxu0 %v2369
      %v2454 = vpop.f32.mrf.mxu0
      %v2455 = vadd.f32 0.0, %v2454
      %v2456 = vpop.f32.mrf.mxu0
      %v2457 = vpop.f32.mrf.mxu0
      %v2458 = vadd.f32 0.0, %v2457
      %v2459 = vpop.f32.mrf.mxu0
      %2460 = vmatprep.mubr.bf16.mxu0 0
      %2461 = vmatmul.mubr.bf16.gmra.mxu0 %v2370
      %v2462 = vpop.f32.mrf.mxu0
      %v2463 = vadd.f32 0.0, %v2462
      %v2464 = vpop.f32.mrf.mxu0
      %v2465 = vpop.f32.mrf.mxu0
      %v2466 = vadd.f32 0.0, %v2465
      %v2467 = vpop.f32.mrf.mxu0
      %2468 = vmatprep.mubr.bf16.mxu0 0
      %2469 = vmatmul.mubr.bf16.gmra.mxu0 %v2371
      %v2470 = vpop.f32.mrf.mxu0
      %v2471 = vadd.f32 0.0, %v2470
      %v2472 = vpop.f32.mrf.mxu0
      %v2473 = vpop.f32.mrf.mxu0
      %v2474 = vadd.f32 0.0, %v2473
      %v2475 = vpop.f32.mrf.mxu0
      %2476 = vdwg.mxu0
      %s2477 = scalar_lea.vmem %s8, 4
      %v2478 = vld [vmem:[%s2477] sm:$0xf]
      %v2479 = vpack.c.bf16 %v2418, %v2415
      %v2480 = vpack.c.bf16 %v2426, %v2423
      %v2481 = vpack.c.bf16 %v2434, %v2431
      %v2482 = vpack.c.bf16 %v2442, %v2439
      %v2483 = vpack.c.bf16 %v2450, %v2447
      %v2484 = vpack.c.bf16 %v2458, %v2455
      %v2485 = vpack.c.bf16 %v2466, %v2463
      %v2486 = vpack.c.bf16 %v2474, %v2471
      %v2488 = vsel %vm712, %v2479, 0
      %v2491 = vsel %vm712, %v2480, 0
      %v2494 = vsel %vm712, %v2481, 0
      %v2497 = vsel %vm712, %v2482, 0
      %v2500 = vsel %vm712, %v2483, 0
      %v2503 = vsel %vm712, %v2484, 0
      %v2506 = vsel %vm712, %v2485, 0
      %v2509 = vsel %vm712, %v2486, 0
      %v2512 = vsel %vm737, %v2478, 0
      %2514 = vmatprep.subr.bf16.mxu0 0
      %2515 = vmatpush1.bf16.msra.mxu0 0
      %2516 = vmatprep.subr.bf16.mxu0 0
      %2517 = vmatpush1.bf16.msra.mxu0 0
      %2518 = vmatprep.subr.bf16.mxu0 0
      %2519 = vmatpush1.bf16.msra.mxu0 0
      %2520 = vmatprep.subr.bf16.mxu0 0
      %2521 = vmatpush1.bf16.msra.mxu0 0
      %2522 = vmatprep.subr.bf16.mxu0 0
      %2523 = vmatpush1.bf16.msra.mxu0 0
      %2524 = vmatprep.subr.bf16.mxu0 0
      %2525 = vmatpush1.bf16.msra.mxu0 0
      %2526 = vmatprep.subr.bf16.mxu0 0
      %2527 = vmatpush1.bf16.msra.mxu0 0
      %2528 = vmatprep.subr.bf16.mxu0 0
      %2529 = vmatpush1.bf16.msra.mxu0 %v2512
      %2530 = vmatprep.subr.bf16.mxu0 0
      %2531 = vmatpush2.bf16.msra.mxu0 0
      %2532 = vmatprep.subr.bf16.mxu0 0
      %2533 = vmatpush2.bf16.msra.mxu0 0
      %2534 = vmatprep.subr.bf16.mxu0 0
      %2535 = vmatpush2.bf16.msra.mxu0 0
      %2536 = vmatprep.subr.bf16.mxu0 0
      %2537 = vmatpush2.bf16.msra.mxu0 0
      %2538 = vmatprep.subr.bf16.mxu0 0
      %2539 = vmatpush2.bf16.msra.mxu0 0
      %2540 = vmatprep.subr.bf16.mxu0 0
      %2541 = vmatpush2.bf16.msra.mxu0 0
      %2542 = vmatprep.subr.bf16.mxu0 0
      %2543 = vmatpush2.bf16.msra.mxu0 0
      %2544 = vmatprep.subr.bf16.mxu0 0
      %2545 = vmatpush2.bf16.msra.mxu0 0
      %2546 = vmatprep.mubr.bf16.mxu0 0
      %2547 = vmatmul.mubr.bf16.gmra.mxu0 %v2488
      %v2548 = vpop.f32.mrf.mxu0
      %v2549 = vadd.f32 0.0, %v2548
      %v2550 = vpop.f32.mrf.mxu0
      %v2551 = vpop.f32.mrf.mxu0
      %v2552 = vadd.f32 0.0, %v2551
      %v2553 = vpop.f32.mrf.mxu0
      %2554 = vmatprep.mubr.bf16.mxu0 0
      %2555 = vmatmul.mubr.bf16.gmra.mxu0 %v2491
      %v2556 = vpop.f32.mrf.mxu0
      %v2557 = vadd.f32 0.0, %v2556
      %v2558 = vpop.f32.mrf.mxu0
      %v2559 = vpop.f32.mrf.mxu0
      %v2560 = vadd.f32 0.0, %v2559
      %v2561 = vpop.f32.mrf.mxu0
      %2562 = vmatprep.mubr.bf16.mxu0 0
      %2563 = vmatmul.mubr.bf16.gmra.mxu0 %v2494
      %v2564 = vpop.f32.mrf.mxu0
      %v2565 = vadd.f32 0.0, %v2564
      %v2566 = vpop.f32.mrf.mxu0
      %v2567 = vpop.f32.mrf.mxu0
      %v2568 = vadd.f32 0.0, %v2567
      %v2569 = vpop.f32.mrf.mxu0
      %2570 = vmatprep.mubr.bf16.mxu0 0
      %2571 = vmatmul.mubr.bf16.gmra.mxu0 %v2497
      %v2572 = vpop.f32.mrf.mxu0
      %v2573 = vadd.f32 0.0, %v2572
      %v2574 = vpop.f32.mrf.mxu0
      %v2575 = vpop.f32.mrf.mxu0
      %v2576 = vadd.f32 0.0, %v2575
      %v2577 = vpop.f32.mrf.mxu0
      %2578 = vmatprep.mubr.bf16.mxu0 0
      %2579 = vmatmul.mubr.bf16.gmra.mxu0 %v2500
      %v2580 = vpop.f32.mrf.mxu0
      %v2581 = vadd.f32 0.0, %v2580
      %v2582 = vpop.f32.mrf.mxu0
      %v2583 = vpop.f32.mrf.mxu0
      %v2584 = vadd.f32 0.0, %v2583
      %v2585 = vpop.f32.mrf.mxu0
      %2586 = vmatprep.mubr.bf16.mxu0 0
      %2587 = vmatmul.mubr.bf16.gmra.mxu0 %v2503
      %v2588 = vpop.f32.mrf.mxu0
      %v2589 = vadd.f32 0.0, %v2588
      %v2590 = vpop.f32.mrf.mxu0
      %v2591 = vpop.f32.mrf.mxu0
      %v2592 = vadd.f32 0.0, %v2591
      %v2593 = vpop.f32.mrf.mxu0
      %2594 = vmatprep.mubr.bf16.mxu0 0
      %2595 = vmatmul.mubr.bf16.gmra.mxu0 %v2506
      %v2596 = vpop.f32.mrf.mxu0
      %v2597 = vadd.f32 0.0, %v2596
      %v2598 = vpop.f32.mrf.mxu0
      %v2599 = vpop.f32.mrf.mxu0
      %v2600 = vadd.f32 0.0, %v2599
      %v2601 = vpop.f32.mrf.mxu0
      %2602 = vmatprep.mubr.bf16.mxu0 0
      %2603 = vmatmul.mubr.bf16.gmra.mxu0 %v2509
      %v2604 = vpop.f32.mrf.mxu0
      %v2605 = vadd.f32 0.0, %v2604
      %v2606 = vpop.f32.mrf.mxu0
      %v2607 = vpop.f32.mrf.mxu0
      %v2608 = vadd.f32 0.0, %v2607
      %v2609 = vpop.f32.mrf.mxu0
      %2610 = vdwg.mxu0
      %v2612 = vsel %vm712, %v1677, 0
      %v2615 = vsel %vm712, %v1678, 0
      %v2618 = vsel %vm712, %v1679, 0
      %v2621 = vsel %vm712, %v1680, 0
      %v2624 = vsel %vm712, %v1681, 0
      %v2627 = vsel %vm712, %v1682, 0
      %v2630 = vsel %vm712, %v1683, 0
      %v2633 = vsel %vm712, %v1684, 0
      %v2636 = vsel %vm737, %v1676, 0
      %2638 = vmatprep.subr.bf16.mxu0 0
      %2639 = vmatpush1.bf16.msra.mxu0 0
      %2640 = vmatprep.subr.bf16.mxu0 0
      %2641 = vmatpush1.bf16.msra.mxu0 0
      %2642 = vmatprep.subr.bf16.mxu0 0
      %2643 = vmatpush1.bf16.msra.mxu0 0
      %2644 = vmatprep.subr.bf16.mxu0 0
      %2645 = vmatpush1.bf16.msra.mxu0 0
      %2646 = vmatprep.subr.bf16.mxu0 0
      %2647 = vmatpush1.bf16.msra.mxu0 0
      %2648 = vmatprep.subr.bf16.mxu0 0
      %2649 = vmatpush1.bf16.msra.mxu0 0
      %2650 = vmatprep.subr.bf16.mxu0 0
      %2651 = vmatpush1.bf16.msra.mxu0 0
      %2652 = vmatprep.subr.bf16.mxu0 0
      %2653 = vmatpush1.bf16.msra.mxu0 %v2636
      %2654 = vmatprep.subr.bf16.mxu0 0
      %2655 = vmatpush2.bf16.msra.mxu0 0
      %2656 = vmatprep.subr.bf16.mxu0 0
      %2657 = vmatpush2.bf16.msra.mxu0 0
      %2658 = vmatprep.subr.bf16.mxu0 0
      %2659 = vmatpush2.bf16.msra.mxu0 0
      %2660 = vmatprep.subr.bf16.mxu0 0
      %2661 = vmatpush2.bf16.msra.mxu0 0
      %2662 = vmatprep.subr.bf16.mxu0 0
      %2663 = vmatpush2.bf16.msra.mxu0 0
      %2664 = vmatprep.subr.bf16.mxu0 0
      %2665 = vmatpush2.bf16.msra.mxu0 0
      %2666 = vmatprep.subr.bf16.mxu0 0
      %2667 = vmatpush2.bf16.msra.mxu0 0
      %2668 = vmatprep.subr.bf16.mxu0 0
      %2669 = vmatpush2.bf16.msra.mxu0 0
      %2670 = vmatprep.mubr.bf16.mxu0 0
      %2671 = vmatmul.mubr.bf16.gmra.mxu0 %v2612
      %v2672 = vpop.f32.mrf.mxu0
      %v2673 = vadd.f32 %v2549, %v2672
      %v2674 = vpop.f32.mrf.mxu0
      %v2675 = vpop.f32.mrf.mxu0
      %v2676 = vadd.f32 %v2552, %v2675
      %v2677 = vpop.f32.mrf.mxu0
      %2678 = vmatprep.mubr.bf16.mxu0 0
      %2679 = vmatmul.mubr.bf16.gmra.mxu0 %v2615
      %v2680 = vpop.f32.mrf.mxu0
      %v2681 = vadd.f32 %v2557, %v2680
      %v2682 = vpop.f32.mrf.mxu0
      %v2683 = vpop.f32.mrf.mxu0
      %v2684 = vadd.f32 %v2560, %v2683
      %v2685 = vpop.f32.mrf.mxu0
      %2686 = vmatprep.mubr.bf16.mxu0 0
      %2687 = vmatmul.mubr.bf16.gmra.mxu0 %v2618
      %v2688 = vpop.f32.mrf.mxu0
      %v2689 = vadd.f32 %v2565, %v2688
      %v2690 = vpop.f32.mrf.mxu0
      %v2691 = vpop.f32.mrf.mxu0
      %v2692 = vadd.f32 %v2568, %v2691
      %v2693 = vpop.f32.mrf.mxu0
      %2694 = vmatprep.mubr.bf16.mxu0 0
      %2695 = vmatmul.mubr.bf16.gmra.mxu0 %v2621
      %v2696 = vpop.f32.mrf.mxu0
      %v2697 = vadd.f32 %v2573, %v2696
      %v2698 = vpop.f32.mrf.mxu0
      %v2699 = vpop.f32.mrf.mxu0
      %v2700 = vadd.f32 %v2576, %v2699
      %v2701 = vpop.f32.mrf.mxu0
      %2702 = vmatprep.mubr.bf16.mxu0 0
      %2703 = vmatmul.mubr.bf16.gmra.mxu0 %v2624
      %v2704 = vpop.f32.mrf.mxu0
      %v2705 = vadd.f32 %v2581, %v2704
      %v2706 = vpop.f32.mrf.mxu0
      %v2707 = vpop.f32.mrf.mxu0
      %v2708 = vadd.f32 %v2584, %v2707
      %v2709 = vpop.f32.mrf.mxu0
      %2710 = vmatprep.mubr.bf16.mxu0 0
      %2711 = vmatmul.mubr.bf16.gmra.mxu0 %v2627
      %v2712 = vpop.f32.mrf.mxu0
      %v2713 = vadd.f32 %v2589, %v2712
      %v2714 = vpop.f32.mrf.mxu0
      %v2715 = vpop.f32.mrf.mxu0
      %v2716 = vadd.f32 %v2592, %v2715
      %v2717 = vpop.f32.mrf.mxu0
      %2718 = vmatprep.mubr.bf16.mxu0 0
      %2719 = vmatmul.mubr.bf16.gmra.mxu0 %v2630
      %v2720 = vpop.f32.mrf.mxu0
      %v2721 = vadd.f32 %v2597, %v2720
      %v2722 = vpop.f32.mrf.mxu0
      %v2723 = vpop.f32.mrf.mxu0
      %v2724 = vadd.f32 %v2600, %v2723
      %v2725 = vpop.f32.mrf.mxu0
      %2726 = vmatprep.mubr.bf16.mxu0 0
      %2727 = vmatmul.mubr.bf16.gmra.mxu0 %v2633
      %v2728 = vpop.f32.mrf.mxu0
      %v2729 = vadd.f32 %v2605, %v2728
      %v2730 = vpop.f32.mrf.mxu0
      %v2731 = vpop.f32.mrf.mxu0
      %v2732 = vadd.f32 %v2608, %v2731
      %v2733 = vpop.f32.mrf.mxu0
      %2734 = vdwg.mxu0
      %s2735 = scalar_lea.vmem %s5, 32
      %v2736 = vld [vmem:[%s2735] sm:$0xf]
      %v2737 = vld [vmem:[%s2735 + $0x4] sm:$0xf]
      %v2738 = vld [vmem:[%s2735 + $0x8] sm:$0xf]
      %v2739 = vld [vmem:[%s2735 + $0xc] sm:$0xf]
      %v2744 = vunpack.c.l.b16 %v2736
      %v2745 = vunpack.c.l.b16 %v2737
      %v2746 = vunpack.c.l.b16 %v2738
      %v2747 = vunpack.c.l.b16 %v2739
      %v2748 = vpack.c.b16 %v2745, %v2744
      %v2749 = vpack.c.b16 %v2747, %v2746
      %2752 = vmatprep.subr.bf16.mxu0 0
      %2753 = vmatpush1.bf16.msra.mxu0 0
      %2754 = vmatprep.subr.bf16.mxu0 0
      %2755 = vmatpush1.bf16.msra.mxu0 0
      %2756 = vmatprep.subr.bf16.mxu0 0
      %2757 = vmatpush1.bf16.msra.mxu0 0
      %2758 = vmatprep.subr.bf16.mxu0 0
      %2759 = vmatpush1.bf16.msra.mxu0 0
      %2760 = vmatprep.subr.bf16.mxu0 0
      %2761 = vmatpush1.bf16.msra.mxu0 0
      %2762 = vmatprep.subr.bf16.mxu0 0
      %2763 = vmatpush1.bf16.msra.mxu0 0
      %2764 = vmatprep.subr.bf16.mxu0 0
      %2765 = vmatpush1.bf16.msra.mxu0 %v2749
      %2766 = vmatprep.subr.bf16.mxu0 0
      %2767 = vmatpush1.bf16.msra.mxu0 %v2748
      %2768 = vmatprep.subr.bf16.mxu0 0
      %2769 = vmatpush2.bf16.msra.mxu0 0
      %2770 = vmatprep.subr.bf16.mxu0 0
      %2771 = vmatpush2.bf16.msra.mxu0 0
      %2772 = vmatprep.subr.bf16.mxu0 0
      %2773 = vmatpush2.bf16.msra.mxu0 0
      %2774 = vmatprep.subr.bf16.mxu0 0
      %2775 = vmatpush2.bf16.msra.mxu0 0
      %2776 = vmatprep.subr.bf16.mxu0 0
      %2777 = vmatpush2.bf16.msra.mxu0 0
      %2778 = vmatprep.subr.bf16.mxu0 0
      %2779 = vmatpush2.bf16.msra.mxu0 0
      %2780 = vmatprep.subr.bf16.mxu0 0
      %2781 = vmatpush2.bf16.msra.mxu0 0
      %2782 = vmatprep.subr.bf16.mxu0 0
      %2783 = vmatpush2.bf16.msra.mxu0 0
      %2784 = vmatprep.mubr.bf16.mxu0 0
      %2785 = vmatmul.mubr.bf16.gmra.mxu0 %v880
      %v2786 = vpop.f32.mrf.mxu0
      %v2787 = vadd.f32 0.0, %v2786
      %v2788 = vpop.f32.mrf.mxu0
      %v2789 = vpop.f32.mrf.mxu0
      %v2790 = vadd.f32 0.0, %v2789
      %v2791 = vpop.f32.mrf.mxu0
      %2792 = vmatprep.mubr.bf16.mxu0 0
      %2793 = vmatmul.mubr.bf16.gmra.mxu0 %v883
      %v2794 = vpop.f32.mrf.mxu0
      %v2795 = vadd.f32 0.0, %v2794
      %v2796 = vpop.f32.mrf.mxu0
      %v2797 = vpop.f32.mrf.mxu0
      %v2798 = vadd.f32 0.0, %v2797
      %v2799 = vpop.f32.mrf.mxu0
      %2800 = vmatprep.mubr.bf16.mxu0 0
      %2801 = vmatmul.mubr.bf16.gmra.mxu0 %v886
      %v2802 = vpop.f32.mrf.mxu0
      %v2803 = vadd.f32 0.0, %v2802
      %v2804 = vpop.f32.mrf.mxu0
      %v2805 = vpop.f32.mrf.mxu0
      %v2806 = vadd.f32 0.0, %v2805
      %v2807 = vpop.f32.mrf.mxu0
      %2808 = vmatprep.mubr.bf16.mxu0 0
      %2809 = vmatmul.mubr.bf16.gmra.mxu0 %v889
      %v2810 = vpop.f32.mrf.mxu0
      %v2811 = vadd.f32 0.0, %v2810
      %v2812 = vpop.f32.mrf.mxu0
      %v2813 = vpop.f32.mrf.mxu0
      %v2814 = vadd.f32 0.0, %v2813
      %v2815 = vpop.f32.mrf.mxu0
      %2816 = vmatprep.mubr.bf16.mxu0 0
      %2817 = vmatmul.mubr.bf16.gmra.mxu0 %v892
      %v2818 = vpop.f32.mrf.mxu0
      %v2819 = vadd.f32 0.0, %v2818
      %v2820 = vpop.f32.mrf.mxu0
      %v2821 = vpop.f32.mrf.mxu0
      %v2822 = vadd.f32 0.0, %v2821
      %v2823 = vpop.f32.mrf.mxu0
      %2824 = vmatprep.mubr.bf16.mxu0 0
      %2825 = vmatmul.mubr.bf16.gmra.mxu0 %v895
      %v2826 = vpop.f32.mrf.mxu0
      %v2827 = vadd.f32 0.0, %v2826
      %v2828 = vpop.f32.mrf.mxu0
      %v2829 = vpop.f32.mrf.mxu0
      %v2830 = vadd.f32 0.0, %v2829
      %v2831 = vpop.f32.mrf.mxu0
      %2832 = vmatprep.mubr.bf16.mxu0 0
      %2833 = vmatmul.mubr.bf16.gmra.mxu0 %v898
      %v2834 = vpop.f32.mrf.mxu0
      %v2835 = vadd.f32 0.0, %v2834
      %v2836 = vpop.f32.mrf.mxu0
      %v2837 = vpop.f32.mrf.mxu0
      %v2838 = vadd.f32 0.0, %v2837
      %v2839 = vpop.f32.mrf.mxu0
      %2840 = vmatprep.mubr.bf16.mxu0 0
      %2841 = vmatmul.mubr.bf16.gmra.mxu0 %v901
      %v2842 = vpop.f32.mrf.mxu0
      %v2843 = vadd.f32 0.0, %v2842
      %v2844 = vpop.f32.mrf.mxu0
      %v2845 = vpop.f32.mrf.mxu0
      %v2846 = vadd.f32 0.0, %v2845
      %v2847 = vpop.f32.mrf.mxu0
      %2848 = vdwg.mxu0
      %s2849 = scalar_lea.vmem %s6, 32
      %v2850 = vld [vmem:[%s2849] sm:$0xf]
      %v2851 = vld [vmem:[%s2849 + $0x4] sm:$0xf]
      %v2852 = vld [vmem:[%s2849 + $0x8] sm:$0xf]
      %v2853 = vld [vmem:[%s2849 + $0xc] sm:$0xf]
      %v2858 = vunpack.c.l.b16 %v2850
      %v2859 = vunpack.c.l.b16 %v2851
      %v2860 = vunpack.c.l.b16 %v2852
      %v2861 = vunpack.c.l.b16 %v2853
      %v2862 = vpack.c.b16 %v2859, %v2858
      %v2863 = vpack.c.b16 %v2861, %v2860
      %2866 = vmatprep.subr.bf16.mxu0 0
      %2867 = vmatpush1.bf16.msra.mxu0 0
      %2868 = vmatprep.subr.bf16.mxu0 0
      %2869 = vmatpush1.bf16.msra.mxu0 0
      %2870 = vmatprep.subr.bf16.mxu0 0
      %2871 = vmatpush1.bf16.msra.mxu0 0
      %2872 = vmatprep.subr.bf16.mxu0 0
      %2873 = vmatpush1.bf16.msra.mxu0 0
      %2874 = vmatprep.subr.bf16.mxu0 0
      %2875 = vmatpush1.bf16.msra.mxu0 0
      %2876 = vmatprep.subr.bf16.mxu0 0
      %2877 = vmatpush1.bf16.msra.mxu0 0
      %2878 = vmatprep.subr.bf16.mxu0 0
      %2879 = vmatpush1.bf16.msra.mxu0 %v2863
      %2880 = vmatprep.subr.bf16.mxu0 0
      %2881 = vmatpush1.bf16.msra.mxu0 %v2862
      %2882 = vmatprep.subr.bf16.mxu0 0
      %2883 = vmatpush2.bf16.msra.mxu0 0
      %2884 = vmatprep.subr.bf16.mxu0 0
      %2885 = vmatpush2.bf16.msra.mxu0 0
      %2886 = vmatprep.subr.bf16.mxu0 0
      %2887 = vmatpush2.bf16.msra.mxu0 0
      %2888 = vmatprep.subr.bf16.mxu0 0
      %2889 = vmatpush2.bf16.msra.mxu0 0
      %2890 = vmatprep.subr.bf16.mxu0 0
      %2891 = vmatpush2.bf16.msra.mxu0 0
      %2892 = vmatprep.subr.bf16.mxu0 0
      %2893 = vmatpush2.bf16.msra.mxu0 0
      %2894 = vmatprep.subr.bf16.mxu0 0
      %2895 = vmatpush2.bf16.msra.mxu0 0
      %2896 = vmatprep.subr.bf16.mxu0 0
      %2897 = vmatpush2.bf16.msra.mxu0 0
      %2898 = vmatprep.mubr.bf16.mxu0 0
      %2899 = vmatmul.mubr.bf16.gmra.mxu0 %v880
      %v2900 = vpop.f32.mrf.mxu0
      %v2901 = vadd.f32 0.0, %v2900
      %v2902 = vpop.f32.mrf.mxu0
      %v2903 = vpop.f32.mrf.mxu0
      %v2904 = vadd.f32 0.0, %v2903
      %v2905 = vpop.f32.mrf.mxu0
      %2906 = vmatprep.mubr.bf16.mxu0 0
      %2907 = vmatmul.mubr.bf16.gmra.mxu0 %v883
      %v2908 = vpop.f32.mrf.mxu0
      %v2909 = vadd.f32 0.0, %v2908
      %v2910 = vpop.f32.mrf.mxu0
      %v2911 = vpop.f32.mrf.mxu0
      %v2912 = vadd.f32 0.0, %v2911
      %v2913 = vpop.f32.mrf.mxu0
      %2914 = vmatprep.mubr.bf16.mxu0 0
      %2915 = vmatmul.mubr.bf16.gmra.mxu0 %v886
      %v2916 = vpop.f32.mrf.mxu0
      %v2917 = vadd.f32 0.0, %v2916
      %v2918 = vpop.f32.mrf.mxu0
      %v2919 = vpop.f32.mrf.mxu0
      %v2920 = vadd.f32 0.0, %v2919
      %v2921 = vpop.f32.mrf.mxu0
      %2922 = vmatprep.mubr.bf16.mxu0 0
      %2923 = vmatmul.mubr.bf16.gmra.mxu0 %v889
      %v2924 = vpop.f32.mrf.mxu0
      %v2925 = vadd.f32 0.0, %v2924
      %v2926 = vpop.f32.mrf.mxu0
      %v2927 = vpop.f32.mrf.mxu0
      %v2928 = vadd.f32 0.0, %v2927
      %v2929 = vpop.f32.mrf.mxu0
      %2930 = vmatprep.mubr.bf16.mxu0 0
      %2931 = vmatmul.mubr.bf16.gmra.mxu0 %v892
      %v2932 = vpop.f32.mrf.mxu0
      %v2933 = vadd.f32 0.0, %v2932
      %v2934 = vpop.f32.mrf.mxu0
      %v2935 = vpop.f32.mrf.mxu0
      %v2936 = vadd.f32 0.0, %v2935
      %v2937 = vpop.f32.mrf.mxu0
      %2938 = vmatprep.mubr.bf16.mxu0 0
      %2939 = vmatmul.mubr.bf16.gmra.mxu0 %v895
      %v2940 = vpop.f32.mrf.mxu0
      %v2941 = vadd.f32 0.0, %v2940
      %v2942 = vpop.f32.mrf.mxu0
      %v2943 = vpop.f32.mrf.mxu0
      %v2944 = vadd.f32 0.0, %v2943
      %v2945 = vpop.f32.mrf.mxu0
      %2946 = vmatprep.mubr.bf16.mxu0 0
      %2947 = vmatmul.mubr.bf16.gmra.mxu0 %v898
      %v2948 = vpop.f32.mrf.mxu0
      %v2949 = vadd.f32 0.0, %v2948
      %v2950 = vpop.f32.mrf.mxu0
      %v2951 = vpop.f32.mrf.mxu0
      %v2952 = vadd.f32 0.0, %v2951
      %v2953 = vpop.f32.mrf.mxu0
      %2954 = vmatprep.mubr.bf16.mxu0 0
      %2955 = vmatmul.mubr.bf16.gmra.mxu0 %v901
      %v2956 = vpop.f32.mrf.mxu0
      %v2957 = vadd.f32 0.0, %v2956
      %v2958 = vpop.f32.mrf.mxu0
      %v2959 = vpop.f32.mrf.mxu0
      %v2960 = vadd.f32 0.0, %v2959
      %v2961 = vpop.f32.mrf.mxu0
      %2962 = vdwg.mxu0
      %s2963 = scalar_lea.vmem %s7, 32
      %v2964 = vld [vmem:[%s2963] sm:$0xf]
      %v2965 = vld [vmem:[%s2963 + $0x4] sm:$0xf]
      %v2966 = vld [vmem:[%s2963 + $0x8] sm:$0xf]
      %v2967 = vld [vmem:[%s2963 + $0xc] sm:$0xf]
      %v2972 = vunpack.c.l.b16 %v2964
      %v2973 = vunpack.c.l.b16 %v2965
      %v2974 = vunpack.c.l.b16 %v2966
      %v2975 = vunpack.c.l.b16 %v2967
      %v2976 = vpack.c.b16 %v2973, %v2972
      %v2977 = vpack.c.b16 %v2975, %v2974
      %2980 = vmatprep.subr.bf16.mxu0 0
      %2981 = vmatpush1.bf16.msra.mxu0 0
      %2982 = vmatprep.subr.bf16.mxu0 0
      %2983 = vmatpush1.bf16.msra.mxu0 0
      %2984 = vmatprep.subr.bf16.mxu0 0
      %2985 = vmatpush1.bf16.msra.mxu0 0
      %2986 = vmatprep.subr.bf16.mxu0 0
      %2987 = vmatpush1.bf16.msra.mxu0 0
      %2988 = vmatprep.subr.bf16.mxu0 0
      %2989 = vmatpush1.bf16.msra.mxu0 0
      %2990 = vmatprep.subr.bf16.mxu0 0
      %2991 = vmatpush1.bf16.msra.mxu0 0
      %2992 = vmatprep.subr.bf16.mxu0 0
      %2993 = vmatpush1.bf16.msra.mxu0 %v2977
      %2994 = vmatprep.subr.bf16.mxu0 0
      %2995 = vmatpush1.bf16.msra.mxu0 %v2976
      %2996 = vmatprep.subr.bf16.mxu0 0
      %2997 = vmatpush2.bf16.msra.mxu0 0
      %2998 = vmatprep.subr.bf16.mxu0 0
      %2999 = vmatpush2.bf16.msra.mxu0 0
      %3000 = vmatprep.subr.bf16.mxu0 0
      %3001 = vmatpush2.bf16.msra.mxu0 0
      %3002 = vmatprep.subr.bf16.mxu0 0
      %3003 = vmatpush2.bf16.msra.mxu0 0
      %3004 = vmatprep.subr.bf16.mxu0 0
      %3005 = vmatpush2.bf16.msra.mxu0 0
      %3006 = vmatprep.subr.bf16.mxu0 0
      %3007 = vmatpush2.bf16.msra.mxu0 0
      %3008 = vmatprep.subr.bf16.mxu0 0
      %3009 = vmatpush2.bf16.msra.mxu0 0
      %3010 = vmatprep.subr.bf16.mxu0 0
      %3011 = vmatpush2.bf16.msra.mxu0 0
      %3012 = vmatprep.mubr.bf16.mxu0 0
      %3013 = vmatmul.mubr.bf16.gmra.mxu0 %v880
      %v3014 = vpop.f32.mrf.mxu0
      %v3015 = vadd.f32 0.0, %v3014
      %v3016 = vpop.f32.mrf.mxu0
      %v3017 = vpop.f32.mrf.mxu0
      %v3018 = vadd.f32 0.0, %v3017
      %v3019 = vpop.f32.mrf.mxu0
      %3020 = vmatprep.mubr.bf16.mxu0 0
      %3021 = vmatmul.mubr.bf16.gmra.mxu0 %v883
      %v3022 = vpop.f32.mrf.mxu0
      %v3023 = vadd.f32 0.0, %v3022
      %v3024 = vpop.f32.mrf.mxu0
      %v3025 = vpop.f32.mrf.mxu0
      %v3026 = vadd.f32 0.0, %v3025
      %v3027 = vpop.f32.mrf.mxu0
      %3028 = vmatprep.mubr.bf16.mxu0 0
      %3029 = vmatmul.mubr.bf16.gmra.mxu0 %v886
      %v3030 = vpop.f32.mrf.mxu0
      %v3031 = vadd.f32 0.0, %v3030
      %v3032 = vpop.f32.mrf.mxu0
      %v3033 = vpop.f32.mrf.mxu0
      %v3034 = vadd.f32 0.0, %v3033
      %v3035 = vpop.f32.mrf.mxu0
      %3036 = vmatprep.mubr.bf16.mxu0 0
      %3037 = vmatmul.mubr.bf16.gmra.mxu0 %v889
      %v3038 = vpop.f32.mrf.mxu0
      %v3039 = vadd.f32 0.0, %v3038
      %v3040 = vpop.f32.mrf.mxu0
      %v3041 = vpop.f32.mrf.mxu0
      %v3042 = vadd.f32 0.0, %v3041
      %v3043 = vpop.f32.mrf.mxu0
      %3044 = vmatprep.mubr.bf16.mxu0 0
      %3045 = vmatmul.mubr.bf16.gmra.mxu0 %v892
      %v3046 = vpop.f32.mrf.mxu0
      %v3047 = vadd.f32 0.0, %v3046
      %v3048 = vpop.f32.mrf.mxu0
      %v3049 = vpop.f32.mrf.mxu0
      %v3050 = vadd.f32 0.0, %v3049
      %v3051 = vpop.f32.mrf.mxu0
      %3052 = vmatprep.mubr.bf16.mxu0 0
      %3053 = vmatmul.mubr.bf16.gmra.mxu0 %v895
      %v3054 = vpop.f32.mrf.mxu0
      %v3055 = vadd.f32 0.0, %v3054
      %v3056 = vpop.f32.mrf.mxu0
      %v3057 = vpop.f32.mrf.mxu0
      %v3058 = vadd.f32 0.0, %v3057
      %v3059 = vpop.f32.mrf.mxu0
      %3060 = vmatprep.mubr.bf16.mxu0 0
      %3061 = vmatmul.mubr.bf16.gmra.mxu0 %v898
      %v3062 = vpop.f32.mrf.mxu0
      %v3063 = vadd.f32 0.0, %v3062
      %v3064 = vpop.f32.mrf.mxu0
      %v3065 = vpop.f32.mrf.mxu0
      %v3066 = vadd.f32 0.0, %v3065
      %v3067 = vpop.f32.mrf.mxu0
      %3068 = vmatprep.mubr.bf16.mxu0 0
      %3069 = vmatmul.mubr.bf16.gmra.mxu0 %v901
      %v3070 = vpop.f32.mrf.mxu0
      %v3071 = vadd.f32 0.0, %v3070
      %v3072 = vpop.f32.mrf.mxu0
      %v3073 = vpop.f32.mrf.mxu0
      %v3074 = vadd.f32 0.0, %v3073
      %v3075 = vpop.f32.mrf.mxu0
      %3076 = vdwg.mxu0
      %v3077 = vpack.c.bf16 %v2790, %v2787
      %v3078 = vpack.c.bf16 %v2798, %v2795
      %v3079 = vpack.c.bf16 %v2806, %v2803
      %v3080 = vpack.c.bf16 %v2814, %v2811
      %v3081 = vpack.c.bf16 %v2822, %v2819
      %v3082 = vpack.c.bf16 %v2830, %v2827
      %v3083 = vpack.c.bf16 %v2838, %v2835
      %v3084 = vpack.c.bf16 %v2846, %v2843
      %v3085 = vpack.c.bf16 %v2904, %v2901
      %v3086 = vpack.c.bf16 %v2912, %v2909
      %v3087 = vpack.c.bf16 %v2920, %v2917
      %v3088 = vpack.c.bf16 %v2928, %v2925
      %v3089 = vpack.c.bf16 %v2936, %v2933
      %v3090 = vpack.c.bf16 %v2944, %v2941
      %v3091 = vpack.c.bf16 %v2952, %v2949
      %v3092 = vpack.c.bf16 %v2960, %v2957
      %v3094 = vsel %vm712, %v3077, 0
      %v3097 = vsel %vm712, %v3078, 0
      %v3100 = vsel %vm712, %v3079, 0
      %v3103 = vsel %vm712, %v3080, 0
      %v3106 = vsel %vm712, %v3081, 0
      %v3109 = vsel %vm712, %v3082, 0
      %v3112 = vsel %vm712, %v3083, 0
      %v3115 = vsel %vm712, %v3084, 0
      %v3118 = vsel %vm712, %v3085, 0
      %v3121 = vsel %vm712, %v3086, 0
      %v3124 = vsel %vm712, %v3087, 0
      %v3127 = vsel %vm712, %v3088, 0
      %v3130 = vsel %vm712, %v3089, 0
      %v3133 = vsel %vm712, %v3090, 0
      %v3136 = vsel %vm712, %v3091, 0
      %v3139 = vsel %vm712, %v3092, 0
      %3141 = vmatprep.subr.bf16.mxu0 0
      %3142 = vmatpush1.bf16.xpose.msra.mxu0 %v3139
      %3143 = vmatprep.subr.bf16.mxu0 0
      %3144 = vmatpush1.bf16.xpose.msra.mxu0 %v3136
      %3145 = vmatprep.subr.bf16.mxu0 0
      %3146 = vmatpush1.bf16.xpose.msra.mxu0 %v3133
      %3147 = vmatprep.subr.bf16.mxu0 0
      %3148 = vmatpush1.bf16.xpose.msra.mxu0 %v3130
      %3149 = vmatprep.subr.bf16.mxu0 0
      %3150 = vmatpush1.bf16.xpose.msra.mxu0 %v3127
      %3151 = vmatprep.subr.bf16.mxu0 0
      %3152 = vmatpush1.bf16.xpose.msra.mxu0 %v3124
      %3153 = vmatprep.subr.bf16.mxu0 0
      %3154 = vmatpush1.bf16.xpose.msra.mxu0 %v3121
      %3155 = vmatprep.subr.bf16.mxu0 0
      %3156 = vmatpush1.bf16.xpose.msra.mxu0 %v3118
      %3157 = vmatprep.subr.bf16.mxu0 0
      %3158 = vmatpush2.bf16.xpose.msra.mxu0 0
      %3159 = vmatprep.subr.bf16.mxu0 0
      %3160 = vmatpush2.bf16.xpose.msra.mxu0 0
      %3161 = vmatprep.subr.bf16.mxu0 0
      %3162 = vmatpush2.bf16.xpose.msra.mxu0 0
      %3163 = vmatprep.subr.bf16.mxu0 0
      %3164 = vmatpush2.bf16.xpose.msra.mxu0 0
      %3165 = vmatprep.subr.bf16.mxu0 0
      %3166 = vmatpush2.bf16.xpose.msra.mxu0 0
      %3167 = vmatprep.subr.bf16.mxu0 0
      %3168 = vmatpush2.bf16.xpose.msra.mxu0 0
      %3169 = vmatprep.subr.bf16.mxu0 0
      %3170 = vmatpush2.bf16.xpose.msra.mxu0 0
      %3171 = vmatprep.subr.bf16.mxu0 0
      %3172 = vmatpush2.bf16.xpose.msra.mxu0 0
      %3173 = vmatprep.mubr.bf16.mxu0 0
      %3174 = vmatmul.mubr.bf16.gmra.mxu0 %v3094
      %v3175 = vpop.f32.mrf.mxu0
      %v3176 = vadd.f32 0.0, %v3175
      %v3177 = vpop.f32.mrf.mxu0
      %v3178 = vpop.f32.mrf.mxu0
      %v3179 = vadd.f32 0.0, %v3178
      %v3180 = vpop.f32.mrf.mxu0
      %3181 = vmatprep.mubr.bf16.mxu0 0
      %3182 = vmatmul.mubr.bf16.gmra.mxu0 %v3097
      %v3183 = vpop.f32.mrf.mxu0
      %v3184 = vadd.f32 0.0, %v3183
      %v3185 = vpop.f32.mrf.mxu0
      %v3186 = vpop.f32.mrf.mxu0
      %v3187 = vadd.f32 0.0, %v3186
      %v3188 = vpop.f32.mrf.mxu0
      %3189 = vmatprep.mubr.bf16.mxu0 0
      %3190 = vmatmul.mubr.bf16.gmra.mxu0 %v3100
      %v3191 = vpop.f32.mrf.mxu0
      %v3192 = vadd.f32 0.0, %v3191
      %v3193 = vpop.f32.mrf.mxu0
      %v3194 = vpop.f32.mrf.mxu0
      %v3195 = vadd.f32 0.0, %v3194
      %v3196 = vpop.f32.mrf.mxu0
      %3197 = vmatprep.mubr.bf16.mxu0 0
      %3198 = vmatmul.mubr.bf16.gmra.mxu0 %v3103
      %v3199 = vpop.f32.mrf.mxu0
      %v3200 = vadd.f32 0.0, %v3199
      %v3201 = vpop.f32.mrf.mxu0
      %v3202 = vpop.f32.mrf.mxu0
      %v3203 = vadd.f32 0.0, %v3202
      %v3204 = vpop.f32.mrf.mxu0
      %3205 = vmatprep.mubr.bf16.mxu0 0
      %3206 = vmatmul.mubr.bf16.gmra.mxu0 %v3106
      %v3207 = vpop.f32.mrf.mxu0
      %v3208 = vadd.f32 0.0, %v3207
      %v3209 = vpop.f32.mrf.mxu0
      %v3210 = vpop.f32.mrf.mxu0
      %v3211 = vadd.f32 0.0, %v3210
      %v3212 = vpop.f32.mrf.mxu0
      %3213 = vmatprep.mubr.bf16.mxu0 0
      %3214 = vmatmul.mubr.bf16.gmra.mxu0 %v3109
      %v3215 = vpop.f32.mrf.mxu0
      %v3216 = vadd.f32 0.0, %v3215
      %v3217 = vpop.f32.mrf.mxu0
      %v3218 = vpop.f32.mrf.mxu0
      %v3219 = vadd.f32 0.0, %v3218
      %v3220 = vpop.f32.mrf.mxu0
      %3221 = vmatprep.mubr.bf16.mxu0 0
      %3222 = vmatmul.mubr.bf16.gmra.mxu0 %v3112
      %v3223 = vpop.f32.mrf.mxu0
      %v3224 = vadd.f32 0.0, %v3223
      %v3225 = vpop.f32.mrf.mxu0
      %v3226 = vpop.f32.mrf.mxu0
      %v3227 = vadd.f32 0.0, %v3226
      %v3228 = vpop.f32.mrf.mxu0
      %3229 = vmatprep.mubr.bf16.mxu0 0
      %3230 = vmatmul.mubr.bf16.gmra.mxu0 %v3115
      %v3231 = vpop.f32.mrf.mxu0
      %v3232 = vadd.f32 0.0, %v3231
      %v3233 = vpop.f32.mrf.mxu0
      %v3234 = vpop.f32.mrf.mxu0
      %v3235 = vadd.f32 0.0, %v3234
      %v3236 = vpop.f32.mrf.mxu0
      %3237 = vdwg.mxu0
      %v3238 = vmul.f32 %v3176, 0.35355338
      %v3239 = vmul.f32 %v3179, 0.35355338
      %v3240 = vmul.f32 %v3184, 0.35355338
      %v3241 = vmul.f32 %v3187, 0.35355338
      %v3242 = vmul.f32 %v3192, 0.35355338
      %v3243 = vmul.f32 %v3195, 0.35355338
      %v3244 = vmul.f32 %v3200, 0.35355338
      %v3245 = vmul.f32 %v3203, 0.35355338
      %v3246 = vmul.f32 %v3208, 0.35355338
      %v3247 = vmul.f32 %v3211, 0.35355338
      %v3248 = vmul.f32 %v3216, 0.35355338
      %v3249 = vmul.f32 %v3219, 0.35355338
      %v3250 = vmul.f32 %v3224, 0.35355338
      %v3251 = vmul.f32 %v3227, 0.35355338
      %v3252 = vmul.f32 %v3232, 0.35355338
      %v3253 = vmul.f32 %v3235, 0.35355338
      %v3254 = vadd.f32 %v3238, %v838
      %v3255 = vadd.f32 %v3239, %v839
      %v3256 = vadd.f32 %v3240, %v840
      %v3257 = vadd.f32 %v3241, %v841
      %v3258 = vadd.f32 %v3242, %v842
      %v3259 = vadd.f32 %v3243, %v843
      %v3260 = vadd.f32 %v3244, %v844
      %v3261 = vadd.f32 %v3245, %v845
      %v3262 = vadd.f32 %v3246, %v846
      %v3263 = vadd.f32 %v3247, %v847
      %v3264 = vadd.f32 %v3248, %v848
      %v3265 = vadd.f32 %v3249, %v849
      %v3266 = vadd.f32 %v3250, %v850
      %v3267 = vadd.f32 %v3251, %v851
      %v3268 = vadd.f32 %v3252, %v852
      %v3269 = vadd.f32 %v3253, %v853
      %3270 = vmax.xlane.f32.xlu0 %v3254
      %v3271 = vpop.xlane.xlu0 %3270
      %3272 = vmax.xlane.f32.xlu0 %v3255
      %v3273 = vpop.xlane.xlu0 %3272
      %3274 = vmax.xlane.f32.xlu0 %v3256
      %v3275 = vpop.xlane.xlu0 %3274
      %3276 = vmax.xlane.f32.xlu0 %v3257
      %v3277 = vpop.xlane.xlu0 %3276
      %3278 = vmax.xlane.f32.xlu0 %v3258
      %v3279 = vpop.xlane.xlu0 %3278
      %3280 = vmax.xlane.f32.xlu0 %v3259
      %v3281 = vpop.xlane.xlu0 %3280
      %3282 = vmax.xlane.f32.xlu0 %v3260
      %v3283 = vpop.xlane.xlu0 %3282
      %3284 = vmax.xlane.f32.xlu0 %v3261
      %v3285 = vpop.xlane.xlu0 %3284
      %3286 = vmax.xlane.f32.xlu0 %v3262
      %v3287 = vpop.xlane.xlu0 %3286
      %3288 = vmax.xlane.f32.xlu0 %v3263
      %v3289 = vpop.xlane.xlu0 %3288
      %3290 = vmax.xlane.f32.xlu0 %v3264
      %v3291 = vpop.xlane.xlu0 %3290
      %3292 = vmax.xlane.f32.xlu0 %v3265
      %v3293 = vpop.xlane.xlu0 %3292
      %3294 = vmax.xlane.f32.xlu0 %v3266
      %v3295 = vpop.xlane.xlu0 %3294
      %3296 = vmax.xlane.f32.xlu0 %v3267
      %v3297 = vpop.xlane.xlu0 %3296
      %3298 = vmax.xlane.f32.xlu0 %v3268
      %v3299 = vpop.xlane.xlu0 %3298
      %3300 = vmax.xlane.f32.xlu0 %v3269
      %v3301 = vpop.xlane.xlu0 %3300
      %v3302 = vsub.f32 %v3254, %v3271
      %v3303 = vsub.f32 %v3255, %v3273
      %v3304 = vsub.f32 %v3256, %v3275
      %v3305 = vsub.f32 %v3257, %v3277
      %v3306 = vsub.f32 %v3258, %v3279
      %v3307 = vsub.f32 %v3259, %v3281
      %v3308 = vsub.f32 %v3260, %v3283
      %v3309 = vsub.f32 %v3261, %v3285
      %v3310 = vsub.f32 %v3262, %v3287
      %v3311 = vsub.f32 %v3263, %v3289
      %v3312 = vsub.f32 %v3264, %v3291
      %v3313 = vsub.f32 %v3265, %v3293
      %v3314 = vsub.f32 %v3266, %v3295
      %v3315 = vsub.f32 %v3267, %v3297
      %v3316 = vsub.f32 %v3268, %v3299
      %v3317 = vsub.f32 %v3269, %v3301
      %v3318 = vmul.f32 %v3302, 1.442695
      %v3319 = vpow.pop %v3318
      %v3320 = vmul.f32 %v3303, 1.442695
      %v3321 = vpow.pop %v3320
      %v3322 = vmul.f32 %v3304, 1.442695
      %v3323 = vpow.pop %v3322
      %v3324 = vmul.f32 %v3305, 1.442695
      %v3325 = vpow.pop %v3324
      %v3326 = vmul.f32 %v3306, 1.442695
      %v3327 = vpow.pop %v3326
      %v3328 = vmul.f32 %v3307, 1.442695
      %v3329 = vpow.pop %v3328
      %v3330 = vmul.f32 %v3308, 1.442695
      %v3331 = vpow.pop %v3330
      %v3332 = vmul.f32 %v3309, 1.442695
      %v3333 = vpow.pop %v3332
      %v3334 = vmul.f32 %v3310, 1.442695
      %v3335 = vpow.pop %v3334
      %v3336 = vmul.f32 %v3311, 1.442695
      %v3337 = vpow.pop %v3336
      %v3338 = vmul.f32 %v3312, 1.442695
      %v3339 = vpow.pop %v3338
      %v3340 = vmul.f32 %v3313, 1.442695
      %v3341 = vpow.pop %v3340
      %v3342 = vmul.f32 %v3314, 1.442695
      %v3343 = vpow.pop %v3342
      %v3344 = vmul.f32 %v3315, 1.442695
      %v3345 = vpow.pop %v3344
      %v3346 = vmul.f32 %v3316, 1.442695
      %v3347 = vpow.pop %v3346
      %v3348 = vmul.f32 %v3317, 1.442695
      %v3349 = vpow.pop %v3348
      %3350 = vadd.xlane.f32.xlu0 %v3319
      %v3351 = vpop.xlane.xlu0 %3350
      %3352 = vadd.xlane.f32.xlu0 %v3321
      %v3353 = vpop.xlane.xlu0 %3352
      %3354 = vadd.xlane.f32.xlu0 %v3323
      %v3355 = vpop.xlane.xlu0 %3354
      %3356 = vadd.xlane.f32.xlu0 %v3325
      %v3357 = vpop.xlane.xlu0 %3356
      %3358 = vadd.xlane.f32.xlu0 %v3327
      %v3359 = vpop.xlane.xlu0 %3358
      %3360 = vadd.xlane.f32.xlu0 %v3329
      %v3361 = vpop.xlane.xlu0 %3360
      %3362 = vadd.xlane.f32.xlu0 %v3331
      %v3363 = vpop.xlane.xlu0 %3362
      %3364 = vadd.xlane.f32.xlu0 %v3333
      %v3365 = vpop.xlane.xlu0 %3364
      %3366 = vadd.xlane.f32.xlu0 %v3335
      %v3367 = vpop.xlane.xlu0 %3366
      %3368 = vadd.xlane.f32.xlu0 %v3337
      %v3369 = vpop.xlane.xlu0 %3368
      %3370 = vadd.xlane.f32.xlu0 %v3339
      %v3371 = vpop.xlane.xlu0 %3370
      %3372 = vadd.xlane.f32.xlu0 %v3341
      %v3373 = vpop.xlane.xlu0 %3372
      %3374 = vadd.xlane.f32.xlu0 %v3343
      %v3375 = vpop.xlane.xlu0 %3374
      %3376 = vadd.xlane.f32.xlu0 %v3345
      %v3377 = vpop.xlane.xlu0 %3376
      %3378 = vadd.xlane.f32.xlu0 %v3347
      %v3379 = vpop.xlane.xlu0 %3378
      %3380 = vadd.xlane.f32.xlu0 %v3349
      %v3381 = vpop.xlane.xlu0 %3380
      %v3382 = vrcp.pop %v3351
      %v3383 = vmul.f32 %v3319, %v3382
      %v3384 = vrcp.pop %v3353
      %v3385 = vmul.f32 %v3321, %v3384
      %v3386 = vrcp.pop %v3355
      %v3387 = vmul.f32 %v3323, %v3386
      %v3388 = vrcp.pop %v3357
      %v3389 = vmul.f32 %v3325, %v3388
      %v3390 = vrcp.pop %v3359
      %v3391 = vmul.f32 %v3327, %v3390
      %v3392 = vrcp.pop %v3361
      %v3393 = vmul.f32 %v3329, %v3392
      %v3394 = vrcp.pop %v3363
      %v3395 = vmul.f32 %v3331, %v3394
      %v3396 = vrcp.pop %v3365
      %v3397 = vmul.f32 %v3333, %v3396
      %v3398 = vrcp.pop %v3367
      %v3399 = vmul.f32 %v3335, %v3398
      %v3400 = vrcp.pop %v3369
      %v3401 = vmul.f32 %v3337, %v3400
      %v3402 = vrcp.pop %v3371
      %v3403 = vmul.f32 %v3339, %v3402
      %v3404 = vrcp.pop %v3373
      %v3405 = vmul.f32 %v3341, %v3404
      %v3406 = vrcp.pop %v3375
      %v3407 = vmul.f32 %v3343, %v3406
      %v3408 = vrcp.pop %v3377
      %v3409 = vmul.f32 %v3345, %v3408
      %v3410 = vrcp.pop %v3379
      %v3411 = vmul.f32 %v3347, %v3410
      %v3412 = vrcp.pop %v3381
      %v3413 = vmul.f32 %v3349, %v3412
      %v3414 = vpack.c.bf16 %v3385, %v3383
      %v3415 = vpack.c.bf16 %v3389, %v3387
      %v3416 = vpack.c.bf16 %v3393, %v3391
      %v3417 = vpack.c.bf16 %v3397, %v3395
      %v3418 = vpack.c.bf16 %v3401, %v3399
      %v3419 = vpack.c.bf16 %v3405, %v3403
      %v3420 = vpack.c.bf16 %v3409, %v3407
      %v3421 = vpack.c.bf16 %v3413, %v3411
      %v3422 = vpack.c.bf16 %v3018, %v3015
      %v3423 = vpack.c.bf16 %v3026, %v3023
      %v3424 = vpack.c.bf16 %v3034, %v3031
      %v3425 = vpack.c.bf16 %v3042, %v3039
      %v3426 = vpack.c.bf16 %v3050, %v3047
      %v3427 = vpack.c.bf16 %v3058, %v3055
      %v3428 = vpack.c.bf16 %v3066, %v3063
      %v3429 = vpack.c.bf16 %v3074, %v3071
      %3430 = vmatprep.subr.bf16.mxu0 0
      %3431 = vmatpush1.bf16.msra.mxu0 %v3429
      %3432 = vmatprep.subr.bf16.mxu0 0
      %3433 = vmatpush1.bf16.msra.mxu0 %v3428
      %3434 = vmatprep.subr.bf16.mxu0 0
      %3435 = vmatpush1.bf16.msra.mxu0 %v3427
      %3436 = vmatprep.subr.bf16.mxu0 0
      %3437 = vmatpush1.bf16.msra.mxu0 %v3426
      %3438 = vmatprep.subr.bf16.mxu0 0
      %3439 = vmatpush1.bf16.msra.mxu0 %v3425
      %3440 = vmatprep.subr.bf16.mxu0 0
      %3441 = vmatpush1.bf16.msra.mxu0 %v3424
      %3442 = vmatprep.subr.bf16.mxu0 0
      %3443 = vmatpush1.bf16.msra.mxu0 %v3423
      %3444 = vmatprep.subr.bf16.mxu0 0
      %3445 = vmatpush1.bf16.msra.mxu0 %v3422
      %3446 = vmatprep.subr.bf16.mxu0 0
      %3447 = vmatpush2.bf16.msra.mxu0 0
      %3448 = vmatprep.subr.bf16.mxu0 0
      %3449 = vmatpush2.bf16.msra.mxu0 0
      %3450 = vmatprep.subr.bf16.mxu0 0
      %3451 = vmatpush2.bf16.msra.mxu0 0
      %3452 = vmatprep.subr.bf16.mxu0 0
      %3453 = vmatpush2.bf16.msra.mxu0 0
      %3454 = vmatprep.subr.bf16.mxu0 0
      %3455 = vmatpush2.bf16.msra.mxu0 0
      %3456 = vmatprep.subr.bf16.mxu0 0
      %3457 = vmatpush2.bf16.msra.mxu0 0
      %3458 = vmatprep.subr.bf16.mxu0 0
      %3459 = vmatpush2.bf16.msra.mxu0 0
      %3460 = vmatprep.subr.bf16.mxu0 0
      %3461 = vmatpush2.bf16.msra.mxu0 0
      %3462 = vmatprep.mubr.bf16.mxu0 0
      %3463 = vmatmul.mubr.bf16.gmra.mxu0 %v3414
      %v3464 = vpop.f32.mrf.mxu0
      %v3465 = vadd.f32 0.0, %v3464
      %v3466 = vpop.f32.mrf.mxu0
      %v3467 = vpop.f32.mrf.mxu0
      %v3468 = vadd.f32 0.0, %v3467
      %v3469 = vpop.f32.mrf.mxu0
      %3470 = vmatprep.mubr.bf16.mxu0 0
      %3471 = vmatmul.mubr.bf16.gmra.mxu0 %v3415
      %v3472 = vpop.f32.mrf.mxu0
      %v3473 = vadd.f32 0.0, %v3472
      %v3474 = vpop.f32.mrf.mxu0
      %v3475 = vpop.f32.mrf.mxu0
      %v3476 = vadd.f32 0.0, %v3475
      %v3477 = vpop.f32.mrf.mxu0
      %3478 = vmatprep.mubr.bf16.mxu0 0
      %3479 = vmatmul.mubr.bf16.gmra.mxu0 %v3416
      %v3480 = vpop.f32.mrf.mxu0
      %v3481 = vadd.f32 0.0, %v3480
      %v3482 = vpop.f32.mrf.mxu0
      %v3483 = vpop.f32.mrf.mxu0
      %v3484 = vadd.f32 0.0, %v3483
      %v3485 = vpop.f32.mrf.mxu0
      %3486 = vmatprep.mubr.bf16.mxu0 0
      %3487 = vmatmul.mubr.bf16.gmra.mxu0 %v3417
      %v3488 = vpop.f32.mrf.mxu0
      %v3489 = vadd.f32 0.0, %v3488
      %v3490 = vpop.f32.mrf.mxu0
      %v3491 = vpop.f32.mrf.mxu0
      %v3492 = vadd.f32 0.0, %v3491
      %v3493 = vpop.f32.mrf.mxu0
      %3494 = vmatprep.mubr.bf16.mxu0 0
      %3495 = vmatmul.mubr.bf16.gmra.mxu0 %v3418
      %v3496 = vpop.f32.mrf.mxu0
      %v3497 = vadd.f32 0.0, %v3496
      %v3498 = vpop.f32.mrf.mxu0
      %v3499 = vpop.f32.mrf.mxu0
      %v3500 = vadd.f32 0.0, %v3499
      %v3501 = vpop.f32.mrf.mxu0
      %3502 = vmatprep.mubr.bf16.mxu0 0
      %3503 = vmatmul.mubr.bf16.gmra.mxu0 %v3419
      %v3504 = vpop.f32.mrf.mxu0
      %v3505 = vadd.f32 0.0, %v3504
      %v3506 = vpop.f32.mrf.mxu0
      %v3507 = vpop.f32.mrf.mxu0
      %v3508 = vadd.f32 0.0, %v3507
      %v3509 = vpop.f32.mrf.mxu0
      %3510 = vmatprep.mubr.bf16.mxu0 0
      %3511 = vmatmul.mubr.bf16.gmra.mxu0 %v3420
      %v3512 = vpop.f32.mrf.mxu0
      %v3513 = vadd.f32 0.0, %v3512
      %v3514 = vpop.f32.mrf.mxu0
      %v3515 = vpop.f32.mrf.mxu0
      %v3516 = vadd.f32 0.0, %v3515
      %v3517 = vpop.f32.mrf.mxu0
      %3518 = vmatprep.mubr.bf16.mxu0 0
      %3519 = vmatmul.mubr.bf16.gmra.mxu0 %v3421
      %v3520 = vpop.f32.mrf.mxu0
      %v3521 = vadd.f32 0.0, %v3520
      %v3522 = vpop.f32.mrf.mxu0
      %v3523 = vpop.f32.mrf.mxu0
      %v3524 = vadd.f32 0.0, %v3523
      %v3525 = vpop.f32.mrf.mxu0
      %3526 = vdwg.mxu0
      %s3527 = scalar_lea.vmem %s8, 8
      %v3528 = vld [vmem:[%s3527] sm:$0xf]
      %v3529 = vpack.c.bf16 %v3468, %v3465
      %v3530 = vpack.c.bf16 %v3476, %v3473
      %v3531 = vpack.c.bf16 %v3484, %v3481
      %v3532 = vpack.c.bf16 %v3492, %v3489
      %v3533 = vpack.c.bf16 %v3500, %v3497
      %v3534 = vpack.c.bf16 %v3508, %v3505
      %v3535 = vpack.c.bf16 %v3516, %v3513
      %v3536 = vpack.c.bf16 %v3524, %v3521
      %v3538 = vsel %vm712, %v3529, 0
      %v3541 = vsel %vm712, %v3530, 0
      %v3544 = vsel %vm712, %v3531, 0
      %v3547 = vsel %vm712, %v3532, 0
      %v3550 = vsel %vm712, %v3533, 0
      %v3553 = vsel %vm712, %v3534, 0
      %v3556 = vsel %vm712, %v3535, 0
      %v3559 = vsel %vm712, %v3536, 0
      %v3562 = vsel %vm737, %v3528, 0
      %3564 = vmatprep.subr.bf16.mxu0 0
      %3565 = vmatpush1.bf16.msra.mxu0 0
      %3566 = vmatprep.subr.bf16.mxu0 0
      %3567 = vmatpush1.bf16.msra.mxu0 0
      %3568 = vmatprep.subr.bf16.mxu0 0
      %3569 = vmatpush1.bf16.msra.mxu0 0
      %3570 = vmatprep.subr.bf16.mxu0 0
      %3571 = vmatpush1.bf16.msra.mxu0 0
      %3572 = vmatprep.subr.bf16.mxu0 0
      %3573 = vmatpush1.bf16.msra.mxu0 0
      %3574 = vmatprep.subr.bf16.mxu0 0
      %3575 = vmatpush1.bf16.msra.mxu0 0
      %3576 = vmatprep.subr.bf16.mxu0 0
      %3577 = vmatpush1.bf16.msra.mxu0 0
      %3578 = vmatprep.subr.bf16.mxu0 0
      %3579 = vmatpush1.bf16.msra.mxu0 %v3562
      %3580 = vmatprep.subr.bf16.mxu0 0
      %3581 = vmatpush2.bf16.msra.mxu0 0
      %3582 = vmatprep.subr.bf16.mxu0 0
      %3583 = vmatpush2.bf16.msra.mxu0 0
      %3584 = vmatprep.subr.bf16.mxu0 0
      %3585 = vmatpush2.bf16.msra.mxu0 0
      %3586 = vmatprep.subr.bf16.mxu0 0
      %3587 = vmatpush2.bf16.msra.mxu0 0
      %3588 = vmatprep.subr.bf16.mxu0 0
      %3589 = vmatpush2.bf16.msra.mxu0 0
      %3590 = vmatprep.subr.bf16.mxu0 0
      %3591 = vmatpush2.bf16.msra.mxu0 0
      %3592 = vmatprep.subr.bf16.mxu0 0
      %3593 = vmatpush2.bf16.msra.mxu0 0
      %3594 = vmatprep.subr.bf16.mxu0 0
      %3595 = vmatpush2.bf16.msra.mxu0 0
      %3596 = vmatprep.mubr.bf16.mxu0 0
      %3597 = vmatmul.mubr.bf16.gmra.mxu0 %v3538
      %v3598 = vpop.f32.mrf.mxu0
      %v3599 = vadd.f32 0.0, %v3598
      %v3600 = vpop.f32.mrf.mxu0
      %v3601 = vpop.f32.mrf.mxu0
      %v3602 = vadd.f32 0.0, %v3601
      %v3603 = vpop.f32.mrf.mxu0
      %3604 = vmatprep.mubr.bf16.mxu0 0
      %3605 = vmatmul.mubr.bf16.gmra.mxu0 %v3541
      %v3606 = vpop.f32.mrf.mxu0
      %v3607 = vadd.f32 0.0, %v3606
      %v3608 = vpop.f32.mrf.mxu0
      %v3609 = vpop.f32.mrf.mxu0
      %v3610 = vadd.f32 0.0, %v3609
      %v3611 = vpop.f32.mrf.mxu0
      %3612 = vmatprep.mubr.bf16.mxu0 0
      %3613 = vmatmul.mubr.bf16.gmra.mxu0 %v3544
      %v3614 = vpop.f32.mrf.mxu0
      %v3615 = vadd.f32 0.0, %v3614
      %v3616 = vpop.f32.mrf.mxu0
      %v3617 = vpop.f32.mrf.mxu0
      %v3618 = vadd.f32 0.0, %v3617
      %v3619 = vpop.f32.mrf.mxu0
      %3620 = vmatprep.mubr.bf16.mxu0 0
      %3621 = vmatmul.mubr.bf16.gmra.mxu0 %v3547
      %v3622 = vpop.f32.mrf.mxu0
      %v3623 = vadd.f32 0.0, %v3622
      %v3624 = vpop.f32.mrf.mxu0
      %v3625 = vpop.f32.mrf.mxu0
      %v3626 = vadd.f32 0.0, %v3625
      %v3627 = vpop.f32.mrf.mxu0
      %3628 = vmatprep.mubr.bf16.mxu0 0
      %3629 = vmatmul.mubr.bf16.gmra.mxu0 %v3550
      %v3630 = vpop.f32.mrf.mxu0
      %v3631 = vadd.f32 0.0, %v3630
      %v3632 = vpop.f32.mrf.mxu0
      %v3633 = vpop.f32.mrf.mxu0
      %v3634 = vadd.f32 0.0, %v3633
      %v3635 = vpop.f32.mrf.mxu0
      %3636 = vmatprep.mubr.bf16.mxu0 0
      %3637 = vmatmul.mubr.bf16.gmra.mxu0 %v3553
      %v3638 = vpop.f32.mrf.mxu0
      %v3639 = vadd.f32 0.0, %v3638
      %v3640 = vpop.f32.mrf.mxu0
      %v3641 = vpop.f32.mrf.mxu0
      %v3642 = vadd.f32 0.0, %v3641
      %v3643 = vpop.f32.mrf.mxu0
      %3644 = vmatprep.mubr.bf16.mxu0 0
      %3645 = vmatmul.mubr.bf16.gmra.mxu0 %v3556
      %v3646 = vpop.f32.mrf.mxu0
      %v3647 = vadd.f32 0.0, %v3646
      %v3648 = vpop.f32.mrf.mxu0
      %v3649 = vpop.f32.mrf.mxu0
      %v3650 = vadd.f32 0.0, %v3649
      %v3651 = vpop.f32.mrf.mxu0
      %3652 = vmatprep.mubr.bf16.mxu0 0
      %3653 = vmatmul.mubr.bf16.gmra.mxu0 %v3559
      %v3654 = vpop.f32.mrf.mxu0
      %v3655 = vadd.f32 0.0, %v3654
      %v3656 = vpop.f32.mrf.mxu0
      %v3657 = vpop.f32.mrf.mxu0
      %v3658 = vadd.f32 0.0, %v3657
      %v3659 = vpop.f32.mrf.mxu0
      %3660 = vdwg.mxu0
      %v3661 = vadd.f32 %v2673, %v3599
      %v3662 = vadd.f32 %v2676, %v3602
      %v3663 = vadd.f32 %v2681, %v3607
      %v3664 = vadd.f32 %v2684, %v3610
      %v3665 = vadd.f32 %v2689, %v3615
      %v3666 = vadd.f32 %v2692, %v3618
      %v3667 = vadd.f32 %v2697, %v3623
      %v3668 = vadd.f32 %v2700, %v3626
      %v3669 = vadd.f32 %v2705, %v3631
      %v3670 = vadd.f32 %v2708, %v3634
      %v3671 = vadd.f32 %v2713, %v3639
      %v3672 = vadd.f32 %v2716, %v3642
      %v3673 = vadd.f32 %v2721, %v3647
      %v3674 = vadd.f32 %v2724, %v3650
      %v3675 = vadd.f32 %v2729, %v3655
      %v3676 = vadd.f32 %v2732, %v3658
      %s3677 = scalar_lea.vmem %s5, 48
      %v3678 = vld [vmem:[%s3677] sm:$0xf]
      %v3679 = vld [vmem:[%s3677 + $0x4] sm:$0xf]
      %v3680 = vld [vmem:[%s3677 + $0x8] sm:$0xf]
      %v3681 = vld [vmem:[%s3677 + $0xc] sm:$0xf]
      %v3686 = vunpack.c.l.b16 %v3678
      %v3687 = vunpack.c.l.b16 %v3679
      %v3688 = vunpack.c.l.b16 %v3680
      %v3689 = vunpack.c.l.b16 %v3681
      %v3690 = vpack.c.b16 %v3687, %v3686
      %v3691 = vpack.c.b16 %v3689, %v3688
      %3694 = vmatprep.subr.bf16.mxu0 0
      %3695 = vmatpush1.bf16.msra.mxu0 0
      %3696 = vmatprep.subr.bf16.mxu0 0
      %3697 = vmatpush1.bf16.msra.mxu0 0
      %3698 = vmatprep.subr.bf16.mxu0 0
      %3699 = vmatpush1.bf16.msra.mxu0 0
      %3700 = vmatprep.subr.bf16.mxu0 0
      %3701 = vmatpush1.bf16.msra.mxu0 0
      %3702 = vmatprep.subr.bf16.mxu0 0
      %3703 = vmatpush1.bf16.msra.mxu0 0
      %3704 = vmatprep.subr.bf16.mxu0 0
      %3705 = vmatpush1.bf16.msra.mxu0 0
      %3706 = vmatprep.subr.bf16.mxu0 0
      %3707 = vmatpush1.bf16.msra.mxu0 %v3691
      %3708 = vmatprep.subr.bf16.mxu0 0
      %3709 = vmatpush1.bf16.msra.mxu0 %v3690
      %3710 = vmatprep.subr.bf16.mxu0 0
      %3711 = vmatpush2.bf16.msra.mxu0 0
      %3712 = vmatprep.subr.bf16.mxu0 0
      %3713 = vmatpush2.bf16.msra.mxu0 0
      %3714 = vmatprep.subr.bf16.mxu0 0
      %3715 = vmatpush2.bf16.msra.mxu0 0
      %3716 = vmatprep.subr.bf16.mxu0 0
      %3717 = vmatpush2.bf16.msra.mxu0 0
      %3718 = vmatprep.subr.bf16.mxu0 0
      %3719 = vmatpush2.bf16.msra.mxu0 0
      %3720 = vmatprep.subr.bf16.mxu0 0
      %3721 = vmatpush2.bf16.msra.mxu0 0
      %3722 = vmatprep.subr.bf16.mxu0 0
      %3723 = vmatpush2.bf16.msra.mxu0 0
      %3724 = vmatprep.subr.bf16.mxu0 0
      %3725 = vmatpush2.bf16.msra.mxu0 0
      %3726 = vmatprep.mubr.bf16.mxu0 0
      %3727 = vmatmul.mubr.bf16.gmra.mxu0 %v880
      %v3728 = vpop.f32.mrf.mxu0
      %v3729 = vadd.f32 0.0, %v3728
      %v3730 = vpop.f32.mrf.mxu0
      %v3731 = vpop.f32.mrf.mxu0
      %v3732 = vadd.f32 0.0, %v3731
      %v3733 = vpop.f32.mrf.mxu0
      %3734 = vmatprep.mubr.bf16.mxu0 0
      %3735 = vmatmul.mubr.bf16.gmra.mxu0 %v883
      %v3736 = vpop.f32.mrf.mxu0
      %v3737 = vadd.f32 0.0, %v3736
      %v3738 = vpop.f32.mrf.mxu0
      %v3739 = vpop.f32.mrf.mxu0
      %v3740 = vadd.f32 0.0, %v3739
      %v3741 = vpop.f32.mrf.mxu0
      %3742 = vmatprep.mubr.bf16.mxu0 0
      %3743 = vmatmul.mubr.bf16.gmra.mxu0 %v886
      %v3744 = vpop.f32.mrf.mxu0
      %v3745 = vadd.f32 0.0, %v3744
      %v3746 = vpop.f32.mrf.mxu0
      %v3747 = vpop.f32.mrf.mxu0
      %v3748 = vadd.f32 0.0, %v3747
      %v3749 = vpop.f32.mrf.mxu0
      %3750 = vmatprep.mubr.bf16.mxu0 0
      %3751 = vmatmul.mubr.bf16.gmra.mxu0 %v889
      %v3752 = vpop.f32.mrf.mxu0
      %v3753 = vadd.f32 0.0, %v3752
      %v3754 = vpop.f32.mrf.mxu0
      %v3755 = vpop.f32.mrf.mxu0
      %v3756 = vadd.f32 0.0, %v3755
      %v3757 = vpop.f32.mrf.mxu0
      %3758 = vmatprep.mubr.bf16.mxu0 0
      %3759 = vmatmul.mubr.bf16.gmra.mxu0 %v892
      %v3760 = vpop.f32.mrf.mxu0
      %v3761 = vadd.f32 0.0, %v3760
      %v3762 = vpop.f32.mrf.mxu0
      %v3763 = vpop.f32.mrf.mxu0
      %v3764 = vadd.f32 0.0, %v3763
      %v3765 = vpop.f32.mrf.mxu0
      %3766 = vmatprep.mubr.bf16.mxu0 0
      %3767 = vmatmul.mubr.bf16.gmra.mxu0 %v895
      %v3768 = vpop.f32.mrf.mxu0
      %v3769 = vadd.f32 0.0, %v3768
      %v3770 = vpop.f32.mrf.mxu0
      %v3771 = vpop.f32.mrf.mxu0
      %v3772 = vadd.f32 0.0, %v3771
      %v3773 = vpop.f32.mrf.mxu0
      %3774 = vmatprep.mubr.bf16.mxu0 0
      %3775 = vmatmul.mubr.bf16.gmra.mxu0 %v898
      %v3776 = vpop.f32.mrf.mxu0
      %v3777 = vadd.f32 0.0, %v3776
      %v3778 = vpop.f32.mrf.mxu0
      %v3779 = vpop.f32.mrf.mxu0
      %v3780 = vadd.f32 0.0, %v3779
      %v3781 = vpop.f32.mrf.mxu0
      %3782 = vmatprep.mubr.bf16.mxu0 0
      %3783 = vmatmul.mubr.bf16.gmra.mxu0 %v901
      %v3784 = vpop.f32.mrf.mxu0
      %v3785 = vadd.f32 0.0, %v3784
      %v3786 = vpop.f32.mrf.mxu0
      %v3787 = vpop.f32.mrf.mxu0
      %v3788 = vadd.f32 0.0, %v3787
      %v3789 = vpop.f32.mrf.mxu0
      %3790 = vdwg.mxu0
      %s3791 = scalar_lea.vmem %s6, 48
      %v3792 = vld [vmem:[%s3791] sm:$0xf]
      %v3793 = vld [vmem:[%s3791 + $0x4] sm:$0xf]
      %v3794 = vld [vmem:[%s3791 + $0x8] sm:$0xf]
      %v3795 = vld [vmem:[%s3791 + $0xc] sm:$0xf]
      %v3800 = vunpack.c.l.b16 %v3792
      %v3801 = vunpack.c.l.b16 %v3793
      %v3802 = vunpack.c.l.b16 %v3794
      %v3803 = vunpack.c.l.b16 %v3795
      %v3804 = vpack.c.b16 %v3801, %v3800
      %v3805 = vpack.c.b16 %v3803, %v3802
      %3808 = vmatprep.subr.bf16.mxu0 0
      %3809 = vmatpush1.bf16.msra.mxu0 0
      %3810 = vmatprep.subr.bf16.mxu0 0
      %3811 = vmatpush1.bf16.msra.mxu0 0
      %3812 = vmatprep.subr.bf16.mxu0 0
      %3813 = vmatpush1.bf16.msra.mxu0 0
      %3814 = vmatprep.subr.bf16.mxu0 0
      %3815 = vmatpush1.bf16.msra.mxu0 0
      %3816 = vmatprep.subr.bf16.mxu0 0
      %3817 = vmatpush1.bf16.msra.mxu0 0
      %3818 = vmatprep.subr.bf16.mxu0 0
      %3819 = vmatpush1.bf16.msra.mxu0 0
      %3820 = vmatprep.subr.bf16.mxu0 0
      %3821 = vmatpush1.bf16.msra.mxu0 %v3805
      %3822 = vmatprep.subr.bf16.mxu0 0
      %3823 = vmatpush1.bf16.msra.mxu0 %v3804
      %3824 = vmatprep.subr.bf16.mxu0 0
      %3825 = vmatpush2.bf16.msra.mxu0 0
      %3826 = vmatprep.subr.bf16.mxu0 0
      %3827 = vmatpush2.bf16.msra.mxu0 0
      %3828 = vmatprep.subr.bf16.mxu0 0
      %3829 = vmatpush2.bf16.msra.mxu0 0
      %3830 = vmatprep.subr.bf16.mxu0 0
      %3831 = vmatpush2.bf16.msra.mxu0 0
      %3832 = vmatprep.subr.bf16.mxu0 0
      %3833 = vmatpush2.bf16.msra.mxu0 0
      %3834 = vmatprep.subr.bf16.mxu0 0
      %3835 = vmatpush2.bf16.msra.mxu0 0
      %3836 = vmatprep.subr.bf16.mxu0 0
      %3837 = vmatpush2.bf16.msra.mxu0 0
      %3838 = vmatprep.subr.bf16.mxu0 0
      %3839 = vmatpush2.bf16.msra.mxu0 0
      %3840 = vmatprep.mubr.bf16.mxu0 0
      %3841 = vmatmul.mubr.bf16.gmra.mxu0 %v880
      %v3842 = vpop.f32.mrf.mxu0
      %v3843 = vadd.f32 0.0, %v3842
      %v3844 = vpop.f32.mrf.mxu0
      %v3845 = vpop.f32.mrf.mxu0
      %v3846 = vadd.f32 0.0, %v3845
      %v3847 = vpop.f32.mrf.mxu0
      %3848 = vmatprep.mubr.bf16.mxu0 0
      %3849 = vmatmul.mubr.bf16.gmra.mxu0 %v883
      %v3850 = vpop.f32.mrf.mxu0
      %v3851 = vadd.f32 0.0, %v3850
      %v3852 = vpop.f32.mrf.mxu0
      %v3853 = vpop.f32.mrf.mxu0
      %v3854 = vadd.f32 0.0, %v3853
      %v3855 = vpop.f32.mrf.mxu0
      %3856 = vmatprep.mubr.bf16.mxu0 0
      %3857 = vmatmul.mubr.bf16.gmra.mxu0 %v886
      %v3858 = vpop.f32.mrf.mxu0
      %v3859 = vadd.f32 0.0, %v3858
      %v3860 = vpop.f32.mrf.mxu0
      %v3861 = vpop.f32.mrf.mxu0
      %v3862 = vadd.f32 0.0, %v3861
      %v3863 = vpop.f32.mrf.mxu0
      %3864 = vmatprep.mubr.bf16.mxu0 0
      %3865 = vmatmul.mubr.bf16.gmra.mxu0 %v889
      %v3866 = vpop.f32.mrf.mxu0
      %v3867 = vadd.f32 0.0, %v3866
      %v3868 = vpop.f32.mrf.mxu0
      %v3869 = vpop.f32.mrf.mxu0
      %v3870 = vadd.f32 0.0, %v3869
      %v3871 = vpop.f32.mrf.mxu0
      %3872 = vmatprep.mubr.bf16.mxu0 0
      %3873 = vmatmul.mubr.bf16.gmra.mxu0 %v892
      %v3874 = vpop.f32.mrf.mxu0
      %v3875 = vadd.f32 0.0, %v3874
      %v3876 = vpop.f32.mrf.mxu0
      %v3877 = vpop.f32.mrf.mxu0
      %v3878 = vadd.f32 0.0, %v3877
      %v3879 = vpop.f32.mrf.mxu0
      %3880 = vmatprep.mubr.bf16.mxu0 0
      %3881 = vmatmul.mubr.bf16.gmra.mxu0 %v895
      %v3882 = vpop.f32.mrf.mxu0
      %v3883 = vadd.f32 0.0, %v3882
      %v3884 = vpop.f32.mrf.mxu0
      %v3885 = vpop.f32.mrf.mxu0
      %v3886 = vadd.f32 0.0, %v3885
      %v3887 = vpop.f32.mrf.mxu0
      %3888 = vmatprep.mubr.bf16.mxu0 0
      %3889 = vmatmul.mubr.bf16.gmra.mxu0 %v898
      %v3890 = vpop.f32.mrf.mxu0
      %v3891 = vadd.f32 0.0, %v3890
      %v3892 = vpop.f32.mrf.mxu0
      %v3893 = vpop.f32.mrf.mxu0
      %v3894 = vadd.f32 0.0, %v3893
      %v3895 = vpop.f32.mrf.mxu0
      %3896 = vmatprep.mubr.bf16.mxu0 0
      %3897 = vmatmul.mubr.bf16.gmra.mxu0 %v901
      %v3898 = vpop.f32.mrf.mxu0
      %v3899 = vadd.f32 0.0, %v3898
      %v3900 = vpop.f32.mrf.mxu0
      %v3901 = vpop.f32.mrf.mxu0
      %v3902 = vadd.f32 0.0, %v3901
      %v3903 = vpop.f32.mrf.mxu0
      %3904 = vdwg.mxu0
      %s3905 = scalar_lea.vmem %s7, 48
      %v3906 = vld [vmem:[%s3905] sm:$0xf]
      %v3907 = vld [vmem:[%s3905 + $0x4] sm:$0xf]
      %v3908 = vld [vmem:[%s3905 + $0x8] sm:$0xf]
      %v3909 = vld [vmem:[%s3905 + $0xc] sm:$0xf]
      %v3914 = vunpack.c.l.b16 %v3906
      %v3915 = vunpack.c.l.b16 %v3907
      %v3916 = vunpack.c.l.b16 %v3908
      %v3917 = vunpack.c.l.b16 %v3909
      %v3918 = vpack.c.b16 %v3915, %v3914
      %v3919 = vpack.c.b16 %v3917, %v3916
      %3922 = vmatprep.subr.bf16.mxu0 0
      %3923 = vmatpush1.bf16.msra.mxu0 0
      %3924 = vmatprep.subr.bf16.mxu0 0
      %3925 = vmatpush1.bf16.msra.mxu0 0
      %3926 = vmatprep.subr.bf16.mxu0 0
      %3927 = vmatpush1.bf16.msra.mxu0 0
      %3928 = vmatprep.subr.bf16.mxu0 0
      %3929 = vmatpush1.bf16.msra.mxu0 0
      %3930 = vmatprep.subr.bf16.mxu0 0
      %3931 = vmatpush1.bf16.msra.mxu0 0
      %3932 = vmatprep.subr.bf16.mxu0 0
      %3933 = vmatpush1.bf16.msra.mxu0 0
      %3934 = vmatprep.subr.bf16.mxu0 0
      %3935 = vmatpush1.bf16.msra.mxu0 %v3919
      %3936 = vmatprep.subr.bf16.mxu0 0
      %3937 = vmatpush1.bf16.msra.mxu0 %v3918
      %3938 = vmatprep.subr.bf16.mxu0 0
      %3939 = vmatpush2.bf16.msra.mxu0 0
      %3940 = vmatprep.subr.bf16.mxu0 0
      %3941 = vmatpush2.bf16.msra.mxu0 0
      %3942 = vmatprep.subr.bf16.mxu0 0
      %3943 = vmatpush2.bf16.msra.mxu0 0
      %3944 = vmatprep.subr.bf16.mxu0 0
      %3945 = vmatpush2.bf16.msra.mxu0 0
      %3946 = vmatprep.subr.bf16.mxu0 0
      %3947 = vmatpush2.bf16.msra.mxu0 0
      %3948 = vmatprep.subr.bf16.mxu0 0
      %3949 = vmatpush2.bf16.msra.mxu0 0
      %3950 = vmatprep.subr.bf16.mxu0 0
      %3951 = vmatpush2.bf16.msra.mxu0 0
      %3952 = vmatprep.subr.bf16.mxu0 0
      %3953 = vmatpush2.bf16.msra.mxu0 0
      %3954 = vmatprep.mubr.bf16.mxu0 0
      %3955 = vmatmul.mubr.bf16.gmra.mxu0 %v880
      %v3956 = vpop.f32.mrf.mxu0
      %v3957 = vadd.f32 0.0, %v3956
      %v3958 = vpop.f32.mrf.mxu0
      %v3959 = vpop.f32.mrf.mxu0
      %v3960 = vadd.f32 0.0, %v3959
      %v3961 = vpop.f32.mrf.mxu0
      %3962 = vmatprep.mubr.bf16.mxu0 0
      %3963 = vmatmul.mubr.bf16.gmra.mxu0 %v883
      %v3964 = vpop.f32.mrf.mxu0
      %v3965 = vadd.f32 0.0, %v3964
      %v3966 = vpop.f32.mrf.mxu0
      %v3967 = vpop.f32.mrf.mxu0
      %v3968 = vadd.f32 0.0, %v3967
      %v3969 = vpop.f32.mrf.mxu0
      %3970 = vmatprep.mubr.bf16.mxu0 0
      %3971 = vmatmul.mubr.bf16.gmra.mxu0 %v886
      %v3972 = vpop.f32.mrf.mxu0
      %v3973 = vadd.f32 0.0, %v3972
      %v3974 = vpop.f32.mrf.mxu0
      %v3975 = vpop.f32.mrf.mxu0
      %v3976 = vadd.f32 0.0, %v3975
      %v3977 = vpop.f32.mrf.mxu0
      %3978 = vmatprep.mubr.bf16.mxu0 0
      %3979 = vmatmul.mubr.bf16.gmra.mxu0 %v889
      %v3980 = vpop.f32.mrf.mxu0
      %v3981 = vadd.f32 0.0, %v3980
      %v3982 = vpop.f32.mrf.mxu0
      %v3983 = vpop.f32.mrf.mxu0
      %v3984 = vadd.f32 0.0, %v3983
      %v3985 = vpop.f32.mrf.mxu0
      %3986 = vmatprep.mubr.bf16.mxu0 0
      %3987 = vmatmul.mubr.bf16.gmra.mxu0 %v892
      %v3988 = vpop.f32.mrf.mxu0
      %v3989 = vadd.f32 0.0, %v3988
      %v3990 = vpop.f32.mrf.mxu0
      %v3991 = vpop.f32.mrf.mxu0
      %v3992 = vadd.f32 0.0, %v3991
      %v3993 = vpop.f32.mrf.mxu0
      %3994 = vmatprep.mubr.bf16.mxu0 0
      %3995 = vmatmul.mubr.bf16.gmra.mxu0 %v895
      %v3996 = vpop.f32.mrf.mxu0
      %v3997 = vadd.f32 0.0, %v3996
      %v3998 = vpop.f32.mrf.mxu0
      %v3999 = vpop.f32.mrf.mxu0
      %v4000 = vadd.f32 0.0, %v3999
      %v4001 = vpop.f32.mrf.mxu0
      %4002 = vmatprep.mubr.bf16.mxu0 0
      %4003 = vmatmul.mubr.bf16.gmra.mxu0 %v898
      %v4004 = vpop.f32.mrf.mxu0
      %v4005 = vadd.f32 0.0, %v4004
      %v4006 = vpop.f32.mrf.mxu0
      %v4007 = vpop.f32.mrf.mxu0
      %v4008 = vadd.f32 0.0, %v4007
      %v4009 = vpop.f32.mrf.mxu0
      %4010 = vmatprep.mubr.bf16.mxu0 0
      %4011 = vmatmul.mubr.bf16.gmra.mxu0 %v901
      %v4012 = vpop.f32.mrf.mxu0
      %v4013 = vadd.f32 0.0, %v4012
      %v4014 = vpop.f32.mrf.mxu0
      %v4015 = vpop.f32.mrf.mxu0
      %v4016 = vadd.f32 0.0, %v4015
      %v4017 = vpop.f32.mrf.mxu0
      %4018 = vdwg.mxu0
      %v4019 = vpack.c.bf16 %v3732, %v3729
      %v4020 = vpack.c.bf16 %v3740, %v3737
      %v4021 = vpack.c.bf16 %v3748, %v3745
      %v4022 = vpack.c.bf16 %v3756, %v3753
      %v4023 = vpack.c.bf16 %v3764, %v3761
      %v4024 = vpack.c.bf16 %v3772, %v3769
      %v4025 = vpack.c.bf16 %v3780, %v3777
      %v4026 = vpack.c.bf16 %v3788, %v3785
      %v4027 = vpack.c.bf16 %v3846, %v3843
      %v4028 = vpack.c.bf16 %v3854, %v3851
      %v4029 = vpack.c.bf16 %v3862, %v3859
      %v4030 = vpack.c.bf16 %v3870, %v3867
      %v4031 = vpack.c.bf16 %v3878, %v3875
      %v4032 = vpack.c.bf16 %v3886, %v3883
      %v4033 = vpack.c.bf16 %v3894, %v3891
      %v4034 = vpack.c.bf16 %v3902, %v3899
      %v4036 = vsel %vm712, %v4019, 0
      %v4039 = vsel %vm712, %v4020, 0
      %v4042 = vsel %vm712, %v4021, 0
      %v4045 = vsel %vm712, %v4022, 0
      %v4048 = vsel %vm712, %v4023, 0
      %v4051 = vsel %vm712, %v4024, 0
      %v4054 = vsel %vm712, %v4025, 0
      %v4057 = vsel %vm712, %v4026, 0
      %v4060 = vsel %vm712, %v4027, 0
      %v4063 = vsel %vm712, %v4028, 0
      %v4066 = vsel %vm712, %v4029, 0
      %v4069 = vsel %vm712, %v4030, 0
      %v4072 = vsel %vm712, %v4031, 0
      %v4075 = vsel %vm712, %v4032, 0
      %v4078 = vsel %vm712, %v4033, 0
      %v4081 = vsel %vm712, %v4034, 0
      %4083 = vmatprep.subr.bf16.mxu0 0
      %4084 = vmatpush1.bf16.xpose.msra.mxu0 %v4081
      %4085 = vmatprep.subr.bf16.mxu0 0
      %4086 = vmatpush1.bf16.xpose.msra.mxu0 %v4078
      %4087 = vmatprep.subr.bf16.mxu0 0
      %4088 = vmatpush1.bf16.xpose.msra.mxu0 %v4075
      %4089 = vmatprep.subr.bf16.mxu0 0
      %4090 = vmatpush1.bf16.xpose.msra.mxu0 %v4072
      %4091 = vmatprep.subr.bf16.mxu0 0
      %4092 = vmatpush1.bf16.xpose.msra.mxu0 %v4069
      %4093 = vmatprep.subr.bf16.mxu0 0
      %4094 = vmatpush1.bf16.xpose.msra.mxu0 %v4066
      %4095 = vmatprep.subr.bf16.mxu0 0
      %4096 = vmatpush1.bf16.xpose.msra.mxu0 %v4063
      %4097 = vmatprep.subr.bf16.mxu0 0
      %4098 = vmatpush1.bf16.xpose.msra.mxu0 %v4060
      %4099 = vmatprep.subr.bf16.mxu0 0
      %4100 = vmatpush2.bf16.xpose.msra.mxu0 0
      %4101 = vmatprep.subr.bf16.mxu0 0
      %4102 = vmatpush2.bf16.xpose.msra.mxu0 0
      %4103 = vmatprep.subr.bf16.mxu0 0
      %4104 = vmatpush2.bf16.xpose.msra.mxu0 0
      %4105 = vmatprep.subr.bf16.mxu0 0
      %4106 = vmatpush2.bf16.xpose.msra.mxu0 0
      %4107 = vmatprep.subr.bf16.mxu0 0
      %4108 = vmatpush2.bf16.xpose.msra.mxu0 0
      %4109 = vmatprep.subr.bf16.mxu0 0
      %4110 = vmatpush2.bf16.xpose.msra.mxu0 0
      %4111 = vmatprep.subr.bf16.mxu0 0
      %4112 = vmatpush2.bf16.xpose.msra.mxu0 0
      %4113 = vmatprep.subr.bf16.mxu0 0
      %4114 = vmatpush2.bf16.xpose.msra.mxu0 0
      %4115 = vmatprep.mubr.bf16.mxu0 0
      %4116 = vmatmul.mubr.bf16.gmra.mxu0 %v4036
      %v4117 = vpop.f32.mrf.mxu0
      %v4118 = vadd.f32 0.0, %v4117
      %v4119 = vpop.f32.mrf.mxu0
      %v4120 = vpop.f32.mrf.mxu0
      %v4121 = vadd.f32 0.0, %v4120
      %v4122 = vpop.f32.mrf.mxu0
      %4123 = vmatprep.mubr.bf16.mxu0 0
      %4124 = vmatmul.mubr.bf16.gmra.mxu0 %v4039
      %v4125 = vpop.f32.mrf.mxu0
      %v4126 = vadd.f32 0.0, %v4125
      %v4127 = vpop.f32.mrf.mxu0
      %v4128 = vpop.f32.mrf.mxu0
      %v4129 = vadd.f32 0.0, %v4128
      %v4130 = vpop.f32.mrf.mxu0
      %4131 = vmatprep.mubr.bf16.mxu0 0
      %4132 = vmatmul.mubr.bf16.gmra.mxu0 %v4042
      %v4133 = vpop.f32.mrf.mxu0
      %v4134 = vadd.f32 0.0, %v4133
      %v4135 = vpop.f32.mrf.mxu0
      %v4136 = vpop.f32.mrf.mxu0
      %v4137 = vadd.f32 0.0, %v4136
      %v4138 = vpop.f32.mrf.mxu0
      %4139 = vmatprep.mubr.bf16.mxu0 0
      %4140 = vmatmul.mubr.bf16.gmra.mxu0 %v4045
      %v4141 = vpop.f32.mrf.mxu0
      %v4142 = vadd.f32 0.0, %v4141
      %v4143 = vpop.f32.mrf.mxu0
      %v4144 = vpop.f32.mrf.mxu0
      %v4145 = vadd.f32 0.0, %v4144
      %v4146 = vpop.f32.mrf.mxu0
      %4147 = vmatprep.mubr.bf16.mxu0 0
      %4148 = vmatmul.mubr.bf16.gmra.mxu0 %v4048
      %v4149 = vpop.f32.mrf.mxu0
      %v4150 = vadd.f32 0.0, %v4149
      %v4151 = vpop.f32.mrf.mxu0
      %v4152 = vpop.f32.mrf.mxu0
      %v4153 = vadd.f32 0.0, %v4152
      %v4154 = vpop.f32.mrf.mxu0
      %4155 = vmatprep.mubr.bf16.mxu0 0
      %4156 = vmatmul.mubr.bf16.gmra.mxu0 %v4051
      %v4157 = vpop.f32.mrf.mxu0
      %v4158 = vadd.f32 0.0, %v4157
      %v4159 = vpop.f32.mrf.mxu0
      %v4160 = vpop.f32.mrf.mxu0
      %v4161 = vadd.f32 0.0, %v4160
      %v4162 = vpop.f32.mrf.mxu0
      %4163 = vmatprep.mubr.bf16.mxu0 0
      %4164 = vmatmul.mubr.bf16.gmra.mxu0 %v4054
      %v4165 = vpop.f32.mrf.mxu0
      %v4166 = vadd.f32 0.0, %v4165
      %v4167 = vpop.f32.mrf.mxu0
      %v4168 = vpop.f32.mrf.mxu0
      %v4169 = vadd.f32 0.0, %v4168
      %v4170 = vpop.f32.mrf.mxu0
      %4171 = vmatprep.mubr.bf16.mxu0 0
      %4172 = vmatmul.mubr.bf16.gmra.mxu0 %v4057
      %v4173 = vpop.f32.mrf.mxu0
      %v4174 = vadd.f32 0.0, %v4173
      %v4175 = vpop.f32.mrf.mxu0
      %v4176 = vpop.f32.mrf.mxu0
      %v4177 = vadd.f32 0.0, %v4176
      %v4178 = vpop.f32.mrf.mxu0
      %4179 = vdwg.mxu0
      %v4180 = vmul.f32 %v4118, 0.35355338
      %v4181 = vmul.f32 %v4121, 0.35355338
      %v4182 = vmul.f32 %v4126, 0.35355338
      %v4183 = vmul.f32 %v4129, 0.35355338
      %v4184 = vmul.f32 %v4134, 0.35355338
      %v4185 = vmul.f32 %v4137, 0.35355338
      %v4186 = vmul.f32 %v4142, 0.35355338
      %v4187 = vmul.f32 %v4145, 0.35355338
      %v4188 = vmul.f32 %v4150, 0.35355338
      %v4189 = vmul.f32 %v4153, 0.35355338
      %v4190 = vmul.f32 %v4158, 0.35355338
      %v4191 = vmul.f32 %v4161, 0.35355338
      %v4192 = vmul.f32 %v4166, 0.35355338
      %v4193 = vmul.f32 %v4169, 0.35355338
      %v4194 = vmul.f32 %v4174, 0.35355338
      %v4195 = vmul.f32 %v4177, 0.35355338
      %v4196 = vadd.f32 %v4180, %v838
      %v4197 = vadd.f32 %v4181, %v839
      %v4198 = vadd.f32 %v4182, %v840
      %v4199 = vadd.f32 %v4183, %v841
      %v4200 = vadd.f32 %v4184, %v842
      %v4201 = vadd.f32 %v4185, %v843
      %v4202 = vadd.f32 %v4186, %v844
      %v4203 = vadd.f32 %v4187, %v845
      %v4204 = vadd.f32 %v4188, %v846
      %v4205 = vadd.f32 %v4189, %v847
      %v4206 = vadd.f32 %v4190, %v848
      %v4207 = vadd.f32 %v4191, %v849
      %v4208 = vadd.f32 %v4192, %v850
      %v4209 = vadd.f32 %v4193, %v851
      %v4210 = vadd.f32 %v4194, %v852
      %v4211 = vadd.f32 %v4195, %v853
      %4212 = vmax.xlane.f32.xlu0 %v4196
      %v4213 = vpop.xlane.xlu0 %4212
      %4214 = vmax.xlane.f32.xlu0 %v4197
      %v4215 = vpop.xlane.xlu0 %4214
      %4216 = vmax.xlane.f32.xlu0 %v4198
      %v4217 = vpop.xlane.xlu0 %4216
      %4218 = vmax.xlane.f32.xlu0 %v4199
      %v4219 = vpop.xlane.xlu0 %4218
      %4220 = vmax.xlane.f32.xlu0 %v4200
      %v4221 = vpop.xlane.xlu0 %4220
      %4222 = vmax.xlane.f32.xlu0 %v4201
      %v4223 = vpop.xlane.xlu0 %4222
      %4224 = vmax.xlane.f32.xlu0 %v4202
      %v4225 = vpop.xlane.xlu0 %4224
      %4226 = vmax.xlane.f32.xlu0 %v4203
      %v4227 = vpop.xlane.xlu0 %4226
      %4228 = vmax.xlane.f32.xlu0 %v4204
      %v4229 = vpop.xlane.xlu0 %4228
      %4230 = vmax.xlane.f32.xlu0 %v4205
      %v4231 = vpop.xlane.xlu0 %4230
      %4232 = vmax.xlane.f32.xlu0 %v4206
      %v4233 = vpop.xlane.xlu0 %4232
      %4234 = vmax.xlane.f32.xlu0 %v4207
      %v4235 = vpop.xlane.xlu0 %4234
      %4236 = vmax.xlane.f32.xlu0 %v4208
      %v4237 = vpop.xlane.xlu0 %4236
      %4238 = vmax.xlane.f32.xlu0 %v4209
      %v4239 = vpop.xlane.xlu0 %4238
      %4240 = vmax.xlane.f32.xlu0 %v4210
      %v4241 = vpop.xlane.xlu0 %4240
      %4242 = vmax.xlane.f32.xlu0 %v4211
      %v4243 = vpop.xlane.xlu0 %4242
      %v4244 = vsub.f32 %v4196, %v4213
      %v4245 = vsub.f32 %v4197, %v4215
      %v4246 = vsub.f32 %v4198, %v4217
      %v4247 = vsub.f32 %v4199, %v4219
      %v4248 = vsub.f32 %v4200, %v4221
      %v4249 = vsub.f32 %v4201, %v4223
      %v4250 = vsub.f32 %v4202, %v4225
      %v4251 = vsub.f32 %v4203, %v4227
      %v4252 = vsub.f32 %v4204, %v4229
      %v4253 = vsub.f32 %v4205, %v4231
      %v4254 = vsub.f32 %v4206, %v4233
      %v4255 = vsub.f32 %v4207, %v4235
      %v4256 = vsub.f32 %v4208, %v4237
      %v4257 = vsub.f32 %v4209, %v4239
      %v4258 = vsub.f32 %v4210, %v4241
      %v4259 = vsub.f32 %v4211, %v4243
      %v4260 = vmul.f32 %v4244, 1.442695
      %v4261 = vpow.pop %v4260
      %v4262 = vmul.f32 %v4245, 1.442695
      %v4263 = vpow.pop %v4262
      %v4264 = vmul.f32 %v4246, 1.442695
      %v4265 = vpow.pop %v4264
      %v4266 = vmul.f32 %v4247, 1.442695
      %v4267 = vpow.pop %v4266
      %v4268 = vmul.f32 %v4248, 1.442695
      %v4269 = vpow.pop %v4268
      %v4270 = vmul.f32 %v4249, 1.442695
      %v4271 = vpow.pop %v4270
      %v4272 = vmul.f32 %v4250, 1.442695
      %v4273 = vpow.pop %v4272
      %v4274 = vmul.f32 %v4251, 1.442695
      %v4275 = vpow.pop %v4274
      %v4276 = vmul.f32 %v4252, 1.442695
      %v4277 = vpow.pop %v4276
      %v4278 = vmul.f32 %v4253, 1.442695
      %v4279 = vpow.pop %v4278
      %v4280 = vmul.f32 %v4254, 1.442695
      %v4281 = vpow.pop %v4280
      %v4282 = vmul.f32 %v4255, 1.442695
      %v4283 = vpow.pop %v4282
      %v4284 = vmul.f32 %v4256, 1.442695
      %v4285 = vpow.pop %v4284
      %v4286 = vmul.f32 %v4257, 1.442695
      %v4287 = vpow.pop %v4286
      %v4288 = vmul.f32 %v4258, 1.442695
      %v4289 = vpow.pop %v4288
      %v4290 = vmul.f32 %v4259, 1.442695
      %v4291 = vpow.pop %v4290
      %4292 = vadd.xlane.f32.xlu0 %v4261
      %v4293 = vpop.xlane.xlu0 %4292
      %4294 = vadd.xlane.f32.xlu0 %v4263
      %v4295 = vpop.xlane.xlu0 %4294
      %4296 = vadd.xlane.f32.xlu0 %v4265
      %v4297 = vpop.xlane.xlu0 %4296
      %4298 = vadd.xlane.f32.xlu0 %v4267
      %v4299 = vpop.xlane.xlu0 %4298
      %4300 = vadd.xlane.f32.xlu0 %v4269
      %v4301 = vpop.xlane.xlu0 %4300
      %4302 = vadd.xlane.f32.xlu0 %v4271
      %v4303 = vpop.xlane.xlu0 %4302
      %4304 = vadd.xlane.f32.xlu0 %v4273
      %v4305 = vpop.xlane.xlu0 %4304
      %4306 = vadd.xlane.f32.xlu0 %v4275
      %v4307 = vpop.xlane.xlu0 %4306
      %4308 = vadd.xlane.f32.xlu0 %v4277
      %v4309 = vpop.xlane.xlu0 %4308
      %4310 = vadd.xlane.f32.xlu0 %v4279
      %v4311 = vpop.xlane.xlu0 %4310
      %4312 = vadd.xlane.f32.xlu0 %v4281
      %v4313 = vpop.xlane.xlu0 %4312
      %4314 = vadd.xlane.f32.xlu0 %v4283
      %v4315 = vpop.xlane.xlu0 %4314
      %4316 = vadd.xlane.f32.xlu0 %v4285
      %v4317 = vpop.xlane.xlu0 %4316
      %4318 = vadd.xlane.f32.xlu0 %v4287
      %v4319 = vpop.xlane.xlu0 %4318
      %4320 = vadd.xlane.f32.xlu0 %v4289
      %v4321 = vpop.xlane.xlu0 %4320
      %4322 = vadd.xlane.f32.xlu0 %v4291
      %v4323 = vpop.xlane.xlu0 %4322
      %v4324 = vrcp.pop %v4293
      %v4325 = vmul.f32 %v4261, %v4324
      %v4326 = vrcp.pop %v4295
      %v4327 = vmul.f32 %v4263, %v4326
      %v4328 = vrcp.pop %v4297
      %v4329 = vmul.f32 %v4265, %v4328
      %v4330 = vrcp.pop %v4299
      %v4331 = vmul.f32 %v4267, %v4330
      %v4332 = vrcp.pop %v4301
      %v4333 = vmul.f32 %v4269, %v4332
      %v4334 = vrcp.pop %v4303
      %v4335 = vmul.f32 %v4271, %v4334
      %v4336 = vrcp.pop %v4305
      %v4337 = vmul.f32 %v4273, %v4336
      %v4338 = vrcp.pop %v4307
      %v4339 = vmul.f32 %v4275, %v4338
      %v4340 = vrcp.pop %v4309
      %v4341 = vmul.f32 %v4277, %v4340
      %v4342 = vrcp.pop %v4311
      %v4343 = vmul.f32 %v4279, %v4342
      %v4344 = vrcp.pop %v4313
      %v4345 = vmul.f32 %v4281, %v4344
      %v4346 = vrcp.pop %v4315
      %v4347 = vmul.f32 %v4283, %v4346
      %v4348 = vrcp.pop %v4317
      %v4349 = vmul.f32 %v4285, %v4348
      %v4350 = vrcp.pop %v4319
      %v4351 = vmul.f32 %v4287, %v4350
      %v4352 = vrcp.pop %v4321
      %v4353 = vmul.f32 %v4289, %v4352
      %v4354 = vrcp.pop %v4323
      %v4355 = vmul.f32 %v4291, %v4354
      %v4356 = vpack.c.bf16 %v4327, %v4325
      %v4357 = vpack.c.bf16 %v4331, %v4329
      %v4358 = vpack.c.bf16 %v4335, %v4333
      %v4359 = vpack.c.bf16 %v4339, %v4337
      %v4360 = vpack.c.bf16 %v4343, %v4341
      %v4361 = vpack.c.bf16 %v4347, %v4345
      %v4362 = vpack.c.bf16 %v4351, %v4349
      %v4363 = vpack.c.bf16 %v4355, %v4353
      %v4364 = vpack.c.bf16 %v3960, %v3957
      %v4365 = vpack.c.bf16 %v3968, %v3965
      %v4366 = vpack.c.bf16 %v3976, %v3973
      %v4367 = vpack.c.bf16 %v3984, %v3981
      %v4368 = vpack.c.bf16 %v3992, %v3989
      %v4369 = vpack.c.bf16 %v4000, %v3997
      %v4370 = vpack.c.bf16 %v4008, %v4005
      %v4371 = vpack.c.bf16 %v4016, %v4013
      %4372 = vmatprep.subr.bf16.mxu0 0
      %4373 = vmatpush1.bf16.msra.mxu0 %v4371
      %4374 = vmatprep.subr.bf16.mxu0 0
      %4375 = vmatpush1.bf16.msra.mxu0 %v4370
      %4376 = vmatprep.subr.bf16.mxu0 0
      %4377 = vmatpush1.bf16.msra.mxu0 %v4369
      %4378 = vmatprep.subr.bf16.mxu0 0
      %4379 = vmatpush1.bf16.msra.mxu0 %v4368
      %4380 = vmatprep.subr.bf16.mxu0 0
      %4381 = vmatpush1.bf16.msra.mxu0 %v4367
      %4382 = vmatprep.subr.bf16.mxu0 0
      %4383 = vmatpush1.bf16.msra.mxu0 %v4366
      %4384 = vmatprep.subr.bf16.mxu0 0
      %4385 = vmatpush1.bf16.msra.mxu0 %v4365
      %4386 = vmatprep.subr.bf16.mxu0 0
      %4387 = vmatpush1.bf16.msra.mxu0 %v4364
      %4388 = vmatprep.subr.bf16.mxu0 0
      %4389 = vmatpush2.bf16.msra.mxu0 0
      %4390 = vmatprep.subr.bf16.mxu0 0
      %4391 = vmatpush2.bf16.msra.mxu0 0
      %4392 = vmatprep.subr.bf16.mxu0 0
      %4393 = vmatpush2.bf16.msra.mxu0 0
      %4394 = vmatprep.subr.bf16.mxu0 0
      %4395 = vmatpush2.bf16.msra.mxu0 0
      %4396 = vmatprep.subr.bf16.mxu0 0
      %4397 = vmatpush2.bf16.msra.mxu0 0
      %4398 = vmatprep.subr.bf16.mxu0 0
      %4399 = vmatpush2.bf16.msra.mxu0 0
      %4400 = vmatprep.subr.bf16.mxu0 0
      %4401 = vmatpush2.bf16.msra.mxu0 0
      %4402 = vmatprep.subr.bf16.mxu0 0
      %4403 = vmatpush2.bf16.msra.mxu0 0
      %4404 = vmatprep.mubr.bf16.mxu0 0
      %4405 = vmatmul.mubr.bf16.gmra.mxu0 %v4356
      %v4406 = vpop.f32.mrf.mxu0
      %v4407 = vadd.f32 0.0, %v4406
      %v4408 = vpop.f32.mrf.mxu0
      %v4409 = vpop.f32.mrf.mxu0
      %v4410 = vadd.f32 0.0, %v4409
      %v4411 = vpop.f32.mrf.mxu0
      %4412 = vmatprep.mubr.bf16.mxu0 0
      %4413 = vmatmul.mubr.bf16.gmra.mxu0 %v4357
      %v4414 = vpop.f32.mrf.mxu0
      %v4415 = vadd.f32 0.0, %v4414
      %v4416 = vpop.f32.mrf.mxu0
      %v4417 = vpop.f32.mrf.mxu0
      %v4418 = vadd.f32 0.0, %v4417
      %v4419 = vpop.f32.mrf.mxu0
      %4420 = vmatprep.mubr.bf16.mxu0 0
      %4421 = vmatmul.mubr.bf16.gmra.mxu0 %v4358
      %v4422 = vpop.f32.mrf.mxu0
      %v4423 = vadd.f32 0.0, %v4422
      %v4424 = vpop.f32.mrf.mxu0
      %v4425 = vpop.f32.mrf.mxu0
      %v4426 = vadd.f32 0.0, %v4425
      %v4427 = vpop.f32.mrf.mxu0
      %4428 = vmatprep.mubr.bf16.mxu0 0
      %4429 = vmatmul.mubr.bf16.gmra.mxu0 %v4359
      %v4430 = vpop.f32.mrf.mxu0
      %v4431 = vadd.f32 0.0, %v4430
      %v4432 = vpop.f32.mrf.mxu0
      %v4433 = vpop.f32.mrf.mxu0
      %v4434 = vadd.f32 0.0, %v4433
      %v4435 = vpop.f32.mrf.mxu0
      %4436 = vmatprep.mubr.bf16.mxu0 0
      %4437 = vmatmul.mubr.bf16.gmra.mxu0 %v4360
      %v4438 = vpop.f32.mrf.mxu0
      %v4439 = vadd.f32 0.0, %v4438
      %v4440 = vpop.f32.mrf.mxu0
      %v4441 = vpop.f32.mrf.mxu0
      %v4442 = vadd.f32 0.0, %v4441
      %v4443 = vpop.f32.mrf.mxu0
      %4444 = vmatprep.mubr.bf16.mxu0 0
      %4445 = vmatmul.mubr.bf16.gmra.mxu0 %v4361
      %v4446 = vpop.f32.mrf.mxu0
      %v4447 = vadd.f32 0.0, %v4446
      %v4448 = vpop.f32.mrf.mxu0
      %v4449 = vpop.f32.mrf.mxu0
      %v4450 = vadd.f32 0.0, %v4449
      %v4451 = vpop.f32.mrf.mxu0
      %4452 = vmatprep.mubr.bf16.mxu0 0
      %4453 = vmatmul.mubr.bf16.gmra.mxu0 %v4362
      %v4454 = vpop.f32.mrf.mxu0
      %v4455 = vadd.f32 0.0, %v4454
      %v4456 = vpop.f32.mrf.mxu0
      %v4457 = vpop.f32.mrf.mxu0
      %v4458 = vadd.f32 0.0, %v4457
      %v4459 = vpop.f32.mrf.mxu0
      %4460 = vmatprep.mubr.bf16.mxu0 0
      %4461 = vmatmul.mubr.bf16.gmra.mxu0 %v4363
      %v4462 = vpop.f32.mrf.mxu0
      %v4463 = vadd.f32 0.0, %v4462
      %v4464 = vpop.f32.mrf.mxu0
      %v4465 = vpop.f32.mrf.mxu0
      %v4466 = vadd.f32 0.0, %v4465
      %v4467 = vpop.f32.mrf.mxu0
      %4468 = vdwg.mxu0
      %s4469 = scalar_lea.vmem %s8, 12
      %v4470 = vld [vmem:[%s4469] sm:$0xf]
      %v4471 = vpack.c.bf16 %v4410, %v4407
      %v4472 = vpack.c.bf16 %v4418, %v4415
      %v4473 = vpack.c.bf16 %v4426, %v4423
      %v4474 = vpack.c.bf16 %v4434, %v4431
      %v4475 = vpack.c.bf16 %v4442, %v4439
      %v4476 = vpack.c.bf16 %v4450, %v4447
      %v4477 = vpack.c.bf16 %v4458, %v4455
      %v4478 = vpack.c.bf16 %v4466, %v4463
      %v4480 = vsel %vm712, %v4471, 0
      %v4483 = vsel %vm712, %v4472, 0
      %v4486 = vsel %vm712, %v4473, 0
      %v4489 = vsel %vm712, %v4474, 0
      %v4492 = vsel %vm712, %v4475, 0
      %v4495 = vsel %vm712, %v4476, 0
      %v4498 = vsel %vm712, %v4477, 0
      %v4501 = vsel %vm712, %v4478, 0
      %v4504 = vsel %vm737, %v4470, 0
      %4506 = vmatprep.subr.bf16.mxu0 0
      %4507 = vmatpush1.bf16.msra.mxu0 0
      %4508 = vmatprep.subr.bf16.mxu0 0
      %4509 = vmatpush1.bf16.msra.mxu0 0
      %4510 = vmatprep.subr.bf16.mxu0 0
      %4511 = vmatpush1.bf16.msra.mxu0 0
      %4512 = vmatprep.subr.bf16.mxu0 0
      %4513 = vmatpush1.bf16.msra.mxu0 0
      %4514 = vmatprep.subr.bf16.mxu0 0
      %4515 = vmatpush1.bf16.msra.mxu0 0
      %4516 = vmatprep.subr.bf16.mxu0 0
      %4517 = vmatpush1.bf16.msra.mxu0 0
      %4518 = vmatprep.subr.bf16.mxu0 0
      %4519 = vmatpush1.bf16.msra.mxu0 0
      %4520 = vmatprep.subr.bf16.mxu0 0
      %4521 = vmatpush1.bf16.msra.mxu0 %v4504
      %4522 = vmatprep.subr.bf16.mxu0 0
      %4523 = vmatpush2.bf16.msra.mxu0 0
      %4524 = vmatprep.subr.bf16.mxu0 0
      %4525 = vmatpush2.bf16.msra.mxu0 0
      %4526 = vmatprep.subr.bf16.mxu0 0
      %4527 = vmatpush2.bf16.msra.mxu0 0
      %4528 = vmatprep.subr.bf16.mxu0 0
      %4529 = vmatpush2.bf16.msra.mxu0 0
      %4530 = vmatprep.subr.bf16.mxu0 0
      %4531 = vmatpush2.bf16.msra.mxu0 0
      %4532 = vmatprep.subr.bf16.mxu0 0
      %4533 = vmatpush2.bf16.msra.mxu0 0
      %4534 = vmatprep.subr.bf16.mxu0 0
      %4535 = vmatpush2.bf16.msra.mxu0 0
      %4536 = vmatprep.subr.bf16.mxu0 0
      %4537 = vmatpush2.bf16.msra.mxu0 0
      %4538 = vmatprep.mubr.bf16.mxu0 0
      %4539 = vmatmul.mubr.bf16.gmra.mxu0 %v4480
      %v4540 = vpop.f32.mrf.mxu0
      %v4541 = vadd.f32 0.0, %v4540
      %v4542 = vpop.f32.mrf.mxu0
      %v4543 = vpop.f32.mrf.mxu0
      %v4544 = vadd.f32 0.0, %v4543
      %v4545 = vpop.f32.mrf.mxu0
      %4546 = vmatprep.mubr.bf16.mxu0 0
      %4547 = vmatmul.mubr.bf16.gmra.mxu0 %v4483
      %v4548 = vpop.f32.mrf.mxu0
      %v4549 = vadd.f32 0.0, %v4548
      %v4550 = vpop.f32.mrf.mxu0
      %v4551 = vpop.f32.mrf.mxu0
      %v4552 = vadd.f32 0.0, %v4551
      %v4553 = vpop.f32.mrf.mxu0
      %4554 = vmatprep.mubr.bf16.mxu0 0
      %4555 = vmatmul.mubr.bf16.gmra.mxu0 %v4486
      %v4556 = vpop.f32.mrf.mxu0
      %v4557 = vadd.f32 0.0, %v4556
      %v4558 = vpop.f32.mrf.mxu0
      %v4559 = vpop.f32.mrf.mxu0
      %v4560 = vadd.f32 0.0, %v4559
      %v4561 = vpop.f32.mrf.mxu0
      %4562 = vmatprep.mubr.bf16.mxu0 0
      %4563 = vmatmul.mubr.bf16.gmra.mxu0 %v4489
      %v4564 = vpop.f32.mrf.mxu0
      %v4565 = vadd.f32 0.0, %v4564
      %v4566 = vpop.f32.mrf.mxu0
      %v4567 = vpop.f32.mrf.mxu0
      %v4568 = vadd.f32 0.0, %v4567
      %v4569 = vpop.f32.mrf.mxu0
      %4570 = vmatprep.mubr.bf16.mxu0 0
      %4571 = vmatmul.mubr.bf16.gmra.mxu0 %v4492
      %v4572 = vpop.f32.mrf.mxu0
      %v4573 = vadd.f32 0.0, %v4572
      %v4574 = vpop.f32.mrf.mxu0
      %v4575 = vpop.f32.mrf.mxu0
      %v4576 = vadd.f32 0.0, %v4575
      %v4577 = vpop.f32.mrf.mxu0
      %4578 = vmatprep.mubr.bf16.mxu0 0
      %4579 = vmatmul.mubr.bf16.gmra.mxu0 %v4495
      %v4580 = vpop.f32.mrf.mxu0
      %v4581 = vadd.f32 0.0, %v4580
      %v4582 = vpop.f32.mrf.mxu0
      %v4583 = vpop.f32.mrf.mxu0
      %v4584 = vadd.f32 0.0, %v4583
      %v4585 = vpop.f32.mrf.mxu0
      %4586 = vmatprep.mubr.bf16.mxu0 0
      %4587 = vmatmul.mubr.bf16.gmra.mxu0 %v4498
      %v4588 = vpop.f32.mrf.mxu0
      %v4589 = vadd.f32 0.0, %v4588
      %v4590 = vpop.f32.mrf.mxu0
      %v4591 = vpop.f32.mrf.mxu0
      %v4592 = vadd.f32 0.0, %v4591
      %v4593 = vpop.f32.mrf.mxu0
      %4594 = vmatprep.mubr.bf16.mxu0 0
      %4595 = vmatmul.mubr.bf16.gmra.mxu0 %v4501
      %v4596 = vpop.f32.mrf.mxu0
      %v4597 = vadd.f32 0.0, %v4596
      %v4598 = vpop.f32.mrf.mxu0
      %v4599 = vpop.f32.mrf.mxu0
      %v4600 = vadd.f32 0.0, %v4599
      %v4601 = vpop.f32.mrf.mxu0
      %4602 = vdwg.mxu0
      %v4603 = vadd.f32 %v3661, %v4541
      %v4604 = vadd.f32 %v3662, %v4544
      %v4605 = vadd.f32 %v3663, %v4549
      %v4606 = vadd.f32 %v3664, %v4552
      %v4607 = vadd.f32 %v3665, %v4557
      %v4608 = vadd.f32 %v3666, %v4560
      %v4609 = vadd.f32 %v3667, %v4565
      %v4610 = vadd.f32 %v3668, %v4568
      %v4611 = vadd.f32 %v3669, %v4573
      %v4612 = vadd.f32 %v3670, %v4576
      %v4613 = vadd.f32 %v3671, %v4581
      %v4614 = vadd.f32 %v3672, %v4584
      %v4615 = vadd.f32 %v3673, %v4589
      %v4616 = vadd.f32 %v3674, %v4592
      %v4617 = vadd.f32 %v3675, %v4597
      %v4618 = vadd.f32 %v3676, %v4600
      %v4619 = vadd.f32 %v776, %v4603
      %v4620 = vadd.f32 %v779, %v4604
      %v4621 = vadd.f32 %v784, %v4605
      %v4622 = vadd.f32 %v787, %v4606
      %v4623 = vadd.f32 %v792, %v4607
      %v4624 = vadd.f32 %v795, %v4608
      %v4625 = vadd.f32 %v800, %v4609
      %v4626 = vadd.f32 %v803, %v4610
      %v4627 = vadd.f32 %v808, %v4611
      %v4628 = vadd.f32 %v811, %v4612
      %v4629 = vadd.f32 %v816, %v4613
      %v4630 = vadd.f32 %v819, %v4614
      %v4631 = vadd.f32 %v824, %v4615
      %v4632 = vadd.f32 %v827, %v4616
      %v4633 = vadd.f32 %v832, %v4617
      %v4634 = vadd.f32 %v835, %v4618
      %v4635 = vld [vmem:[%s9] sm:$0x1]
      %v4636 = vld [vmem:[%s10] sm:$0x1]
      %v4637 = vsel %vm878, %v4619, 0.0
      %4638 = vadd.xlane.f32.xlu0 %v4637
      %v4639 = vpop.xlane.xlu0 %4638
      %v4640 = vsel %vm878, %v4620, 0.0
      %4641 = vadd.xlane.f32.xlu0 %v4640
      %v4642 = vpop.xlane.xlu0 %4641
      %v4643 = vsel %vm878, %v4621, 0.0
      %4644 = vadd.xlane.f32.xlu0 %v4643
      %v4645 = vpop.xlane.xlu0 %4644
      %v4646 = vsel %vm878, %v4622, 0.0
      %4647 = vadd.xlane.f32.xlu0 %v4646
      %v4648 = vpop.xlane.xlu0 %4647
      %v4649 = vsel %vm878, %v4623, 0.0
      %4650 = vadd.xlane.f32.xlu0 %v4649
      %v4651 = vpop.xlane.xlu0 %4650
      %v4652 = vsel %vm878, %v4624, 0.0
      %4653 = vadd.xlane.f32.xlu0 %v4652
      %v4654 = vpop.xlane.xlu0 %4653
      %v4655 = vsel %vm878, %v4625, 0.0
      %4656 = vadd.xlane.f32.xlu0 %v4655
      %v4657 = vpop.xlane.xlu0 %4656
      %v4658 = vsel %vm878, %v4626, 0.0
      %4659 = vadd.xlane.f32.xlu0 %v4658
      %v4660 = vpop.xlane.xlu0 %4659
      %v4661 = vsel %vm878, %v4627, 0.0
      %4662 = vadd.xlane.f32.xlu0 %v4661
      %v4663 = vpop.xlane.xlu0 %4662
      %v4664 = vsel %vm878, %v4628, 0.0
      %4665 = vadd.xlane.f32.xlu0 %v4664
      %v4666 = vpop.xlane.xlu0 %4665
      %v4667 = vsel %vm878, %v4629, 0.0
      %4668 = vadd.xlane.f32.xlu0 %v4667
      %v4669 = vpop.xlane.xlu0 %4668
      %v4670 = vsel %vm878, %v4630, 0.0
      %4671 = vadd.xlane.f32.xlu0 %v4670
      %v4672 = vpop.xlane.xlu0 %4671
      %v4673 = vsel %vm878, %v4631, 0.0
      %4674 = vadd.xlane.f32.xlu0 %v4673
      %v4675 = vpop.xlane.xlu0 %4674
      %v4676 = vsel %vm878, %v4632, 0.0
      %4677 = vadd.xlane.f32.xlu0 %v4676
      %v4678 = vpop.xlane.xlu0 %4677
      %v4679 = vsel %vm878, %v4633, 0.0
      %4680 = vadd.xlane.f32.xlu0 %v4679
      %v4681 = vpop.xlane.xlu0 %4680
      %v4682 = vsel %vm878, %v4634, 0.0
      %4683 = vadd.xlane.f32.xlu0 %v4682
      %v4684 = vpop.xlane.xlu0 %4683
      %v4685 = vrcp.pop 32.0
      %v4686 = vmul.f32 %v4639, %v4685
      %v4687 = vmul.f32 %v4642, %v4685
      %v4688 = vmul.f32 %v4645, %v4685
      %v4689 = vmul.f32 %v4648, %v4685
      %v4690 = vmul.f32 %v4651, %v4685
      %v4691 = vmul.f32 %v4654, %v4685
      %v4692 = vmul.f32 %v4657, %v4685
      %v4693 = vmul.f32 %v4660, %v4685
      %v4694 = vmul.f32 %v4663, %v4685
      %v4695 = vmul.f32 %v4666, %v4685
      %v4696 = vmul.f32 %v4669, %v4685
      %v4697 = vmul.f32 %v4672, %v4685
      %v4698 = vmul.f32 %v4675, %v4685
      %v4699 = vmul.f32 %v4678, %v4685
      %v4700 = vmul.f32 %v4681, %v4685
      %v4701 = vmul.f32 %v4684, %v4685
      %v4702 = vsub.f32 %v4619, %v4686
      %v4703 = vsub.f32 %v4620, %v4687
      %v4704 = vsub.f32 %v4621, %v4688
      %v4705 = vsub.f32 %v4622, %v4689
      %v4706 = vsub.f32 %v4623, %v4690
      %v4707 = vsub.f32 %v4624, %v4691
      %v4708 = vsub.f32 %v4625, %v4692
      %v4709 = vsub.f32 %v4626, %v4693
      %v4710 = vsub.f32 %v4627, %v4694
      %v4711 = vsub.f32 %v4628, %v4695
      %v4712 = vsub.f32 %v4629, %v4696
      %v4713 = vsub.f32 %v4630, %v4697
      %v4714 = vsub.f32 %v4631, %v4698
      %v4715 = vsub.f32 %v4632, %v4699
      %v4716 = vsub.f32 %v4633, %v4700
      %v4717 = vsub.f32 %v4634, %v4701
      %v4718 = vmul.f32 %v4702, %v4702
      %v4719 = vmul.f32 %v4703, %v4703
      %v4720 = vmul.f32 %v4704, %v4704
      %v4721 = vmul.f32 %v4705, %v4705
      %v4722 = vmul.f32 %v4706, %v4706
      %v4723 = vmul.f32 %v4707, %v4707
      %v4724 = vmul.f32 %v4708, %v4708
      %v4725 = vmul.f32 %v4709, %v4709
      %v4726 = vmul.f32 %v4710, %v4710
      %v4727 = vmul.f32 %v4711, %v4711
      %v4728 = vmul.f32 %v4712, %v4712
      %v4729 = vmul.f32 %v4713, %v4713
      %v4730 = vmul.f32 %v4714, %v4714
      %v4731 = vmul.f32 %v4715, %v4715
      %v4732 = vmul.f32 %v4716, %v4716
      %v4733 = vmul.f32 %v4717, %v4717
      %v4734 = vsel %vm878, %v4718, 0.0
      %4735 = vadd.xlane.f32.xlu0 %v4734
      %v4736 = vpop.xlane.xlu0 %4735
      %v4737 = vsel %vm878, %v4719, 0.0
      %4738 = vadd.xlane.f32.xlu0 %v4737
      %v4739 = vpop.xlane.xlu0 %4738
      %v4740 = vsel %vm878, %v4720, 0.0
      %4741 = vadd.xlane.f32.xlu0 %v4740
      %v4742 = vpop.xlane.xlu0 %4741
      %v4743 = vsel %vm878, %v4721, 0.0
      %4744 = vadd.xlane.f32.xlu0 %v4743
      %v4745 = vpop.xlane.xlu0 %4744
      %v4746 = vsel %vm878, %v4722, 0.0
      %4747 = vadd.xlane.f32.xlu0 %v4746
      %v4748 = vpop.xlane.xlu0 %4747
      %v4749 = vsel %vm878, %v4723, 0.0
      %4750 = vadd.xlane.f32.xlu0 %v4749
      %v4751 = vpop.xlane.xlu0 %4750
      %v4752 = vsel %vm878, %v4724, 0.0
      %4753 = vadd.xlane.f32.xlu0 %v4752
      %v4754 = vpop.xlane.xlu0 %4753
      %v4755 = vsel %vm878, %v4725, 0.0
      %4756 = vadd.xlane.f32.xlu0 %v4755
      %v4757 = vpop.xlane.xlu0 %4756
      %v4758 = vsel %vm878, %v4726, 0.0
      %4759 = vadd.xlane.f32.xlu0 %v4758
      %v4760 = vpop.xlane.xlu0 %4759
      %v4761 = vsel %vm878, %v4727, 0.0
      %4762 = vadd.xlane.f32.xlu0 %v4761
      %v4763 = vpop.xlane.xlu0 %4762
      %v4764 = vsel %vm878, %v4728, 0.0
      %4765 = vadd.xlane.f32.xlu0 %v4764
      %v4766 = vpop.xlane.xlu0 %4765
      %v4767 = vsel %vm878, %v4729, 0.0
      %4768 = vadd.xlane.f32.xlu0 %v4767
      %v4769 = vpop.xlane.xlu0 %4768
      %v4770 = vsel %vm878, %v4730, 0.0
      %4771 = vadd.xlane.f32.xlu0 %v4770
      %v4772 = vpop.xlane.xlu0 %4771
      %v4773 = vsel %vm878, %v4731, 0.0
      %4774 = vadd.xlane.f32.xlu0 %v4773
      %v4775 = vpop.xlane.xlu0 %4774
      %v4776 = vsel %vm878, %v4732, 0.0
      %4777 = vadd.xlane.f32.xlu0 %v4776
      %v4778 = vpop.xlane.xlu0 %4777
      %v4779 = vsel %vm878, %v4733, 0.0
      %4780 = vadd.xlane.f32.xlu0 %v4779
      %v4781 = vpop.xlane.xlu0 %4780
      %v4782 = vmul.f32 %v4736, %v4685
      %v4783 = vmul.f32 %v4739, %v4685
      %v4784 = vmul.f32 %v4742, %v4685
      %v4785 = vmul.f32 %v4745, %v4685
      %v4786 = vmul.f32 %v4748, %v4685
      %v4787 = vmul.f32 %v4751, %v4685
      %v4788 = vmul.f32 %v4754, %v4685
      %v4789 = vmul.f32 %v4757, %v4685
      %v4790 = vmul.f32 %v4760, %v4685
      %v4791 = vmul.f32 %v4763, %v4685
      %v4792 = vmul.f32 %v4766, %v4685
      %v4793 = vmul.f32 %v4769, %v4685
      %v4794 = vmul.f32 %v4772, %v4685
      %v4795 = vmul.f32 %v4775, %v4685
      %v4796 = vmul.f32 %v4778, %v4685
      %v4797 = vmul.f32 %v4781, %v4685
      %v4798 = vadd.f32 %v4782, 1e-05
      %v4799 = vadd.f32 %v4783, 1e-05
      %v4800 = vadd.f32 %v4784, 1e-05
      %v4801 = vadd.f32 %v4785, 1e-05
      %v4802 = vadd.f32 %v4786, 1e-05
      %v4803 = vadd.f32 %v4787, 1e-05
      %v4804 = vadd.f32 %v4788, 1e-05
      %v4805 = vadd.f32 %v4789, 1e-05
      %v4806 = vadd.f32 %v4790, 1e-05
      %v4807 = vadd.f32 %v4791, 1e-05
      %v4808 = vadd.f32 %v4792, 1e-05
      %v4809 = vadd.f32 %v4793, 1e-05
      %v4810 = vadd.f32 %v4794, 1e-05
      %v4811 = vadd.f32 %v4795, 1e-05
      %v4812 = vadd.f32 %v4796, 1e-05
      %v4813 = vadd.f32 %v4797, 1e-05
      %v4814 = vrsqrt.pop %v4798
      %v4815 = vrsqrt.pop %v4799
      %v4816 = vrsqrt.pop %v4800
      %v4817 = vrsqrt.pop %v4801
      %v4818 = vrsqrt.pop %v4802
      %v4819 = vrsqrt.pop %v4803
      %v4820 = vrsqrt.pop %v4804
      %v4821 = vrsqrt.pop %v4805
      %v4822 = vrsqrt.pop %v4806
      %v4823 = vrsqrt.pop %v4807
      %v4824 = vrsqrt.pop %v4808
      %v4825 = vrsqrt.pop %v4809
      %v4826 = vrsqrt.pop %v4810
      %v4827 = vrsqrt.pop %v4811
      %v4828 = vrsqrt.pop %v4812
      %v4829 = vrsqrt.pop %v4813
      %v4830 = vmul.f32 %v4702, %v4814
      %v4831 = vmul.f32 %v4703, %v4815
      %v4832 = vmul.f32 %v4704, %v4816
      %v4833 = vmul.f32 %v4705, %v4817
      %v4834 = vmul.f32 %v4706, %v4818
      %v4835 = vmul.f32 %v4707, %v4819
      %v4836 = vmul.f32 %v4708, %v4820
      %v4837 = vmul.f32 %v4709, %v4821
      %v4838 = vmul.f32 %v4710, %v4822
      %v4839 = vmul.f32 %v4711, %v4823
      %v4840 = vmul.f32 %v4712, %v4824
      %v4841 = vmul.f32 %v4713, %v4825
      %v4842 = vmul.f32 %v4714, %v4826
      %v4843 = vmul.f32 %v4715, %v4827
      %v4844 = vmul.f32 %v4716, %v4828
      %v4845 = vmul.f32 %v4717, %v4829
      %v4847 = vlaneseq
      %v4848 = vshrl.u32 %v4847, 7
      %v4849 = vsub.s32 0, %v4848
      %v4850 = vrot.slane %v4635, %v4849
      %v4852 = vmul.f32 %v4830, %v4850
      %v4853 = vmul.f32 %v4831, %v4850
      %v4854 = vmul.f32 %v4832, %v4850
      %v4855 = vmul.f32 %v4833, %v4850
      %v4856 = vmul.f32 %v4834, %v4850
      %v4857 = vmul.f32 %v4835, %v4850
      %v4858 = vmul.f32 %v4836, %v4850
      %v4859 = vmul.f32 %v4837, %v4850
      %v4860 = vmul.f32 %v4838, %v4850
      %v4861 = vmul.f32 %v4839, %v4850
      %v4862 = vmul.f32 %v4840, %v4850
      %v4863 = vmul.f32 %v4841, %v4850
      %v4864 = vmul.f32 %v4842, %v4850
      %v4865 = vmul.f32 %v4843, %v4850
      %v4866 = vmul.f32 %v4844, %v4850
      %v4867 = vmul.f32 %v4845, %v4850
      %v4869 = vlaneseq
      %v4870 = vshrl.u32 %v4869, 7
      %v4871 = vsub.s32 0, %v4870
      %v4872 = vrot.slane %v4636, %v4871
      %v4874 = vadd.f32 %v4852, %v4872
      %v4875 = vadd.f32 %v4853, %v4872
      %v4876 = vadd.f32 %v4854, %v4872
      %v4877 = vadd.f32 %v4855, %v4872
      %v4878 = vadd.f32 %v4856, %v4872
      %v4879 = vadd.f32 %v4857, %v4872
      %v4880 = vadd.f32 %v4858, %v4872
      %v4881 = vadd.f32 %v4859, %v4872
      %v4882 = vadd.f32 %v4860, %v4872
      %v4883 = vadd.f32 %v4861, %v4872
      %v4884 = vadd.f32 %v4862, %v4872
      %v4885 = vadd.f32 %v4863, %v4872
      %v4886 = vadd.f32 %v4864, %v4872
      %v4887 = vadd.f32 %v4865, %v4872
      %v4888 = vadd.f32 %v4866, %v4872
      %v4889 = vadd.f32 %v4867, %v4872
      %v4890 = vld [vmem:[%s11] sm:$0xf]
      %v4891 = vld [vmem:[%s11 + $0x4] sm:$0xf]
      %v4892 = vld [vmem:[%s11 + $0x8] sm:$0xf]
      %v4893 = vld [vmem:[%s11 + $0xc] sm:$0xf]
      %v4894 = vpack.c.bf16 %v4875, %v4874
      %v4895 = vpack.c.bf16 %v4877, %v4876
      %v4896 = vpack.c.bf16 %v4879, %v4878
      %v4897 = vpack.c.bf16 %v4881, %v4880
      %v4898 = vpack.c.bf16 %v4883, %v4882
      %v4899 = vpack.c.bf16 %v4885, %v4884
      %v4900 = vpack.c.bf16 %v4887, %v4886
      %v4901 = vpack.c.bf16 %v4889, %v4888
      %v4902 = vld [vmem:[%s12] sm:$0x1]
      %v4904 = vlaneseq
      %v4905 = vshrl.u32 %v4904, 7
      %v4906 = vsub.s32 0, %v4905
      %v4907 = vrot.slane %v4902, %v4906
      %v4913 = vunpack.c.l.b16 %v4890
      %v4914 = vunpack.c.l.b16 %v4891
      %v4915 = vunpack.c.l.b16 %v4892
      %v4916 = vunpack.c.l.b16 %v4893
      %v4917 = vpack.c.b16 %v4914, %v4913
      %v4918 = vpack.c.b16 %v4916, %v4915
      %v4922 = vsel %vm878, %v4894, 0
      %v4925 = vsel %vm878, %v4895, 0
      %v4928 = vsel %vm878, %v4896, 0
      %v4931 = vsel %vm878, %v4897, 0
      %v4934 = vsel %vm878, %v4898, 0
      %v4937 = vsel %vm878, %v4899, 0
      %v4940 = vsel %vm878, %v4900, 0
      %v4943 = vsel %vm878, %v4901, 0
      %4945 = vmatprep.subr.bf16.mxu0 0
      %4946 = vmatpush1.bf16.msra.mxu0 0
      %4947 = vmatprep.subr.bf16.mxu0 0
      %4948 = vmatpush1.bf16.msra.mxu0 0
      %4949 = vmatprep.subr.bf16.mxu0 0
      %4950 = vmatpush1.bf16.msra.mxu0 0
      %4951 = vmatprep.subr.bf16.mxu0 0
      %4952 = vmatpush1.bf16.msra.mxu0 0
      %4953 = vmatprep.subr.bf16.mxu0 0
      %4954 = vmatpush1.bf16.msra.mxu0 0
      %4955 = vmatprep.subr.bf16.mxu0 0
      %4956 = vmatpush1.bf16.msra.mxu0 0
      %4957 = vmatprep.subr.bf16.mxu0 0
      %4958 = vmatpush1.bf16.msra.mxu0 %v4918
      %4959 = vmatprep.subr.bf16.mxu0 0
      %4960 = vmatpush1.bf16.msra.mxu0 %v4917
      %4961 = vmatprep.subr.bf16.mxu0 0
      %4962 = vmatpush2.bf16.msra.mxu0 0
      %4963 = vmatprep.subr.bf16.mxu0 0
      %4964 = vmatpush2.bf16.msra.mxu0 0
      %4965 = vmatprep.subr.bf16.mxu0 0
      %4966 = vmatpush2.bf16.msra.mxu0 0
      %4967 = vmatprep.subr.bf16.mxu0 0
      %4968 = vmatpush2.bf16.msra.mxu0 0
      %4969 = vmatprep.subr.bf16.mxu0 0
      %4970 = vmatpush2.bf16.msra.mxu0 0
      %4971 = vmatprep.subr.bf16.mxu0 0
      %4972 = vmatpush2.bf16.msra.mxu0 0
      %4973 = vmatprep.subr.bf16.mxu0 0
      %4974 = vmatpush2.bf16.msra.mxu0 0
      %4975 = vmatprep.subr.bf16.mxu0 0
      %4976 = vmatpush2.bf16.msra.mxu0 0
      %4977 = vmatprep.mubr.bf16.mxu0 0
      %4978 = vmatmul.mubr.bf16.gmra.mxu0 %v4922
      %v4979 = vpop.f32.mrf.mxu0
      %v4980 = vadd.f32 %v4907, %v4979
      %v4981 = vpop.f32.mrf.mxu0
      %v4982 = vpop.f32.mrf.mxu0
      %v4983 = vadd.f32 %v4907, %v4982
      %v4984 = vpop.f32.mrf.mxu0
      %4985 = vmatprep.mubr.bf16.mxu0 0
      %4986 = vmatmul.mubr.bf16.gmra.mxu0 %v4925
      %v4987 = vpop.f32.mrf.mxu0
      %v4988 = vadd.f32 %v4907, %v4987
      %v4989 = vpop.f32.mrf.mxu0
      %v4990 = vpop.f32.mrf.mxu0
      %v4991 = vadd.f32 %v4907, %v4990
      %v4992 = vpop.f32.mrf.mxu0
      %4993 = vmatprep.mubr.bf16.mxu0 0
      %4994 = vmatmul.mubr.bf16.gmra.mxu0 %v4928
      %v4995 = vpop.f32.mrf.mxu0
      %v4996 = vadd.f32 %v4907, %v4995
      %v4997 = vpop.f32.mrf.mxu0
      %v4998 = vpop.f32.mrf.mxu0
      %v4999 = vadd.f32 %v4907, %v4998
      %v5000 = vpop.f32.mrf.mxu0
      %5001 = vmatprep.mubr.bf16.mxu0 0
      %5002 = vmatmul.mubr.bf16.gmra.mxu0 %v4931
      %v5003 = vpop.f32.mrf.mxu0
      %v5004 = vadd.f32 %v4907, %v5003
      %v5005 = vpop.f32.mrf.mxu0
      %v5006 = vpop.f32.mrf.mxu0
      %v5007 = vadd.f32 %v4907, %v5006
      %v5008 = vpop.f32.mrf.mxu0
      %5009 = vmatprep.mubr.bf16.mxu0 0
      %5010 = vmatmul.mubr.bf16.gmra.mxu0 %v4934
      %v5011 = vpop.f32.mrf.mxu0
      %v5012 = vadd.f32 %v4907, %v5011
      %v5013 = vpop.f32.mrf.mxu0
      %v5014 = vpop.f32.mrf.mxu0
      %v5015 = vadd.f32 %v4907, %v5014
      %v5016 = vpop.f32.mrf.mxu0
      %5017 = vmatprep.mubr.bf16.mxu0 0
      %5018 = vmatmul.mubr.bf16.gmra.mxu0 %v4937
      %v5019 = vpop.f32.mrf.mxu0
      %v5020 = vadd.f32 %v4907, %v5019
      %v5021 = vpop.f32.mrf.mxu0
      %v5022 = vpop.f32.mrf.mxu0
      %v5023 = vadd.f32 %v4907, %v5022
      %v5024 = vpop.f32.mrf.mxu0
      %5025 = vmatprep.mubr.bf16.mxu0 0
      %5026 = vmatmul.mubr.bf16.gmra.mxu0 %v4940
      %v5027 = vpop.f32.mrf.mxu0
      %v5028 = vadd.f32 %v4907, %v5027
      %v5029 = vpop.f32.mrf.mxu0
      %v5030 = vpop.f32.mrf.mxu0
      %v5031 = vadd.f32 %v4907, %v5030
      %v5032 = vpop.f32.mrf.mxu0
      %5033 = vmatprep.mubr.bf16.mxu0 0
      %5034 = vmatmul.mubr.bf16.gmra.mxu0 %v4943
      %v5035 = vpop.f32.mrf.mxu0
      %v5036 = vadd.f32 %v4907, %v5035
      %v5037 = vpop.f32.mrf.mxu0
      %v5038 = vpop.f32.mrf.mxu0
      %v5039 = vadd.f32 %v4907, %v5038
      %v5040 = vpop.f32.mrf.mxu0
      %5041 = vdwg.mxu0
      %v5042 = vmax.f32 %v4980, 0.0
      %v5043 = vmax.f32 %v4983, 0.0
      %v5044 = vmax.f32 %v4988, 0.0
      %v5045 = vmax.f32 %v4991, 0.0
      %v5046 = vmax.f32 %v4996, 0.0
      %v5047 = vmax.f32 %v4999, 0.0
      %v5048 = vmax.f32 %v5004, 0.0
      %v5049 = vmax.f32 %v5007, 0.0
      %v5050 = vmax.f32 %v5012, 0.0
      %v5051 = vmax.f32 %v5015, 0.0
      %v5052 = vmax.f32 %v5020, 0.0
      %v5053 = vmax.f32 %v5023, 0.0
      %v5054 = vmax.f32 %v5028, 0.0
      %v5055 = vmax.f32 %v5031, 0.0
      %v5056 = vmax.f32 %v5036, 0.0
      %v5057 = vmax.f32 %v5039, 0.0
      %v5058 = vld [vmem:[%s13] sm:$0xf]
      %v5059 = vld [vmem:[%s13 + $0x4] sm:$0xf]
      %v5060 = vld [vmem:[%s13 + $0x8] sm:$0xf]
      %v5061 = vld [vmem:[%s13 + $0xc] sm:$0xf]
      %v5062 = vld [vmem:[%s13 + $0x10] sm:$0xf]
      %v5063 = vld [vmem:[%s13 + $0x14] sm:$0xf]
      %v5064 = vld [vmem:[%s13 + $0x18] sm:$0xf]
      %v5065 = vld [vmem:[%s13 + $0x1c] sm:$0xf]
      %v5066 = vld [vmem:[%s13 + $0x20] sm:$0xf]
      %v5067 = vld [vmem:[%s13 + $0x24] sm:$0xf]
      %v5068 = vld [vmem:[%s13 + $0x28] sm:$0xf]
      %v5069 = vld [vmem:[%s13 + $0x2c] sm:$0xf]
      %v5070 = vld [vmem:[%s13 + $0x30] sm:$0xf]
      %v5071 = vld [vmem:[%s13 + $0x34] sm:$0xf]
      %v5072 = vld [vmem:[%s13 + $0x38] sm:$0xf]
      %v5073 = vld [vmem:[%s13 + $0x3c] sm:$0xf]
      %v5074 = vpack.c.bf16 %v5043, %v5042
      %v5075 = vpack.c.bf16 %v5045, %v5044
      %v5076 = vpack.c.bf16 %v5047, %v5046
      %v5077 = vpack.c.bf16 %v5049, %v5048
      %v5078 = vpack.c.bf16 %v5051, %v5050
      %v5079 = vpack.c.bf16 %v5053, %v5052
      %v5080 = vpack.c.bf16 %v5055, %v5054
      %v5081 = vpack.c.bf16 %v5057, %v5056
      %v5082 = vld [vmem:[%s14] sm:$0x1]
      %v5084 = vlaneseq
      %v5085 = vshrl.u32 %v5084, 7
      %v5086 = vsub.s32 0, %v5085
      %v5087 = vrot.slane %v5082, %v5086
      %v5105 = vunpack.c.l.b16 %v5058
      %v5106 = vunpack.c.l.b16 %v5059
      %v5107 = vunpack.c.l.b16 %v5060
      %v5108 = vunpack.c.l.b16 %v5061
      %v5109 = vunpack.c.l.b16 %v5062
      %v5110 = vunpack.c.l.b16 %v5063
      %v5111 = vunpack.c.l.b16 %v5064
      %v5112 = vunpack.c.l.b16 %v5065
      %v5113 = vunpack.c.l.b16 %v5066
      %v5114 = vunpack.c.l.b16 %v5067
      %v5115 = vunpack.c.l.b16 %v5068
      %v5116 = vunpack.c.l.b16 %v5069
      %v5117 = vunpack.c.l.b16 %v5070
      %v5118 = vunpack.c.l.b16 %v5071
      %v5119 = vunpack.c.l.b16 %v5072
      %v5120 = vunpack.c.l.b16 %v5073
      %v5121 = vpack.c.b16 %v5106, %v5105
      %v5122 = vpack.c.b16 %v5108, %v5107
      %v5123 = vpack.c.b16 %v5110, %v5109
      %v5124 = vpack.c.b16 %v5112, %v5111
      %v5125 = vpack.c.b16 %v5114, %v5113
      %v5126 = vpack.c.b16 %v5116, %v5115
      %v5127 = vpack.c.b16 %v5118, %v5117
      %v5128 = vpack.c.b16 %v5120, %v5119
      %5137 = vmatprep.subr.bf16.mxu0 0
      %5138 = vmatpush1.bf16.msra.mxu0 %v5128
      %5139 = vmatprep.subr.bf16.mxu0 0
      %5140 = vmatpush1.bf16.msra.mxu0 %v5127
      %5141 = vmatprep.subr.bf16.mxu0 0
      %5142 = vmatpush1.bf16.msra.mxu0 %v5126
      %5143 = vmatprep.subr.bf16.mxu0 0
      %5144 = vmatpush1.bf16.msra.mxu0 %v5125
      %5145 = vmatprep.subr.bf16.mxu0 0
      %5146 = vmatpush1.bf16.msra.mxu0 %v5124
      %5147 = vmatprep.subr.bf16.mxu0 0
      %5148 = vmatpush1.bf16.msra.mxu0 %v5123
      %5149 = vmatprep.subr.bf16.mxu0 0
      %5150 = vmatpush1.bf16.msra.mxu0 %v5122
      %5151 = vmatprep.subr.bf16.mxu0 0
      %5152 = vmatpush1.bf16.msra.mxu0 %v5121
      %5153 = vmatprep.subr.bf16.mxu0 0
      %5154 = vmatpush2.bf16.msra.mxu0 0
      %5155 = vmatprep.subr.bf16.mxu0 0
      %5156 = vmatpush2.bf16.msra.mxu0 0
      %5157 = vmatprep.subr.bf16.mxu0 0
      %5158 = vmatpush2.bf16.msra.mxu0 0
      %5159 = vmatprep.subr.bf16.mxu0 0
      %5160 = vmatpush2.bf16.msra.mxu0 0
      %5161 = vmatprep.subr.bf16.mxu0 0
      %5162 = vmatpush2.bf16.msra.mxu0 0
      %5163 = vmatprep.subr.bf16.mxu0 0
      %5164 = vmatpush2.bf16.msra.mxu0 0
      %5165 = vmatprep.subr.bf16.mxu0 0
      %5166 = vmatpush2.bf16.msra.mxu0 0
      %5167 = vmatprep.subr.bf16.mxu0 0
      %5168 = vmatpush2.bf16.msra.mxu0 0
      %5169 = vmatprep.mubr.bf16.mxu0 0
      %5170 = vmatmul.mubr.bf16.gmra.mxu0 %v5074
      %v5171 = vpop.f32.mrf.mxu0
      %v5172 = vadd.f32 %v5087, %v5171
      %v5173 = vpop.f32.mrf.mxu0
      %v5174 = vpop.f32.mrf.mxu0
      %v5175 = vadd.f32 %v5087, %v5174
      %v5176 = vpop.f32.mrf.mxu0
      %5177 = vmatprep.mubr.bf16.mxu0 0
      %5178 = vmatmul.mubr.bf16.gmra.mxu0 %v5075
      %v5179 = vpop.f32.mrf.mxu0
      %v5180 = vadd.f32 %v5087, %v5179
      %v5181 = vpop.f32.mrf.mxu0
      %v5182 = vpop.f32.mrf.mxu0
      %v5183 = vadd.f32 %v5087, %v5182
      %v5184 = vpop.f32.mrf.mxu0
      %5185 = vmatprep.mubr.bf16.mxu0 0
      %5186 = vmatmul.mubr.bf16.gmra.mxu0 %v5076
      %v5187 = vpop.f32.mrf.mxu0
      %v5188 = vadd.f32 %v5087, %v5187
      %v5189 = vpop.f32.mrf.mxu0
      %v5190 = vpop.f32.mrf.mxu0
      %v5191 = vadd.f32 %v5087, %v5190
      %v5192 = vpop.f32.mrf.mxu0
      %5193 = vmatprep.mubr.bf16.mxu0 0
      %5194 = vmatmul.mubr.bf16.gmra.mxu0 %v5077
      %v5195 = vpop.f32.mrf.mxu0
      %v5196 = vadd.f32 %v5087, %v5195
      %v5197 = vpop.f32.mrf.mxu0
      %v5198 = vpop.f32.mrf.mxu0
      %v5199 = vadd.f32 %v5087, %v5198
      %v5200 = vpop.f32.mrf.mxu0
      %5201 = vmatprep.mubr.bf16.mxu0 0
      %5202 = vmatmul.mubr.bf16.gmra.mxu0 %v5078
      %v5203 = vpop.f32.mrf.mxu0
      %v5204 = vadd.f32 %v5087, %v5203
      %v5205 = vpop.f32.mrf.mxu0
      %v5206 = vpop.f32.mrf.mxu0
      %v5207 = vadd.f32 %v5087, %v5206
      %v5208 = vpop.f32.mrf.mxu0
      %5209 = vmatprep.mubr.bf16.mxu0 0
      %5210 = vmatmul.mubr.bf16.gmra.mxu0 %v5079
      %v5211 = vpop.f32.mrf.mxu0
      %v5212 = vadd.f32 %v5087, %v5211
      %v5213 = vpop.f32.mrf.mxu0
      %v5214 = vpop.f32.mrf.mxu0
      %v5215 = vadd.f32 %v5087, %v5214
      %v5216 = vpop.f32.mrf.mxu0
      %5217 = vmatprep.mubr.bf16.mxu0 0
      %5218 = vmatmul.mubr.bf16.gmra.mxu0 %v5080
      %v5219 = vpop.f32.mrf.mxu0
      %v5220 = vadd.f32 %v5087, %v5219
      %v5221 = vpop.f32.mrf.mxu0
      %v5222 = vpop.f32.mrf.mxu0
      %v5223 = vadd.f32 %v5087, %v5222
      %v5224 = vpop.f32.mrf.mxu0
      %5225 = vmatprep.mubr.bf16.mxu0 0
      %5226 = vmatmul.mubr.bf16.gmra.mxu0 %v5081
      %v5227 = vpop.f32.mrf.mxu0
      %v5228 = vadd.f32 %v5087, %v5227
      %v5229 = vpop.f32.mrf.mxu0
      %v5230 = vpop.f32.mrf.mxu0
      %v5231 = vadd.f32 %v5087, %v5230
      %v5232 = vpop.f32.mrf.mxu0
      %5233 = vdwg.mxu0
      %v5234 = vadd.f32 %v4874, %v5172
      %v5235 = vadd.f32 %v4875, %v5175
      %v5236 = vadd.f32 %v4876, %v5180
      %v5237 = vadd.f32 %v4877, %v5183
      %v5238 = vadd.f32 %v4878, %v5188
      %v5239 = vadd.f32 %v4879, %v5191
      %v5240 = vadd.f32 %v4880, %v5196
      %v5241 = vadd.f32 %v4881, %v5199
      %v5242 = vadd.f32 %v4882, %v5204
      %v5243 = vadd.f32 %v4883, %v5207
      %v5244 = vadd.f32 %v4884, %v5212
      %v5245 = vadd.f32 %v4885, %v5215
      %v5246 = vadd.f32 %v4886, %v5220
      %v5247 = vadd.f32 %v4887, %v5223
      %v5248 = vadd.f32 %v4888, %v5228
      %v5249 = vadd.f32 %v4889, %v5231
      %v5250 = vld [vmem:[%s15] sm:$0x1]
      %v5251 = vld [vmem:[%s16] sm:$0x1]
      %v5252 = vsel %vm878, %v5234, 0.0
      %5253 = vadd.xlane.f32.xlu0 %v5252
      %v5254 = vpop.xlane.xlu0 %5253
      %v5255 = vsel %vm878, %v5235, 0.0
      %5256 = vadd.xlane.f32.xlu0 %v5255
      %v5257 = vpop.xlane.xlu0 %5256
      %v5258 = vsel %vm878, %v5236, 0.0
      %5259 = vadd.xlane.f32.xlu0 %v5258
      %v5260 = vpop.xlane.xlu0 %5259
      %v5261 = vsel %vm878, %v5237, 0.0
      %5262 = vadd.xlane.f32.xlu0 %v5261
      %v5263 = vpop.xlane.xlu0 %5262
      %v5264 = vsel %vm878, %v5238, 0.0
      %5265 = vadd.xlane.f32.xlu0 %v5264
      %v5266 = vpop.xlane.xlu0 %5265
      %v5267 = vsel %vm878, %v5239, 0.0
      %5268 = vadd.xlane.f32.xlu0 %v5267
      %v5269 = vpop.xlane.xlu0 %5268
      %v5270 = vsel %vm878, %v5240, 0.0
      %5271 = vadd.xlane.f32.xlu0 %v5270
      %v5272 = vpop.xlane.xlu0 %5271
      %v5273 = vsel %vm878, %v5241, 0.0
      %5274 = vadd.xlane.f32.xlu0 %v5273
      %v5275 = vpop.xlane.xlu0 %5274
      %v5276 = vsel %vm878, %v5242, 0.0
      %5277 = vadd.xlane.f32.xlu0 %v5276
      %v5278 = vpop.xlane.xlu0 %5277
      %v5279 = vsel %vm878, %v5243, 0.0
      %5280 = vadd.xlane.f32.xlu0 %v5279
      %v5281 = vpop.xlane.xlu0 %5280
      %v5282 = vsel %vm878, %v5244, 0.0
      %5283 = vadd.xlane.f32.xlu0 %v5282
      %v5284 = vpop.xlane.xlu0 %5283
      %v5285 = vsel %vm878, %v5245, 0.0
      %5286 = vadd.xlane.f32.xlu0 %v5285
      %v5287 = vpop.xlane.xlu0 %5286
      %v5288 = vsel %vm878, %v5246, 0.0
      %5289 = vadd.xlane.f32.xlu0 %v5288
      %v5290 = vpop.xlane.xlu0 %5289
      %v5291 = vsel %vm878, %v5247, 0.0
      %5292 = vadd.xlane.f32.xlu0 %v5291
      %v5293 = vpop.xlane.xlu0 %5292
      %v5294 = vsel %vm878, %v5248, 0.0
      %5295 = vadd.xlane.f32.xlu0 %v5294
      %v5296 = vpop.xlane.xlu0 %5295
      %v5297 = vsel %vm878, %v5249, 0.0
      %5298 = vadd.xlane.f32.xlu0 %v5297
      %v5299 = vpop.xlane.xlu0 %5298
      %v5300 = vmul.f32 %v5254, %v4685
      %v5301 = vmul.f32 %v5257, %v4685
      %v5302 = vmul.f32 %v5260, %v4685
      %v5303 = vmul.f32 %v5263, %v4685
      %v5304 = vmul.f32 %v5266, %v4685
      %v5305 = vmul.f32 %v5269, %v4685
      %v5306 = vmul.f32 %v5272, %v4685
      %v5307 = vmul.f32 %v5275, %v4685
      %v5308 = vmul.f32 %v5278, %v4685
      %v5309 = vmul.f32 %v5281, %v4685
      %v5310 = vmul.f32 %v5284, %v4685
      %v5311 = vmul.f32 %v5287, %v4685
      %v5312 = vmul.f32 %v5290, %v4685
      %v5313 = vmul.f32 %v5293, %v4685
      %v5314 = vmul.f32 %v5296, %v4685
      %v5315 = vmul.f32 %v5299, %v4685
      %v5316 = vsub.f32 %v5234, %v5300
      %v5317 = vsub.f32 %v5235, %v5301
      %v5318 = vsub.f32 %v5236, %v5302
      %v5319 = vsub.f32 %v5237, %v5303
      %v5320 = vsub.f32 %v5238, %v5304
      %v5321 = vsub.f32 %v5239, %v5305
      %v5322 = vsub.f32 %v5240, %v5306
      %v5323 = vsub.f32 %v5241, %v5307
      %v5324 = vsub.f32 %v5242, %v5308
      %v5325 = vsub.f32 %v5243, %v5309
      %v5326 = vsub.f32 %v5244, %v5310
      %v5327 = vsub.f32 %v5245, %v5311
      %v5328 = vsub.f32 %v5246, %v5312
      %v5329 = vsub.f32 %v5247, %v5313
      %v5330 = vsub.f32 %v5248, %v5314
      %v5331 = vsub.f32 %v5249, %v5315
      %v5332 = vmul.f32 %v5316, %v5316
      %v5333 = vmul.f32 %v5317, %v5317
      %v5334 = vmul.f32 %v5318, %v5318
      %v5335 = vmul.f32 %v5319, %v5319
      %v5336 = vmul.f32 %v5320, %v5320
      %v5337 = vmul.f32 %v5321, %v5321
      %v5338 = vmul.f32 %v5322, %v5322
      %v5339 = vmul.f32 %v5323, %v5323
      %v5340 = vmul.f32 %v5324, %v5324
      %v5341 = vmul.f32 %v5325, %v5325
      %v5342 = vmul.f32 %v5326, %v5326
      %v5343 = vmul.f32 %v5327, %v5327
      %v5344 = vmul.f32 %v5328, %v5328
      %v5345 = vmul.f32 %v5329, %v5329
      %v5346 = vmul.f32 %v5330, %v5330
      %v5347 = vmul.f32 %v5331, %v5331
      %v5348 = vsel %vm878, %v5332, 0.0
      %5349 = vadd.xlane.f32.xlu0 %v5348
      %v5350 = vpop.xlane.xlu0 %5349
      %v5351 = vsel %vm878, %v5333, 0.0
      %5352 = vadd.xlane.f32.xlu0 %v5351
      %v5353 = vpop.xlane.xlu0 %5352
      %v5354 = vsel %vm878, %v5334, 0.0
      %5355 = vadd.xlane.f32.xlu0 %v5354
      %v5356 = vpop.xlane.xlu0 %5355
      %v5357 = vsel %vm878, %v5335, 0.0
      %5358 = vadd.xlane.f32.xlu0 %v5357
      %v5359 = vpop.xlane.xlu0 %5358
      %v5360 = vsel %vm878, %v5336, 0.0
      %5361 = vadd.xlane.f32.xlu0 %v5360
      %v5362 = vpop.xlane.xlu0 %5361
      %v5363 = vsel %vm878, %v5337, 0.0
      %5364 = vadd.xlane.f32.xlu0 %v5363
      %v5365 = vpop.xlane.xlu0 %5364
      %v5366 = vsel %vm878, %v5338, 0.0
      %5367 = vadd.xlane.f32.xlu0 %v5366
      %v5368 = vpop.xlane.xlu0 %5367
      %v5369 = vsel %vm878, %v5339, 0.0
      %5370 = vadd.xlane.f32.xlu0 %v5369
      %v5371 = vpop.xlane.xlu0 %5370
      %v5372 = vsel %vm878, %v5340, 0.0
      %5373 = vadd.xlane.f32.xlu0 %v5372
      %v5374 = vpop.xlane.xlu0 %5373
      %v5375 = vsel %vm878, %v5341, 0.0
      %5376 = vadd.xlane.f32.xlu0 %v5375
      %v5377 = vpop.xlane.xlu0 %5376
      %v5378 = vsel %vm878, %v5342, 0.0
      %5379 = vadd.xlane.f32.xlu0 %v5378
      %v5380 = vpop.xlane.xlu0 %5379
      %v5381 = vsel %vm878, %v5343, 0.0
      %5382 = vadd.xlane.f32.xlu0 %v5381
      %v5383 = vpop.xlane.xlu0 %5382
      %v5384 = vsel %vm878, %v5344, 0.0
      %5385 = vadd.xlane.f32.xlu0 %v5384
      %v5386 = vpop.xlane.xlu0 %5385
      %v5387 = vsel %vm878, %v5345, 0.0
      %5388 = vadd.xlane.f32.xlu0 %v5387
      %v5389 = vpop.xlane.xlu0 %5388
      %v5390 = vsel %vm878, %v5346, 0.0
      %5391 = vadd.xlane.f32.xlu0 %v5390
      %v5392 = vpop.xlane.xlu0 %5391
      %v5393 = vsel %vm878, %v5347, 0.0
      %5394 = vadd.xlane.f32.xlu0 %v5393
      %v5395 = vpop.xlane.xlu0 %5394
      %v5396 = vmul.f32 %v5350, %v4685
      %v5397 = vmul.f32 %v5353, %v4685
      %v5398 = vmul.f32 %v5356, %v4685
      %v5399 = vmul.f32 %v5359, %v4685
      %v5400 = vmul.f32 %v5362, %v4685
      %v5401 = vmul.f32 %v5365, %v4685
      %v5402 = vmul.f32 %v5368, %v4685
      %v5403 = vmul.f32 %v5371, %v4685
      %v5404 = vmul.f32 %v5374, %v4685
      %v5405 = vmul.f32 %v5377, %v4685
      %v5406 = vmul.f32 %v5380, %v4685
      %v5407 = vmul.f32 %v5383, %v4685
      %v5408 = vmul.f32 %v5386, %v4685
      %v5409 = vmul.f32 %v5389, %v4685
      %v5410 = vmul.f32 %v5392, %v4685
      %v5411 = vmul.f32 %v5395, %v4685
      %v5412 = vadd.f32 %v5396, 1e-05
      %v5413 = vadd.f32 %v5397, 1e-05
      %v5414 = vadd.f32 %v5398, 1e-05
      %v5415 = vadd.f32 %v5399, 1e-05
      %v5416 = vadd.f32 %v5400, 1e-05
      %v5417 = vadd.f32 %v5401, 1e-05
      %v5418 = vadd.f32 %v5402, 1e-05
      %v5419 = vadd.f32 %v5403, 1e-05
      %v5420 = vadd.f32 %v5404, 1e-05
      %v5421 = vadd.f32 %v5405, 1e-05
      %v5422 = vadd.f32 %v5406, 1e-05
      %v5423 = vadd.f32 %v5407, 1e-05
      %v5424 = vadd.f32 %v5408, 1e-05
      %v5425 = vadd.f32 %v5409, 1e-05
      %v5426 = vadd.f32 %v5410, 1e-05
      %v5427 = vadd.f32 %v5411, 1e-05
      %v5428 = vrsqrt.pop %v5412
      %v5429 = vrsqrt.pop %v5413
      %v5430 = vrsqrt.pop %v5414
      %v5431 = vrsqrt.pop %v5415
      %v5432 = vrsqrt.pop %v5416
      %v5433 = vrsqrt.pop %v5417
      %v5434 = vrsqrt.pop %v5418
      %v5435 = vrsqrt.pop %v5419
      %v5436 = vrsqrt.pop %v5420
      %v5437 = vrsqrt.pop %v5421
      %v5438 = vrsqrt.pop %v5422
      %v5439 = vrsqrt.pop %v5423
      %v5440 = vrsqrt.pop %v5424
      %v5441 = vrsqrt.pop %v5425
      %v5442 = vrsqrt.pop %v5426
      %v5443 = vrsqrt.pop %v5427
      %v5444 = vmul.f32 %v5316, %v5428
      %v5445 = vmul.f32 %v5317, %v5429
      %v5446 = vmul.f32 %v5318, %v5430
      %v5447 = vmul.f32 %v5319, %v5431
      %v5448 = vmul.f32 %v5320, %v5432
      %v5449 = vmul.f32 %v5321, %v5433
      %v5450 = vmul.f32 %v5322, %v5434
      %v5451 = vmul.f32 %v5323, %v5435
      %v5452 = vmul.f32 %v5324, %v5436
      %v5453 = vmul.f32 %v5325, %v5437
      %v5454 = vmul.f32 %v5326, %v5438
      %v5455 = vmul.f32 %v5327, %v5439
      %v5456 = vmul.f32 %v5328, %v5440
      %v5457 = vmul.f32 %v5329, %v5441
      %v5458 = vmul.f32 %v5330, %v5442
      %v5459 = vmul.f32 %v5331, %v5443
      %v5461 = vlaneseq
      %v5462 = vshrl.u32 %v5461, 7
      %v5463 = vsub.s32 0, %v5462
      %v5464 = vrot.slane %v5250, %v5463
      %v5466 = vmul.f32 %v5444, %v5464
      %v5467 = vmul.f32 %v5445, %v5464
      %v5468 = vmul.f32 %v5446, %v5464
      %v5469 = vmul.f32 %v5447, %v5464
      %v5470 = vmul.f32 %v5448, %v5464
      %v5471 = vmul.f32 %v5449, %v5464
      %v5472 = vmul.f32 %v5450, %v5464
      %v5473 = vmul.f32 %v5451, %v5464
      %v5474 = vmul.f32 %v5452, %v5464
      %v5475 = vmul.f32 %v5453, %v5464
      %v5476 = vmul.f32 %v5454, %v5464
      %v5477 = vmul.f32 %v5455, %v5464
      %v5478 = vmul.f32 %v5456, %v5464
      %v5479 = vmul.f32 %v5457, %v5464
      %v5480 = vmul.f32 %v5458, %v5464
      %v5481 = vmul.f32 %v5459, %v5464
      %v5483 = vlaneseq
      %v5484 = vshrl.u32 %v5483, 7
      %v5485 = vsub.s32 0, %v5484
      %v5486 = vrot.slane %v5251, %v5485
      %v5488 = vadd.f32 %v5466, %v5486
      %v5489 = vadd.f32 %v5467, %v5486
      %v5490 = vadd.f32 %v5468, %v5486
      %v5491 = vadd.f32 %v5469, %v5486
      %v5492 = vadd.f32 %v5470, %v5486
      %v5493 = vadd.f32 %v5471, %v5486
      %v5494 = vadd.f32 %v5472, %v5486
      %v5495 = vadd.f32 %v5473, %v5486
      %v5496 = vadd.f32 %v5474, %v5486
      %v5497 = vadd.f32 %v5475, %v5486
      %v5498 = vadd.f32 %v5476, %v5486
      %v5499 = vadd.f32 %v5477, %v5486
      %v5500 = vadd.f32 %v5478, %v5486
      %v5501 = vadd.f32 %v5479, %v5486
      %v5502 = vadd.f32 %v5480, %v5486
      %v5503 = vadd.f32 %v5481, %v5486
      %v5504 = vpack.c.bf16 %v5489, %v5488
      %v5505 = vpack.c.bf16 %v5491, %v5490
      %v5506 = vpack.c.bf16 %v5493, %v5492
      %v5507 = vpack.c.bf16 %v5495, %v5494
      %v5508 = vpack.c.bf16 %v5497, %v5496
      %v5509 = vpack.c.bf16 %v5499, %v5498
      %v5510 = vpack.c.bf16 %v5501, %v5500
      %v5511 = vpack.c.bf16 %v5503, %v5502
      %s5512 = scalar_lea.vmem %s5, 64
      %v5513 = vld [vmem:[%s5512] sm:$0xf]
      %v5514 = vld [vmem:[%s5512 + $0x4] sm:$0xf]
      %v5515 = vld [vmem:[%s5512 + $0x8] sm:$0xf]
      %v5516 = vld [vmem:[%s5512 + $0xc] sm:$0xf]
      %v5521 = vunpack.c.l.b16 %v5513
      %v5522 = vunpack.c.l.b16 %v5514
      %v5523 = vunpack.c.l.b16 %v5515
      %v5524 = vunpack.c.l.b16 %v5516
      %v5525 = vpack.c.b16 %v5522, %v5521
      %v5526 = vpack.c.b16 %v5524, %v5523
      %v5530 = vsel %vm878, %v5504, 0
      %v5533 = vsel %vm878, %v5505, 0
      %v5536 = vsel %vm878, %v5506, 0
      %v5539 = vsel %vm878, %v5507, 0
      %v5542 = vsel %vm878, %v5508, 0
      %v5545 = vsel %vm878, %v5509, 0
      %v5548 = vsel %vm878, %v5510, 0
      %v5551 = vsel %vm878, %v5511, 0
      %5553 = vmatprep.subr.bf16.mxu0 0
      %5554 = vmatpush1.bf16.msra.mxu0 0
      %5555 = vmatprep.subr.bf16.mxu0 0
      %5556 = vmatpush1.bf16.msra.mxu0 0
      %5557 = vmatprep.subr.bf16.mxu0 0
      %5558 = vmatpush1.bf16.msra.mxu0 0
      %5559 = vmatprep.subr.bf16.mxu0 0
      %5560 = vmatpush1.bf16.msra.mxu0 0
      %5561 = vmatprep.subr.bf16.mxu0 0
      %5562 = vmatpush1.bf16.msra.mxu0 0
      %5563 = vmatprep.subr.bf16.mxu0 0
      %5564 = vmatpush1.bf16.msra.mxu0 0
      %5565 = vmatprep.subr.bf16.mxu0 0
      %5566 = vmatpush1.bf16.msra.mxu0 %v5526
      %5567 = vmatprep.subr.bf16.mxu0 0
      %5568 = vmatpush1.bf16.msra.mxu0 %v5525
      %5569 = vmatprep.subr.bf16.mxu0 0
      %5570 = vmatpush2.bf16.msra.mxu0 0
      %5571 = vmatprep.subr.bf16.mxu0 0
      %5572 = vmatpush2.bf16.msra.mxu0 0
      %5573 = vmatprep.subr.bf16.mxu0 0
      %5574 = vmatpush2.bf16.msra.mxu0 0
      %5575 = vmatprep.subr.bf16.mxu0 0
      %5576 = vmatpush2.bf16.msra.mxu0 0
      %5577 = vmatprep.subr.bf16.mxu0 0
      %5578 = vmatpush2.bf16.msra.mxu0 0
      %5579 = vmatprep.subr.bf16.mxu0 0
      %5580 = vmatpush2.bf16.msra.mxu0 0
      %5581 = vmatprep.subr.bf16.mxu0 0
      %5582 = vmatpush2.bf16.msra.mxu0 0
      %5583 = vmatprep.subr.bf16.mxu0 0
      %5584 = vmatpush2.bf16.msra.mxu0 0
      %5585 = vmatprep.mubr.bf16.mxu0 0
      %5586 = vmatmul.mubr.bf16.gmra.mxu0 %v5530
      %v5587 = vpop.f32.mrf.mxu0
      %v5588 = vadd.f32 0.0, %v5587
      %v5589 = vpop.f32.mrf.mxu0
      %v5590 = vpop.f32.mrf.mxu0
      %v5591 = vadd.f32 0.0, %v5590
      %v5592 = vpop.f32.mrf.mxu0
      %5593 = vmatprep.mubr.bf16.mxu0 0
      %5594 = vmatmul.mubr.bf16.gmra.mxu0 %v5533
      %v5595 = vpop.f32.mrf.mxu0
      %v5596 = vadd.f32 0.0, %v5595
      %v5597 = vpop.f32.mrf.mxu0
      %v5598 = vpop.f32.mrf.mxu0
      %v5599 = vadd.f32 0.0, %v5598
      %v5600 = vpop.f32.mrf.mxu0
      %5601 = vmatprep.mubr.bf16.mxu0 0
      %5602 = vmatmul.mubr.bf16.gmra.mxu0 %v5536
      %v5603 = vpop.f32.mrf.mxu0
      %v5604 = vadd.f32 0.0, %v5603
      %v5605 = vpop.f32.mrf.mxu0
      %v5606 = vpop.f32.mrf.mxu0
      %v5607 = vadd.f32 0.0, %v5606
      %v5608 = vpop.f32.mrf.mxu0
      %5609 = vmatprep.mubr.bf16.mxu0 0
      %5610 = vmatmul.mubr.bf16.gmra.mxu0 %v5539
      %v5611 = vpop.f32.mrf.mxu0
      %v5612 = vadd.f32 0.0, %v5611
      %v5613 = vpop.f32.mrf.mxu0
      %v5614 = vpop.f32.mrf.mxu0
      %v5615 = vadd.f32 0.0, %v5614
      %v5616 = vpop.f32.mrf.mxu0
      %5617 = vmatprep.mubr.bf16.mxu0 0
      %5618 = vmatmul.mubr.bf16.gmra.mxu0 %v5542
      %v5619 = vpop.f32.mrf.mxu0
      %v5620 = vadd.f32 0.0, %v5619
      %v5621 = vpop.f32.mrf.mxu0
      %v5622 = vpop.f32.mrf.mxu0
      %v5623 = vadd.f32 0.0, %v5622
      %v5624 = vpop.f32.mrf.mxu0
      %5625 = vmatprep.mubr.bf16.mxu0 0
      %5626 = vmatmul.mubr.bf16.gmra.mxu0 %v5545
      %v5627 = vpop.f32.mrf.mxu0
      %v5628 = vadd.f32 0.0, %v5627
      %v5629 = vpop.f32.mrf.mxu0
      %v5630 = vpop.f32.mrf.mxu0
      %v5631 = vadd.f32 0.0, %v5630
      %v5632 = vpop.f32.mrf.mxu0
      %5633 = vmatprep.mubr.bf16.mxu0 0
      %5634 = vmatmul.mubr.bf16.gmra.mxu0 %v5548
      %v5635 = vpop.f32.mrf.mxu0
      %v5636 = vadd.f32 0.0, %v5635
      %v5637 = vpop.f32.mrf.mxu0
      %v5638 = vpop.f32.mrf.mxu0
      %v5639 = vadd.f32 0.0, %v5638
      %v5640 = vpop.f32.mrf.mxu0
      %5641 = vmatprep.mubr.bf16.mxu0 0
      %5642 = vmatmul.mubr.bf16.gmra.mxu0 %v5551
      %v5643 = vpop.f32.mrf.mxu0
      %v5644 = vadd.f32 0.0, %v5643
      %v5645 = vpop.f32.mrf.mxu0
      %v5646 = vpop.f32.mrf.mxu0
      %v5647 = vadd.f32 0.0, %v5646
      %v5648 = vpop.f32.mrf.mxu0
      %5649 = vdwg.mxu0
      %s5650 = scalar_lea.vmem %s6, 64
      %v5651 = vld [vmem:[%s5650] sm:$0xf]
      %v5652 = vld [vmem:[%s5650 + $0x4] sm:$0xf]
      %v5653 = vld [vmem:[%s5650 + $0x8] sm:$0xf]
      %v5654 = vld [vmem:[%s5650 + $0xc] sm:$0xf]
      %v5659 = vunpack.c.l.b16 %v5651
      %v5660 = vunpack.c.l.b16 %v5652
      %v5661 = vunpack.c.l.b16 %v5653
      %v5662 = vunpack.c.l.b16 %v5654
      %v5663 = vpack.c.b16 %v5660, %v5659
      %v5664 = vpack.c.b16 %v5662, %v5661
      %5667 = vmatprep.subr.bf16.mxu0 0
      %5668 = vmatpush1.bf16.msra.mxu0 0
      %5669 = vmatprep.subr.bf16.mxu0 0
      %5670 = vmatpush1.bf16.msra.mxu0 0
      %5671 = vmatprep.subr.bf16.mxu0 0
      %5672 = vmatpush1.bf16.msra.mxu0 0
      %5673 = vmatprep.subr.bf16.mxu0 0
      %5674 = vmatpush1.bf16.msra.mxu0 0
      %5675 = vmatprep.subr.bf16.mxu0 0
      %5676 = vmatpush1.bf16.msra.mxu0 0
      %5677 = vmatprep.subr.bf16.mxu0 0
      %5678 = vmatpush1.bf16.msra.mxu0 0
      %5679 = vmatprep.subr.bf16.mxu0 0
      %5680 = vmatpush1.bf16.msra.mxu0 %v5664
      %5681 = vmatprep.subr.bf16.mxu0 0
      %5682 = vmatpush1.bf16.msra.mxu0 %v5663
      %5683 = vmatprep.subr.bf16.mxu0 0
      %5684 = vmatpush2.bf16.msra.mxu0 0
      %5685 = vmatprep.subr.bf16.mxu0 0
      %5686 = vmatpush2.bf16.msra.mxu0 0
      %5687 = vmatprep.subr.bf16.mxu0 0
      %5688 = vmatpush2.bf16.msra.mxu0 0
      %5689 = vmatprep.subr.bf16.mxu0 0
      %5690 = vmatpush2.bf16.msra.mxu0 0
      %5691 = vmatprep.subr.bf16.mxu0 0
      %5692 = vmatpush2.bf16.msra.mxu0 0
      %5693 = vmatprep.subr.bf16.mxu0 0
      %5694 = vmatpush2.bf16.msra.mxu0 0
      %5695 = vmatprep.subr.bf16.mxu0 0
      %5696 = vmatpush2.bf16.msra.mxu0 0
      %5697 = vmatprep.subr.bf16.mxu0 0
      %5698 = vmatpush2.bf16.msra.mxu0 0
      %5699 = vmatprep.mubr.bf16.mxu0 0
      %5700 = vmatmul.mubr.bf16.gmra.mxu0 %v5530
      %v5701 = vpop.f32.mrf.mxu0
      %v5702 = vadd.f32 0.0, %v5701
      %v5703 = vpop.f32.mrf.mxu0
      %v5704 = vpop.f32.mrf.mxu0
      %v5705 = vadd.f32 0.0, %v5704
      %v5706 = vpop.f32.mrf.mxu0
      %5707 = vmatprep.mubr.bf16.mxu0 0
      %5708 = vmatmul.mubr.bf16.gmra.mxu0 %v5533
      %v5709 = vpop.f32.mrf.mxu0
      %v5710 = vadd.f32 0.0, %v5709
      %v5711 = vpop.f32.mrf.mxu0
      %v5712 = vpop.f32.mrf.mxu0
      %v5713 = vadd.f32 0.0, %v5712
      %v5714 = vpop.f32.mrf.mxu0
      %5715 = vmatprep.mubr.bf16.mxu0 0
      %5716 = vmatmul.mubr.bf16.gmra.mxu0 %v5536
      %v5717 = vpop.f32.mrf.mxu0
      %v5718 = vadd.f32 0.0, %v5717
      %v5719 = vpop.f32.mrf.mxu0
      %v5720 = vpop.f32.mrf.mxu0
      %v5721 = vadd.f32 0.0, %v5720
      %v5722 = vpop.f32.mrf.mxu0
      %5723 = vmatprep.mubr.bf16.mxu0 0
      %5724 = vmatmul.mubr.bf16.gmra.mxu0 %v5539
      %v5725 = vpop.f32.mrf.mxu0
      %v5726 = vadd.f32 0.0, %v5725
      %v5727 = vpop.f32.mrf.mxu0
      %v5728 = vpop.f32.mrf.mxu0
      %v5729 = vadd.f32 0.0, %v5728
      %v5730 = vpop.f32.mrf.mxu0
      %5731 = vmatprep.mubr.bf16.mxu0 0
      %5732 = vmatmul.mubr.bf16.gmra.mxu0 %v5542
      %v5733 = vpop.f32.mrf.mxu0
      %v5734 = vadd.f32 0.0, %v5733
      %v5735 = vpop.f32.mrf.mxu0
      %v5736 = vpop.f32.mrf.mxu0
      %v5737 = vadd.f32 0.0, %v5736
      %v5738 = vpop.f32.mrf.mxu0
      %5739 = vmatprep.mubr.bf16.mxu0 0
      %5740 = vmatmul.mubr.bf16.gmra.mxu0 %v5545
      %v5741 = vpop.f32.mrf.mxu0
      %v5742 = vadd.f32 0.0, %v5741
      %v5743 = vpop.f32.mrf.mxu0
      %v5744 = vpop.f32.mrf.mxu0
      %v5745 = vadd.f32 0.0, %v5744
      %v5746 = vpop.f32.mrf.mxu0
      %5747 = vmatprep.mubr.bf16.mxu0 0
      %5748 = vmatmul.mubr.bf16.gmra.mxu0 %v5548
      %v5749 = vpop.f32.mrf.mxu0
      %v5750 = vadd.f32 0.0, %v5749
      %v5751 = vpop.f32.mrf.mxu0
      %v5752 = vpop.f32.mrf.mxu0
      %v5753 = vadd.f32 0.0, %v5752
      %v5754 = vpop.f32.mrf.mxu0
      %5755 = vmatprep.mubr.bf16.mxu0 0
      %5756 = vmatmul.mubr.bf16.gmra.mxu0 %v5551
      %v5757 = vpop.f32.mrf.mxu0
      %v5758 = vadd.f32 0.0, %v5757
      %v5759 = vpop.f32.mrf.mxu0
      %v5760 = vpop.f32.mrf.mxu0
      %v5761 = vadd.f32 0.0, %v5760
      %v5762 = vpop.f32.mrf.mxu0
      %5763 = vdwg.mxu0
      %s5764 = scalar_lea.vmem %s7, 64
      %v5765 = vld [vmem:[%s5764] sm:$0xf]
      %v5766 = vld [vmem:[%s5764 + $0x4] sm:$0xf]
      %v5767 = vld [vmem:[%s5764 + $0x8] sm:$0xf]
      %v5768 = vld [vmem:[%s5764 + $0xc] sm:$0xf]
      %v5773 = vunpack.c.l.b16 %v5765
      %v5774 = vunpack.c.l.b16 %v5766
      %v5775 = vunpack.c.l.b16 %v5767
      %v5776 = vunpack.c.l.b16 %v5768
      %v5777 = vpack.c.b16 %v5774, %v5773
      %v5778 = vpack.c.b16 %v5776, %v5775
      %5781 = vmatprep.subr.bf16.mxu0 0
      %5782 = vmatpush1.bf16.msra.mxu0 0
      %5783 = vmatprep.subr.bf16.mxu0 0
      %5784 = vmatpush1.bf16.msra.mxu0 0
      %5785 = vmatprep.subr.bf16.mxu0 0
      %5786 = vmatpush1.bf16.msra.mxu0 0
      %5787 = vmatprep.subr.bf16.mxu0 0
      %5788 = vmatpush1.bf16.msra.mxu0 0
      %5789 = vmatprep.subr.bf16.mxu0 0
      %5790 = vmatpush1.bf16.msra.mxu0 0
      %5791 = vmatprep.subr.bf16.mxu0 0
      %5792 = vmatpush1.bf16.msra.mxu0 0
      %5793 = vmatprep.subr.bf16.mxu0 0
      %5794 = vmatpush1.bf16.msra.mxu0 %v5778
      %5795 = vmatprep.subr.bf16.mxu0 0
      %5796 = vmatpush1.bf16.msra.mxu0 %v5777
      %5797 = vmatprep.subr.bf16.mxu0 0
      %5798 = vmatpush2.bf16.msra.mxu0 0
      %5799 = vmatprep.subr.bf16.mxu0 0
      %5800 = vmatpush2.bf16.msra.mxu0 0
      %5801 = vmatprep.subr.bf16.mxu0 0
      %5802 = vmatpush2.bf16.msra.mxu0 0
      %5803 = vmatprep.subr.bf16.mxu0 0
      %5804 = vmatpush2.bf16.msra.mxu0 0
      %5805 = vmatprep.subr.bf16.mxu0 0
      %5806 = vmatpush2.bf16.msra.mxu0 0
      %5807 = vmatprep.subr.bf16.mxu0 0
      %5808 = vmatpush2.bf16.msra.mxu0 0
      %5809 = vmatprep.subr.bf16.mxu0 0
      %5810 = vmatpush2.bf16.msra.mxu0 0
      %5811 = vmatprep.subr.bf16.mxu0 0
      %5812 = vmatpush2.bf16.msra.mxu0 0
      %5813 = vmatprep.mubr.bf16.mxu0 0
      %5814 = vmatmul.mubr.bf16.gmra.mxu0 %v5530
      %v5815 = vpop.f32.mrf.mxu0
      %v5816 = vadd.f32 0.0, %v5815
      %v5817 = vpop.f32.mrf.mxu0
      %v5818 = vpop.f32.mrf.mxu0
      %v5819 = vadd.f32 0.0, %v5818
      %v5820 = vpop.f32.mrf.mxu0
      %5821 = vmatprep.mubr.bf16.mxu0 0
      %5822 = vmatmul.mubr.bf16.gmra.mxu0 %v5533
      %v5823 = vpop.f32.mrf.mxu0
      %v5824 = vadd.f32 0.0, %v5823
      %v5825 = vpop.f32.mrf.mxu0
      %v5826 = vpop.f32.mrf.mxu0
      %v5827 = vadd.f32 0.0, %v5826
      %v5828 = vpop.f32.mrf.mxu0
      %5829 = vmatprep.mubr.bf16.mxu0 0
      %5830 = vmatmul.mubr.bf16.gmra.mxu0 %v5536
      %v5831 = vpop.f32.mrf.mxu0
      %v5832 = vadd.f32 0.0, %v5831
      %v5833 = vpop.f32.mrf.mxu0
      %v5834 = vpop.f32.mrf.mxu0
      %v5835 = vadd.f32 0.0, %v5834
      %v5836 = vpop.f32.mrf.mxu0
      %5837 = vmatprep.mubr.bf16.mxu0 0
      %5838 = vmatmul.mubr.bf16.gmra.mxu0 %v5539
      %v5839 = vpop.f32.mrf.mxu0
      %v5840 = vadd.f32 0.0, %v5839
      %v5841 = vpop.f32.mrf.mxu0
      %v5842 = vpop.f32.mrf.mxu0
      %v5843 = vadd.f32 0.0, %v5842
      %v5844 = vpop.f32.mrf.mxu0
      %5845 = vmatprep.mubr.bf16.mxu0 0
      %5846 = vmatmul.mubr.bf16.gmra.mxu0 %v5542
      %v5847 = vpop.f32.mrf.mxu0
      %v5848 = vadd.f32 0.0, %v5847
      %v5849 = vpop.f32.mrf.mxu0
      %v5850 = vpop.f32.mrf.mxu0
      %v5851 = vadd.f32 0.0, %v5850
      %v5852 = vpop.f32.mrf.mxu0
      %5853 = vmatprep.mubr.bf16.mxu0 0
      %5854 = vmatmul.mubr.bf16.gmra.mxu0 %v5545
      %v5855 = vpop.f32.mrf.mxu0
      %v5856 = vadd.f32 0.0, %v5855
      %v5857 = vpop.f32.mrf.mxu0
      %v5858 = vpop.f32.mrf.mxu0
      %v5859 = vadd.f32 0.0, %v5858
      %v5860 = vpop.f32.mrf.mxu0
      %5861 = vmatprep.mubr.bf16.mxu0 0
      %5862 = vmatmul.mubr.bf16.gmra.mxu0 %v5548
      %v5863 = vpop.f32.mrf.mxu0
      %v5864 = vadd.f32 0.0, %v5863
      %v5865 = vpop.f32.mrf.mxu0
      %v5866 = vpop.f32.mrf.mxu0
      %v5867 = vadd.f32 0.0, %v5866
      %v5868 = vpop.f32.mrf.mxu0
      %5869 = vmatprep.mubr.bf16.mxu0 0
      %5870 = vmatmul.mubr.bf16.gmra.mxu0 %v5551
      %v5871 = vpop.f32.mrf.mxu0
      %v5872 = vadd.f32 0.0, %v5871
      %v5873 = vpop.f32.mrf.mxu0
      %v5874 = vpop.f32.mrf.mxu0
      %v5875 = vadd.f32 0.0, %v5874
      %v5876 = vpop.f32.mrf.mxu0
      %5877 = vdwg.mxu0
      %v5878 = vpack.c.bf16 %v5591, %v5588
      %v5879 = vpack.c.bf16 %v5599, %v5596
      %v5880 = vpack.c.bf16 %v5607, %v5604
      %v5881 = vpack.c.bf16 %v5615, %v5612
      %v5882 = vpack.c.bf16 %v5623, %v5620
      %v5883 = vpack.c.bf16 %v5631, %v5628
      %v5884 = vpack.c.bf16 %v5639, %v5636
      %v5885 = vpack.c.bf16 %v5647, %v5644
      %v5886 = vpack.c.bf16 %v5705, %v5702
      %v5887 = vpack.c.bf16 %v5713, %v5710
      %v5888 = vpack.c.bf16 %v5721, %v5718
      %v5889 = vpack.c.bf16 %v5729, %v5726
      %v5890 = vpack.c.bf16 %v5737, %v5734
      %v5891 = vpack.c.bf16 %v5745, %v5742
      %v5892 = vpack.c.bf16 %v5753, %v5750
      %v5893 = vpack.c.bf16 %v5761, %v5758
      %v5895 = vsel %vm712, %v5878, 0
      %v5898 = vsel %vm712, %v5879, 0
      %v5901 = vsel %vm712, %v5880, 0
      %v5904 = vsel %vm712, %v5881, 0
      %v5907 = vsel %vm712, %v5882, 0
      %v5910 = vsel %vm712, %v5883, 0
      %v5913 = vsel %vm712, %v5884, 0
      %v5916 = vsel %vm712, %v5885, 0
      %v5919 = vsel %vm712, %v5886, 0
      %v5922 = vsel %vm712, %v5887, 0
      %v5925 = vsel %vm712, %v5888, 0
      %v5928 = vsel %vm712, %v5889, 0
      %v5931 = vsel %vm712, %v5890, 0
      %v5934 = vsel %vm712, %v5891, 0
      %v5937 = vsel %vm712, %v5892, 0
      %v5940 = vsel %vm712, %v5893, 0
      %5942 = vmatprep.subr.bf16.mxu0 0
      %5943 = vmatpush1.bf16.xpose.msra.mxu0 %v5940
      %5944 = vmatprep.subr.bf16.mxu0 0
      %5945 = vmatpush1.bf16.xpose.msra.mxu0 %v5937
      %5946 = vmatprep.subr.bf16.mxu0 0
      %5947 = vmatpush1.bf16.xpose.msra.mxu0 %v5934
      %5948 = vmatprep.subr.bf16.mxu0 0
      %5949 = vmatpush1.bf16.xpose.msra.mxu0 %v5931
      %5950 = vmatprep.subr.bf16.mxu0 0
      %5951 = vmatpush1.bf16.xpose.msra.mxu0 %v5928
      %5952 = vmatprep.subr.bf16.mxu0 0
      %5953 = vmatpush1.bf16.xpose.msra.mxu0 %v5925
      %5954 = vmatprep.subr.bf16.mxu0 0
      %5955 = vmatpush1.bf16.xpose.msra.mxu0 %v5922
      %5956 = vmatprep.subr.bf16.mxu0 0
      %5957 = vmatpush1.bf16.xpose.msra.mxu0 %v5919
      %5958 = vmatprep.subr.bf16.mxu0 0
      %5959 = vmatpush2.bf16.xpose.msra.mxu0 0
      %5960 = vmatprep.subr.bf16.mxu0 0
      %5961 = vmatpush2.bf16.xpose.msra.mxu0 0
      %5962 = vmatprep.subr.bf16.mxu0 0
      %5963 = vmatpush2.bf16.xpose.msra.mxu0 0
      %5964 = vmatprep.subr.bf16.mxu0 0
      %5965 = vmatpush2.bf16.xpose.msra.mxu0 0
      %5966 = vmatprep.subr.bf16.mxu0 0
      %5967 = vmatpush2.bf16.xpose.msra.mxu0 0
      %5968 = vmatprep.subr.bf16.mxu0 0
      %5969 = vmatpush2.bf16.xpose.msra.mxu0 0
      %5970 = vmatprep.subr.bf16.mxu0 0
      %5971 = vmatpush2.bf16.xpose.msra.mxu0 0
      %5972 = vmatprep.subr.bf16.mxu0 0
      %5973 = vmatpush2.bf16.xpose.msra.mxu0 0
      %5974 = vmatprep.mubr.bf16.mxu0 0
      %5975 = vmatmul.mubr.bf16.gmra.mxu0 %v5895
      %v5976 = vpop.f32.mrf.mxu0
      %v5977 = vadd.f32 0.0, %v5976
      %v5978 = vpop.f32.mrf.mxu0
      %v5979 = vpop.f32.mrf.mxu0
      %v5980 = vadd.f32 0.0, %v5979
      %v5981 = vpop.f32.mrf.mxu0
      %5982 = vmatprep.mubr.bf16.mxu0 0
      %5983 = vmatmul.mubr.bf16.gmra.mxu0 %v5898
      %v5984 = vpop.f32.mrf.mxu0
      %v5985 = vadd.f32 0.0, %v5984
      %v5986 = vpop.f32.mrf.mxu0
      %v5987 = vpop.f32.mrf.mxu0
      %v5988 = vadd.f32 0.0, %v5987
      %v5989 = vpop.f32.mrf.mxu0
      %5990 = vmatprep.mubr.bf16.mxu0 0
      %5991 = vmatmul.mubr.bf16.gmra.mxu0 %v5901
      %v5992 = vpop.f32.mrf.mxu0
      %v5993 = vadd.f32 0.0, %v5992
      %v5994 = vpop.f32.mrf.mxu0
      %v5995 = vpop.f32.mrf.mxu0
      %v5996 = vadd.f32 0.0, %v5995
      %v5997 = vpop.f32.mrf.mxu0
      %5998 = vmatprep.mubr.bf16.mxu0 0
      %5999 = vmatmul.mubr.bf16.gmra.mxu0 %v5904
      %v6000 = vpop.f32.mrf.mxu0
      %v6001 = vadd.f32 0.0, %v6000
      %v6002 = vpop.f32.mrf.mxu0
      %v6003 = vpop.f32.mrf.mxu0
      %v6004 = vadd.f32 0.0, %v6003
      %v6005 = vpop.f32.mrf.mxu0
      %6006 = vmatprep.mubr.bf16.mxu0 0
      %6007 = vmatmul.mubr.bf16.gmra.mxu0 %v5907
      %v6008 = vpop.f32.mrf.mxu0
      %v6009 = vadd.f32 0.0, %v6008
      %v6010 = vpop.f32.mrf.mxu0
      %v6011 = vpop.f32.mrf.mxu0
      %v6012 = vadd.f32 0.0, %v6011
      %v6013 = vpop.f32.mrf.mxu0
      %6014 = vmatprep.mubr.bf16.mxu0 0
      %6015 = vmatmul.mubr.bf16.gmra.mxu0 %v5910
      %v6016 = vpop.f32.mrf.mxu0
      %v6017 = vadd.f32 0.0, %v6016
      %v6018 = vpop.f32.mrf.mxu0
      %v6019 = vpop.f32.mrf.mxu0
      %v6020 = vadd.f32 0.0, %v6019
      %v6021 = vpop.f32.mrf.mxu0
      %6022 = vmatprep.mubr.bf16.mxu0 0
      %6023 = vmatmul.mubr.bf16.gmra.mxu0 %v5913
      %v6024 = vpop.f32.mrf.mxu0
      %v6025 = vadd.f32 0.0, %v6024
      %v6026 = vpop.f32.mrf.mxu0
      %v6027 = vpop.f32.mrf.mxu0
      %v6028 = vadd.f32 0.0, %v6027
      %v6029 = vpop.f32.mrf.mxu0
      %6030 = vmatprep.mubr.bf16.mxu0 0
      %6031 = vmatmul.mubr.bf16.gmra.mxu0 %v5916
      %v6032 = vpop.f32.mrf.mxu0
      %v6033 = vadd.f32 0.0, %v6032
      %v6034 = vpop.f32.mrf.mxu0
      %v6035 = vpop.f32.mrf.mxu0
      %v6036 = vadd.f32 0.0, %v6035
      %v6037 = vpop.f32.mrf.mxu0
      %6038 = vdwg.mxu0
      %v6039 = vmul.f32 %v5977, 0.35355338
      %v6040 = vmul.f32 %v5980, 0.35355338
      %v6041 = vmul.f32 %v5985, 0.35355338
      %v6042 = vmul.f32 %v5988, 0.35355338
      %v6043 = vmul.f32 %v5993, 0.35355338
      %v6044 = vmul.f32 %v5996, 0.35355338
      %v6045 = vmul.f32 %v6001, 0.35355338
      %v6046 = vmul.f32 %v6004, 0.35355338
      %v6047 = vmul.f32 %v6009, 0.35355338
      %v6048 = vmul.f32 %v6012, 0.35355338
      %v6049 = vmul.f32 %v6017, 0.35355338
      %v6050 = vmul.f32 %v6020, 0.35355338
      %v6051 = vmul.f32 %v6025, 0.35355338
      %v6052 = vmul.f32 %v6028, 0.35355338
      %v6053 = vmul.f32 %v6033, 0.35355338
      %v6054 = vmul.f32 %v6036, 0.35355338
      %v6055 = vadd.f32 %v6039, %v838
      %v6056 = vadd.f32 %v6040, %v839
      %v6057 = vadd.f32 %v6041, %v840
      %v6058 = vadd.f32 %v6042, %v841
      %v6059 = vadd.f32 %v6043, %v842
      %v6060 = vadd.f32 %v6044, %v843
      %v6061 = vadd.f32 %v6045, %v844
      %v6062 = vadd.f32 %v6046, %v845
      %v6063 = vadd.f32 %v6047, %v846
      %v6064 = vadd.f32 %v6048, %v847
      %v6065 = vadd.f32 %v6049, %v848
      %v6066 = vadd.f32 %v6050, %v849
      %v6067 = vadd.f32 %v6051, %v850
      %v6068 = vadd.f32 %v6052, %v851
      %v6069 = vadd.f32 %v6053, %v852
      %v6070 = vadd.f32 %v6054, %v853
      %6071 = vmax.xlane.f32.xlu0 %v6055
      %v6072 = vpop.xlane.xlu0 %6071
      %6073 = vmax.xlane.f32.xlu0 %v6056
      %v6074 = vpop.xlane.xlu0 %6073
      %6075 = vmax.xlane.f32.xlu0 %v6057
      %v6076 = vpop.xlane.xlu0 %6075
      %6077 = vmax.xlane.f32.xlu0 %v6058
      %v6078 = vpop.xlane.xlu0 %6077
      %6079 = vmax.xlane.f32.xlu0 %v6059
      %v6080 = vpop.xlane.xlu0 %6079
      %6081 = vmax.xlane.f32.xlu0 %v6060
      %v6082 = vpop.xlane.xlu0 %6081
      %6083 = vmax.xlane.f32.xlu0 %v6061
      %v6084 = vpop.xlane.xlu0 %6083
      %6085 = vmax.xlane.f32.xlu0 %v6062
      %v6086 = vpop.xlane.xlu0 %6085
      %6087 = vmax.xlane.f32.xlu0 %v6063
      %v6088 = vpop.xlane.xlu0 %6087
      %6089 = vmax.xlane.f32.xlu0 %v6064
      %v6090 = vpop.xlane.xlu0 %6089
      %6091 = vmax.xlane.f32.xlu0 %v6065
      %v6092 = vpop.xlane.xlu0 %6091
      %6093 = vmax.xlane.f32.xlu0 %v6066
      %v6094 = vpop.xlane.xlu0 %6093
      %6095 = vmax.xlane.f32.xlu0 %v6067
      %v6096 = vpop.xlane.xlu0 %6095
      %6097 = vmax.xlane.f32.xlu0 %v6068
      %v6098 = vpop.xlane.xlu0 %6097
      %6099 = vmax.xlane.f32.xlu0 %v6069
      %v6100 = vpop.xlane.xlu0 %6099
      %6101 = vmax.xlane.f32.xlu0 %v6070
      %v6102 = vpop.xlane.xlu0 %6101
      %v6103 = vsub.f32 %v6055, %v6072
      %v6104 = vsub.f32 %v6056, %v6074
      %v6105 = vsub.f32 %v6057, %v6076
      %v6106 = vsub.f32 %v6058, %v6078
      %v6107 = vsub.f32 %v6059, %v6080
      %v6108 = vsub.f32 %v6060, %v6082
      %v6109 = vsub.f32 %v6061, %v6084
      %v6110 = vsub.f32 %v6062, %v6086
      %v6111 = vsub.f32 %v6063, %v6088
      %v6112 = vsub.f32 %v6064, %v6090
      %v6113 = vsub.f32 %v6065, %v6092
      %v6114 = vsub.f32 %v6066, %v6094
      %v6115 = vsub.f32 %v6067, %v6096
      %v6116 = vsub.f32 %v6068, %v6098
      %v6117 = vsub.f32 %v6069, %v6100
      %v6118 = vsub.f32 %v6070, %v6102
      %v6119 = vmul.f32 %v6103, 1.442695
      %v6120 = vpow.pop %v6119
      %v6121 = vmul.f32 %v6104, 1.442695
      %v6122 = vpow.pop %v6121
      %v6123 = vmul.f32 %v6105, 1.442695
      %v6124 = vpow.pop %v6123
      %v6125 = vmul.f32 %v6106, 1.442695
      %v6126 = vpow.pop %v6125
      %v6127 = vmul.f32 %v6107, 1.442695
      %v6128 = vpow.pop %v6127
      %v6129 = vmul.f32 %v6108, 1.442695
      %v6130 = vpow.pop %v6129
      %v6131 = vmul.f32 %v6109, 1.442695
      %v6132 = vpow.pop %v6131
      %v6133 = vmul.f32 %v6110, 1.442695
      %v6134 = vpow.pop %v6133
      %v6135 = vmul.f32 %v6111, 1.442695
      %v6136 = vpow.pop %v6135
      %v6137 = vmul.f32 %v6112, 1.442695
      %v6138 = vpow.pop %v6137
      %v6139 = vmul.f32 %v6113, 1.442695
      %v6140 = vpow.pop %v6139
      %v6141 = vmul.f32 %v6114, 1.442695
      %v6142 = vpow.pop %v6141
      %v6143 = vmul.f32 %v6115, 1.442695
      %v6144 = vpow.pop %v6143
      %v6145 = vmul.f32 %v6116, 1.442695
      %v6146 = vpow.pop %v6145
      %v6147 = vmul.f32 %v6117, 1.442695
      %v6148 = vpow.pop %v6147
      %v6149 = vmul.f32 %v6118, 1.442695
      %v6150 = vpow.pop %v6149
      %6151 = vadd.xlane.f32.xlu0 %v6120
      %v6152 = vpop.xlane.xlu0 %6151
      %6153 = vadd.xlane.f32.xlu0 %v6122
      %v6154 = vpop.xlane.xlu0 %6153
      %6155 = vadd.xlane.f32.xlu0 %v6124
      %v6156 = vpop.xlane.xlu0 %6155
      %6157 = vadd.xlane.f32.xlu0 %v6126
      %v6158 = vpop.xlane.xlu0 %6157
      %6159 = vadd.xlane.f32.xlu0 %v6128
      %v6160 = vpop.xlane.xlu0 %6159
      %6161 = vadd.xlane.f32.xlu0 %v6130
      %v6162 = vpop.xlane.xlu0 %6161
      %6163 = vadd.xlane.f32.xlu0 %v6132
      %v6164 = vpop.xlane.xlu0 %6163
      %6165 = vadd.xlane.f32.xlu0 %v6134
      %v6166 = vpop.xlane.xlu0 %6165
      %6167 = vadd.xlane.f32.xlu0 %v6136
      %v6168 = vpop.xlane.xlu0 %6167
      %6169 = vadd.xlane.f32.xlu0 %v6138
      %v6170 = vpop.xlane.xlu0 %6169
      %6171 = vadd.xlane.f32.xlu0 %v6140
      %v6172 = vpop.xlane.xlu0 %6171
      %6173 = vadd.xlane.f32.xlu0 %v6142
      %v6174 = vpop.xlane.xlu0 %6173
      %6175 = vadd.xlane.f32.xlu0 %v6144
      %v6176 = vpop.xlane.xlu0 %6175
      %6177 = vadd.xlane.f32.xlu0 %v6146
      %v6178 = vpop.xlane.xlu0 %6177
      %6179 = vadd.xlane.f32.xlu0 %v6148
      %v6180 = vpop.xlane.xlu0 %6179
      %6181 = vadd.xlane.f32.xlu0 %v6150
      %v6182 = vpop.xlane.xlu0 %6181
      %v6183 = vrcp.pop %v6152
      %v6184 = vmul.f32 %v6120, %v6183
      %v6185 = vrcp.pop %v6154
      %v6186 = vmul.f32 %v6122, %v6185
      %v6187 = vrcp.pop %v6156
      %v6188 = vmul.f32 %v6124, %v6187
      %v6189 = vrcp.pop %v6158
      %v6190 = vmul.f32 %v6126, %v6189
      %v6191 = vrcp.pop %v6160
      %v6192 = vmul.f32 %v6128, %v6191
      %v6193 = vrcp.pop %v6162
      %v6194 = vmul.f32 %v6130, %v6193
      %v6195 = vrcp.pop %v6164
      %v6196 = vmul.f32 %v6132, %v6195
      %v6197 = vrcp.pop %v6166
      %v6198 = vmul.f32 %v6134, %v6197
      %v6199 = vrcp.pop %v6168
      %v6200 = vmul.f32 %v6136, %v6199
      %v6201 = vrcp.pop %v6170
      %v6202 = vmul.f32 %v6138, %v6201
      %v6203 = vrcp.pop %v6172
      %v6204 = vmul.f32 %v6140, %v6203
      %v6205 = vrcp.pop %v6174
      %v6206 = vmul.f32 %v6142, %v6205
      %v6207 = vrcp.pop %v6176
      %v6208 = vmul.f32 %v6144, %v6207
      %v6209 = vrcp.pop %v6178
      %v6210 = vmul.f32 %v6146, %v6209
      %v6211 = vrcp.pop %v6180
      %v6212 = vmul.f32 %v6148, %v6211
      %v6213 = vrcp.pop %v6182
      %v6214 = vmul.f32 %v6150, %v6213
      %v6215 = vpack.c.bf16 %v6186, %v6184
      %v6216 = vpack.c.bf16 %v6190, %v6188
      %v6217 = vpack.c.bf16 %v6194, %v6192
      %v6218 = vpack.c.bf16 %v6198, %v6196
      %v6219 = vpack.c.bf16 %v6202, %v6200
      %v6220 = vpack.c.bf16 %v6206, %v6204
      %v6221 = vpack.c.bf16 %v6210, %v6208
      %v6222 = vpack.c.bf16 %v6214, %v6212
      %v6223 = vpack.c.bf16 %v5819, %v5816
      %v6224 = vpack.c.bf16 %v5827, %v5824
      %v6225 = vpack.c.bf16 %v5835, %v5832
      %v6226 = vpack.c.bf16 %v5843, %v5840
      %v6227 = vpack.c.bf16 %v5851, %v5848
      %v6228 = vpack.c.bf16 %v5859, %v5856
      %v6229 = vpack.c.bf16 %v5867, %v5864
      %v6230 = vpack.c.bf16 %v5875, %v5872
      %6231 = vmatprep.subr.bf16.mxu0 0
      %6232 = vmatpush1.bf16.msra.mxu0 %v6230
      %6233 = vmatprep.subr.bf16.mxu0 0
      %6234 = vmatpush1.bf16.msra.mxu0 %v6229
      %6235 = vmatprep.subr.bf16.mxu0 0
      %6236 = vmatpush1.bf16.msra.mxu0 %v6228
      %6237 = vmatprep.subr.bf16.mxu0 0
      %6238 = vmatpush1.bf16.msra.mxu0 %v6227
      %6239 = vmatprep.subr.bf16.mxu0 0
      %6240 = vmatpush1.bf16.msra.mxu0 %v6226
      %6241 = vmatprep.subr.bf16.mxu0 0
      %6242 = vmatpush1.bf16.msra.mxu0 %v6225
      %6243 = vmatprep.subr.bf16.mxu0 0
      %6244 = vmatpush1.bf16.msra.mxu0 %v6224
      %6245 = vmatprep.subr.bf16.mxu0 0
      %6246 = vmatpush1.bf16.msra.mxu0 %v6223
      %6247 = vmatprep.subr.bf16.mxu0 0
      %6248 = vmatpush2.bf16.msra.mxu0 0
      %6249 = vmatprep.subr.bf16.mxu0 0
      %6250 = vmatpush2.bf16.msra.mxu0 0
      %6251 = vmatprep.subr.bf16.mxu0 0
      %6252 = vmatpush2.bf16.msra.mxu0 0
      %6253 = vmatprep.subr.bf16.mxu0 0
      %6254 = vmatpush2.bf16.msra.mxu0 0
      %6255 = vmatprep.subr.bf16.mxu0 0
      %6256 = vmatpush2.bf16.msra.mxu0 0
      %6257 = vmatprep.subr.bf16.mxu0 0
      %6258 = vmatpush2.bf16.msra.mxu0 0
      %6259 = vmatprep.subr.bf16.mxu0 0
      %6260 = vmatpush2.bf16.msra.mxu0 0
      %6261 = vmatprep.subr.bf16.mxu0 0
      %6262 = vmatpush2.bf16.msra.mxu0 0
      %6263 = vmatprep.mubr.bf16.mxu0 0
      %6264 = vmatmul.mubr.bf16.gmra.mxu0 %v6215
      %v6265 = vpop.f32.mrf.mxu0
      %v6266 = vadd.f32 0.0, %v6265
      %v6267 = vpop.f32.mrf.mxu0
      %v6268 = vpop.f32.mrf.mxu0
      %v6269 = vadd.f32 0.0, %v6268
      %v6270 = vpop.f32.mrf.mxu0
      %6271 = vmatprep.mubr.bf16.mxu0 0
      %6272 = vmatmul.mubr.bf16.gmra.mxu0 %v6216
      %v6273 = vpop.f32.mrf.mxu0
      %v6274 = vadd.f32 0.0, %v6273
      %v6275 = vpop.f32.mrf.mxu0
      %v6276 = vpop.f32.mrf.mxu0
      %v6277 = vadd.f32 0.0, %v6276
      %v6278 = vpop.f32.mrf.mxu0
      %6279 = vmatprep.mubr.bf16.mxu0 0
      %6280 = vmatmul.mubr.bf16.gmra.mxu0 %v6217
      %v6281 = vpop.f32.mrf.mxu0
      %v6282 = vadd.f32 0.0, %v6281
      %v6283 = vpop.f32.mrf.mxu0
      %v6284 = vpop.f32.mrf.mxu0
      %v6285 = vadd.f32 0.0, %v6284
      %v6286 = vpop.f32.mrf.mxu0
      %6287 = vmatprep.mubr.bf16.mxu0 0
      %6288 = vmatmul.mubr.bf16.gmra.mxu0 %v6218
      %v6289 = vpop.f32.mrf.mxu0
      %v6290 = vadd.f32 0.0, %v6289
      %v6291 = vpop.f32.mrf.mxu0
      %v6292 = vpop.f32.mrf.mxu0
      %v6293 = vadd.f32 0.0, %v6292
      %v6294 = vpop.f32.mrf.mxu0
      %6295 = vmatprep.mubr.bf16.mxu0 0
      %6296 = vmatmul.mubr.bf16.gmra.mxu0 %v6219
      %v6297 = vpop.f32.mrf.mxu0
      %v6298 = vadd.f32 0.0, %v6297
      %v6299 = vpop.f32.mrf.mxu0
      %v6300 = vpop.f32.mrf.mxu0
      %v6301 = vadd.f32 0.0, %v6300
      %v6302 = vpop.f32.mrf.mxu0
      %6303 = vmatprep.mubr.bf16.mxu0 0
      %6304 = vmatmul.mubr.bf16.gmra.mxu0 %v6220
      %v6305 = vpop.f32.mrf.mxu0
      %v6306 = vadd.f32 0.0, %v6305
      %v6307 = vpop.f32.mrf.mxu0
      %v6308 = vpop.f32.mrf.mxu0
      %v6309 = vadd.f32 0.0, %v6308
      %v6310 = vpop.f32.mrf.mxu0
      %6311 = vmatprep.mubr.bf16.mxu0 0
      %6312 = vmatmul.mubr.bf16.gmra.mxu0 %v6221
      %v6313 = vpop.f32.mrf.mxu0
      %v6314 = vadd.f32 0.0, %v6313
      %v6315 = vpop.f32.mrf.mxu0
      %v6316 = vpop.f32.mrf.mxu0
      %v6317 = vadd.f32 0.0, %v6316
      %v6318 = vpop.f32.mrf.mxu0
      %6319 = vmatprep.mubr.bf16.mxu0 0
      %6320 = vmatmul.mubr.bf16.gmra.mxu0 %v6222
      %v6321 = vpop.f32.mrf.mxu0
      %v6322 = vadd.f32 0.0, %v6321
      %v6323 = vpop.f32.mrf.mxu0
      %v6324 = vpop.f32.mrf.mxu0
      %v6325 = vadd.f32 0.0, %v6324
      %v6326 = vpop.f32.mrf.mxu0
      %6327 = vdwg.mxu0
      %s6328 = scalar_lea.vmem %s8, 16
      %v6329 = vld [vmem:[%s6328] sm:$0xf]
      %v6330 = vpack.c.bf16 %v6269, %v6266
      %v6331 = vpack.c.bf16 %v6277, %v6274
      %v6332 = vpack.c.bf16 %v6285, %v6282
      %v6333 = vpack.c.bf16 %v6293, %v6290
      %v6334 = vpack.c.bf16 %v6301, %v6298
      %v6335 = vpack.c.bf16 %v6309, %v6306
      %v6336 = vpack.c.bf16 %v6317, %v6314
      %v6337 = vpack.c.bf16 %v6325, %v6322
      %s6338 = scalar_lea.vmem %s5, 80
      %v6339 = vld [vmem:[%s6338] sm:$0xf]
      %v6340 = vld [vmem:[%s6338 + $0x4] sm:$0xf]
      %v6341 = vld [vmem:[%s6338 + $0x8] sm:$0xf]
      %v6342 = vld [vmem:[%s6338 + $0xc] sm:$0xf]
      %v6347 = vunpack.c.l.b16 %v6339
      %v6348 = vunpack.c.l.b16 %v6340
      %v6349 = vunpack.c.l.b16 %v6341
      %v6350 = vunpack.c.l.b16 %v6342
      %v6351 = vpack.c.b16 %v6348, %v6347
      %v6352 = vpack.c.b16 %v6350, %v6349
      %6355 = vmatprep.subr.bf16.mxu0 0
      %6356 = vmatpush1.bf16.msra.mxu0 0
      %6357 = vmatprep.subr.bf16.mxu0 0
      %6358 = vmatpush1.bf16.msra.mxu0 0
      %6359 = vmatprep.subr.bf16.mxu0 0
      %6360 = vmatpush1.bf16.msra.mxu0 0
      %6361 = vmatprep.subr.bf16.mxu0 0
      %6362 = vmatpush1.bf16.msra.mxu0 0
      %6363 = vmatprep.subr.bf16.mxu0 0
      %6364 = vmatpush1.bf16.msra.mxu0 0
      %6365 = vmatprep.subr.bf16.mxu0 0
      %6366 = vmatpush1.bf16.msra.mxu0 0
      %6367 = vmatprep.subr.bf16.mxu0 0
      %6368 = vmatpush1.bf16.msra.mxu0 %v6352
      %6369 = vmatprep.subr.bf16.mxu0 0
      %6370 = vmatpush1.bf16.msra.mxu0 %v6351
      %6371 = vmatprep.subr.bf16.mxu0 0
      %6372 = vmatpush2.bf16.msra.mxu0 0
      %6373 = vmatprep.subr.bf16.mxu0 0
      %6374 = vmatpush2.bf16.msra.mxu0 0
      %6375 = vmatprep.subr.bf16.mxu0 0
      %6376 = vmatpush2.bf16.msra.mxu0 0
      %6377 = vmatprep.subr.bf16.mxu0 0
      %6378 = vmatpush2.bf16.msra.mxu0 0
      %6379 = vmatprep.subr.bf16.mxu0 0
      %6380 = vmatpush2.bf16.msra.mxu0 0
      %6381 = vmatprep.subr.bf16.mxu0 0
      %6382 = vmatpush2.bf16.msra.mxu0 0
      %6383 = vmatprep.subr.bf16.mxu0 0
      %6384 = vmatpush2.bf16.msra.mxu0 0
      %6385 = vmatprep.subr.bf16.mxu0 0
      %6386 = vmatpush2.bf16.msra.mxu0 0
      %6387 = vmatprep.mubr.bf16.mxu0 0
      %6388 = vmatmul.mubr.bf16.gmra.mxu0 %v5530
      %v6389 = vpop.f32.mrf.mxu0
      %v6390 = vadd.f32 0.0, %v6389
      %v6391 = vpop.f32.mrf.mxu0
      %v6392 = vpop.f32.mrf.mxu0
      %v6393 = vadd.f32 0.0, %v6392
      %v6394 = vpop.f32.mrf.mxu0
      %6395 = vmatprep.mubr.bf16.mxu0 0
      %6396 = vmatmul.mubr.bf16.gmra.mxu0 %v5533
      %v6397 = vpop.f32.mrf.mxu0
      %v6398 = vadd.f32 0.0, %v6397
      %v6399 = vpop.f32.mrf.mxu0
      %v6400 = vpop.f32.mrf.mxu0
      %v6401 = vadd.f32 0.0, %v6400
      %v6402 = vpop.f32.mrf.mxu0
      %6403 = vmatprep.mubr.bf16.mxu0 0
      %6404 = vmatmul.mubr.bf16.gmra.mxu0 %v5536
      %v6405 = vpop.f32.mrf.mxu0
      %v6406 = vadd.f32 0.0, %v6405
      %v6407 = vpop.f32.mrf.mxu0
      %v6408 = vpop.f32.mrf.mxu0
      %v6409 = vadd.f32 0.0, %v6408
      %v6410 = vpop.f32.mrf.mxu0
      %6411 = vmatprep.mubr.bf16.mxu0 0
      %6412 = vmatmul.mubr.bf16.gmra.mxu0 %v5539
      %v6413 = vpop.f32.mrf.mxu0
      %v6414 = vadd.f32 0.0, %v6413
      %v6415 = vpop.f32.mrf.mxu0
      %v6416 = vpop.f32.mrf.mxu0
      %v6417 = vadd.f32 0.0, %v6416
      %v6418 = vpop.f32.mrf.mxu0
      %6419 = vmatprep.mubr.bf16.mxu0 0
      %6420 = vmatmul.mubr.bf16.gmra.mxu0 %v5542
      %v6421 = vpop.f32.mrf.mxu0
      %v6422 = vadd.f32 0.0, %v6421
      %v6423 = vpop.f32.mrf.mxu0
      %v6424 = vpop.f32.mrf.mxu0
      %v6425 = vadd.f32 0.0, %v6424
      %v6426 = vpop.f32.mrf.mxu0
      %6427 = vmatprep.mubr.bf16.mxu0 0
      %6428 = vmatmul.mubr.bf16.gmra.mxu0 %v5545
      %v6429 = vpop.f32.mrf.mxu0
      %v6430 = vadd.f32 0.0, %v6429
      %v6431 = vpop.f32.mrf.mxu0
      %v6432 = vpop.f32.mrf.mxu0
      %v6433 = vadd.f32 0.0, %v6432
      %v6434 = vpop.f32.mrf.mxu0
      %6435 = vmatprep.mubr.bf16.mxu0 0
      %6436 = vmatmul.mubr.bf16.gmra.mxu0 %v5548
      %v6437 = vpop.f32.mrf.mxu0
      %v6438 = vadd.f32 0.0, %v6437
      %v6439 = vpop.f32.mrf.mxu0
      %v6440 = vpop.f32.mrf.mxu0
      %v6441 = vadd.f32 0.0, %v6440
      %v6442 = vpop.f32.mrf.mxu0
      %6443 = vmatprep.mubr.bf16.mxu0 0
      %6444 = vmatmul.mubr.bf16.gmra.mxu0 %v5551
      %v6445 = vpop.f32.mrf.mxu0
      %v6446 = vadd.f32 0.0, %v6445
      %v6447 = vpop.f32.mrf.mxu0
      %v6448 = vpop.f32.mrf.mxu0
      %v6449 = vadd.f32 0.0, %v6448
      %v6450 = vpop.f32.mrf.mxu0
      %6451 = vdwg.mxu0
      %s6452 = scalar_lea.vmem %s6, 80
      %v6453 = vld [vmem:[%s6452] sm:$0xf]
      %v6454 = vld [vmem:[%s6452 + $0x4] sm:$0xf]
      %v6455 = vld [vmem:[%s6452 + $0x8] sm:$0xf]
      %v6456 = vld [vmem:[%s6452 + $0xc] sm:$0xf]
      %v6461 = vunpack.c.l.b16 %v6453
      %v6462 = vunpack.c.l.b16 %v6454
      %v6463 = vunpack.c.l.b16 %v6455
      %v6464 = vunpack.c.l.b16 %v6456
      %v6465 = vpack.c.b16 %v6462, %v6461
      %v6466 = vpack.c.b16 %v6464, %v6463
      %6469 = vmatprep.subr.bf16.mxu0 0
      %6470 = vmatpush1.bf16.msra.mxu0 0
      %6471 = vmatprep.subr.bf16.mxu0 0
      %6472 = vmatpush1.bf16.msra.mxu0 0
      %6473 = vmatprep.subr.bf16.mxu0 0
      %6474 = vmatpush1.bf16.msra.mxu0 0
      %6475 = vmatprep.subr.bf16.mxu0 0
      %6476 = vmatpush1.bf16.msra.mxu0 0
      %6477 = vmatprep.subr.bf16.mxu0 0
      %6478 = vmatpush1.bf16.msra.mxu0 0
      %6479 = vmatprep.subr.bf16.mxu0 0
      %6480 = vmatpush1.bf16.msra.mxu0 0
      %6481 = vmatprep.subr.bf16.mxu0 0
      %6482 = vmatpush1.bf16.msra.mxu0 %v6466
      %6483 = vmatprep.subr.bf16.mxu0 0
      %6484 = vmatpush1.bf16.msra.mxu0 %v6465
      %6485 = vmatprep.subr.bf16.mxu0 0
      %6486 = vmatpush2.bf16.msra.mxu0 0
      %6487 = vmatprep.subr.bf16.mxu0 0
      %6488 = vmatpush2.bf16.msra.mxu0 0
      %6489 = vmatprep.subr.bf16.mxu0 0
      %6490 = vmatpush2.bf16.msra.mxu0 0
      %6491 = vmatprep.subr.bf16.mxu0 0
      %6492 = vmatpush2.bf16.msra.mxu0 0
      %6493 = vmatprep.subr.bf16.mxu0 0
      %6494 = vmatpush2.bf16.msra.mxu0 0
      %6495 = vmatprep.subr.bf16.mxu0 0
      %6496 = vmatpush2.bf16.msra.mxu0 0
      %6497 = vmatprep.subr.bf16.mxu0 0
      %6498 = vmatpush2.bf16.msra.mxu0 0
      %6499 = vmatprep.subr.bf16.mxu0 0
      %6500 = vmatpush2.bf16.msra.mxu0 0
      %6501 = vmatprep.mubr.bf16.mxu0 0
      %6502 = vmatmul.mubr.bf16.gmra.mxu0 %v5530
      %v6503 = vpop.f32.mrf.mxu0
      %v6504 = vadd.f32 0.0, %v6503
      %v6505 = vpop.f32.mrf.mxu0
      %v6506 = vpop.f32.mrf.mxu0
      %v6507 = vadd.f32 0.0, %v6506
      %v6508 = vpop.f32.mrf.mxu0
      %6509 = vmatprep.mubr.bf16.mxu0 0
      %6510 = vmatmul.mubr.bf16.gmra.mxu0 %v5533
      %v6511 = vpop.f32.mrf.mxu0
      %v6512 = vadd.f32 0.0, %v6511
      %v6513 = vpop.f32.mrf.mxu0
      %v6514 = vpop.f32.mrf.mxu0
      %v6515 = vadd.f32 0.0, %v6514
      %v6516 = vpop.f32.mrf.mxu0
      %6517 = vmatprep.mubr.bf16.mxu0 0
      %6518 = vmatmul.mubr.bf16.gmra.mxu0 %v5536
      %v6519 = vpop.f32.mrf.mxu0
      %v6520 = vadd.f32 0.0, %v6519
      %v6521 = vpop.f32.mrf.mxu0
      %v6522 = vpop.f32.mrf.mxu0
      %v6523 = vadd.f32 0.0, %v6522
      %v6524 = vpop.f32.mrf.mxu0
      %6525 = vmatprep.mubr.bf16.mxu0 0
      %6526 = vmatmul.mubr.bf16.gmra.mxu0 %v5539
      %v6527 = vpop.f32.mrf.mxu0
      %v6528 = vadd.f32 0.0, %v6527
      %v6529 = vpop.f32.mrf.mxu0
      %v6530 = vpop.f32.mrf.mxu0
      %v6531 = vadd.f32 0.0, %v6530
      %v6532 = vpop.f32.mrf.mxu0
      %6533 = vmatprep.mubr.bf16.mxu0 0
      %6534 = vmatmul.mubr.bf16.gmra.mxu0 %v5542
      %v6535 = vpop.f32.mrf.mxu0
      %v6536 = vadd.f32 0.0, %v6535
      %v6537 = vpop.f32.mrf.mxu0
      %v6538 = vpop.f32.mrf.mxu0
      %v6539 = vadd.f32 0.0, %v6538
      %v6540 = vpop.f32.mrf.mxu0
      %6541 = vmatprep.mubr.bf16.mxu0 0
      %6542 = vmatmul.mubr.bf16.gmra.mxu0 %v5545
      %v6543 = vpop.f32.mrf.mxu0
      %v6544 = vadd.f32 0.0, %v6543
      %v6545 = vpop.f32.mrf.mxu0
      %v6546 = vpop.f32.mrf.mxu0
      %v6547 = vadd.f32 0.0, %v6546
      %v6548 = vpop.f32.mrf.mxu0
      %6549 = vmatprep.mubr.bf16.mxu0 0
      %6550 = vmatmul.mubr.bf16.gmra.mxu0 %v5548
      %v6551 = vpop.f32.mrf.mxu0
      %v6552 = vadd.f32 0.0, %v6551
      %v6553 = vpop.f32.mrf.mxu0
      %v6554 = vpop.f32.mrf.mxu0
      %v6555 = vadd.f32 0.0, %v6554
      %v6556 = vpop.f32.mrf.mxu0
      %6557 = vmatprep.mubr.bf16.mxu0 0
      %6558 = vmatmul.mubr.bf16.gmra.mxu0 %v5551
      %v6559 = vpop.f32.mrf.mxu0
      %v6560 = vadd.f32 0.0, %v6559
      %v6561 = vpop.f32.mrf.mxu0
      %v6562 = vpop.f32.mrf.mxu0
      %v6563 = vadd.f32 0.0, %v6562
      %v6564 = vpop.f32.mrf.mxu0
      %6565 = vdwg.mxu0
      %s6566 = scalar_lea.vmem %s7, 80
      %v6567 = vld [vmem:[%s6566] sm:$0xf]
      %v6568 = vld [vmem:[%s6566 + $0x4] sm:$0xf]
      %v6569 = vld [vmem:[%s6566 + $0x8] sm:$0xf]
      %v6570 = vld [vmem:[%s6566 + $0xc] sm:$0xf]
      %v6575 = vunpack.c.l.b16 %v6567
      %v6576 = vunpack.c.l.b16 %v6568
      %v6577 = vunpack.c.l.b16 %v6569
      %v6578 = vunpack.c.l.b16 %v6570
      %v6579 = vpack.c.b16 %v6576, %v6575
      %v6580 = vpack.c.b16 %v6578, %v6577
      %6583 = vmatprep.subr.bf16.mxu0 0
      %6584 = vmatpush1.bf16.msra.mxu0 0
      %6585 = vmatprep.subr.bf16.mxu0 0
      %6586 = vmatpush1.bf16.msra.mxu0 0
      %6587 = vmatprep.subr.bf16.mxu0 0
      %6588 = vmatpush1.bf16.msra.mxu0 0
      %6589 = vmatprep.subr.bf16.mxu0 0
      %6590 = vmatpush1.bf16.msra.mxu0 0
      %6591 = vmatprep.subr.bf16.mxu0 0
      %6592 = vmatpush1.bf16.msra.mxu0 0
      %6593 = vmatprep.subr.bf16.mxu0 0
      %6594 = vmatpush1.bf16.msra.mxu0 0
      %6595 = vmatprep.subr.bf16.mxu0 0
      %6596 = vmatpush1.bf16.msra.mxu0 %v6580
      %6597 = vmatprep.subr.bf16.mxu0 0
      %6598 = vmatpush1.bf16.msra.mxu0 %v6579
      %6599 = vmatprep.subr.bf16.mxu0 0
      %6600 = vmatpush2.bf16.msra.mxu0 0
      %6601 = vmatprep.subr.bf16.mxu0 0
      %6602 = vmatpush2.bf16.msra.mxu0 0
      %6603 = vmatprep.subr.bf16.mxu0 0
      %6604 = vmatpush2.bf16.msra.mxu0 0
      %6605 = vmatprep.subr.bf16.mxu0 0
      %6606 = vmatpush2.bf16.msra.mxu0 0
      %6607 = vmatprep.subr.bf16.mxu0 0
      %6608 = vmatpush2.bf16.msra.mxu0 0
      %6609 = vmatprep.subr.bf16.mxu0 0
      %6610 = vmatpush2.bf16.msra.mxu0 0
      %6611 = vmatprep.subr.bf16.mxu0 0
      %6612 = vmatpush2.bf16.msra.mxu0 0
      %6613 = vmatprep.subr.bf16.mxu0 0
      %6614 = vmatpush2.bf16.msra.mxu0 0
      %6615 = vmatprep.mubr.bf16.mxu0 0
      %6616 = vmatmul.mubr.bf16.gmra.mxu0 %v5530
      %v6617 = vpop.f32.mrf.mxu0
      %v6618 = vadd.f32 0.0, %v6617
      %v6619 = vpop.f32.mrf.mxu0
      %v6620 = vpop.f32.mrf.mxu0
      %v6621 = vadd.f32 0.0, %v6620
      %v6622 = vpop.f32.mrf.mxu0
      %6623 = vmatprep.mubr.bf16.mxu0 0
      %6624 = vmatmul.mubr.bf16.gmra.mxu0 %v5533
      %v6625 = vpop.f32.mrf.mxu0
      %v6626 = vadd.f32 0.0, %v6625
      %v6627 = vpop.f32.mrf.mxu0
      %v6628 = vpop.f32.mrf.mxu0
      %v6629 = vadd.f32 0.0, %v6628
      %v6630 = vpop.f32.mrf.mxu0
      %6631 = vmatprep.mubr.bf16.mxu0 0
      %6632 = vmatmul.mubr.bf16.gmra.mxu0 %v5536
      %v6633 = vpop.f32.mrf.mxu0
      %v6634 = vadd.f32 0.0, %v6633
      %v6635 = vpop.f32.mrf.mxu0
      %v6636 = vpop.f32.mrf.mxu0
      %v6637 = vadd.f32 0.0, %v6636
      %v6638 = vpop.f32.mrf.mxu0
      %6639 = vmatprep.mubr.bf16.mxu0 0
      %6640 = vmatmul.mubr.bf16.gmra.mxu0 %v5539
      %v6641 = vpop.f32.mrf.mxu0
      %v6642 = vadd.f32 0.0, %v6641
      %v6643 = vpop.f32.mrf.mxu0
      %v6644 = vpop.f32.mrf.mxu0
      %v6645 = vadd.f32 0.0, %v6644
      %v6646 = vpop.f32.mrf.mxu0
      %6647 = vmatprep.mubr.bf16.mxu0 0
      %6648 = vmatmul.mubr.bf16.gmra.mxu0 %v5542
      %v6649 = vpop.f32.mrf.mxu0
      %v6650 = vadd.f32 0.0, %v6649
      %v6651 = vpop.f32.mrf.mxu0
      %v6652 = vpop.f32.mrf.mxu0
      %v6653 = vadd.f32 0.0, %v6652
      %v6654 = vpop.f32.mrf.mxu0
      %6655 = vmatprep.mubr.bf16.mxu0 0
      %6656 = vmatmul.mubr.bf16.gmra.mxu0 %v5545
      %v6657 = vpop.f32.mrf.mxu0
      %v6658 = vadd.f32 0.0, %v6657
      %v6659 = vpop.f32.mrf.mxu0
      %v6660 = vpop.f32.mrf.mxu0
      %v6661 = vadd.f32 0.0, %v6660
      %v6662 = vpop.f32.mrf.mxu0
      %6663 = vmatprep.mubr.bf16.mxu0 0
      %6664 = vmatmul.mubr.bf16.gmra.mxu0 %v5548
      %v6665 = vpop.f32.mrf.mxu0
      %v6666 = vadd.f32 0.0, %v6665
      %v6667 = vpop.f32.mrf.mxu0
      %v6668 = vpop.f32.mrf.mxu0
      %v6669 = vadd.f32 0.0, %v6668
      %v6670 = vpop.f32.mrf.mxu0
      %6671 = vmatprep.mubr.bf16.mxu0 0
      %6672 = vmatmul.mubr.bf16.gmra.mxu0 %v5551
      %v6673 = vpop.f32.mrf.mxu0
      %v6674 = vadd.f32 0.0, %v6673
      %v6675 = vpop.f32.mrf.mxu0
      %v6676 = vpop.f32.mrf.mxu0
      %v6677 = vadd.f32 0.0, %v6676
      %v6678 = vpop.f32.mrf.mxu0
      %6679 = vdwg.mxu0
      %v6680 = vpack.c.bf16 %v6393, %v6390
      %v6681 = vpack.c.bf16 %v6401, %v6398
      %v6682 = vpack.c.bf16 %v6409, %v6406
      %v6683 = vpack.c.bf16 %v6417, %v6414
      %v6684 = vpack.c.bf16 %v6425, %v6422
      %v6685 = vpack.c.bf16 %v6433, %v6430
      %v6686 = vpack.c.bf16 %v6441, %v6438
      %v6687 = vpack.c.bf16 %v6449, %v6446
      %v6688 = vpack.c.bf16 %v6507, %v6504
      %v6689 = vpack.c.bf16 %v6515, %v6512
      %v6690 = vpack.c.bf16 %v6523, %v6520
      %v6691 = vpack.c.bf16 %v6531, %v6528
      %v6692 = vpack.c.bf16 %v6539, %v6536
      %v6693 = vpack.c.bf16 %v6547, %v6544
      %v6694 = vpack.c.bf16 %v6555, %v6552
      %v6695 = vpack.c.bf16 %v6563, %v6560
      %v6697 = vsel %vm712, %v6680, 0
      %v6700 = vsel %vm712, %v6681, 0
      %v6703 = vsel %vm712, %v6682, 0
      %v6706 = vsel %vm712, %v6683, 0
      %v6709 = vsel %vm712, %v6684, 0
      %v6712 = vsel %vm712, %v6685, 0
      %v6715 = vsel %vm712, %v6686, 0
      %v6718 = vsel %vm712, %v6687, 0
      %v6721 = vsel %vm712, %v6688, 0
      %v6724 = vsel %vm712, %v6689, 0
      %v6727 = vsel %vm712, %v6690, 0
      %v6730 = vsel %vm712, %v6691, 0
      %v6733 = vsel %vm712, %v6692, 0
      %v6736 = vsel %vm712, %v6693, 0
      %v6739 = vsel %vm712, %v6694, 0
      %v6742 = vsel %vm712, %v6695, 0
      %6744 = vmatprep.subr.bf16.mxu0 0
      %6745 = vmatpush1.bf16.xpose.msra.mxu0 %v6742
      %6746 = vmatprep.subr.bf16.mxu0 0
      %6747 = vmatpush1.bf16.xpose.msra.mxu0 %v6739
      %6748 = vmatprep.subr.bf16.mxu0 0
      %6749 = vmatpush1.bf16.xpose.msra.mxu0 %v6736
      %6750 = vmatprep.subr.bf16.mxu0 0
      %6751 = vmatpush1.bf16.xpose.msra.mxu0 %v6733
      %6752 = vmatprep.subr.bf16.mxu0 0
      %6753 = vmatpush1.bf16.xpose.msra.mxu0 %v6730
      %6754 = vmatprep.subr.bf16.mxu0 0
      %6755 = vmatpush1.bf16.xpose.msra.mxu0 %v6727
      %6756 = vmatprep.subr.bf16.mxu0 0
      %6757 = vmatpush1.bf16.xpose.msra.mxu0 %v6724
      %6758 = vmatprep.subr.bf16.mxu0 0
      %6759 = vmatpush1.bf16.xpose.msra.mxu0 %v6721
      %6760 = vmatprep.subr.bf16.mxu0 0
      %6761 = vmatpush2.bf16.xpose.msra.mxu0 0
      %6762 = vmatprep.subr.bf16.mxu0 0
      %6763 = vmatpush2.bf16.xpose.msra.mxu0 0
      %6764 = vmatprep.subr.bf16.mxu0 0
      %6765 = vmatpush2.bf16.xpose.msra.mxu0 0
      %6766 = vmatprep.subr.bf16.mxu0 0
      %6767 = vmatpush2.bf16.xpose.msra.mxu0 0
      %6768 = vmatprep.subr.bf16.mxu0 0
      %6769 = vmatpush2.bf16.xpose.msra.mxu0 0
      %6770 = vmatprep.subr.bf16.mxu0 0
      %6771 = vmatpush2.bf16.xpose.msra.mxu0 0
      %6772 = vmatprep.subr.bf16.mxu0 0
      %6773 = vmatpush2.bf16.xpose.msra.mxu0 0
      %6774 = vmatprep.subr.bf16.mxu0 0
      %6775 = vmatpush2.bf16.xpose.msra.mxu0 0
      %6776 = vmatprep.mubr.bf16.mxu0 0
      %6777 = vmatmul.mubr.bf16.gmra.mxu0 %v6697
      %v6778 = vpop.f32.mrf.mxu0
      %v6779 = vadd.f32 0.0, %v6778
      %v6780 = vpop.f32.mrf.mxu0
      %v6781 = vpop.f32.mrf.mxu0
      %v6782 = vadd.f32 0.0, %v6781
      %v6783 = vpop.f32.mrf.mxu0
      %6784 = vmatprep.mubr.bf16.mxu0 0
      %6785 = vmatmul.mubr.bf16.gmra.mxu0 %v6700
      %v6786 = vpop.f32.mrf.mxu0
      %v6787 = vadd.f32 0.0, %v6786
      %v6788 = vpop.f32.mrf.mxu0
      %v6789 = vpop.f32.mrf.mxu0
      %v6790 = vadd.f32 0.0, %v6789
      %v6791 = vpop.f32.mrf.mxu0
      %6792 = vmatprep.mubr.bf16.mxu0 0
      %6793 = vmatmul.mubr.bf16.gmra.mxu0 %v6703
      %v6794 = vpop.f32.mrf.mxu0
      %v6795 = vadd.f32 0.0, %v6794
      %v6796 = vpop.f32.mrf.mxu0
      %v6797 = vpop.f32.mrf.mxu0
      %v6798 = vadd.f32 0.0, %v6797
      %v6799 = vpop.f32.mrf.mxu0
      %6800 = vmatprep.mubr.bf16.mxu0 0
      %6801 = vmatmul.mubr.bf16.gmra.mxu0 %v6706
      %v6802 = vpop.f32.mrf.mxu0
      %v6803 = vadd.f32 0.0, %v6802
      %v6804 = vpop.f32.mrf.mxu0
      %v6805 = vpop.f32.mrf.mxu0
      %v6806 = vadd.f32 0.0, %v6805
      %v6807 = vpop.f32.mrf.mxu0
      %6808 = vmatprep.mubr.bf16.mxu0 0
      %6809 = vmatmul.mubr.bf16.gmra.mxu0 %v6709
      %v6810 = vpop.f32.mrf.mxu0
      %v6811 = vadd.f32 0.0, %v6810
      %v6812 = vpop.f32.mrf.mxu0
      %v6813 = vpop.f32.mrf.mxu0
      %v6814 = vadd.f32 0.0, %v6813
      %v6815 = vpop.f32.mrf.mxu0
      %6816 = vmatprep.mubr.bf16.mxu0 0
      %6817 = vmatmul.mubr.bf16.gmra.mxu0 %v6712
      %v6818 = vpop.f32.mrf.mxu0
      %v6819 = vadd.f32 0.0, %v6818
      %v6820 = vpop.f32.mrf.mxu0
      %v6821 = vpop.f32.mrf.mxu0
      %v6822 = vadd.f32 0.0, %v6821
      %v6823 = vpop.f32.mrf.mxu0
      %6824 = vmatprep.mubr.bf16.mxu0 0
      %6825 = vmatmul.mubr.bf16.gmra.mxu0 %v6715
      %v6826 = vpop.f32.mrf.mxu0
      %v6827 = vadd.f32 0.0, %v6826
      %v6828 = vpop.f32.mrf.mxu0
      %v6829 = vpop.f32.mrf.mxu0
      %v6830 = vadd.f32 0.0, %v6829
      %v6831 = vpop.f32.mrf.mxu0
      %6832 = vmatprep.mubr.bf16.mxu0 0
      %6833 = vmatmul.mubr.bf16.gmra.mxu0 %v6718
      %v6834 = vpop.f32.mrf.mxu0
      %v6835 = vadd.f32 0.0, %v6834
      %v6836 = vpop.f32.mrf.mxu0
      %v6837 = vpop.f32.mrf.mxu0
      %v6838 = vadd.f32 0.0, %v6837
      %v6839 = vpop.f32.mrf.mxu0
      %6840 = vdwg.mxu0
      %v6841 = vmul.f32 %v6779, 0.35355338
      %v6842 = vmul.f32 %v6782, 0.35355338
      %v6843 = vmul.f32 %v6787, 0.35355338
      %v6844 = vmul.f32 %v6790, 0.35355338
      %v6845 = vmul.f32 %v6795, 0.35355338
      %v6846 = vmul.f32 %v6798, 0.35355338
      %v6847 = vmul.f32 %v6803, 0.35355338
      %v6848 = vmul.f32 %v6806, 0.35355338
      %v6849 = vmul.f32 %v6811, 0.35355338
      %v6850 = vmul.f32 %v6814, 0.35355338
      %v6851 = vmul.f32 %v6819, 0.35355338
      %v6852 = vmul.f32 %v6822, 0.35355338
      %v6853 = vmul.f32 %v6827, 0.35355338
      %v6854 = vmul.f32 %v6830, 0.35355338
      %v6855 = vmul.f32 %v6835, 0.35355338
      %v6856 = vmul.f32 %v6838, 0.35355338
      %v6857 = vadd.f32 %v6841, %v838
      %v6858 = vadd.f32 %v6842, %v839
      %v6859 = vadd.f32 %v6843, %v840
      %v6860 = vadd.f32 %v6844, %v841
      %v6861 = vadd.f32 %v6845, %v842
      %v6862 = vadd.f32 %v6846, %v843
      %v6863 = vadd.f32 %v6847, %v844
      %v6864 = vadd.f32 %v6848, %v845
      %v6865 = vadd.f32 %v6849, %v846
      %v6866 = vadd.f32 %v6850, %v847
      %v6867 = vadd.f32 %v6851, %v848
      %v6868 = vadd.f32 %v6852, %v849
      %v6869 = vadd.f32 %v6853, %v850
      %v6870 = vadd.f32 %v6854, %v851
      %v6871 = vadd.f32 %v6855, %v852
      %v6872 = vadd.f32 %v6856, %v853
      %6873 = vmax.xlane.f32.xlu0 %v6857
      %v6874 = vpop.xlane.xlu0 %6873
      %6875 = vmax.xlane.f32.xlu0 %v6858
      %v6876 = vpop.xlane.xlu0 %6875
      %6877 = vmax.xlane.f32.xlu0 %v6859
      %v6878 = vpop.xlane.xlu0 %6877
      %6879 = vmax.xlane.f32.xlu0 %v6860
      %v6880 = vpop.xlane.xlu0 %6879
      %6881 = vmax.xlane.f32.xlu0 %v6861
      %v6882 = vpop.xlane.xlu0 %6881
      %6883 = vmax.xlane.f32.xlu0 %v6862
      %v6884 = vpop.xlane.xlu0 %6883
      %6885 = vmax.xlane.f32.xlu0 %v6863
      %v6886 = vpop.xlane.xlu0 %6885
      %6887 = vmax.xlane.f32.xlu0 %v6864
      %v6888 = vpop.xlane.xlu0 %6887
      %6889 = vmax.xlane.f32.xlu0 %v6865
      %v6890 = vpop.xlane.xlu0 %6889
      %6891 = vmax.xlane.f32.xlu0 %v6866
      %v6892 = vpop.xlane.xlu0 %6891
      %6893 = vmax.xlane.f32.xlu0 %v6867
      %v6894 = vpop.xlane.xlu0 %6893
      %6895 = vmax.xlane.f32.xlu0 %v6868
      %v6896 = vpop.xlane.xlu0 %6895
      %6897 = vmax.xlane.f32.xlu0 %v6869
      %v6898 = vpop.xlane.xlu0 %6897
      %6899 = vmax.xlane.f32.xlu0 %v6870
      %v6900 = vpop.xlane.xlu0 %6899
      %6901 = vmax.xlane.f32.xlu0 %v6871
      %v6902 = vpop.xlane.xlu0 %6901
      %6903 = vmax.xlane.f32.xlu0 %v6872
      %v6904 = vpop.xlane.xlu0 %6903
      %v6905 = vsub.f32 %v6857, %v6874
      %v6906 = vsub.f32 %v6858, %v6876
      %v6907 = vsub.f32 %v6859, %v6878
      %v6908 = vsub.f32 %v6860, %v6880
      %v6909 = vsub.f32 %v6861, %v6882
      %v6910 = vsub.f32 %v6862, %v6884
      %v6911 = vsub.f32 %v6863, %v6886
      %v6912 = vsub.f32 %v6864, %v6888
      %v6913 = vsub.f32 %v6865, %v6890
      %v6914 = vsub.f32 %v6866, %v6892
      %v6915 = vsub.f32 %v6867, %v6894
      %v6916 = vsub.f32 %v6868, %v6896
      %v6917 = vsub.f32 %v6869, %v6898
      %v6918 = vsub.f32 %v6870, %v6900
      %v6919 = vsub.f32 %v6871, %v6902
      %v6920 = vsub.f32 %v6872, %v6904
      %v6921 = vmul.f32 %v6905, 1.442695
      %v6922 = vpow.pop %v6921
      %v6923 = vmul.f32 %v6906, 1.442695
      %v6924 = vpow.pop %v6923
      %v6925 = vmul.f32 %v6907, 1.442695
      %v6926 = vpow.pop %v6925
      %v6927 = vmul.f32 %v6908, 1.442695
      %v6928 = vpow.pop %v6927
      %v6929 = vmul.f32 %v6909, 1.442695
      %v6930 = vpow.pop %v6929
      %v6931 = vmul.f32 %v6910, 1.442695
      %v6932 = vpow.pop %v6931
      %v6933 = vmul.f32 %v6911, 1.442695
      %v6934 = vpow.pop %v6933
      %v6935 = vmul.f32 %v6912, 1.442695
      %v6936 = vpow.pop %v6935
      %v6937 = vmul.f32 %v6913, 1.442695
      %v6938 = vpow.pop %v6937
      %v6939 = vmul.f32 %v6914, 1.442695
      %v6940 = vpow.pop %v6939
      %v6941 = vmul.f32 %v6915, 1.442695
      %v6942 = vpow.pop %v6941
      %v6943 = vmul.f32 %v6916, 1.442695
      %v6944 = vpow.pop %v6943
      %v6945 = vmul.f32 %v6917, 1.442695
      %v6946 = vpow.pop %v6945
      %v6947 = vmul.f32 %v6918, 1.442695
      %v6948 = vpow.pop %v6947
      %v6949 = vmul.f32 %v6919, 1.442695
      %v6950 = vpow.pop %v6949
      %v6951 = vmul.f32 %v6920, 1.442695
      %v6952 = vpow.pop %v6951
      %6953 = vadd.xlane.f32.xlu0 %v6922
      %v6954 = vpop.xlane.xlu0 %6953
      %6955 = vadd.xlane.f32.xlu0 %v6924
      %v6956 = vpop.xlane.xlu0 %6955
      %6957 = vadd.xlane.f32.xlu0 %v6926
      %v6958 = vpop.xlane.xlu0 %6957
      %6959 = vadd.xlane.f32.xlu0 %v6928
      %v6960 = vpop.xlane.xlu0 %6959
      %6961 = vadd.xlane.f32.xlu0 %v6930
      %v6962 = vpop.xlane.xlu0 %6961
      %6963 = vadd.xlane.f32.xlu0 %v6932
      %v6964 = vpop.xlane.xlu0 %6963
      %6965 = vadd.xlane.f32.xlu0 %v6934
      %v6966 = vpop.xlane.xlu0 %6965
      %6967 = vadd.xlane.f32.xlu0 %v6936
      %v6968 = vpop.xlane.xlu0 %6967
      %6969 = vadd.xlane.f32.xlu0 %v6938
      %v6970 = vpop.xlane.xlu0 %6969
      %6971 = vadd.xlane.f32.xlu0 %v6940
      %v6972 = vpop.xlane.xlu0 %6971
      %6973 = vadd.xlane.f32.xlu0 %v6942
      %v6974 = vpop.xlane.xlu0 %6973
      %6975 = vadd.xlane.f32.xlu0 %v6944
      %v6976 = vpop.xlane.xlu0 %6975
      %6977 = vadd.xlane.f32.xlu0 %v6946
      %v6978 = vpop.xlane.xlu0 %6977
      %6979 = vadd.xlane.f32.xlu0 %v6948
      %v6980 = vpop.xlane.xlu0 %6979
      %6981 = vadd.xlane.f32.xlu0 %v6950
      %v6982 = vpop.xlane.xlu0 %6981
      %6983 = vadd.xlane.f32.xlu0 %v6952
      %v6984 = vpop.xlane.xlu0 %6983
      %v6985 = vrcp.pop %v6954
      %v6986 = vmul.f32 %v6922, %v6985
      %v6987 = vrcp.pop %v6956
      %v6988 = vmul.f32 %v6924, %v6987
      %v6989 = vrcp.pop %v6958
      %v6990 = vmul.f32 %v6926, %v6989
      %v6991 = vrcp.pop %v6960
      %v6992 = vmul.f32 %v6928, %v6991
      %v6993 = vrcp.pop %v6962
      %v6994 = vmul.f32 %v6930, %v6993
      %v6995 = vrcp.pop %v6964
      %v6996 = vmul.f32 %v6932, %v6995
      %v6997 = vrcp.pop %v6966
      %v6998 = vmul.f32 %v6934, %v6997
      %v6999 = vrcp.pop %v6968
      %v7000 = vmul.f32 %v6936, %v6999
      %v7001 = vrcp.pop %v6970
      %v7002 = vmul.f32 %v6938, %v7001
      %v7003 = vrcp.pop %v6972
      %v7004 = vmul.f32 %v6940, %v7003
      %v7005 = vrcp.pop %v6974
      %v7006 = vmul.f32 %v6942, %v7005
      %v7007 = vrcp.pop %v6976
      %v7008 = vmul.f32 %v6944, %v7007
      %v7009 = vrcp.pop %v6978
      %v7010 = vmul.f32 %v6946, %v7009
      %v7011 = vrcp.pop %v6980
      %v7012 = vmul.f32 %v6948, %v7011
      %v7013 = vrcp.pop %v6982
      %v7014 = vmul.f32 %v6950, %v7013
      %v7015 = vrcp.pop %v6984
      %v7016 = vmul.f32 %v6952, %v7015
      %v7017 = vpack.c.bf16 %v6988, %v6986
      %v7018 = vpack.c.bf16 %v6992, %v6990
      %v7019 = vpack.c.bf16 %v6996, %v6994
      %v7020 = vpack.c.bf16 %v7000, %v6998
      %v7021 = vpack.c.bf16 %v7004, %v7002
      %v7022 = vpack.c.bf16 %v7008, %v7006
      %v7023 = vpack.c.bf16 %v7012, %v7010
      %v7024 = vpack.c.bf16 %v7016, %v7014
      %v7025 = vpack.c.bf16 %v6621, %v6618
      %v7026 = vpack.c.bf16 %v6629, %v6626
      %v7027 = vpack.c.bf16 %v6637, %v6634
      %v7028 = vpack.c.bf16 %v6645, %v6642
      %v7029 = vpack.c.bf16 %v6653, %v6650
      %v7030 = vpack.c.bf16 %v6661, %v6658
      %v7031 = vpack.c.bf16 %v6669, %v6666
      %v7032 = vpack.c.bf16 %v6677, %v6674
      %7033 = vmatprep.subr.bf16.mxu0 0
      %7034 = vmatpush1.bf16.msra.mxu0 %v7032
      %7035 = vmatprep.subr.bf16.mxu0 0
      %7036 = vmatpush1.bf16.msra.mxu0 %v7031
      %7037 = vmatprep.subr.bf16.mxu0 0
      %7038 = vmatpush1.bf16.msra.mxu0 %v7030
      %7039 = vmatprep.subr.bf16.mxu0 0
      %7040 = vmatpush1.bf16.msra.mxu0 %v7029
      %7041 = vmatprep.subr.bf16.mxu0 0
      %7042 = vmatpush1.bf16.msra.mxu0 %v7028
      %7043 = vmatprep.subr.bf16.mxu0 0
      %7044 = vmatpush1.bf16.msra.mxu0 %v7027
      %7045 = vmatprep.subr.bf16.mxu0 0
      %7046 = vmatpush1.bf16.msra.mxu0 %v7026
      %7047 = vmatprep.subr.bf16.mxu0 0
      %7048 = vmatpush1.bf16.msra.mxu0 %v7025
      %7049 = vmatprep.subr.bf16.mxu0 0
      %7050 = vmatpush2.bf16.msra.mxu0 0
      %7051 = vmatprep.subr.bf16.mxu0 0
      %7052 = vmatpush2.bf16.msra.mxu0 0
      %7053 = vmatprep.subr.bf16.mxu0 0
      %7054 = vmatpush2.bf16.msra.mxu0 0
      %7055 = vmatprep.subr.bf16.mxu0 0
      %7056 = vmatpush2.bf16.msra.mxu0 0
      %7057 = vmatprep.subr.bf16.mxu0 0
      %7058 = vmatpush2.bf16.msra.mxu0 0
      %7059 = vmatprep.subr.bf16.mxu0 0
      %7060 = vmatpush2.bf16.msra.mxu0 0
      %7061 = vmatprep.subr.bf16.mxu0 0
      %7062 = vmatpush2.bf16.msra.mxu0 0
      %7063 = vmatprep.subr.bf16.mxu0 0
      %7064 = vmatpush2.bf16.msra.mxu0 0
      %7065 = vmatprep.mubr.bf16.mxu0 0
      %7066 = vmatmul.mubr.bf16.gmra.mxu0 %v7017
      %v7067 = vpop.f32.mrf.mxu0
      %v7068 = vadd.f32 0.0, %v7067
      %v7069 = vpop.f32.mrf.mxu0
      %v7070 = vpop.f32.mrf.mxu0
      %v7071 = vadd.f32 0.0, %v7070
      %v7072 = vpop.f32.mrf.mxu0
      %7073 = vmatprep.mubr.bf16.mxu0 0
      %7074 = vmatmul.mubr.bf16.gmra.mxu0 %v7018
      %v7075 = vpop.f32.mrf.mxu0
      %v7076 = vadd.f32 0.0, %v7075
      %v7077 = vpop.f32.mrf.mxu0
      %v7078 = vpop.f32.mrf.mxu0
      %v7079 = vadd.f32 0.0, %v7078
      %v7080 = vpop.f32.mrf.mxu0
      %7081 = vmatprep.mubr.bf16.mxu0 0
      %7082 = vmatmul.mubr.bf16.gmra.mxu0 %v7019
      %v7083 = vpop.f32.mrf.mxu0
      %v7084 = vadd.f32 0.0, %v7083
      %v7085 = vpop.f32.mrf.mxu0
      %v7086 = vpop.f32.mrf.mxu0
      %v7087 = vadd.f32 0.0, %v7086
      %v7088 = vpop.f32.mrf.mxu0
      %7089 = vmatprep.mubr.bf16.mxu0 0
      %7090 = vmatmul.mubr.bf16.gmra.mxu0 %v7020
      %v7091 = vpop.f32.mrf.mxu0
      %v7092 = vadd.f32 0.0, %v7091
      %v7093 = vpop.f32.mrf.mxu0
      %v7094 = vpop.f32.mrf.mxu0
      %v7095 = vadd.f32 0.0, %v7094
      %v7096 = vpop.f32.mrf.mxu0
      %7097 = vmatprep.mubr.bf16.mxu0 0
      %7098 = vmatmul.mubr.bf16.gmra.mxu0 %v7021
      %v7099 = vpop.f32.mrf.mxu0
      %v7100 = vadd.f32 0.0, %v7099
      %v7101 = vpop.f32.mrf.mxu0
      %v7102 = vpop.f32.mrf.mxu0
      %v7103 = vadd.f32 0.0, %v7102
      %v7104 = vpop.f32.mrf.mxu0
      %7105 = vmatprep.mubr.bf16.mxu0 0
      %7106 = vmatmul.mubr.bf16.gmra.mxu0 %v7022
      %v7107 = vpop.f32.mrf.mxu0
      %v7108 = vadd.f32 0.0, %v7107
      %v7109 = vpop.f32.mrf.mxu0
      %v7110 = vpop.f32.mrf.mxu0
      %v7111 = vadd.f32 0.0, %v7110
      %v7112 = vpop.f32.mrf.mxu0
      %7113 = vmatprep.mubr.bf16.mxu0 0
      %7114 = vmatmul.mubr.bf16.gmra.mxu0 %v7023
      %v7115 = vpop.f32.mrf.mxu0
      %v7116 = vadd.f32 0.0, %v7115
      %v7117 = vpop.f32.mrf.mxu0
      %v7118 = vpop.f32.mrf.mxu0
      %v7119 = vadd.f32 0.0, %v7118
      %v7120 = vpop.f32.mrf.mxu0
      %7121 = vmatprep.mubr.bf16.mxu0 0
      %7122 = vmatmul.mubr.bf16.gmra.mxu0 %v7024
      %v7123 = vpop.f32.mrf.mxu0
      %v7124 = vadd.f32 0.0, %v7123
      %v7125 = vpop.f32.mrf.mxu0
      %v7126 = vpop.f32.mrf.mxu0
      %v7127 = vadd.f32 0.0, %v7126
      %v7128 = vpop.f32.mrf.mxu0
      %7129 = vdwg.mxu0
      %s7130 = scalar_lea.vmem %s8, 20
      %v7131 = vld [vmem:[%s7130] sm:$0xf]
      %v7132 = vpack.c.bf16 %v7071, %v7068
      %v7133 = vpack.c.bf16 %v7079, %v7076
      %v7134 = vpack.c.bf16 %v7087, %v7084
      %v7135 = vpack.c.bf16 %v7095, %v7092
      %v7136 = vpack.c.bf16 %v7103, %v7100
      %v7137 = vpack.c.bf16 %v7111, %v7108
      %v7138 = vpack.c.bf16 %v7119, %v7116
      %v7139 = vpack.c.bf16 %v7127, %v7124
      %v7141 = vsel %vm712, %v7132, 0
      %v7144 = vsel %vm712, %v7133, 0
      %v7147 = vsel %vm712, %v7134, 0
      %v7150 = vsel %vm712, %v7135, 0
      %v7153 = vsel %vm712, %v7136, 0
      %v7156 = vsel %vm712, %v7137, 0
      %v7159 = vsel %vm712, %v7138, 0
      %v7162 = vsel %vm712, %v7139, 0
      %v7165 = vsel %vm737, %v7131, 0
      %7167 = vmatprep.subr.bf16.mxu0 0
      %7168 = vmatpush1.bf16.msra.mxu0 0
      %7169 = vmatprep.subr.bf16.mxu0 0
      %7170 = vmatpush1.bf16.msra.mxu0 0
      %7171 = vmatprep.subr.bf16.mxu0 0
      %7172 = vmatpush1.bf16.msra.mxu0 0
      %7173 = vmatprep.subr.bf16.mxu0 0
      %7174 = vmatpush1.bf16.msra.mxu0 0
      %7175 = vmatprep.subr.bf16.mxu0 0
      %7176 = vmatpush1.bf16.msra.mxu0 0
      %7177 = vmatprep.subr.bf16.mxu0 0
      %7178 = vmatpush1.bf16.msra.mxu0 0
      %7179 = vmatprep.subr.bf16.mxu0 0
      %7180 = vmatpush1.bf16.msra.mxu0 0
      %7181 = vmatprep.subr.bf16.mxu0 0
      %7182 = vmatpush1.bf16.msra.mxu0 %v7165
      %7183 = vmatprep.subr.bf16.mxu0 0
      %7184 = vmatpush2.bf16.msra.mxu0 0
      %7185 = vmatprep.subr.bf16.mxu0 0
      %7186 = vmatpush2.bf16.msra.mxu0 0
      %7187 = vmatprep.subr.bf16.mxu0 0
      %7188 = vmatpush2.bf16.msra.mxu0 0
      %7189 = vmatprep.subr.bf16.mxu0 0
      %7190 = vmatpush2.bf16.msra.mxu0 0
      %7191 = vmatprep.subr.bf16.mxu0 0
      %7192 = vmatpush2.bf16.msra.mxu0 0
      %7193 = vmatprep.subr.bf16.mxu0 0
      %7194 = vmatpush2.bf16.msra.mxu0 0
      %7195 = vmatprep.subr.bf16.mxu0 0
      %7196 = vmatpush2.bf16.msra.mxu0 0
      %7197 = vmatprep.subr.bf16.mxu0 0
      %7198 = vmatpush2.bf16.msra.mxu0 0
      %7199 = vmatprep.mubr.bf16.mxu0 0
      %7200 = vmatmul.mubr.bf16.gmra.mxu0 %v7141
      %v7201 = vpop.f32.mrf.mxu0
      %v7202 = vadd.f32 0.0, %v7201
      %v7203 = vpop.f32.mrf.mxu0
      %v7204 = vpop.f32.mrf.mxu0
      %v7205 = vadd.f32 0.0, %v7204
      %v7206 = vpop.f32.mrf.mxu0
      %7207 = vmatprep.mubr.bf16.mxu0 0
      %7208 = vmatmul.mubr.bf16.gmra.mxu0 %v7144
      %v7209 = vpop.f32.mrf.mxu0
      %v7210 = vadd.f32 0.0, %v7209
      %v7211 = vpop.f32.mrf.mxu0
      %v7212 = vpop.f32.mrf.mxu0
      %v7213 = vadd.f32 0.0, %v7212
      %v7214 = vpop.f32.mrf.mxu0
      %7215 = vmatprep.mubr.bf16.mxu0 0
      %7216 = vmatmul.mubr.bf16.gmra.mxu0 %v7147
      %v7217 = vpop.f32.mrf.mxu0
      %v7218 = vadd.f32 0.0, %v7217
      %v7219 = vpop.f32.mrf.mxu0
      %v7220 = vpop.f32.mrf.mxu0
      %v7221 = vadd.f32 0.0, %v7220
      %v7222 = vpop.f32.mrf.mxu0
      %7223 = vmatprep.mubr.bf16.mxu0 0
      %7224 = vmatmul.mubr.bf16.gmra.mxu0 %v7150
      %v7225 = vpop.f32.mrf.mxu0
      %v7226 = vadd.f32 0.0, %v7225
      %v7227 = vpop.f32.mrf.mxu0
      %v7228 = vpop.f32.mrf.mxu0
      %v7229 = vadd.f32 0.0, %v7228
      %v7230 = vpop.f32.mrf.mxu0
      %7231 = vmatprep.mubr.bf16.mxu0 0
      %7232 = vmatmul.mubr.bf16.gmra.mxu0 %v7153
      %v7233 = vpop.f32.mrf.mxu0
      %v7234 = vadd.f32 0.0, %v7233
      %v7235 = vpop.f32.mrf.mxu0
      %v7236 = vpop.f32.mrf.mxu0
      %v7237 = vadd.f32 0.0, %v7236
      %v7238 = vpop.f32.mrf.mxu0
      %7239 = vmatprep.mubr.bf16.mxu0 0
      %7240 = vmatmul.mubr.bf16.gmra.mxu0 %v7156
      %v7241 = vpop.f32.mrf.mxu0
      %v7242 = vadd.f32 0.0, %v7241
      %v7243 = vpop.f32.mrf.mxu0
      %v7244 = vpop.f32.mrf.mxu0
      %v7245 = vadd.f32 0.0, %v7244
      %v7246 = vpop.f32.mrf.mxu0
      %7247 = vmatprep.mubr.bf16.mxu0 0
      %7248 = vmatmul.mubr.bf16.gmra.mxu0 %v7159
      %v7249 = vpop.f32.mrf.mxu0
      %v7250 = vadd.f32 0.0, %v7249
      %v7251 = vpop.f32.mrf.mxu0
      %v7252 = vpop.f32.mrf.mxu0
      %v7253 = vadd.f32 0.0, %v7252
      %v7254 = vpop.f32.mrf.mxu0
      %7255 = vmatprep.mubr.bf16.mxu0 0
      %7256 = vmatmul.mubr.bf16.gmra.mxu0 %v7162
      %v7257 = vpop.f32.mrf.mxu0
      %v7258 = vadd.f32 0.0, %v7257
      %v7259 = vpop.f32.mrf.mxu0
      %v7260 = vpop.f32.mrf.mxu0
      %v7261 = vadd.f32 0.0, %v7260
      %v7262 = vpop.f32.mrf.mxu0
      %7263 = vdwg.mxu0
      %v7265 = vsel %vm712, %v6330, 0
      %v7268 = vsel %vm712, %v6331, 0
      %v7271 = vsel %vm712, %v6332, 0
      %v7274 = vsel %vm712, %v6333, 0
      %v7277 = vsel %vm712, %v6334, 0
      %v7280 = vsel %vm712, %v6335, 0
      %v7283 = vsel %vm712, %v6336, 0
      %v7286 = vsel %vm712, %v6337, 0
      %v7289 = vsel %vm737, %v6329, 0
      %7291 = vmatprep.subr.bf16.mxu0 0
      %7292 = vmatpush1.bf16.msra.mxu0 0
      %7293 = vmatprep.subr.bf16.mxu0 0
      %7294 = vmatpush1.bf16.msra.mxu0 0
      %7295 = vmatprep.subr.bf16.mxu0 0
      %7296 = vmatpush1.bf16.msra.mxu0 0
      %7297 = vmatprep.subr.bf16.mxu0 0
      %7298 = vmatpush1.bf16.msra.mxu0 0
      %7299 = vmatprep.subr.bf16.mxu0 0
      %7300 = vmatpush1.bf16.msra.mxu0 0
      %7301 = vmatprep.subr.bf16.mxu0 0
      %7302 = vmatpush1.bf16.msra.mxu0 0
      %7303 = vmatprep.subr.bf16.mxu0 0
      %7304 = vmatpush1.bf16.msra.mxu0 0
      %7305 = vmatprep.subr.bf16.mxu0 0
      %7306 = vmatpush1.bf16.msra.mxu0 %v7289
      %7307 = vmatprep.subr.bf16.mxu0 0
      %7308 = vmatpush2.bf16.msra.mxu0 0
      %7309 = vmatprep.subr.bf16.mxu0 0
      %7310 = vmatpush2.bf16.msra.mxu0 0
      %7311 = vmatprep.subr.bf16.mxu0 0
      %7312 = vmatpush2.bf16.msra.mxu0 0
      %7313 = vmatprep.subr.bf16.mxu0 0
      %7314 = vmatpush2.bf16.msra.mxu0 0
      %7315 = vmatprep.subr.bf16.mxu0 0
      %7316 = vmatpush2.bf16.msra.mxu0 0
      %7317 = vmatprep.subr.bf16.mxu0 0
      %7318 = vmatpush2.bf16.msra.mxu0 0
      %7319 = vmatprep.subr.bf16.mxu0 0
      %7320 = vmatpush2.bf16.msra.mxu0 0
      %7321 = vmatprep.subr.bf16.mxu0 0
      %7322 = vmatpush2.bf16.msra.mxu0 0
      %7323 = vmatprep.mubr.bf16.mxu0 0
      %7324 = vmatmul.mubr.bf16.gmra.mxu0 %v7265
      %v7325 = vpop.f32.mrf.mxu0
      %v7326 = vadd.f32 %v7202, %v7325
      %v7327 = vpop.f32.mrf.mxu0
      %v7328 = vpop.f32.mrf.mxu0
      %v7329 = vadd.f32 %v7205, %v7328
      %v7330 = vpop.f32.mrf.mxu0
      %7331 = vmatprep.mubr.bf16.mxu0 0
      %7332 = vmatmul.mubr.bf16.gmra.mxu0 %v7268
      %v7333 = vpop.f32.mrf.mxu0
      %v7334 = vadd.f32 %v7210, %v7333
      %v7335 = vpop.f32.mrf.mxu0
      %v7336 = vpop.f32.mrf.mxu0
      %v7337 = vadd.f32 %v7213, %v7336
      %v7338 = vpop.f32.mrf.mxu0
      %7339 = vmatprep.mubr.bf16.mxu0 0
      %7340 = vmatmul.mubr.bf16.gmra.mxu0 %v7271
      %v7341 = vpop.f32.mrf.mxu0
      %v7342 = vadd.f32 %v7218, %v7341
      %v7343 = vpop.f32.mrf.mxu0
      %v7344 = vpop.f32.mrf.mxu0
      %v7345 = vadd.f32 %v7221, %v7344
      %v7346 = vpop.f32.mrf.mxu0
      %7347 = vmatprep.mubr.bf16.mxu0 0
      %7348 = vmatmul.mubr.bf16.gmra.mxu0 %v7274
      %v7349 = vpop.f32.mrf.mxu0
      %v7350 = vadd.f32 %v7226, %v7349
      %v7351 = vpop.f32.mrf.mxu0
      %v7352 = vpop.f32.mrf.mxu0
      %v7353 = vadd.f32 %v7229, %v7352
      %v7354 = vpop.f32.mrf.mxu0
      %7355 = vmatprep.mubr.bf16.mxu0 0
      %7356 = vmatmul.mubr.bf16.gmra.mxu0 %v7277
      %v7357 = vpop.f32.mrf.mxu0
      %v7358 = vadd.f32 %v7234, %v7357
      %v7359 = vpop.f32.mrf.mxu0
      %v7360 = vpop.f32.mrf.mxu0
      %v7361 = vadd.f32 %v7237, %v7360
      %v7362 = vpop.f32.mrf.mxu0
      %7363 = vmatprep.mubr.bf16.mxu0 0
      %7364 = vmatmul.mubr.bf16.gmra.mxu0 %v7280
      %v7365 = vpop.f32.mrf.mxu0
      %v7366 = vadd.f32 %v7242, %v7365
      %v7367 = vpop.f32.mrf.mxu0
      %v7368 = vpop.f32.mrf.mxu0
      %v7369 = vadd.f32 %v7245, %v7368
      %v7370 = vpop.f32.mrf.mxu0
      %7371 = vmatprep.mubr.bf16.mxu0 0
      %7372 = vmatmul.mubr.bf16.gmra.mxu0 %v7283
      %v7373 = vpop.f32.mrf.mxu0
      %v7374 = vadd.f32 %v7250, %v7373
      %v7375 = vpop.f32.mrf.mxu0
      %v7376 = vpop.f32.mrf.mxu0
      %v7377 = vadd.f32 %v7253, %v7376
      %v7378 = vpop.f32.mrf.mxu0
      %7379 = vmatprep.mubr.bf16.mxu0 0
      %7380 = vmatmul.mubr.bf16.gmra.mxu0 %v7286
      %v7381 = vpop.f32.mrf.mxu0
      %v7382 = vadd.f32 %v7258, %v7381
      %v7383 = vpop.f32.mrf.mxu0
      %v7384 = vpop.f32.mrf.mxu0
      %v7385 = vadd.f32 %v7261, %v7384
      %v7386 = vpop.f32.mrf.mxu0
      %7387 = vdwg.mxu0
      %s7388 = scalar_lea.vmem %s5, 96
      %v7389 = vld [vmem:[%s7388] sm:$0xf]
      %v7390 = vld [vmem:[%s7388 + $0x4] sm:$0xf]
      %v7391 = vld [vmem:[%s7388 + $0x8] sm:$0xf]
      %v7392 = vld [vmem:[%s7388 + $0xc] sm:$0xf]
      %v7397 = vunpack.c.l.b16 %v7389
      %v7398 = vunpack.c.l.b16 %v7390
      %v7399 = vunpack.c.l.b16 %v7391
      %v7400 = vunpack.c.l.b16 %v7392
      %v7401 = vpack.c.b16 %v7398, %v7397
      %v7402 = vpack.c.b16 %v7400, %v7399
      %7405 = vmatprep.subr.bf16.mxu0 0
      %7406 = vmatpush1.bf16.msra.mxu0 0
      %7407 = vmatprep.subr.bf16.mxu0 0
      %7408 = vmatpush1.bf16.msra.mxu0 0
      %7409 = vmatprep.subr.bf16.mxu0 0
      %7410 = vmatpush1.bf16.msra.mxu0 0
      %7411 = vmatprep.subr.bf16.mxu0 0
      %7412 = vmatpush1.bf16.msra.mxu0 0
      %7413 = vmatprep.subr.bf16.mxu0 0
      %7414 = vmatpush1.bf16.msra.mxu0 0
      %7415 = vmatprep.subr.bf16.mxu0 0
      %7416 = vmatpush1.bf16.msra.mxu0 0
      %7417 = vmatprep.subr.bf16.mxu0 0
      %7418 = vmatpush1.bf16.msra.mxu0 %v7402
      %7419 = vmatprep.subr.bf16.mxu0 0
      %7420 = vmatpush1.bf16.msra.mxu0 %v7401
      %7421 = vmatprep.subr.bf16.mxu0 0
      %7422 = vmatpush2.bf16.msra.mxu0 0
      %7423 = vmatprep.subr.bf16.mxu0 0
      %7424 = vmatpush2.bf16.msra.mxu0 0
      %7425 = vmatprep.subr.bf16.mxu0 0
      %7426 = vmatpush2.bf16.msra.mxu0 0
      %7427 = vmatprep.subr.bf16.mxu0 0
      %7428 = vmatpush2.bf16.msra.mxu0 0
      %7429 = vmatprep.subr.bf16.mxu0 0
      %7430 = vmatpush2.bf16.msra.mxu0 0
      %7431 = vmatprep.subr.bf16.mxu0 0
      %7432 = vmatpush2.bf16.msra.mxu0 0
      %7433 = vmatprep.subr.bf16.mxu0 0
      %7434 = vmatpush2.bf16.msra.mxu0 0
      %7435 = vmatprep.subr.bf16.mxu0 0
      %7436 = vmatpush2.bf16.msra.mxu0 0
      %7437 = vmatprep.mubr.bf16.mxu0 0
      %7438 = vmatmul.mubr.bf16.gmra.mxu0 %v5530
      %v7439 = vpop.f32.mrf.mxu0
      %v7440 = vadd.f32 0.0, %v7439
      %v7441 = vpop.f32.mrf.mxu0
      %v7442 = vpop.f32.mrf.mxu0
      %v7443 = vadd.f32 0.0, %v7442
      %v7444 = vpop.f32.mrf.mxu0
      %7445 = vmatprep.mubr.bf16.mxu0 0
      %7446 = vmatmul.mubr.bf16.gmra.mxu0 %v5533
      %v7447 = vpop.f32.mrf.mxu0
      %v7448 = vadd.f32 0.0, %v7447
      %v7449 = vpop.f32.mrf.mxu0
      %v7450 = vpop.f32.mrf.mxu0
      %v7451 = vadd.f32 0.0, %v7450
      %v7452 = vpop.f32.mrf.mxu0
      %7453 = vmatprep.mubr.bf16.mxu0 0
      %7454 = vmatmul.mubr.bf16.gmra.mxu0 %v5536
      %v7455 = vpop.f32.mrf.mxu0
      %v7456 = vadd.f32 0.0, %v7455
      %v7457 = vpop.f32.mrf.mxu0
      %v7458 = vpop.f32.mrf.mxu0
      %v7459 = vadd.f32 0.0, %v7458
      %v7460 = vpop.f32.mrf.mxu0
      %7461 = vmatprep.mubr.bf16.mxu0 0
      %7462 = vmatmul.mubr.bf16.gmra.mxu0 %v5539
      %v7463 = vpop.f32.mrf.mxu0
      %v7464 = vadd.f32 0.0, %v7463
      %v7465 = vpop.f32.mrf.mxu0
      %v7466 = vpop.f32.mrf.mxu0
      %v7467 = vadd.f32 0.0, %v7466
      %v7468 = vpop.f32.mrf.mxu0
      %7469 = vmatprep.mubr.bf16.mxu0 0
      %7470 = vmatmul.mubr.bf16.gmra.mxu0 %v5542
      %v7471 = vpop.f32.mrf.mxu0
      %v7472 = vadd.f32 0.0, %v7471
      %v7473 = vpop.f32.mrf.mxu0
      %v7474 = vpop.f32.mrf.mxu0
      %v7475 = vadd.f32 0.0, %v7474
      %v7476 = vpop.f32.mrf.mxu0
      %7477 = vmatprep.mubr.bf16.mxu0 0
      %7478 = vmatmul.mubr.bf16.gmra.mxu0 %v5545
      %v7479 = vpop.f32.mrf.mxu0
      %v7480 = vadd.f32 0.0, %v7479
      %v7481 = vpop.f32.mrf.mxu0
      %v7482 = vpop.f32.mrf.mxu0
      %v7483 = vadd.f32 0.0, %v7482
      %v7484 = vpop.f32.mrf.mxu0
      %7485 = vmatprep.mubr.bf16.mxu0 0
      %7486 = vmatmul.mubr.bf16.gmra.mxu0 %v5548
      %v7487 = vpop.f32.mrf.mxu0
      %v7488 = vadd.f32 0.0, %v7487
      %v7489 = vpop.f32.mrf.mxu0
      %v7490 = vpop.f32.mrf.mxu0
      %v7491 = vadd.f32 0.0, %v7490
      %v7492 = vpop.f32.mrf.mxu0
      %7493 = vmatprep.mubr.bf16.mxu0 0
      %7494 = vmatmul.mubr.bf16.gmra.mxu0 %v5551
      %v7495 = vpop.f32.mrf.mxu0
      %v7496 = vadd.f32 0.0, %v7495
      %v7497 = vpop.f32.mrf.mxu0
      %v7498 = vpop.f32.mrf.mxu0
      %v7499 = vadd.f32 0.0, %v7498
      %v7500 = vpop.f32.mrf.mxu0
      %7501 = vdwg.mxu0
      %s7502 = scalar_lea.vmem %s6, 96
      %v7503 = vld [vmem:[%s7502] sm:$0xf]
      %v7504 = vld [vmem:[%s7502 + $0x4] sm:$0xf]
      %v7505 = vld [vmem:[%s7502 + $0x8] sm:$0xf]
      %v7506 = vld [vmem:[%s7502 + $0xc] sm:$0xf]
      %v7511 = vunpack.c.l.b16 %v7503
      %v7512 = vunpack.c.l.b16 %v7504
      %v7513 = vunpack.c.l.b16 %v7505
      %v7514 = vunpack.c.l.b16 %v7506
      %v7515 = vpack.c.b16 %v7512, %v7511
      %v7516 = vpack.c.b16 %v7514, %v7513
      %7519 = vmatprep.subr.bf16.mxu0 0
      %7520 = vmatpush1.bf16.msra.mxu0 0
      %7521 = vmatprep.subr.bf16.mxu0 0
      %7522 = vmatpush1.bf16.msra.mxu0 0
      %7523 = vmatprep.subr.bf16.mxu0 0
      %7524 = vmatpush1.bf16.msra.mxu0 0
      %7525 = vmatprep.subr.bf16.mxu0 0
      %7526 = vmatpush1.bf16.msra.mxu0 0
      %7527 = vmatprep.subr.bf16.mxu0 0
      %7528 = vmatpush1.bf16.msra.mxu0 0
      %7529 = vmatprep.subr.bf16.mxu0 0
      %7530 = vmatpush1.bf16.msra.mxu0 0
      %7531 = vmatprep.subr.bf16.mxu0 0
      %7532 = vmatpush1.bf16.msra.mxu0 %v7516
      %7533 = vmatprep.subr.bf16.mxu0 0
      %7534 = vmatpush1.bf16.msra.mxu0 %v7515
      %7535 = vmatprep.subr.bf16.mxu0 0
      %7536 = vmatpush2.bf16.msra.mxu0 0
      %7537 = vmatprep.subr.bf16.mxu0 0
      %7538 = vmatpush2.bf16.msra.mxu0 0
      %7539 = vmatprep.subr.bf16.mxu0 0
      %7540 = vmatpush2.bf16.msra.mxu0 0
      %7541 = vmatprep.subr.bf16.mxu0 0
      %7542 = vmatpush2.bf16.msra.mxu0 0
      %7543 = vmatprep.subr.bf16.mxu0 0
      %7544 = vmatpush2.bf16.msra.mxu0 0
      %7545 = vmatprep.subr.bf16.mxu0 0
      %7546 = vmatpush2.bf16.msra.mxu0 0
      %7547 = vmatprep.subr.bf16.mxu0 0
      %7548 = vmatpush2.bf16.msra.mxu0 0
      %7549 = vmatprep.subr.bf16.mxu0 0
      %7550 = vmatpush2.bf16.msra.mxu0 0
      %7551 = vmatprep.mubr.bf16.mxu0 0
      %7552 = vmatmul.mubr.bf16.gmra.mxu0 %v5530
      %v7553 = vpop.f32.mrf.mxu0
      %v7554 = vadd.f32 0.0, %v7553
      %v7555 = vpop.f32.mrf.mxu0
      %v7556 = vpop.f32.mrf.mxu0
      %v7557 = vadd.f32 0.0, %v7556
      %v7558 = vpop.f32.mrf.mxu0
      %7559 = vmatprep.mubr.bf16.mxu0 0
      %7560 = vmatmul.mubr.bf16.gmra.mxu0 %v5533
      %v7561 = vpop.f32.mrf.mxu0
      %v7562 = vadd.f32 0.0, %v7561
      %v7563 = vpop.f32.mrf.mxu0
      %v7564 = vpop.f32.mrf.mxu0
      %v7565 = vadd.f32 0.0, %v7564
      %v7566 = vpop.f32.mrf.mxu0
      %7567 = vmatprep.mubr.bf16.mxu0 0
      %7568 = vmatmul.mubr.bf16.gmra.mxu0 %v5536
      %v7569 = vpop.f32.mrf.mxu0
      %v7570 = vadd.f32 0.0, %v7569
      %v7571 = vpop.f32.mrf.mxu0
      %v7572 = vpop.f32.mrf.mxu0
      %v7573 = vadd.f32 0.0, %v7572
      %v7574 = vpop.f32.mrf.mxu0
      %7575 = vmatprep.mubr.bf16.mxu0 0
      %7576 = vmatmul.mubr.bf16.gmra.mxu0 %v5539
      %v7577 = vpop.f32.mrf.mxu0
      %v7578 = vadd.f32 0.0, %v7577
      %v7579 = vpop.f32.mrf.mxu0
      %v7580 = vpop.f32.mrf.mxu0
      %v7581 = vadd.f32 0.0, %v7580
      %v7582 = vpop.f32.mrf.mxu0
      %7583 = vmatprep.mubr.bf16.mxu0 0
      %7584 = vmatmul.mubr.bf16.gmra.mxu0 %v5542
      %v7585 = vpop.f32.mrf.mxu0
      %v7586 = vadd.f32 0.0, %v7585
      %v7587 = vpop.f32.mrf.mxu0
      %v7588 = vpop.f32.mrf.mxu0
      %v7589 = vadd.f32 0.0, %v7588
      %v7590 = vpop.f32.mrf.mxu0
      %7591 = vmatprep.mubr.bf16.mxu0 0
      %7592 = vmatmul.mubr.bf16.gmra.mxu0 %v5545
      %v7593 = vpop.f32.mrf.mxu0
      %v7594 = vadd.f32 0.0, %v7593
      %v7595 = vpop.f32.mrf.mxu0
      %v7596 = vpop.f32.mrf.mxu0
      %v7597 = vadd.f32 0.0, %v7596
      %v7598 = vpop.f32.mrf.mxu0
      %7599 = vmatprep.mubr.bf16.mxu0 0
      %7600 = vmatmul.mubr.bf16.gmra.mxu0 %v5548
      %v7601 = vpop.f32.mrf.mxu0
      %v7602 = vadd.f32 0.0, %v7601
      %v7603 = vpop.f32.mrf.mxu0
      %v7604 = vpop.f32.mrf.mxu0
      %v7605 = vadd.f32 0.0, %v7604
      %v7606 = vpop.f32.mrf.mxu0
      %7607 = vmatprep.mubr.bf16.mxu0 0
      %7608 = vmatmul.mubr.bf16.gmra.mxu0 %v5551
      %v7609 = vpop.f32.mrf.mxu0
      %v7610 = vadd.f32 0.0, %v7609
      %v7611 = vpop.f32.mrf.mxu0
      %v7612 = vpop.f32.mrf.mxu0
      %v7613 = vadd.f32 0.0, %v7612
      %v7614 = vpop.f32.mrf.mxu0
      %7615 = vdwg.mxu0
      %s7616 = scalar_lea.vmem %s7, 96
      %v7617 = vld [vmem:[%s7616] sm:$0xf]
      %v7618 = vld [vmem:[%s7616 + $0x4] sm:$0xf]
      %v7619 = vld [vmem:[%s7616 + $0x8] sm:$0xf]
      %v7620 = vld [vmem:[%s7616 + $0xc] sm:$0xf]
      %v7625 = vunpack.c.l.b16 %v7617
      %v7626 = vunpack.c.l.b16 %v7618
      %v7627 = vunpack.c.l.b16 %v7619
      %v7628 = vunpack.c.l.b16 %v7620
      %v7629 = vpack.c.b16 %v7626, %v7625
      %v7630 = vpack.c.b16 %v7628, %v7627
      %7633 = vmatprep.subr.bf16.mxu0 0
      %7634 = vmatpush1.bf16.msra.mxu0 0
      %7635 = vmatprep.subr.bf16.mxu0 0
      %7636 = vmatpush1.bf16.msra.mxu0 0
      %7637 = vmatprep.subr.bf16.mxu0 0
      %7638 = vmatpush1.bf16.msra.mxu0 0
      %7639 = vmatprep.subr.bf16.mxu0 0
      %7640 = vmatpush1.bf16.msra.mxu0 0
      %7641 = vmatprep.subr.bf16.mxu0 0
      %7642 = vmatpush1.bf16.msra.mxu0 0
      %7643 = vmatprep.subr.bf16.mxu0 0
      %7644 = vmatpush1.bf16.msra.mxu0 0
      %7645 = vmatprep.subr.bf16.mxu0 0
      %7646 = vmatpush1.bf16.msra.mxu0 %v7630
      %7647 = vmatprep.subr.bf16.mxu0 0
      %7648 = vmatpush1.bf16.msra.mxu0 %v7629
      %7649 = vmatprep.subr.bf16.mxu0 0
      %7650 = vmatpush2.bf16.msra.mxu0 0
      %7651 = vmatprep.subr.bf16.mxu0 0
      %7652 = vmatpush2.bf16.msra.mxu0 0
      %7653 = vmatprep.subr.bf16.mxu0 0
      %7654 = vmatpush2.bf16.msra.mxu0 0
      %7655 = vmatprep.subr.bf16.mxu0 0
      %7656 = vmatpush2.bf16.msra.mxu0 0
      %7657 = vmatprep.subr.bf16.mxu0 0
      %7658 = vmatpush2.bf16.msra.mxu0 0
      %7659 = vmatprep.subr.bf16.mxu0 0
      %7660 = vmatpush2.bf16.msra.mxu0 0
      %7661 = vmatprep.subr.bf16.mxu0 0
      %7662 = vmatpush2.bf16.msra.mxu0 0
      %7663 = vmatprep.subr.bf16.mxu0 0
      %7664 = vmatpush2.bf16.msra.mxu0 0
      %7665 = vmatprep.mubr.bf16.mxu0 0
      %7666 = vmatmul.mubr.bf16.gmra.mxu0 %v5530
      %v7667 = vpop.f32.mrf.mxu0
      %v7668 = vadd.f32 0.0, %v7667
      %v7669 = vpop.f32.mrf.mxu0
      %v7670 = vpop.f32.mrf.mxu0
      %v7671 = vadd.f32 0.0, %v7670
      %v7672 = vpop.f32.mrf.mxu0
      %7673 = vmatprep.mubr.bf16.mxu0 0
      %7674 = vmatmul.mubr.bf16.gmra.mxu0 %v5533
      %v7675 = vpop.f32.mrf.mxu0
      %v7676 = vadd.f32 0.0, %v7675
      %v7677 = vpop.f32.mrf.mxu0
      %v7678 = vpop.f32.mrf.mxu0
      %v7679 = vadd.f32 0.0, %v7678
      %v7680 = vpop.f32.mrf.mxu0
      %7681 = vmatprep.mubr.bf16.mxu0 0
      %7682 = vmatmul.mubr.bf16.gmra.mxu0 %v5536
      %v7683 = vpop.f32.mrf.mxu0
      %v7684 = vadd.f32 0.0, %v7683
      %v7685 = vpop.f32.mrf.mxu0
      %v7686 = vpop.f32.mrf.mxu0
      %v7687 = vadd.f32 0.0, %v7686
      %v7688 = vpop.f32.mrf.mxu0
      %7689 = vmatprep.mubr.bf16.mxu0 0
      %7690 = vmatmul.mubr.bf16.gmra.mxu0 %v5539
      %v7691 = vpop.f32.mrf.mxu0
      %v7692 = vadd.f32 0.0, %v7691
      %v7693 = vpop.f32.mrf.mxu0
      %v7694 = vpop.f32.mrf.mxu0
      %v7695 = vadd.f32 0.0, %v7694
      %v7696 = vpop.f32.mrf.mxu0
      %7697 = vmatprep.mubr.bf16.mxu0 0
      %7698 = vmatmul.mubr.bf16.gmra.mxu0 %v5542
      %v7699 = vpop.f32.mrf.mxu0
      %v7700 = vadd.f32 0.0, %v7699
      %v7701 = vpop.f32.mrf.mxu0
      %v7702 = vpop.f32.mrf.mxu0
      %v7703 = vadd.f32 0.0, %v7702
      %v7704 = vpop.f32.mrf.mxu0
      %7705 = vmatprep.mubr.bf16.mxu0 0
      %7706 = vmatmul.mubr.bf16.gmra.mxu0 %v5545
      %v7707 = vpop.f32.mrf.mxu0
      %v7708 = vadd.f32 0.0, %v7707
      %v7709 = vpop.f32.mrf.mxu0
      %v7710 = vpop.f32.mrf.mxu0
      %v7711 = vadd.f32 0.0, %v7710
      %v7712 = vpop.f32.mrf.mxu0
      %7713 = vmatprep.mubr.bf16.mxu0 0
      %7714 = vmatmul.mubr.bf16.gmra.mxu0 %v5548
      %v7715 = vpop.f32.mrf.mxu0
      %v7716 = vadd.f32 0.0, %v7715
      %v7717 = vpop.f32.mrf.mxu0
      %v7718 = vpop.f32.mrf.mxu0
      %v7719 = vadd.f32 0.0, %v7718
      %v7720 = vpop.f32.mrf.mxu0
      %7721 = vmatprep.mubr.bf16.mxu0 0
      %7722 = vmatmul.mubr.bf16.gmra.mxu0 %v5551
      %v7723 = vpop.f32.mrf.mxu0
      %v7724 = vadd.f32 0.0, %v7723
      %v7725 = vpop.f32.mrf.mxu0
      %v7726 = vpop.f32.mrf.mxu0
      %v7727 = vadd.f32 0.0, %v7726
      %v7728 = vpop.f32.mrf.mxu0
      %7729 = vdwg.mxu0
      %v7730 = vpack.c.bf16 %v7443, %v7440
      %v7731 = vpack.c.bf16 %v7451, %v7448
      %v7732 = vpack.c.bf16 %v7459, %v7456
      %v7733 = vpack.c.bf16 %v7467, %v7464
      %v7734 = vpack.c.bf16 %v7475, %v7472
      %v7735 = vpack.c.bf16 %v7483, %v7480
      %v7736 = vpack.c.bf16 %v7491, %v7488
      %v7737 = vpack.c.bf16 %v7499, %v7496
      %v7738 = vpack.c.bf16 %v7557, %v7554
      %v7739 = vpack.c.bf16 %v7565, %v7562
      %v7740 = vpack.c.bf16 %v7573, %v7570
      %v7741 = vpack.c.bf16 %v7581, %v7578
      %v7742 = vpack.c.bf16 %v7589, %v7586
      %v7743 = vpack.c.bf16 %v7597, %v7594
      %v7744 = vpack.c.bf16 %v7605, %v7602
      %v7745 = vpack.c.bf16 %v7613, %v7610
      %v7747 = vsel %vm712, %v7730, 0
      %v7750 = vsel %vm712, %v7731, 0
      %v7753 = vsel %vm712, %v7732, 0
      %v7756 = vsel %vm712, %v7733, 0
      %v7759 = vsel %vm712, %v7734, 0
      %v7762 = vsel %vm712, %v7735, 0
      %v7765 = vsel %vm712, %v7736, 0
      %v7768 = vsel %vm712, %v7737, 0
      %v7771 = vsel %vm712, %v7738, 0
      %v7774 = vsel %vm712, %v7739, 0
      %v7777 = vsel %vm712, %v7740, 0
      %v7780 = vsel %vm712, %v7741, 0
      %v7783 = vsel %vm712, %v7742, 0
      %v7786 = vsel %vm712, %v7743, 0
      %v7789 = vsel %vm712, %v7744, 0
      %v7792 = vsel %vm712, %v7745, 0
      %7794 = vmatprep.subr.bf16.mxu0 0
      %7795 = vmatpush1.bf16.xpose.msra.mxu0 %v7792
      %7796 = vmatprep.subr.bf16.mxu0 0
      %7797 = vmatpush1.bf16.xpose.msra.mxu0 %v7789
      %7798 = vmatprep.subr.bf16.mxu0 0
      %7799 = vmatpush1.bf16.xpose.msra.mxu0 %v7786
      %7800 = vmatprep.subr.bf16.mxu0 0
      %7801 = vmatpush1.bf16.xpose.msra.mxu0 %v7783
      %7802 = vmatprep.subr.bf16.mxu0 0
      %7803 = vmatpush1.bf16.xpose.msra.mxu0 %v7780
      %7804 = vmatprep.subr.bf16.mxu0 0
      %7805 = vmatpush1.bf16.xpose.msra.mxu0 %v7777
      %7806 = vmatprep.subr.bf16.mxu0 0
      %7807 = vmatpush1.bf16.xpose.msra.mxu0 %v7774
      %7808 = vmatprep.subr.bf16.mxu0 0
      %7809 = vmatpush1.bf16.xpose.msra.mxu0 %v7771
      %7810 = vmatprep.subr.bf16.mxu0 0
      %7811 = vmatpush2.bf16.xpose.msra.mxu0 0
      %7812 = vmatprep.subr.bf16.mxu0 0
      %7813 = vmatpush2.bf16.xpose.msra.mxu0 0
      %7814 = vmatprep.subr.bf16.mxu0 0
      %7815 = vmatpush2.bf16.xpose.msra.mxu0 0
      %7816 = vmatprep.subr.bf16.mxu0 0
      %7817 = vmatpush2.bf16.xpose.msra.mxu0 0
      %7818 = vmatprep.subr.bf16.mxu0 0
      %7819 = vmatpush2.bf16.xpose.msra.mxu0 0
      %7820 = vmatprep.subr.bf16.mxu0 0
      %7821 = vmatpush2.bf16.xpose.msra.mxu0 0
      %7822 = vmatprep.subr.bf16.mxu0 0
      %7823 = vmatpush2.bf16.xpose.msra.mxu0 0
      %7824 = vmatprep.subr.bf16.mxu0 0
      %7825 = vmatpush2.bf16.xpose.msra.mxu0 0
      %7826 = vmatprep.mubr.bf16.mxu0 0
      %7827 = vmatmul.mubr.bf16.gmra.mxu0 %v7747
      %v7828 = vpop.f32.mrf.mxu0
      %v7829 = vadd.f32 0.0, %v7828
      %v7830 = vpop.f32.mrf.mxu0
      %v7831 = vpop.f32.mrf.mxu0
      %v7832 = vadd.f32 0.0, %v7831
      %v7833 = vpop.f32.mrf.mxu0
      %7834 = vmatprep.mubr.bf16.mxu0 0
      %7835 = vmatmul.mubr.bf16.gmra.mxu0 %v7750
      %v7836 = vpop.f32.mrf.mxu0
      %v7837 = vadd.f32 0.0, %v7836
      %v7838 = vpop.f32.mrf.mxu0
      %v7839 = vpop.f32.mrf.mxu0
      %v7840 = vadd.f32 0.0, %v7839
      %v7841 = vpop.f32.mrf.mxu0
      %7842 = vmatprep.mubr.bf16.mxu0 0
      %7843 = vmatmul.mubr.bf16.gmra.mxu0 %v7753
      %v7844 = vpop.f32.mrf.mxu0
      %v7845 = vadd.f32 0.0, %v7844
      %v7846 = vpop.f32.mrf.mxu0
      %v7847 = vpop.f32.mrf.mxu0
      %v7848 = vadd.f32 0.0, %v7847
      %v7849 = vpop.f32.mrf.mxu0
      %7850 = vmatprep.mubr.bf16.mxu0 0
      %7851 = vmatmul.mubr.bf16.gmra.mxu0 %v7756
      %v7852 = vpop.f32.mrf.mxu0
      %v7853 = vadd.f32 0.0, %v7852
      %v7854 = vpop.f32.mrf.mxu0
      %v7855 = vpop.f32.mrf.mxu0
      %v7856 = vadd.f32 0.0, %v7855
      %v7857 = vpop.f32.mrf.mxu0
      %7858 = vmatprep.mubr.bf16.mxu0 0
      %7859 = vmatmul.mubr.bf16.gmra.mxu0 %v7759
      %v7860 = vpop.f32.mrf.mxu0
      %v7861 = vadd.f32 0.0, %v7860
      %v7862 = vpop.f32.mrf.mxu0
      %v7863 = vpop.f32.mrf.mxu0
      %v7864 = vadd.f32 0.0, %v7863
      %v7865 = vpop.f32.mrf.mxu0
      %7866 = vmatprep.mubr.bf16.mxu0 0
      %7867 = vmatmul.mubr.bf16.gmra.mxu0 %v7762
      %v7868 = vpop.f32.mrf.mxu0
      %v7869 = vadd.f32 0.0, %v7868
      %v7870 = vpop.f32.mrf.mxu0
      %v7871 = vpop.f32.mrf.mxu0
      %v7872 = vadd.f32 0.0, %v7871
      %v7873 = vpop.f32.mrf.mxu0
      %7874 = vmatprep.mubr.bf16.mxu0 0
      %7875 = vmatmul.mubr.bf16.gmra.mxu0 %v7765
      %v7876 = vpop.f32.mrf.mxu0
      %v7877 = vadd.f32 0.0, %v7876
      %v7878 = vpop.f32.mrf.mxu0
      %v7879 = vpop.f32.mrf.mxu0
      %v7880 = vadd.f32 0.0, %v7879
      %v7881 = vpop.f32.mrf.mxu0
      %7882 = vmatprep.mubr.bf16.mxu0 0
      %7883 = vmatmul.mubr.bf16.gmra.mxu0 %v7768
      %v7884 = vpop.f32.mrf.mxu0
      %v7885 = vadd.f32 0.0, %v7884
      %v7886 = vpop.f32.mrf.mxu0
      %v7887 = vpop.f32.mrf.mxu0
      %v7888 = vadd.f32 0.0, %v7887
      %v7889 = vpop.f32.mrf.mxu0
      %7890 = vdwg.mxu0
      %v7891 = vmul.f32 %v7829, 0.35355338
      %v7892 = vmul.f32 %v7832, 0.35355338
      %v7893 = vmul.f32 %v7837, 0.35355338
      %v7894 = vmul.f32 %v7840, 0.35355338
      %v7895 = vmul.f32 %v7845, 0.35355338
      %v7896 = vmul.f32 %v7848, 0.35355338
      %v7897 = vmul.f32 %v7853, 0.35355338
      %v7898 = vmul.f32 %v7856, 0.35355338
      %v7899 = vmul.f32 %v7861, 0.35355338
      %v7900 = vmul.f32 %v7864, 0.35355338
      %v7901 = vmul.f32 %v7869, 0.35355338
      %v7902 = vmul.f32 %v7872, 0.35355338
      %v7903 = vmul.f32 %v7877, 0.35355338
      %v7904 = vmul.f32 %v7880, 0.35355338
      %v7905 = vmul.f32 %v7885, 0.35355338
      %v7906 = vmul.f32 %v7888, 0.35355338
      %v7907 = vadd.f32 %v7891, %v838
      %v7908 = vadd.f32 %v7892, %v839
      %v7909 = vadd.f32 %v7893, %v840
      %v7910 = vadd.f32 %v7894, %v841
      %v7911 = vadd.f32 %v7895, %v842
      %v7912 = vadd.f32 %v7896, %v843
      %v7913 = vadd.f32 %v7897, %v844
      %v7914 = vadd.f32 %v7898, %v845
      %v7915 = vadd.f32 %v7899, %v846
      %v7916 = vadd.f32 %v7900, %v847
      %v7917 = vadd.f32 %v7901, %v848
      %v7918 = vadd.f32 %v7902, %v849
      %v7919 = vadd.f32 %v7903, %v850
      %v7920 = vadd.f32 %v7904, %v851
      %v7921 = vadd.f32 %v7905, %v852
      %v7922 = vadd.f32 %v7906, %v853
      %7923 = vmax.xlane.f32.xlu0 %v7907
      %v7924 = vpop.xlane.xlu0 %7923
      %7925 = vmax.xlane.f32.xlu0 %v7908
      %v7926 = vpop.xlane.xlu0 %7925
      %7927 = vmax.xlane.f32.xlu0 %v7909
      %v7928 = vpop.xlane.xlu0 %7927
      %7929 = vmax.xlane.f32.xlu0 %v7910
      %v7930 = vpop.xlane.xlu0 %7929
      %7931 = vmax.xlane.f32.xlu0 %v7911
      %v7932 = vpop.xlane.xlu0 %7931
      %7933 = vmax.xlane.f32.xlu0 %v7912
      %v7934 = vpop.xlane.xlu0 %7933
      %7935 = vmax.xlane.f32.xlu0 %v7913
      %v7936 = vpop.xlane.xlu0 %7935
      %7937 = vmax.xlane.f32.xlu0 %v7914
      %v7938 = vpop.xlane.xlu0 %7937
      %7939 = vmax.xlane.f32.xlu0 %v7915
      %v7940 = vpop.xlane.xlu0 %7939
      %7941 = vmax.xlane.f32.xlu0 %v7916
      %v7942 = vpop.xlane.xlu0 %7941
      %7943 = vmax.xlane.f32.xlu0 %v7917
      %v7944 = vpop.xlane.xlu0 %7943
      %7945 = vmax.xlane.f32.xlu0 %v7918
      %v7946 = vpop.xlane.xlu0 %7945
      %7947 = vmax.xlane.f32.xlu0 %v7919
      %v7948 = vpop.xlane.xlu0 %7947
      %7949 = vmax.xlane.f32.xlu0 %v7920
      %v7950 = vpop.xlane.xlu0 %7949
      %7951 = vmax.xlane.f32.xlu0 %v7921
      %v7952 = vpop.xlane.xlu0 %7951
      %7953 = vmax.xlane.f32.xlu0 %v7922
      %v7954 = vpop.xlane.xlu0 %7953
      %v7955 = vsub.f32 %v7907, %v7924
      %v7956 = vsub.f32 %v7908, %v7926
      %v7957 = vsub.f32 %v7909, %v7928
      %v7958 = vsub.f32 %v7910, %v7930
      %v7959 = vsub.f32 %v7911, %v7932
      %v7960 = vsub.f32 %v7912, %v7934
      %v7961 = vsub.f32 %v7913, %v7936
      %v7962 = vsub.f32 %v7914, %v7938
      %v7963 = vsub.f32 %v7915, %v7940
      %v7964 = vsub.f32 %v7916, %v7942
      %v7965 = vsub.f32 %v7917, %v7944
      %v7966 = vsub.f32 %v7918, %v7946
      %v7967 = vsub.f32 %v7919, %v7948
      %v7968 = vsub.f32 %v7920, %v7950
      %v7969 = vsub.f32 %v7921, %v7952
      %v7970 = vsub.f32 %v7922, %v7954
      %v7971 = vmul.f32 %v7955, 1.442695
      %v7972 = vpow.pop %v7971
      %v7973 = vmul.f32 %v7956, 1.442695
      %v7974 = vpow.pop %v7973
      %v7975 = vmul.f32 %v7957, 1.442695
      %v7976 = vpow.pop %v7975
      %v7977 = vmul.f32 %v7958, 1.442695
      %v7978 = vpow.pop %v7977
      %v7979 = vmul.f32 %v7959, 1.442695
      %v7980 = vpow.pop %v7979
      %v7981 = vmul.f32 %v7960, 1.442695
      %v7982 = vpow.pop %v7981
      %v7983 = vmul.f32 %v7961, 1.442695
      %v7984 = vpow.pop %v7983
      %v7985 = vmul.f32 %v7962, 1.442695
      %v7986 = vpow.pop %v7985
      %v7987 = vmul.f32 %v7963, 1.442695
      %v7988 = vpow.pop %v7987
      %v7989 = vmul.f32 %v7964, 1.442695
      %v7990 = vpow.pop %v7989
      %v7991 = vmul.f32 %v7965, 1.442695
      %v7992 = vpow.pop %v7991
      %v7993 = vmul.f32 %v7966, 1.442695
      %v7994 = vpow.pop %v7993
      %v7995 = vmul.f32 %v7967, 1.442695
      %v7996 = vpow.pop %v7995
      %v7997 = vmul.f32 %v7968, 1.442695
      %v7998 = vpow.pop %v7997
      %v7999 = vmul.f32 %v7969, 1.442695
      %v8000 = vpow.pop %v7999
      %v8001 = vmul.f32 %v7970, 1.442695
      %v8002 = vpow.pop %v8001
      %8003 = vadd.xlane.f32.xlu0 %v7972
      %v8004 = vpop.xlane.xlu0 %8003
      %8005 = vadd.xlane.f32.xlu0 %v7974
      %v8006 = vpop.xlane.xlu0 %8005
      %8007 = vadd.xlane.f32.xlu0 %v7976
      %v8008 = vpop.xlane.xlu0 %8007
      %8009 = vadd.xlane.f32.xlu0 %v7978
      %v8010 = vpop.xlane.xlu0 %8009
      %8011 = vadd.xlane.f32.xlu0 %v7980
      %v8012 = vpop.xlane.xlu0 %8011
      %8013 = vadd.xlane.f32.xlu0 %v7982
      %v8014 = vpop.xlane.xlu0 %8013
      %8015 = vadd.xlane.f32.xlu0 %v7984
      %v8016 = vpop.xlane.xlu0 %8015
      %8017 = vadd.xlane.f32.xlu0 %v7986
      %v8018 = vpop.xlane.xlu0 %8017
      %8019 = vadd.xlane.f32.xlu0 %v7988
      %v8020 = vpop.xlane.xlu0 %8019
      %8021 = vadd.xlane.f32.xlu0 %v7990
      %v8022 = vpop.xlane.xlu0 %8021
      %8023 = vadd.xlane.f32.xlu0 %v7992
      %v8024 = vpop.xlane.xlu0 %8023
      %8025 = vadd.xlane.f32.xlu0 %v7994
      %v8026 = vpop.xlane.xlu0 %8025
      %8027 = vadd.xlane.f32.xlu0 %v7996
      %v8028 = vpop.xlane.xlu0 %8027
      %8029 = vadd.xlane.f32.xlu0 %v7998
      %v8030 = vpop.xlane.xlu0 %8029
      %8031 = vadd.xlane.f32.xlu0 %v8000
      %v8032 = vpop.xlane.xlu0 %8031
      %8033 = vadd.xlane.f32.xlu0 %v8002
      %v8034 = vpop.xlane.xlu0 %8033
      %v8035 = vrcp.pop %v8004
      %v8036 = vmul.f32 %v7972, %v8035
      %v8037 = vrcp.pop %v8006
      %v8038 = vmul.f32 %v7974, %v8037
      %v8039 = vrcp.pop %v8008
      %v8040 = vmul.f32 %v7976, %v8039
      %v8041 = vrcp.pop %v8010
      %v8042 = vmul.f32 %v7978, %v8041
      %v8043 = vrcp.pop %v8012
      %v8044 = vmul.f32 %v7980, %v8043
      %v8045 = vrcp.pop %v8014
      %v8046 = vmul.f32 %v7982, %v8045
      %v8047 = vrcp.pop %v8016
      %v8048 = vmul.f32 %v7984, %v8047
      %v8049 = vrcp.pop %v8018
      %v8050 = vmul.f32 %v7986, %v8049
      %v8051 = vrcp.pop %v8020
      %v8052 = vmul.f32 %v7988, %v8051
      %v8053 = vrcp.pop %v8022
      %v8054 = vmul.f32 %v7990, %v8053
      %v8055 = vrcp.pop %v8024
      %v8056 = vmul.f32 %v7992, %v8055
      %v8057 = vrcp.pop %v8026
      %v8058 = vmul.f32 %v7994, %v8057
      %v8059 = vrcp.pop %v8028
      %v8060 = vmul.f32 %v7996, %v8059
      %v8061 = vrcp.pop %v8030
      %v8062 = vmul.f32 %v7998, %v8061
      %v8063 = vrcp.pop %v8032
      %v8064 = vmul.f32 %v8000, %v8063
      %v8065 = vrcp.pop %v8034
      %v8066 = vmul.f32 %v8002, %v8065
      %v8067 = vpack.c.bf16 %v8038, %v8036
      %v8068 = vpack.c.bf16 %v8042, %v8040
      %v8069 = vpack.c.bf16 %v8046, %v8044
      %v8070 = vpack.c.bf16 %v8050, %v8048
      %v8071 = vpack.c.bf16 %v8054, %v8052
      %v8072 = vpack.c.bf16 %v8058, %v8056
      %v8073 = vpack.c.bf16 %v8062, %v8060
      %v8074 = vpack.c.bf16 %v8066, %v8064
      %v8075 = vpack.c.bf16 %v7671, %v7668
      %v8076 = vpack.c.bf16 %v7679, %v7676
      %v8077 = vpack.c.bf16 %v7687, %v7684
      %v8078 = vpack.c.bf16 %v7695, %v7692
      %v8079 = vpack.c.bf16 %v7703, %v7700
      %v8080 = vpack.c.bf16 %v7711, %v7708
      %v8081 = vpack.c.bf16 %v7719, %v7716
      %v8082 = vpack.c.bf16 %v7727, %v7724
      %8083 = vmatprep.subr.bf16.mxu0 0
      %8084 = vmatpush1.bf16.msra.mxu0 %v8082
      %8085 = vmatprep.subr.bf16.mxu0 0
      %8086 = vmatpush1.bf16.msra.mxu0 %v8081
      %8087 = vmatprep.subr.bf16.mxu0 0
      %8088 = vmatpush1.bf16.msra.mxu0 %v8080
      %8089 = vmatprep.subr.bf16.mxu0 0
      %8090 = vmatpush1.bf16.msra.mxu0 %v8079
      %8091 = vmatprep.subr.bf16.mxu0 0
      %8092 = vmatpush1.bf16.msra.mxu0 %v8078
      %8093 = vmatprep.subr.bf16.mxu0 0
      %8094 = vmatpush1.bf16.msra.mxu0 %v8077
      %8095 = vmatprep.subr.bf16.mxu0 0
      %8096 = vmatpush1.bf16.msra.mxu0 %v8076
      %8097 = vmatprep.subr.bf16.mxu0 0
      %8098 = vmatpush1.bf16.msra.mxu0 %v8075
      %8099 = vmatprep.subr.bf16.mxu0 0
      %8100 = vmatpush2.bf16.msra.mxu0 0
      %8101 = vmatprep.subr.bf16.mxu0 0
      %8102 = vmatpush2.bf16.msra.mxu0 0
      %8103 = vmatprep.subr.bf16.mxu0 0
      %8104 = vmatpush2.bf16.msra.mxu0 0
      %8105 = vmatprep.subr.bf16.mxu0 0
      %8106 = vmatpush2.bf16.msra.mxu0 0
      %8107 = vmatprep.subr.bf16.mxu0 0
      %8108 = vmatpush2.bf16.msra.mxu0 0
      %8109 = vmatprep.subr.bf16.mxu0 0
      %8110 = vmatpush2.bf16.msra.mxu0 0
      %8111 = vmatprep.subr.bf16.mxu0 0
      %8112 = vmatpush2.bf16.msra.mxu0 0
      %8113 = vmatprep.subr.bf16.mxu0 0
      %8114 = vmatpush2.bf16.msra.mxu0 0
      %8115 = vmatprep.mubr.bf16.mxu0 0
      %8116 = vmatmul.mubr.bf16.gmra.mxu0 %v8067
      %v8117 = vpop.f32.mrf.mxu0
      %v8118 = vadd.f32 0.0, %v8117
      %v8119 = vpop.f32.mrf.mxu0
      %v8120 = vpop.f32.mrf.mxu0
      %v8121 = vadd.f32 0.0, %v8120
      %v8122 = vpop.f32.mrf.mxu0
      %8123 = vmatprep.mubr.bf16.mxu0 0
      %8124 = vmatmul.mubr.bf16.gmra.mxu0 %v8068
      %v8125 = vpop.f32.mrf.mxu0
      %v8126 = vadd.f32 0.0, %v8125
      %v8127 = vpop.f32.mrf.mxu0
      %v8128 = vpop.f32.mrf.mxu0
      %v8129 = vadd.f32 0.0, %v8128
      %v8130 = vpop.f32.mrf.mxu0
      %8131 = vmatprep.mubr.bf16.mxu0 0
      %8132 = vmatmul.mubr.bf16.gmra.mxu0 %v8069
      %v8133 = vpop.f32.mrf.mxu0
      %v8134 = vadd.f32 0.0, %v8133
      %v8135 = vpop.f32.mrf.mxu0
      %v8136 = vpop.f32.mrf.mxu0
      %v8137 = vadd.f32 0.0, %v8136
      %v8138 = vpop.f32.mrf.mxu0
      %8139 = vmatprep.mubr.bf16.mxu0 0
      %8140 = vmatmul.mubr.bf16.gmra.mxu0 %v8070
      %v8141 = vpop.f32.mrf.mxu0
      %v8142 = vadd.f32 0.0, %v8141
      %v8143 = vpop.f32.mrf.mxu0
      %v8144 = vpop.f32.mrf.mxu0
      %v8145 = vadd.f32 0.0, %v8144
      %v8146 = vpop.f32.mrf.mxu0
      %8147 = vmatprep.mubr.bf16.mxu0 0
      %8148 = vmatmul.mubr.bf16.gmra.mxu0 %v8071
      %v8149 = vpop.f32.mrf.mxu0
      %v8150 = vadd.f32 0.0, %v8149
      %v8151 = vpop.f32.mrf.mxu0
      %v8152 = vpop.f32.mrf.mxu0
      %v8153 = vadd.f32 0.0, %v8152
      %v8154 = vpop.f32.mrf.mxu0
      %8155 = vmatprep.mubr.bf16.mxu0 0
      %8156 = vmatmul.mubr.bf16.gmra.mxu0 %v8072
      %v8157 = vpop.f32.mrf.mxu0
      %v8158 = vadd.f32 0.0, %v8157
      %v8159 = vpop.f32.mrf.mxu0
      %v8160 = vpop.f32.mrf.mxu0
      %v8161 = vadd.f32 0.0, %v8160
      %v8162 = vpop.f32.mrf.mxu0
      %8163 = vmatprep.mubr.bf16.mxu0 0
      %8164 = vmatmul.mubr.bf16.gmra.mxu0 %v8073
      %v8165 = vpop.f32.mrf.mxu0
      %v8166 = vadd.f32 0.0, %v8165
      %v8167 = vpop.f32.mrf.mxu0
      %v8168 = vpop.f32.mrf.mxu0
      %v8169 = vadd.f32 0.0, %v8168
      %v8170 = vpop.f32.mrf.mxu0
      %8171 = vmatprep.mubr.bf16.mxu0 0
      %8172 = vmatmul.mubr.bf16.gmra.mxu0 %v8074
      %v8173 = vpop.f32.mrf.mxu0
      %v8174 = vadd.f32 0.0, %v8173
      %v8175 = vpop.f32.mrf.mxu0
      %v8176 = vpop.f32.mrf.mxu0
      %v8177 = vadd.f32 0.0, %v8176
      %v8178 = vpop.f32.mrf.mxu0
      %8179 = vdwg.mxu0
      %s8180 = scalar_lea.vmem %s8, 24
      %v8181 = vld [vmem:[%s8180] sm:$0xf]
      %v8182 = vpack.c.bf16 %v8121, %v8118
      %v8183 = vpack.c.bf16 %v8129, %v8126
      %v8184 = vpack.c.bf16 %v8137, %v8134
      %v8185 = vpack.c.bf16 %v8145, %v8142
      %v8186 = vpack.c.bf16 %v8153, %v8150
      %v8187 = vpack.c.bf16 %v8161, %v8158
      %v8188 = vpack.c.bf16 %v8169, %v8166
      %v8189 = vpack.c.bf16 %v8177, %v8174
      %v8191 = vsel %vm712, %v8182, 0
      %v8194 = vsel %vm712, %v8183, 0
      %v8197 = vsel %vm712, %v8184, 0
      %v8200 = vsel %vm712, %v8185, 0
      %v8203 = vsel %vm712, %v8186, 0
      %v8206 = vsel %vm712, %v8187, 0
      %v8209 = vsel %vm712, %v8188, 0
      %v8212 = vsel %vm712, %v8189, 0
      %v8215 = vsel %vm737, %v8181, 0
      %8217 = vmatprep.subr.bf16.mxu0 0
      %8218 = vmatpush1.bf16.msra.mxu0 0
      %8219 = vmatprep.subr.bf16.mxu0 0
      %8220 = vmatpush1.bf16.msra.mxu0 0
      %8221 = vmatprep.subr.bf16.mxu0 0
      %8222 = vmatpush1.bf16.msra.mxu0 0
      %8223 = vmatprep.subr.bf16.mxu0 0
      %8224 = vmatpush1.bf16.msra.mxu0 0
      %8225 = vmatprep.subr.bf16.mxu0 0
      %8226 = vmatpush1.bf16.msra.mxu0 0
      %8227 = vmatprep.subr.bf16.mxu0 0
      %8228 = vmatpush1.bf16.msra.mxu0 0
      %8229 = vmatprep.subr.bf16.mxu0 0
      %8230 = vmatpush1.bf16.msra.mxu0 0
      %8231 = vmatprep.subr.bf16.mxu0 0
      %8232 = vmatpush1.bf16.msra.mxu0 %v8215
      %8233 = vmatprep.subr.bf16.mxu0 0
      %8234 = vmatpush2.bf16.msra.mxu0 0
      %8235 = vmatprep.subr.bf16.mxu0 0
      %8236 = vmatpush2.bf16.msra.mxu0 0
      %8237 = vmatprep.subr.bf16.mxu0 0
      %8238 = vmatpush2.bf16.msra.mxu0 0
      %8239 = vmatprep.subr.bf16.mxu0 0
      %8240 = vmatpush2.bf16.msra.mxu0 0
      %8241 = vmatprep.subr.bf16.mxu0 0
      %8242 = vmatpush2.bf16.msra.mxu0 0
      %8243 = vmatprep.subr.bf16.mxu0 0
      %8244 = vmatpush2.bf16.msra.mxu0 0
      %8245 = vmatprep.subr.bf16.mxu0 0
      %8246 = vmatpush2.bf16.msra.mxu0 0
      %8247 = vmatprep.subr.bf16.mxu0 0
      %8248 = vmatpush2.bf16.msra.mxu0 0
      %8249 = vmatprep.mubr.bf16.mxu0 0
      %8250 = vmatmul.mubr.bf16.gmra.mxu0 %v8191
      %v8251 = vpop.f32.mrf.mxu0
      %v8252 = vadd.f32 0.0, %v8251
      %v8253 = vpop.f32.mrf.mxu0
      %v8254 = vpop.f32.mrf.mxu0
      %v8255 = vadd.f32 0.0, %v8254
      %v8256 = vpop.f32.mrf.mxu0
      %8257 = vmatprep.mubr.bf16.mxu0 0
      %8258 = vmatmul.mubr.bf16.gmra.mxu0 %v8194
      %v8259 = vpop.f32.mrf.mxu0
      %v8260 = vadd.f32 0.0, %v8259
      %v8261 = vpop.f32.mrf.mxu0
      %v8262 = vpop.f32.mrf.mxu0
      %v8263 = vadd.f32 0.0, %v8262
      %v8264 = vpop.f32.mrf.mxu0
      %8265 = vmatprep.mubr.bf16.mxu0 0
      %8266 = vmatmul.mubr.bf16.gmra.mxu0 %v8197
      %v8267 = vpop.f32.mrf.mxu0
      %v8268 = vadd.f32 0.0, %v8267
      %v8269 = vpop.f32.mrf.mxu0
      %v8270 = vpop.f32.mrf.mxu0
      %v8271 = vadd.f32 0.0, %v8270
      %v8272 = vpop.f32.mrf.mxu0
      %8273 = vmatprep.mubr.bf16.mxu0 0
      %8274 = vmatmul.mubr.bf16.gmra.mxu0 %v8200
      %v8275 = vpop.f32.mrf.mxu0
      %v8276 = vadd.f32 0.0, %v8275
      %v8277 = vpop.f32.mrf.mxu0
      %v8278 = vpop.f32.mrf.mxu0
      %v8279 = vadd.f32 0.0, %v8278
      %v8280 = vpop.f32.mrf.mxu0
      %8281 = vmatprep.mubr.bf16.mxu0 0
      %8282 = vmatmul.mubr.bf16.gmra.mxu0 %v8203
      %v8283 = vpop.f32.mrf.mxu0
      %v8284 = vadd.f32 0.0, %v8283
      %v8285 = vpop.f32.mrf.mxu0
      %v8286 = vpop.f32.mrf.mxu0
      %v8287 = vadd.f32 0.0, %v8286
      %v8288 = vpop.f32.mrf.mxu0
      %8289 = vmatprep.mubr.bf16.mxu0 0
      %8290 = vmatmul.mubr.bf16.gmra.mxu0 %v8206
      %v8291 = vpop.f32.mrf.mxu0
      %v8292 = vadd.f32 0.0, %v8291
      %v8293 = vpop.f32.mrf.mxu0
      %v8294 = vpop.f32.mrf.mxu0
      %v8295 = vadd.f32 0.0, %v8294
      %v8296 = vpop.f32.mrf.mxu0
      %8297 = vmatprep.mubr.bf16.mxu0 0
      %8298 = vmatmul.mubr.bf16.gmra.mxu0 %v8209
      %v8299 = vpop.f32.mrf.mxu0
      %v8300 = vadd.f32 0.0, %v8299
      %v8301 = vpop.f32.mrf.mxu0
      %v8302 = vpop.f32.mrf.mxu0
      %v8303 = vadd.f32 0.0, %v8302
      %v8304 = vpop.f32.mrf.mxu0
      %8305 = vmatprep.mubr.bf16.mxu0 0
      %8306 = vmatmul.mubr.bf16.gmra.mxu0 %v8212
      %v8307 = vpop.f32.mrf.mxu0
      %v8308 = vadd.f32 0.0, %v8307
      %v8309 = vpop.f32.mrf.mxu0
      %v8310 = vpop.f32.mrf.mxu0
      %v8311 = vadd.f32 0.0, %v8310
      %v8312 = vpop.f32.mrf.mxu0
      %8313 = vdwg.mxu0
      %v8314 = vadd.f32 %v7326, %v8252
      %v8315 = vadd.f32 %v7329, %v8255
      %v8316 = vadd.f32 %v7334, %v8260
      %v8317 = vadd.f32 %v7337, %v8263
      %v8318 = vadd.f32 %v7342, %v8268
      %v8319 = vadd.f32 %v7345, %v8271
      %v8320 = vadd.f32 %v7350, %v8276
      %v8321 = vadd.f32 %v7353, %v8279
      %v8322 = vadd.f32 %v7358, %v8284
      %v8323 = vadd.f32 %v7361, %v8287
      %v8324 = vadd.f32 %v7366, %v8292
      %v8325 = vadd.f32 %v7369, %v8295
      %v8326 = vadd.f32 %v7374, %v8300
      %v8327 = vadd.f32 %v7377, %v8303
      %v8328 = vadd.f32 %v7382, %v8308
      %v8329 = vadd.f32 %v7385, %v8311
      %s8330 = scalar_lea.vmem %s5, 112
      %v8331 = vld [vmem:[%s8330] sm:$0xf]
      %v8332 = vld [vmem:[%s8330 + $0x4] sm:$0xf]
      %v8333 = vld [vmem:[%s8330 + $0x8] sm:$0xf]
      %v8334 = vld [vmem:[%s8330 + $0xc] sm:$0xf]
      %v8339 = vunpack.c.l.b16 %v8331
      %v8340 = vunpack.c.l.b16 %v8332
      %v8341 = vunpack.c.l.b16 %v8333
      %v8342 = vunpack.c.l.b16 %v8334
      %v8343 = vpack.c.b16 %v8340, %v8339
      %v8344 = vpack.c.b16 %v8342, %v8341
      %8347 = vmatprep.subr.bf16.mxu0 0
      %8348 = vmatpush1.bf16.msra.mxu0 0
      %8349 = vmatprep.subr.bf16.mxu0 0
      %8350 = vmatpush1.bf16.msra.mxu0 0
      %8351 = vmatprep.subr.bf16.mxu0 0
      %8352 = vmatpush1.bf16.msra.mxu0 0
      %8353 = vmatprep.subr.bf16.mxu0 0
      %8354 = vmatpush1.bf16.msra.mxu0 0
      %8355 = vmatprep.subr.bf16.mxu0 0
      %8356 = vmatpush1.bf16.msra.mxu0 0
      %8357 = vmatprep.subr.bf16.mxu0 0
      %8358 = vmatpush1.bf16.msra.mxu0 0
      %8359 = vmatprep.subr.bf16.mxu0 0
      %8360 = vmatpush1.bf16.msra.mxu0 %v8344
      %8361 = vmatprep.subr.bf16.mxu0 0
      %8362 = vmatpush1.bf16.msra.mxu0 %v8343
      %8363 = vmatprep.subr.bf16.mxu0 0
      %8364 = vmatpush2.bf16.msra.mxu0 0
      %8365 = vmatprep.subr.bf16.mxu0 0
      %8366 = vmatpush2.bf16.msra.mxu0 0
      %8367 = vmatprep.subr.bf16.mxu0 0
      %8368 = vmatpush2.bf16.msra.mxu0 0
      %8369 = vmatprep.subr.bf16.mxu0 0
      %8370 = vmatpush2.bf16.msra.mxu0 0
      %8371 = vmatprep.subr.bf16.mxu0 0
      %8372 = vmatpush2.bf16.msra.mxu0 0
      %8373 = vmatprep.subr.bf16.mxu0 0
      %8374 = vmatpush2.bf16.msra.mxu0 0
      %8375 = vmatprep.subr.bf16.mxu0 0
      %8376 = vmatpush2.bf16.msra.mxu0 0
      %8377 = vmatprep.subr.bf16.mxu0 0
      %8378 = vmatpush2.bf16.msra.mxu0 0
      %8379 = vmatprep.mubr.bf16.mxu0 0
      %8380 = vmatmul.mubr.bf16.gmra.mxu0 %v5530
      %v8381 = vpop.f32.mrf.mxu0
      %v8382 = vadd.f32 0.0, %v8381
      %v8383 = vpop.f32.mrf.mxu0
      %v8384 = vpop.f32.mrf.mxu0
      %v8385 = vadd.f32 0.0, %v8384
      %v8386 = vpop.f32.mrf.mxu0
      %8387 = vmatprep.mubr.bf16.mxu0 0
      %8388 = vmatmul.mubr.bf16.gmra.mxu0 %v5533
      %v8389 = vpop.f32.mrf.mxu0
      %v8390 = vadd.f32 0.0, %v8389
      %v8391 = vpop.f32.mrf.mxu0
      %v8392 = vpop.f32.mrf.mxu0
      %v8393 = vadd.f32 0.0, %v8392
      %v8394 = vpop.f32.mrf.mxu0
      %8395 = vmatprep.mubr.bf16.mxu0 0
      %8396 = vmatmul.mubr.bf16.gmra.mxu0 %v5536
      %v8397 = vpop.f32.mrf.mxu0
      %v8398 = vadd.f32 0.0, %v8397
      %v8399 = vpop.f32.mrf.mxu0
      %v8400 = vpop.f32.mrf.mxu0
      %v8401 = vadd.f32 0.0, %v8400
      %v8402 = vpop.f32.mrf.mxu0
      %8403 = vmatprep.mubr.bf16.mxu0 0
      %8404 = vmatmul.mubr.bf16.gmra.mxu0 %v5539
      %v8405 = vpop.f32.mrf.mxu0
      %v8406 = vadd.f32 0.0, %v8405
      %v8407 = vpop.f32.mrf.mxu0
      %v8408 = vpop.f32.mrf.mxu0
      %v8409 = vadd.f32 0.0, %v8408
      %v8410 = vpop.f32.mrf.mxu0
      %8411 = vmatprep.mubr.bf16.mxu0 0
      %8412 = vmatmul.mubr.bf16.gmra.mxu0 %v5542
      %v8413 = vpop.f32.mrf.mxu0
      %v8414 = vadd.f32 0.0, %v8413
      %v8415 = vpop.f32.mrf.mxu0
      %v8416 = vpop.f32.mrf.mxu0
      %v8417 = vadd.f32 0.0, %v8416
      %v8418 = vpop.f32.mrf.mxu0
      %8419 = vmatprep.mubr.bf16.mxu0 0
      %8420 = vmatmul.mubr.bf16.gmra.mxu0 %v5545
      %v8421 = vpop.f32.mrf.mxu0
      %v8422 = vadd.f32 0.0, %v8421
      %v8423 = vpop.f32.mrf.mxu0
      %v8424 = vpop.f32.mrf.mxu0
      %v8425 = vadd.f32 0.0, %v8424
      %v8426 = vpop.f32.mrf.mxu0
      %8427 = vmatprep.mubr.bf16.mxu0 0
      %8428 = vmatmul.mubr.bf16.gmra.mxu0 %v5548
      %v8429 = vpop.f32.mrf.mxu0
      %v8430 = vadd.f32 0.0, %v8429
      %v8431 = vpop.f32.mrf.mxu0
      %v8432 = vpop.f32.mrf.mxu0
      %v8433 = vadd.f32 0.0, %v8432
      %v8434 = vpop.f32.mrf.mxu0
      %8435 = vmatprep.mubr.bf16.mxu0 0
      %8436 = vmatmul.mubr.bf16.gmra.mxu0 %v5551
      %v8437 = vpop.f32.mrf.mxu0
      %v8438 = vadd.f32 0.0, %v8437
      %v8439 = vpop.f32.mrf.mxu0
      %v8440 = vpop.f32.mrf.mxu0
      %v8441 = vadd.f32 0.0, %v8440
      %v8442 = vpop.f32.mrf.mxu0
      %8443 = vdwg.mxu0
      %s8444 = scalar_lea.vmem %s6, 112
      %v8445 = vld [vmem:[%s8444] sm:$0xf]
      %v8446 = vld [vmem:[%s8444 + $0x4] sm:$0xf]
      %v8447 = vld [vmem:[%s8444 + $0x8] sm:$0xf]
      %v8448 = vld [vmem:[%s8444 + $0xc] sm:$0xf]
      %v8453 = vunpack.c.l.b16 %v8445
      %v8454 = vunpack.c.l.b16 %v8446
      %v8455 = vunpack.c.l.b16 %v8447
      %v8456 = vunpack.c.l.b16 %v8448
      %v8457 = vpack.c.b16 %v8454, %v8453
      %v8458 = vpack.c.b16 %v8456, %v8455
      %8461 = vmatprep.subr.bf16.mxu0 0
      %8462 = vmatpush1.bf16.msra.mxu0 0
      %8463 = vmatprep.subr.bf16.mxu0 0
      %8464 = vmatpush1.bf16.msra.mxu0 0
      %8465 = vmatprep.subr.bf16.mxu0 0
      %8466 = vmatpush1.bf16.msra.mxu0 0
      %8467 = vmatprep.subr.bf16.mxu0 0
      %8468 = vmatpush1.bf16.msra.mxu0 0
      %8469 = vmatprep.subr.bf16.mxu0 0
      %8470 = vmatpush1.bf16.msra.mxu0 0
      %8471 = vmatprep.subr.bf16.mxu0 0
      %8472 = vmatpush1.bf16.msra.mxu0 0
      %8473 = vmatprep.subr.bf16.mxu0 0
      %8474 = vmatpush1.bf16.msra.mxu0 %v8458
      %8475 = vmatprep.subr.bf16.mxu0 0
      %8476 = vmatpush1.bf16.msra.mxu0 %v8457
      %8477 = vmatprep.subr.bf16.mxu0 0
      %8478 = vmatpush2.bf16.msra.mxu0 0
      %8479 = vmatprep.subr.bf16.mxu0 0
      %8480 = vmatpush2.bf16.msra.mxu0 0
      %8481 = vmatprep.subr.bf16.mxu0 0
      %8482 = vmatpush2.bf16.msra.mxu0 0
      %8483 = vmatprep.subr.bf16.mxu0 0
      %8484 = vmatpush2.bf16.msra.mxu0 0
      %8485 = vmatprep.subr.bf16.mxu0 0
      %8486 = vmatpush2.bf16.msra.mxu0 0
      %8487 = vmatprep.subr.bf16.mxu0 0
      %8488 = vmatpush2.bf16.msra.mxu0 0
      %8489 = vmatprep.subr.bf16.mxu0 0
      %8490 = vmatpush2.bf16.msra.mxu0 0
      %8491 = vmatprep.subr.bf16.mxu0 0
      %8492 = vmatpush2.bf16.msra.mxu0 0
      %8493 = vmatprep.mubr.bf16.mxu0 0
      %8494 = vmatmul.mubr.bf16.gmra.mxu0 %v5530
      %v8495 = vpop.f32.mrf.mxu0
      %v8496 = vadd.f32 0.0, %v8495
      %v8497 = vpop.f32.mrf.mxu0
      %v8498 = vpop.f32.mrf.mxu0
      %v8499 = vadd.f32 0.0, %v8498
      %v8500 = vpop.f32.mrf.mxu0
      %8501 = vmatprep.mubr.bf16.mxu0 0
      %8502 = vmatmul.mubr.bf16.gmra.mxu0 %v5533
      %v8503 = vpop.f32.mrf.mxu0
      %v8504 = vadd.f32 0.0, %v8503
      %v8505 = vpop.f32.mrf.mxu0
      %v8506 = vpop.f32.mrf.mxu0
      %v8507 = vadd.f32 0.0, %v8506
      %v8508 = vpop.f32.mrf.mxu0
      %8509 = vmatprep.mubr.bf16.mxu0 0
      %8510 = vmatmul.mubr.bf16.gmra.mxu0 %v5536
      %v8511 = vpop.f32.mrf.mxu0
      %v8512 = vadd.f32 0.0, %v8511
      %v8513 = vpop.f32.mrf.mxu0
      %v8514 = vpop.f32.mrf.mxu0
      %v8515 = vadd.f32 0.0, %v8514
      %v8516 = vpop.f32.mrf.mxu0
      %8517 = vmatprep.mubr.bf16.mxu0 0
      %8518 = vmatmul.mubr.bf16.gmra.mxu0 %v5539
      %v8519 = vpop.f32.mrf.mxu0
      %v8520 = vadd.f32 0.0, %v8519
      %v8521 = vpop.f32.mrf.mxu0
      %v8522 = vpop.f32.mrf.mxu0
      %v8523 = vadd.f32 0.0, %v8522
      %v8524 = vpop.f32.mrf.mxu0
      %8525 = vmatprep.mubr.bf16.mxu0 0
      %8526 = vmatmul.mubr.bf16.gmra.mxu0 %v5542
      %v8527 = vpop.f32.mrf.mxu0
      %v8528 = vadd.f32 0.0, %v8527
      %v8529 = vpop.f32.mrf.mxu0
      %v8530 = vpop.f32.mrf.mxu0
      %v8531 = vadd.f32 0.0, %v8530
      %v8532 = vpop.f32.mrf.mxu0
      %8533 = vmatprep.mubr.bf16.mxu0 0
      %8534 = vmatmul.mubr.bf16.gmra.mxu0 %v5545
      %v8535 = vpop.f32.mrf.mxu0
      %v8536 = vadd.f32 0.0, %v8535
      %v8537 = vpop.f32.mrf.mxu0
      %v8538 = vpop.f32.mrf.mxu0
      %v8539 = vadd.f32 0.0, %v8538
      %v8540 = vpop.f32.mrf.mxu0
      %8541 = vmatprep.mubr.bf16.mxu0 0
      %8542 = vmatmul.mubr.bf16.gmra.mxu0 %v5548
      %v8543 = vpop.f32.mrf.mxu0
      %v8544 = vadd.f32 0.0, %v8543
      %v8545 = vpop.f32.mrf.mxu0
      %v8546 = vpop.f32.mrf.mxu0
      %v8547 = vadd.f32 0.0, %v8546
      %v8548 = vpop.f32.mrf.mxu0
      %8549 = vmatprep.mubr.bf16.mxu0 0
      %8550 = vmatmul.mubr.bf16.gmra.mxu0 %v5551
      %v8551 = vpop.f32.mrf.mxu0
      %v8552 = vadd.f32 0.0, %v8551
      %v8553 = vpop.f32.mrf.mxu0
      %v8554 = vpop.f32.mrf.mxu0
      %v8555 = vadd.f32 0.0, %v8554
      %v8556 = vpop.f32.mrf.mxu0
      %8557 = vdwg.mxu0
      %s8558 = scalar_lea.vmem %s7, 112
      %v8559 = vld [vmem:[%s8558] sm:$0xf]
      %v8560 = vld [vmem:[%s8558 + $0x4] sm:$0xf]
      %v8561 = vld [vmem:[%s8558 + $0x8] sm:$0xf]
      %v8562 = vld [vmem:[%s8558 + $0xc] sm:$0xf]
      %v8567 = vunpack.c.l.b16 %v8559
      %v8568 = vunpack.c.l.b16 %v8560
      %v8569 = vunpack.c.l.b16 %v8561
      %v8570 = vunpack.c.l.b16 %v8562
      %v8571 = vpack.c.b16 %v8568, %v8567
      %v8572 = vpack.c.b16 %v8570, %v8569
      %8575 = vmatprep.subr.bf16.mxu0 0
      %8576 = vmatpush1.bf16.msra.mxu0 0
      %8577 = vmatprep.subr.bf16.mxu0 0
      %8578 = vmatpush1.bf16.msra.mxu0 0
      %8579 = vmatprep.subr.bf16.mxu0 0
      %8580 = vmatpush1.bf16.msra.mxu0 0
      %8581 = vmatprep.subr.bf16.mxu0 0
      %8582 = vmatpush1.bf16.msra.mxu0 0
      %8583 = vmatprep.subr.bf16.mxu0 0
      %8584 = vmatpush1.bf16.msra.mxu0 0
      %8585 = vmatprep.subr.bf16.mxu0 0
      %8586 = vmatpush1.bf16.msra.mxu0 0
      %8587 = vmatprep.subr.bf16.mxu0 0
      %8588 = vmatpush1.bf16.msra.mxu0 %v8572
      %8589 = vmatprep.subr.bf16.mxu0 0
      %8590 = vmatpush1.bf16.msra.mxu0 %v8571
      %8591 = vmatprep.subr.bf16.mxu0 0
      %8592 = vmatpush2.bf16.msra.mxu0 0
      %8593 = vmatprep.subr.bf16.mxu0 0
      %8594 = vmatpush2.bf16.msra.mxu0 0
      %8595 = vmatprep.subr.bf16.mxu0 0
      %8596 = vmatpush2.bf16.msra.mxu0 0
      %8597 = vmatprep.subr.bf16.mxu0 0
      %8598 = vmatpush2.bf16.msra.mxu0 0
      %8599 = vmatprep.subr.bf16.mxu0 0
      %8600 = vmatpush2.bf16.msra.mxu0 0
      %8601 = vmatprep.subr.bf16.mxu0 0
      %8602 = vmatpush2.bf16.msra.mxu0 0
      %8603 = vmatprep.subr.bf16.mxu0 0
      %8604 = vmatpush2.bf16.msra.mxu0 0
      %8605 = vmatprep.subr.bf16.mxu0 0
      %8606 = vmatpush2.bf16.msra.mxu0 0
      %8607 = vmatprep.mubr.bf16.mxu0 0
      %8608 = vmatmul.mubr.bf16.gmra.mxu0 %v5530
      %v8609 = vpop.f32.mrf.mxu0
      %v8610 = vadd.f32 0.0, %v8609
      %v8611 = vpop.f32.mrf.mxu0
      %v8612 = vpop.f32.mrf.mxu0
      %v8613 = vadd.f32 0.0, %v8612
      %v8614 = vpop.f32.mrf.mxu0
      %8615 = vmatprep.mubr.bf16.mxu0 0
      %8616 = vmatmul.mubr.bf16.gmra.mxu0 %v5533
      %v8617 = vpop.f32.mrf.mxu0
      %v8618 = vadd.f32 0.0, %v8617
      %v8619 = vpop.f32.mrf.mxu0
      %v8620 = vpop.f32.mrf.mxu0
      %v8621 = vadd.f32 0.0, %v8620
      %v8622 = vpop.f32.mrf.mxu0
      %8623 = vmatprep.mubr.bf16.mxu0 0
      %8624 = vmatmul.mubr.bf16.gmra.mxu0 %v5536
      %v8625 = vpop.f32.mrf.mxu0
      %v8626 = vadd.f32 0.0, %v8625
      %v8627 = vpop.f32.mrf.mxu0
      %v8628 = vpop.f32.mrf.mxu0
      %v8629 = vadd.f32 0.0, %v8628
      %v8630 = vpop.f32.mrf.mxu0
      %8631 = vmatprep.mubr.bf16.mxu0 0
      %8632 = vmatmul.mubr.bf16.gmra.mxu0 %v5539
      %v8633 = vpop.f32.mrf.mxu0
      %v8634 = vadd.f32 0.0, %v8633
      %v8635 = vpop.f32.mrf.mxu0
      %v8636 = vpop.f32.mrf.mxu0
      %v8637 = vadd.f32 0.0, %v8636
      %v8638 = vpop.f32.mrf.mxu0
      %8639 = vmatprep.mubr.bf16.mxu0 0
      %8640 = vmatmul.mubr.bf16.gmra.mxu0 %v5542
      %v8641 = vpop.f32.mrf.mxu0
      %v8642 = vadd.f32 0.0, %v8641
      %v8643 = vpop.f32.mrf.mxu0
      %v8644 = vpop.f32.mrf.mxu0
      %v8645 = vadd.f32 0.0, %v8644
      %v8646 = vpop.f32.mrf.mxu0
      %8647 = vmatprep.mubr.bf16.mxu0 0
      %8648 = vmatmul.mubr.bf16.gmra.mxu0 %v5545
      %v8649 = vpop.f32.mrf.mxu0
      %v8650 = vadd.f32 0.0, %v8649
      %v8651 = vpop.f32.mrf.mxu0
      %v8652 = vpop.f32.mrf.mxu0
      %v8653 = vadd.f32 0.0, %v8652
      %v8654 = vpop.f32.mrf.mxu0
      %8655 = vmatprep.mubr.bf16.mxu0 0
      %8656 = vmatmul.mubr.bf16.gmra.mxu0 %v5548
      %v8657 = vpop.f32.mrf.mxu0
      %v8658 = vadd.f32 0.0, %v8657
      %v8659 = vpop.f32.mrf.mxu0
      %v8660 = vpop.f32.mrf.mxu0
      %v8661 = vadd.f32 0.0, %v8660
      %v8662 = vpop.f32.mrf.mxu0
      %8663 = vmatprep.mubr.bf16.mxu0 0
      %8664 = vmatmul.mubr.bf16.gmra.mxu0 %v5551
      %v8665 = vpop.f32.mrf.mxu0
      %v8666 = vadd.f32 0.0, %v8665
      %v8667 = vpop.f32.mrf.mxu0
      %v8668 = vpop.f32.mrf.mxu0
      %v8669 = vadd.f32 0.0, %v8668
      %v8670 = vpop.f32.mrf.mxu0
      %8671 = vdwg.mxu0
      %v8672 = vpack.c.bf16 %v8385, %v8382
      %v8673 = vpack.c.bf16 %v8393, %v8390
      %v8674 = vpack.c.bf16 %v8401, %v8398
      %v8675 = vpack.c.bf16 %v8409, %v8406
      %v8676 = vpack.c.bf16 %v8417, %v8414
      %v8677 = vpack.c.bf16 %v8425, %v8422
      %v8678 = vpack.c.bf16 %v8433, %v8430
      %v8679 = vpack.c.bf16 %v8441, %v8438
      %v8680 = vpack.c.bf16 %v8499, %v8496
      %v8681 = vpack.c.bf16 %v8507, %v8504
      %v8682 = vpack.c.bf16 %v8515, %v8512
      %v8683 = vpack.c.bf16 %v8523, %v8520
      %v8684 = vpack.c.bf16 %v8531, %v8528
      %v8685 = vpack.c.bf16 %v8539, %v8536
      %v8686 = vpack.c.bf16 %v8547, %v8544
      %v8687 = vpack.c.bf16 %v8555, %v8552
      %v8689 = vsel %vm712, %v8672, 0
      %v8692 = vsel %vm712, %v8673, 0
      %v8695 = vsel %vm712, %v8674, 0
      %v8698 = vsel %vm712, %v8675, 0
      %v8701 = vsel %vm712, %v8676, 0
      %v8704 = vsel %vm712, %v8677, 0
      %v8707 = vsel %vm712, %v8678, 0
      %v8710 = vsel %vm712, %v8679, 0
      %v8713 = vsel %vm712, %v8680, 0
      %v8716 = vsel %vm712, %v8681, 0
      %v8719 = vsel %vm712, %v8682, 0
      %v8722 = vsel %vm712, %v8683, 0
      %v8725 = vsel %vm712, %v8684, 0
      %v8728 = vsel %vm712, %v8685, 0
      %v8731 = vsel %vm712, %v8686, 0
      %v8734 = vsel %vm712, %v8687, 0
      %8736 = vmatprep.subr.bf16.mxu0 0
      %8737 = vmatpush1.bf16.xpose.msra.mxu0 %v8734
      %8738 = vmatprep.subr.bf16.mxu0 0
      %8739 = vmatpush1.bf16.xpose.msra.mxu0 %v8731
      %8740 = vmatprep.subr.bf16.mxu0 0
      %8741 = vmatpush1.bf16.xpose.msra.mxu0 %v8728
      %8742 = vmatprep.subr.bf16.mxu0 0
      %8743 = vmatpush1.bf16.xpose.msra.mxu0 %v8725
      %8744 = vmatprep.subr.bf16.mxu0 0
      %8745 = vmatpush1.bf16.xpose.msra.mxu0 %v8722
      %8746 = vmatprep.subr.bf16.mxu0 0
      %8747 = vmatpush1.bf16.xpose.msra.mxu0 %v8719
      %8748 = vmatprep.subr.bf16.mxu0 0
      %8749 = vmatpush1.bf16.xpose.msra.mxu0 %v8716
      %8750 = vmatprep.subr.bf16.mxu0 0
      %8751 = vmatpush1.bf16.xpose.msra.mxu0 %v8713
      %8752 = vmatprep.subr.bf16.mxu0 0
      %8753 = vmatpush2.bf16.xpose.msra.mxu0 0
      %8754 = vmatprep.subr.bf16.mxu0 0
      %8755 = vmatpush2.bf16.xpose.msra.mxu0 0
      %8756 = vmatprep.subr.bf16.mxu0 0
      %8757 = vmatpush2.bf16.xpose.msra.mxu0 0
      %8758 = vmatprep.subr.bf16.mxu0 0
      %8759 = vmatpush2.bf16.xpose.msra.mxu0 0
      %8760 = vmatprep.subr.bf16.mxu0 0
      %8761 = vmatpush2.bf16.xpose.msra.mxu0 0
      %8762 = vmatprep.subr.bf16.mxu0 0
      %8763 = vmatpush2.bf16.xpose.msra.mxu0 0
      %8764 = vmatprep.subr.bf16.mxu0 0
      %8765 = vmatpush2.bf16.xpose.msra.mxu0 0
      %8766 = vmatprep.subr.bf16.mxu0 0
      %8767 = vmatpush2.bf16.xpose.msra.mxu0 0
      %8768 = vmatprep.mubr.bf16.mxu0 0
      %8769 = vmatmul.mubr.bf16.gmra.mxu0 %v8689
      %v8770 = vpop.f32.mrf.mxu0
      %v8771 = vadd.f32 0.0, %v8770
      %v8772 = vpop.f32.mrf.mxu0
      %v8773 = vpop.f32.mrf.mxu0
      %v8774 = vadd.f32 0.0, %v8773
      %v8775 = vpop.f32.mrf.mxu0
      %8776 = vmatprep.mubr.bf16.mxu0 0
      %8777 = vmatmul.mubr.bf16.gmra.mxu0 %v8692
      %v8778 = vpop.f32.mrf.mxu0
      %v8779 = vadd.f32 0.0, %v8778
      %v8780 = vpop.f32.mrf.mxu0
      %v8781 = vpop.f32.mrf.mxu0
      %v8782 = vadd.f32 0.0, %v8781
      %v8783 = vpop.f32.mrf.mxu0
      %8784 = vmatprep.mubr.bf16.mxu0 0
      %8785 = vmatmul.mubr.bf16.gmra.mxu0 %v8695
      %v8786 = vpop.f32.mrf.mxu0
      %v8787 = vadd.f32 0.0, %v8786
      %v8788 = vpop.f32.mrf.mxu0
      %v8789 = vpop.f32.mrf.mxu0
      %v8790 = vadd.f32 0.0, %v8789
      %v8791 = vpop.f32.mrf.mxu0
      %8792 = vmatprep.mubr.bf16.mxu0 0
      %8793 = vmatmul.mubr.bf16.gmra.mxu0 %v8698
      %v8794 = vpop.f32.mrf.mxu0
      %v8795 = vadd.f32 0.0, %v8794
      %v8796 = vpop.f32.mrf.mxu0
      %v8797 = vpop.f32.mrf.mxu0
      %v8798 = vadd.f32 0.0, %v8797
      %v8799 = vpop.f32.mrf.mxu0
      %8800 = vmatprep.mubr.bf16.mxu0 0
      %8801 = vmatmul.mubr.bf16.gmra.mxu0 %v8701
      %v8802 = vpop.f32.mrf.mxu0
      %v8803 = vadd.f32 0.0, %v8802
      %v8804 = vpop.f32.mrf.mxu0
      %v8805 = vpop.f32.mrf.mxu0
      %v8806 = vadd.f32 0.0, %v8805
      %v8807 = vpop.f32.mrf.mxu0
      %8808 = vmatprep.mubr.bf16.mxu0 0
      %8809 = vmatmul.mubr.bf16.gmra.mxu0 %v8704
      %v8810 = vpop.f32.mrf.mxu0
      %v8811 = vadd.f32 0.0, %v8810
      %v8812 = vpop.f32.mrf.mxu0
      %v8813 = vpop.f32.mrf.mxu0
      %v8814 = vadd.f32 0.0, %v8813
      %v8815 = vpop.f32.mrf.mxu0
      %8816 = vmatprep.mubr.bf16.mxu0 0
      %8817 = vmatmul.mubr.bf16.gmra.mxu0 %v8707
      %v8818 = vpop.f32.mrf.mxu0
      %v8819 = vadd.f32 0.0, %v8818
      %v8820 = vpop.f32.mrf.mxu0
      %v8821 = vpop.f32.mrf.mxu0
      %v8822 = vadd.f32 0.0, %v8821
      %v8823 = vpop.f32.mrf.mxu0
      %8824 = vmatprep.mubr.bf16.mxu0 0
      %8825 = vmatmul.mubr.bf16.gmra.mxu0 %v8710
      %v8826 = vpop.f32.mrf.mxu0
      %v8827 = vadd.f32 0.0, %v8826
      %v8828 = vpop.f32.mrf.mxu0
      %v8829 = vpop.f32.mrf.mxu0
      %v8830 = vadd.f32 0.0, %v8829
      %v8831 = vpop.f32.mrf.mxu0
      %8832 = vdwg.mxu0
      %v8833 = vmul.f32 %v8771, 0.35355338
      %v8834 = vmul.f32 %v8774, 0.35355338
      %v8835 = vmul.f32 %v8779, 0.35355338
      %v8836 = vmul.f32 %v8782, 0.35355338
      %v8837 = vmul.f32 %v8787, 0.35355338
      %v8838 = vmul.f32 %v8790, 0.35355338
      %v8839 = vmul.f32 %v8795, 0.35355338
      %v8840 = vmul.f32 %v8798, 0.35355338
      %v8841 = vmul.f32 %v8803, 0.35355338
      %v8842 = vmul.f32 %v8806, 0.35355338
      %v8843 = vmul.f32 %v8811, 0.35355338
      %v8844 = vmul.f32 %v8814, 0.35355338
      %v8845 = vmul.f32 %v8819, 0.35355338
      %v8846 = vmul.f32 %v8822, 0.35355338
      %v8847 = vmul.f32 %v8827, 0.35355338
      %v8848 = vmul.f32 %v8830, 0.35355338
      %v8849 = vadd.f32 %v8833, %v838
      %v8850 = vadd.f32 %v8834, %v839
      %v8851 = vadd.f32 %v8835, %v840
      %v8852 = vadd.f32 %v8836, %v841
      %v8853 = vadd.f32 %v8837, %v842
      %v8854 = vadd.f32 %v8838, %v843
      %v8855 = vadd.f32 %v8839, %v844
      %v8856 = vadd.f32 %v8840, %v845
      %v8857 = vadd.f32 %v8841, %v846
      %v8858 = vadd.f32 %v8842, %v847
      %v8859 = vadd.f32 %v8843, %v848
      %v8860 = vadd.f32 %v8844, %v849
      %v8861 = vadd.f32 %v8845, %v850
      %v8862 = vadd.f32 %v8846, %v851
      %v8863 = vadd.f32 %v8847, %v852
      %v8864 = vadd.f32 %v8848, %v853
      %8865 = vmax.xlane.f32.xlu0 %v8849
      %v8866 = vpop.xlane.xlu0 %8865
      %8867 = vmax.xlane.f32.xlu0 %v8850
      %v8868 = vpop.xlane.xlu0 %8867
      %8869 = vmax.xlane.f32.xlu0 %v8851
      %v8870 = vpop.xlane.xlu0 %8869
      %8871 = vmax.xlane.f32.xlu0 %v8852
      %v8872 = vpop.xlane.xlu0 %8871
      %8873 = vmax.xlane.f32.xlu0 %v8853
      %v8874 = vpop.xlane.xlu0 %8873
      %8875 = vmax.xlane.f32.xlu0 %v8854
      %v8876 = vpop.xlane.xlu0 %8875
      %8877 = vmax.xlane.f32.xlu0 %v8855
      %v8878 = vpop.xlane.xlu0 %8877
      %8879 = vmax.xlane.f32.xlu0 %v8856
      %v8880 = vpop.xlane.xlu0 %8879
      %8881 = vmax.xlane.f32.xlu0 %v8857
      %v8882 = vpop.xlane.xlu0 %8881
      %8883 = vmax.xlane.f32.xlu0 %v8858
      %v8884 = vpop.xlane.xlu0 %8883
      %8885 = vmax.xlane.f32.xlu0 %v8859
      %v8886 = vpop.xlane.xlu0 %8885
      %8887 = vmax.xlane.f32.xlu0 %v8860
      %v8888 = vpop.xlane.xlu0 %8887
      %8889 = vmax.xlane.f32.xlu0 %v8861
      %v8890 = vpop.xlane.xlu0 %8889
      %8891 = vmax.xlane.f32.xlu0 %v8862
      %v8892 = vpop.xlane.xlu0 %8891
      %8893 = vmax.xlane.f32.xlu0 %v8863
      %v8894 = vpop.xlane.xlu0 %8893
      %8895 = vmax.xlane.f32.xlu0 %v8864
      %v8896 = vpop.xlane.xlu0 %8895
      %v8897 = vsub.f32 %v8849, %v8866
      %v8898 = vsub.f32 %v8850, %v8868
      %v8899 = vsub.f32 %v8851, %v8870
      %v8900 = vsub.f32 %v8852, %v8872
      %v8901 = vsub.f32 %v8853, %v8874
      %v8902 = vsub.f32 %v8854, %v8876
      %v8903 = vsub.f32 %v8855, %v8878
      %v8904 = vsub.f32 %v8856, %v8880
      %v8905 = vsub.f32 %v8857, %v8882
      %v8906 = vsub.f32 %v8858, %v8884
      %v8907 = vsub.f32 %v8859, %v8886
      %v8908 = vsub.f32 %v8860, %v8888
      %v8909 = vsub.f32 %v8861, %v8890
      %v8910 = vsub.f32 %v8862, %v8892
      %v8911 = vsub.f32 %v8863, %v8894
      %v8912 = vsub.f32 %v8864, %v8896
      %v8913 = vmul.f32 %v8897, 1.442695
      %v8914 = vpow.pop %v8913
      %v8915 = vmul.f32 %v8898, 1.442695
      %v8916 = vpow.pop %v8915
      %v8917 = vmul.f32 %v8899, 1.442695
      %v8918 = vpow.pop %v8917
      %v8919 = vmul.f32 %v8900, 1.442695
      %v8920 = vpow.pop %v8919
      %v8921 = vmul.f32 %v8901, 1.442695
      %v8922 = vpow.pop %v8921
      %v8923 = vmul.f32 %v8902, 1.442695
      %v8924 = vpow.pop %v8923
      %v8925 = vmul.f32 %v8903, 1.442695
      %v8926 = vpow.pop %v8925
      %v8927 = vmul.f32 %v8904, 1.442695
      %v8928 = vpow.pop %v8927
      %v8929 = vmul.f32 %v8905, 1.442695
      %v8930 = vpow.pop %v8929
      %v8931 = vmul.f32 %v8906, 1.442695
      %v8932 = vpow.pop %v8931
      %v8933 = vmul.f32 %v8907, 1.442695
      %v8934 = vpow.pop %v8933
      %v8935 = vmul.f32 %v8908, 1.442695
      %v8936 = vpow.pop %v8935
      %v8937 = vmul.f32 %v8909, 1.442695
      %v8938 = vpow.pop %v8937
      %v8939 = vmul.f32 %v8910, 1.442695
      %v8940 = vpow.pop %v8939
      %v8941 = vmul.f32 %v8911, 1.442695
      %v8942 = vpow.pop %v8941
      %v8943 = vmul.f32 %v8912, 1.442695
      %v8944 = vpow.pop %v8943
      %8945 = vadd.xlane.f32.xlu0 %v8914
      %v8946 = vpop.xlane.xlu0 %8945
      %8947 = vadd.xlane.f32.xlu0 %v8916
      %v8948 = vpop.xlane.xlu0 %8947
      %8949 = vadd.xlane.f32.xlu0 %v8918
      %v8950 = vpop.xlane.xlu0 %8949
      %8951 = vadd.xlane.f32.xlu0 %v8920
      %v8952 = vpop.xlane.xlu0 %8951
      %8953 = vadd.xlane.f32.xlu0 %v8922
      %v8954 = vpop.xlane.xlu0 %8953
      %8955 = vadd.xlane.f32.xlu0 %v8924
      %v8956 = vpop.xlane.xlu0 %8955
      %8957 = vadd.xlane.f32.xlu0 %v8926
      %v8958 = vpop.xlane.xlu0 %8957
      %8959 = vadd.xlane.f32.xlu0 %v8928
      %v8960 = vpop.xlane.xlu0 %8959
      %8961 = vadd.xlane.f32.xlu0 %v8930
      %v8962 = vpop.xlane.xlu0 %8961
      %8963 = vadd.xlane.f32.xlu0 %v8932
      %v8964 = vpop.xlane.xlu0 %8963
      %8965 = vadd.xlane.f32.xlu0 %v8934
      %v8966 = vpop.xlane.xlu0 %8965
      %8967 = vadd.xlane.f32.xlu0 %v8936
      %v8968 = vpop.xlane.xlu0 %8967
      %8969 = vadd.xlane.f32.xlu0 %v8938
      %v8970 = vpop.xlane.xlu0 %8969
      %8971 = vadd.xlane.f32.xlu0 %v8940
      %v8972 = vpop.xlane.xlu0 %8971
      %8973 = vadd.xlane.f32.xlu0 %v8942
      %v8974 = vpop.xlane.xlu0 %8973
      %8975 = vadd.xlane.f32.xlu0 %v8944
      %v8976 = vpop.xlane.xlu0 %8975
      %v8977 = vrcp.pop %v8946
      %v8978 = vmul.f32 %v8914, %v8977
      %v8979 = vrcp.pop %v8948
      %v8980 = vmul.f32 %v8916, %v8979
      %v8981 = vrcp.pop %v8950
      %v8982 = vmul.f32 %v8918, %v8981
      %v8983 = vrcp.pop %v8952
      %v8984 = vmul.f32 %v8920, %v8983
      %v8985 = vrcp.pop %v8954
      %v8986 = vmul.f32 %v8922, %v8985
      %v8987 = vrcp.pop %v8956
      %v8988 = vmul.f32 %v8924, %v8987
      %v8989 = vrcp.pop %v8958
      %v8990 = vmul.f32 %v8926, %v8989
      %v8991 = vrcp.pop %v8960
      %v8992 = vmul.f32 %v8928, %v8991
      %v8993 = vrcp.pop %v8962
      %v8994 = vmul.f32 %v8930, %v8993
      %v8995 = vrcp.pop %v8964
      %v8996 = vmul.f32 %v8932, %v8995
      %v8997 = vrcp.pop %v8966
      %v8998 = vmul.f32 %v8934, %v8997
      %v8999 = vrcp.pop %v8968
      %v9000 = vmul.f32 %v8936, %v8999
      %v9001 = vrcp.pop %v8970
      %v9002 = vmul.f32 %v8938, %v9001
      %v9003 = vrcp.pop %v8972
      %v9004 = vmul.f32 %v8940, %v9003
      %v9005 = vrcp.pop %v8974
      %v9006 = vmul.f32 %v8942, %v9005
      %v9007 = vrcp.pop %v8976
      %v9008 = vmul.f32 %v8944, %v9007
      %v9009 = vpack.c.bf16 %v8980, %v8978
      %v9010 = vpack.c.bf16 %v8984, %v8982
      %v9011 = vpack.c.bf16 %v8988, %v8986
      %v9012 = vpack.c.bf16 %v8992, %v8990
      %v9013 = vpack.c.bf16 %v8996, %v8994
      %v9014 = vpack.c.bf16 %v9000, %v8998
      %v9015 = vpack.c.bf16 %v9004, %v9002
      %v9016 = vpack.c.bf16 %v9008, %v9006
      %v9017 = vpack.c.bf16 %v8613, %v8610
      %v9018 = vpack.c.bf16 %v8621, %v8618
      %v9019 = vpack.c.bf16 %v8629, %v8626
      %v9020 = vpack.c.bf16 %v8637, %v8634
      %v9021 = vpack.c.bf16 %v8645, %v8642
      %v9022 = vpack.c.bf16 %v8653, %v8650
      %v9023 = vpack.c.bf16 %v8661, %v8658
      %v9024 = vpack.c.bf16 %v8669, %v8666
      %9025 = vmatprep.subr.bf16.mxu0 0
      %9026 = vmatpush1.bf16.msra.mxu0 %v9024
      %9027 = vmatprep.subr.bf16.mxu0 0
      %9028 = vmatpush1.bf16.msra.mxu0 %v9023
      %9029 = vmatprep.subr.bf16.mxu0 0
      %9030 = vmatpush1.bf16.msra.mxu0 %v9022
      %9031 = vmatprep.subr.bf16.mxu0 0
      %9032 = vmatpush1.bf16.msra.mxu0 %v9021
      %9033 = vmatprep.subr.bf16.mxu0 0
      %9034 = vmatpush1.bf16.msra.mxu0 %v9020
      %9035 = vmatprep.subr.bf16.mxu0 0
      %9036 = vmatpush1.bf16.msra.mxu0 %v9019
      %9037 = vmatprep.subr.bf16.mxu0 0
      %9038 = vmatpush1.bf16.msra.mxu0 %v9018
      %9039 = vmatprep.subr.bf16.mxu0 0
      %9040 = vmatpush1.bf16.msra.mxu0 %v9017
      %9041 = vmatprep.subr.bf16.mxu0 0
      %9042 = vmatpush2.bf16.msra.mxu0 0
      %9043 = vmatprep.subr.bf16.mxu0 0
      %9044 = vmatpush2.bf16.msra.mxu0 0
      %9045 = vmatprep.subr.bf16.mxu0 0
      %9046 = vmatpush2.bf16.msra.mxu0 0
      %9047 = vmatprep.subr.bf16.mxu0 0
      %9048 = vmatpush2.bf16.msra.mxu0 0
      %9049 = vmatprep.subr.bf16.mxu0 0
      %9050 = vmatpush2.bf16.msra.mxu0 0
      %9051 = vmatprep.subr.bf16.mxu0 0
      %9052 = vmatpush2.bf16.msra.mxu0 0
      %9053 = vmatprep.subr.bf16.mxu0 0
      %9054 = vmatpush2.bf16.msra.mxu0 0
      %9055 = vmatprep.subr.bf16.mxu0 0
      %9056 = vmatpush2.bf16.msra.mxu0 0
      %9057 = vmatprep.mubr.bf16.mxu0 0
      %9058 = vmatmul.mubr.bf16.gmra.mxu0 %v9009
      %v9059 = vpop.f32.mrf.mxu0
      %v9060 = vadd.f32 0.0, %v9059
      %v9061 = vpop.f32.mrf.mxu0
      %v9062 = vpop.f32.mrf.mxu0
      %v9063 = vadd.f32 0.0, %v9062
      %v9064 = vpop.f32.mrf.mxu0
      %9065 = vmatprep.mubr.bf16.mxu0 0
      %9066 = vmatmul.mubr.bf16.gmra.mxu0 %v9010
      %v9067 = vpop.f32.mrf.mxu0
      %v9068 = vadd.f32 0.0, %v9067
      %v9069 = vpop.f32.mrf.mxu0
      %v9070 = vpop.f32.mrf.mxu0
      %v9071 = vadd.f32 0.0, %v9070
      %v9072 = vpop.f32.mrf.mxu0
      %9073 = vmatprep.mubr.bf16.mxu0 0
      %9074 = vmatmul.mubr.bf16.gmra.mxu0 %v9011
      %v9075 = vpop.f32.mrf.mxu0
      %v9076 = vadd.f32 0.0, %v9075
      %v9077 = vpop.f32.mrf.mxu0
      %v9078 = vpop.f32.mrf.mxu0
      %v9079 = vadd.f32 0.0, %v9078
      %v9080 = vpop.f32.mrf.mxu0
      %9081 = vmatprep.mubr.bf16.mxu0 0
      %9082 = vmatmul.mubr.bf16.gmra.mxu0 %v9012
      %v9083 = vpop.f32.mrf.mxu0
      %v9084 = vadd.f32 0.0, %v9083
      %v9085 = vpop.f32.mrf.mxu0
      %v9086 = vpop.f32.mrf.mxu0
      %v9087 = vadd.f32 0.0, %v9086
      %v9088 = vpop.f32.mrf.mxu0
      %9089 = vmatprep.mubr.bf16.mxu0 0
      %9090 = vmatmul.mubr.bf16.gmra.mxu0 %v9013
      %v9091 = vpop.f32.mrf.mxu0
      %v9092 = vadd.f32 0.0, %v9091
      %v9093 = vpop.f32.mrf.mxu0
      %v9094 = vpop.f32.mrf.mxu0
      %v9095 = vadd.f32 0.0, %v9094
      %v9096 = vpop.f32.mrf.mxu0
      %9097 = vmatprep.mubr.bf16.mxu0 0
      %9098 = vmatmul.mubr.bf16.gmra.mxu0 %v9014
      %v9099 = vpop.f32.mrf.mxu0
      %v9100 = vadd.f32 0.0, %v9099
      %v9101 = vpop.f32.mrf.mxu0
      %v9102 = vpop.f32.mrf.mxu0
      %v9103 = vadd.f32 0.0, %v9102
      %v9104 = vpop.f32.mrf.mxu0
      %9105 = vmatprep.mubr.bf16.mxu0 0
      %9106 = vmatmul.mubr.bf16.gmra.mxu0 %v9015
      %v9107 = vpop.f32.mrf.mxu0
      %v9108 = vadd.f32 0.0, %v9107
      %v9109 = vpop.f32.mrf.mxu0
      %v9110 = vpop.f32.mrf.mxu0
      %v9111 = vadd.f32 0.0, %v9110
      %v9112 = vpop.f32.mrf.mxu0
      %9113 = vmatprep.mubr.bf16.mxu0 0
      %9114 = vmatmul.mubr.bf16.gmra.mxu0 %v9016
      %v9115 = vpop.f32.mrf.mxu0
      %v9116 = vadd.f32 0.0, %v9115
      %v9117 = vpop.f32.mrf.mxu0
      %v9118 = vpop.f32.mrf.mxu0
      %v9119 = vadd.f32 0.0, %v9118
      %v9120 = vpop.f32.mrf.mxu0
      %9121 = vdwg.mxu0
      %s9122 = scalar_lea.vmem %s8, 28
      %v9123 = vld [vmem:[%s9122] sm:$0xf]
      %v9124 = vpack.c.bf16 %v9063, %v9060
      %v9125 = vpack.c.bf16 %v9071, %v9068
      %v9126 = vpack.c.bf16 %v9079, %v9076
      %v9127 = vpack.c.bf16 %v9087, %v9084
      %v9128 = vpack.c.bf16 %v9095, %v9092
      %v9129 = vpack.c.bf16 %v9103, %v9100
      %v9130 = vpack.c.bf16 %v9111, %v9108
      %v9131 = vpack.c.bf16 %v9119, %v9116
      %v9133 = vsel %vm712, %v9124, 0
      %v9136 = vsel %vm712, %v9125, 0
      %v9139 = vsel %vm712, %v9126, 0
      %v9142 = vsel %vm712, %v9127, 0
      %v9145 = vsel %vm712, %v9128, 0
      %v9148 = vsel %vm712, %v9129, 0
      %v9151 = vsel %vm712, %v9130, 0
      %v9154 = vsel %vm712, %v9131, 0
      %v9157 = vsel %vm737, %v9123, 0
      %9159 = vmatprep.subr.bf16.mxu0 0
      %9160 = vmatpush1.bf16.msra.mxu0 0
      %9161 = vmatprep.subr.bf16.mxu0 0
      %9162 = vmatpush1.bf16.msra.mxu0 0
      %9163 = vmatprep.subr.bf16.mxu0 0
      %9164 = vmatpush1.bf16.msra.mxu0 0
      %9165 = vmatprep.subr.bf16.mxu0 0
      %9166 = vmatpush1.bf16.msra.mxu0 0
      %9167 = vmatprep.subr.bf16.mxu0 0
      %9168 = vmatpush1.bf16.msra.mxu0 0
      %9169 = vmatprep.subr.bf16.mxu0 0
      %9170 = vmatpush1.bf16.msra.mxu0 0
      %9171 = vmatprep.subr.bf16.mxu0 0
      %9172 = vmatpush1.bf16.msra.mxu0 0
      %9173 = vmatprep.subr.bf16.mxu0 0
      %9174 = vmatpush1.bf16.msra.mxu0 %v9157
      %9175 = vmatprep.subr.bf16.mxu0 0
      %9176 = vmatpush2.bf16.msra.mxu0 0
      %9177 = vmatprep.subr.bf16.mxu0 0
      %9178 = vmatpush2.bf16.msra.mxu0 0
      %9179 = vmatprep.subr.bf16.mxu0 0
      %9180 = vmatpush2.bf16.msra.mxu0 0
      %9181 = vmatprep.subr.bf16.mxu0 0
      %9182 = vmatpush2.bf16.msra.mxu0 0
      %9183 = vmatprep.subr.bf16.mxu0 0
      %9184 = vmatpush2.bf16.msra.mxu0 0
      %9185 = vmatprep.subr.bf16.mxu0 0
      %9186 = vmatpush2.bf16.msra.mxu0 0
      %9187 = vmatprep.subr.bf16.mxu0 0
      %9188 = vmatpush2.bf16.msra.mxu0 0
      %9189 = vmatprep.subr.bf16.mxu0 0
      %9190 = vmatpush2.bf16.msra.mxu0 0
      %9191 = vmatprep.mubr.bf16.mxu0 0
      %9192 = vmatmul.mubr.bf16.gmra.mxu0 %v9133
      %v9193 = vpop.f32.mrf.mxu0
      %v9194 = vadd.f32 0.0, %v9193
      %v9195 = vpop.f32.mrf.mxu0
      %v9196 = vpop.f32.mrf.mxu0
      %v9197 = vadd.f32 0.0, %v9196
      %v9198 = vpop.f32.mrf.mxu0
      %9199 = vmatprep.mubr.bf16.mxu0 0
      %9200 = vmatmul.mubr.bf16.gmra.mxu0 %v9136
      %v9201 = vpop.f32.mrf.mxu0
      %v9202 = vadd.f32 0.0, %v9201
      %v9203 = vpop.f32.mrf.mxu0
      %v9204 = vpop.f32.mrf.mxu0
      %v9205 = vadd.f32 0.0, %v9204
      %v9206 = vpop.f32.mrf.mxu0
      %9207 = vmatprep.mubr.bf16.mxu0 0
      %9208 = vmatmul.mubr.bf16.gmra.mxu0 %v9139
      %v9209 = vpop.f32.mrf.mxu0
      %v9210 = vadd.f32 0.0, %v9209
      %v9211 = vpop.f32.mrf.mxu0
      %v9212 = vpop.f32.mrf.mxu0
      %v9213 = vadd.f32 0.0, %v9212
      %v9214 = vpop.f32.mrf.mxu0
      %9215 = vmatprep.mubr.bf16.mxu0 0
      %9216 = vmatmul.mubr.bf16.gmra.mxu0 %v9142
      %v9217 = vpop.f32.mrf.mxu0
      %v9218 = vadd.f32 0.0, %v9217
      %v9219 = vpop.f32.mrf.mxu0
      %v9220 = vpop.f32.mrf.mxu0
      %v9221 = vadd.f32 0.0, %v9220
      %v9222 = vpop.f32.mrf.mxu0
      %9223 = vmatprep.mubr.bf16.mxu0 0
      %9224 = vmatmul.mubr.bf16.gmra.mxu0 %v9145
      %v9225 = vpop.f32.mrf.mxu0
      %v9226 = vadd.f32 0.0, %v9225
      %v9227 = vpop.f32.mrf.mxu0
      %v9228 = vpop.f32.mrf.mxu0
      %v9229 = vadd.f32 0.0, %v9228
      %v9230 = vpop.f32.mrf.mxu0
      %9231 = vmatprep.mubr.bf16.mxu0 0
      %9232 = vmatmul.mubr.bf16.gmra.mxu0 %v9148
      %v9233 = vpop.f32.mrf.mxu0
      %v9234 = vadd.f32 0.0, %v9233
      %v9235 = vpop.f32.mrf.mxu0
      %v9236 = vpop.f32.mrf.mxu0
      %v9237 = vadd.f32 0.0, %v9236
      %v9238 = vpop.f32.mrf.mxu0
      %9239 = vmatprep.mubr.bf16.mxu0 0
      %9240 = vmatmul.mubr.bf16.gmra.mxu0 %v9151
      %v9241 = vpop.f32.mrf.mxu0
      %v9242 = vadd.f32 0.0, %v9241
      %v9243 = vpop.f32.mrf.mxu0
      %v9244 = vpop.f32.mrf.mxu0
      %v9245 = vadd.f32 0.0, %v9244
      %v9246 = vpop.f32.mrf.mxu0
      %9247 = vmatprep.mubr.bf16.mxu0 0
      %9248 = vmatmul.mubr.bf16.gmra.mxu0 %v9154
      %v9249 = vpop.f32.mrf.mxu0
      %v9250 = vadd.f32 0.0, %v9249
      %v9251 = vpop.f32.mrf.mxu0
      %v9252 = vpop.f32.mrf.mxu0
      %v9253 = vadd.f32 0.0, %v9252
      %v9254 = vpop.f32.mrf.mxu0
      %9255 = vdwg.mxu0
      %v9256 = vadd.f32 %v8314, %v9194
      %v9257 = vadd.f32 %v8315, %v9197
      %v9258 = vadd.f32 %v8316, %v9202
      %v9259 = vadd.f32 %v8317, %v9205
      %v9260 = vadd.f32 %v8318, %v9210
      %v9261 = vadd.f32 %v8319, %v9213
      %v9262 = vadd.f32 %v8320, %v9218
      %v9263 = vadd.f32 %v8321, %v9221
      %v9264 = vadd.f32 %v8322, %v9226
      %v9265 = vadd.f32 %v8323, %v9229
      %v9266 = vadd.f32 %v8324, %v9234
      %v9267 = vadd.f32 %v8325, %v9237
      %v9268 = vadd.f32 %v8326, %v9242
      %v9269 = vadd.f32 %v8327, %v9245
      %v9270 = vadd.f32 %v8328, %v9250
      %v9271 = vadd.f32 %v8329, %v9253
      %v9272 = vadd.f32 %v5488, %v9256
      %v9273 = vadd.f32 %v5489, %v9257
      %v9274 = vadd.f32 %v5490, %v9258
      %v9275 = vadd.f32 %v5491, %v9259
      %v9276 = vadd.f32 %v5492, %v9260
      %v9277 = vadd.f32 %v5493, %v9261
      %v9278 = vadd.f32 %v5494, %v9262
      %v9279 = vadd.f32 %v5495, %v9263
      %v9280 = vadd.f32 %v5496, %v9264
      %v9281 = vadd.f32 %v5497, %v9265
      %v9282 = vadd.f32 %v5498, %v9266
      %v9283 = vadd.f32 %v5499, %v9267
      %v9284 = vadd.f32 %v5500, %v9268
      %v9285 = vadd.f32 %v5501, %v9269
      %v9286 = vadd.f32 %v5502, %v9270
      %v9287 = vadd.f32 %v5503, %v9271
      %s9288 = scalar_lea.vmem %s9, 1
      %v9289 = vld [vmem:[%s9288] sm:$0x1]
      %s9290 = scalar_lea.vmem %s10, 1
      %v9291 = vld [vmem:[%s9290] sm:$0x1]
      %v9292 = vsel %vm878, %v9272, 0.0
      %9293 = vadd.xlane.f32.xlu0 %v9292
      %v9294 = vpop.xlane.xlu0 %9293
      %v9295 = vsel %vm878, %v9273, 0.0
      %9296 = vadd.xlane.f32.xlu0 %v9295
      %v9297 = vpop.xlane.xlu0 %9296
      %v9298 = vsel %vm878, %v9274, 0.0
      %9299 = vadd.xlane.f32.xlu0 %v9298
      %v9300 = vpop.xlane.xlu0 %9299
      %v9301 = vsel %vm878, %v9275, 0.0
      %9302 = vadd.xlane.f32.xlu0 %v9301
      %v9303 = vpop.xlane.xlu0 %9302
      %v9304 = vsel %vm878, %v9276, 0.0
      %9305 = vadd.xlane.f32.xlu0 %v9304
      %v9306 = vpop.xlane.xlu0 %9305
      %v9307 = vsel %vm878, %v9277, 0.0
      %9308 = vadd.xlane.f32.xlu0 %v9307
      %v9309 = vpop.xlane.xlu0 %9308
      %v9310 = vsel %vm878, %v9278, 0.0
      %9311 = vadd.xlane.f32.xlu0 %v9310
      %v9312 = vpop.xlane.xlu0 %9311
      %v9313 = vsel %vm878, %v9279, 0.0
      %9314 = vadd.xlane.f32.xlu0 %v9313
      %v9315 = vpop.xlane.xlu0 %9314
      %v9316 = vsel %vm878, %v9280, 0.0
      %9317 = vadd.xlane.f32.xlu0 %v9316
      %v9318 = vpop.xlane.xlu0 %9317
      %v9319 = vsel %vm878, %v9281, 0.0
      %9320 = vadd.xlane.f32.xlu0 %v9319
      %v9321 = vpop.xlane.xlu0 %9320
      %v9322 = vsel %vm878, %v9282, 0.0
      %9323 = vadd.xlane.f32.xlu0 %v9322
      %v9324 = vpop.xlane.xlu0 %9323
      %v9325 = vsel %vm878, %v9283, 0.0
      %9326 = vadd.xlane.f32.xlu0 %v9325
      %v9327 = vpop.xlane.xlu0 %9326
      %v9328 = vsel %vm878, %v9284, 0.0
      %9329 = vadd.xlane.f32.xlu0 %v9328
      %v9330 = vpop.xlane.xlu0 %9329
      %v9331 = vsel %vm878, %v9285, 0.0
      %9332 = vadd.xlane.f32.xlu0 %v9331
      %v9333 = vpop.xlane.xlu0 %9332
      %v9334 = vsel %vm878, %v9286, 0.0
      %9335 = vadd.xlane.f32.xlu0 %v9334
      %v9336 = vpop.xlane.xlu0 %9335
      %v9337 = vsel %vm878, %v9287, 0.0
      %9338 = vadd.xlane.f32.xlu0 %v9337
      %v9339 = vpop.xlane.xlu0 %9338
      %v9340 = vmul.f32 %v9294, %v4685
      %v9341 = vmul.f32 %v9297, %v4685
      %v9342 = vmul.f32 %v9300, %v4685
      %v9343 = vmul.f32 %v9303, %v4685
      %v9344 = vmul.f32 %v9306, %v4685
      %v9345 = vmul.f32 %v9309, %v4685
      %v9346 = vmul.f32 %v9312, %v4685
      %v9347 = vmul.f32 %v9315, %v4685
      %v9348 = vmul.f32 %v9318, %v4685
      %v9349 = vmul.f32 %v9321, %v4685
      %v9350 = vmul.f32 %v9324, %v4685
      %v9351 = vmul.f32 %v9327, %v4685
      %v9352 = vmul.f32 %v9330, %v4685
      %v9353 = vmul.f32 %v9333, %v4685
      %v9354 = vmul.f32 %v9336, %v4685
      %v9355 = vmul.f32 %v9339, %v4685
      %v9356 = vsub.f32 %v9272, %v9340
      %v9357 = vsub.f32 %v9273, %v9341
      %v9358 = vsub.f32 %v9274, %v9342
      %v9359 = vsub.f32 %v9275, %v9343
      %v9360 = vsub.f32 %v9276, %v9344
      %v9361 = vsub.f32 %v9277, %v9345
      %v9362 = vsub.f32 %v9278, %v9346
      %v9363 = vsub.f32 %v9279, %v9347
      %v9364 = vsub.f32 %v9280, %v9348
      %v9365 = vsub.f32 %v9281, %v9349
      %v9366 = vsub.f32 %v9282, %v9350
      %v9367 = vsub.f32 %v9283, %v9351
      %v9368 = vsub.f32 %v9284, %v9352
      %v9369 = vsub.f32 %v9285, %v9353
      %v9370 = vsub.f32 %v9286, %v9354
      %v9371 = vsub.f32 %v9287, %v9355
      %v9372 = vmul.f32 %v9356, %v9356
      %v9373 = vmul.f32 %v9357, %v9357
      %v9374 = vmul.f32 %v9358, %v9358
      %v9375 = vmul.f32 %v9359, %v9359
      %v9376 = vmul.f32 %v9360, %v9360
      %v9377 = vmul.f32 %v9361, %v9361
      %v9378 = vmul.f32 %v9362, %v9362
      %v9379 = vmul.f32 %v9363, %v9363
      %v9380 = vmul.f32 %v9364, %v9364
      %v9381 = vmul.f32 %v9365, %v9365
      %v9382 = vmul.f32 %v9366, %v9366
      %v9383 = vmul.f32 %v9367, %v9367
      %v9384 = vmul.f32 %v9368, %v9368
      %v9385 = vmul.f32 %v9369, %v9369
      %v9386 = vmul.f32 %v9370, %v9370
      %v9387 = vmul.f32 %v9371, %v9371
      %v9388 = vsel %vm878, %v9372, 0.0
      %9389 = vadd.xlane.f32.xlu0 %v9388
      %v9390 = vpop.xlane.xlu0 %9389
      %v9391 = vsel %vm878, %v9373, 0.0
      %9392 = vadd.xlane.f32.xlu0 %v9391
      %v9393 = vpop.xlane.xlu0 %9392
      %v9394 = vsel %vm878, %v9374, 0.0
      %9395 = vadd.xlane.f32.xlu0 %v9394
      %v9396 = vpop.xlane.xlu0 %9395
      %v9397 = vsel %vm878, %v9375, 0.0
      %9398 = vadd.xlane.f32.xlu0 %v9397
      %v9399 = vpop.xlane.xlu0 %9398
      %v9400 = vsel %vm878, %v9376, 0.0
      %9401 = vadd.xlane.f32.xlu0 %v9400
      %v9402 = vpop.xlane.xlu0 %9401
      %v9403 = vsel %vm878, %v9377, 0.0
      %9404 = vadd.xlane.f32.xlu0 %v9403
      %v9405 = vpop.xlane.xlu0 %9404
      %v9406 = vsel %vm878, %v9378, 0.0
      %9407 = vadd.xlane.f32.xlu0 %v9406
      %v9408 = vpop.xlane.xlu0 %9407
      %v9409 = vsel %vm878, %v9379, 0.0
      %9410 = vadd.xlane.f32.xlu0 %v9409
      %v9411 = vpop.xlane.xlu0 %9410
      %v9412 = vsel %vm878, %v9380, 0.0
      %9413 = vadd.xlane.f32.xlu0 %v9412
      %v9414 = vpop.xlane.xlu0 %9413
      %v9415 = vsel %vm878, %v9381, 0.0
      %9416 = vadd.xlane.f32.xlu0 %v9415
      %v9417 = vpop.xlane.xlu0 %9416
      %v9418 = vsel %vm878, %v9382, 0.0
      %9419 = vadd.xlane.f32.xlu0 %v9418
      %v9420 = vpop.xlane.xlu0 %9419
      %v9421 = vsel %vm878, %v9383, 0.0
      %9422 = vadd.xlane.f32.xlu0 %v9421
      %v9423 = vpop.xlane.xlu0 %9422
      %v9424 = vsel %vm878, %v9384, 0.0
      %9425 = vadd.xlane.f32.xlu0 %v9424
      %v9426 = vpop.xlane.xlu0 %9425
      %v9427 = vsel %vm878, %v9385, 0.0
      %9428 = vadd.xlane.f32.xlu0 %v9427
      %v9429 = vpop.xlane.xlu0 %9428
      %v9430 = vsel %vm878, %v9386, 0.0
      %9431 = vadd.xlane.f32.xlu0 %v9430
      %v9432 = vpop.xlane.xlu0 %9431
      %v9433 = vsel %vm878, %v9387, 0.0
      %9434 = vadd.xlane.f32.xlu0 %v9433
      %v9435 = vpop.xlane.xlu0 %9434
      %v9436 = vmul.f32 %v9390, %v4685
      %v9437 = vmul.f32 %v9393, %v4685
      %v9438 = vmul.f32 %v9396, %v4685
      %v9439 = vmul.f32 %v9399, %v4685
      %v9440 = vmul.f32 %v9402, %v4685
      %v9441 = vmul.f32 %v9405, %v4685
      %v9442 = vmul.f32 %v9408, %v4685
      %v9443 = vmul.f32 %v9411, %v4685
      %v9444 = vmul.f32 %v9414, %v4685
      %v9445 = vmul.f32 %v9417, %v4685
      %v9446 = vmul.f32 %v9420, %v4685
      %v9447 = vmul.f32 %v9423, %v4685
      %v9448 = vmul.f32 %v9426, %v4685
      %v9449 = vmul.f32 %v9429, %v4685
      %v9450 = vmul.f32 %v9432, %v4685
      %v9451 = vmul.f32 %v9435, %v4685
      %v9452 = vadd.f32 %v9436, 1e-05
      %v9453 = vadd.f32 %v9437, 1e-05
      %v9454 = vadd.f32 %v9438, 1e-05
      %v9455 = vadd.f32 %v9439, 1e-05
      %v9456 = vadd.f32 %v9440, 1e-05
      %v9457 = vadd.f32 %v9441, 1e-05
      %v9458 = vadd.f32 %v9442, 1e-05
      %v9459 = vadd.f32 %v9443, 1e-05
      %v9460 = vadd.f32 %v9444, 1e-05
      %v9461 = vadd.f32 %v9445, 1e-05
      %v9462 = vadd.f32 %v9446, 1e-05
      %v9463 = vadd.f32 %v9447, 1e-05
      %v9464 = vadd.f32 %v9448, 1e-05
      %v9465 = vadd.f32 %v9449, 1e-05
      %v9466 = vadd.f32 %v9450, 1e-05
      %v9467 = vadd.f32 %v9451, 1e-05
      %v9468 = vrsqrt.pop %v9452
      %v9469 = vrsqrt.pop %v9453
      %v9470 = vrsqrt.pop %v9454
      %v9471 = vrsqrt.pop %v9455
      %v9472 = vrsqrt.pop %v9456
      %v9473 = vrsqrt.pop %v9457
      %v9474 = vrsqrt.pop %v9458
      %v9475 = vrsqrt.pop %v9459
      %v9476 = vrsqrt.pop %v9460
      %v9477 = vrsqrt.pop %v9461
      %v9478 = vrsqrt.pop %v9462
      %v9479 = vrsqrt.pop %v9463
      %v9480 = vrsqrt.pop %v9464
      %v9481 = vrsqrt.pop %v9465
      %v9482 = vrsqrt.pop %v9466
      %v9483 = vrsqrt.pop %v9467
      %v9484 = vmul.f32 %v9356, %v9468
      %v9485 = vmul.f32 %v9357, %v9469
      %v9486 = vmul.f32 %v9358, %v9470
      %v9487 = vmul.f32 %v9359, %v9471
      %v9488 = vmul.f32 %v9360, %v9472
      %v9489 = vmul.f32 %v9361, %v9473
      %v9490 = vmul.f32 %v9362, %v9474
      %v9491 = vmul.f32 %v9363, %v9475
      %v9492 = vmul.f32 %v9364, %v9476
      %v9493 = vmul.f32 %v9365, %v9477
      %v9494 = vmul.f32 %v9366, %v9478
      %v9495 = vmul.f32 %v9367, %v9479
      %v9496 = vmul.f32 %v9368, %v9480
      %v9497 = vmul.f32 %v9369, %v9481
      %v9498 = vmul.f32 %v9370, %v9482
      %v9499 = vmul.f32 %v9371, %v9483
      %v9501 = vlaneseq
      %v9502 = vshrl.u32 %v9501, 7
      %v9503 = vsub.s32 0, %v9502
      %v9504 = vrot.slane %v9289, %v9503
      %v9506 = vmul.f32 %v9484, %v9504
      %v9507 = vmul.f32 %v9485, %v9504
      %v9508 = vmul.f32 %v9486, %v9504
      %v9509 = vmul.f32 %v9487, %v9504
      %v9510 = vmul.f32 %v9488, %v9504
      %v9511 = vmul.f32 %v9489, %v9504
      %v9512 = vmul.f32 %v9490, %v9504
      %v9513 = vmul.f32 %v9491, %v9504
      %v9514 = vmul.f32 %v9492, %v9504
      %v9515 = vmul.f32 %v9493, %v9504
      %v9516 = vmul.f32 %v9494, %v9504
      %v9517 = vmul.f32 %v9495, %v9504
      %v9518 = vmul.f32 %v9496, %v9504
      %v9519 = vmul.f32 %v9497, %v9504
      %v9520 = vmul.f32 %v9498, %v9504
      %v9521 = vmul.f32 %v9499, %v9504
      %v9523 = vlaneseq
      %v9524 = vshrl.u32 %v9523, 7
      %v9525 = vsub.s32 0, %v9524
      %v9526 = vrot.slane %v9291, %v9525
      %v9528 = vadd.f32 %v9506, %v9526
      %v9529 = vadd.f32 %v9507, %v9526
      %v9530 = vadd.f32 %v9508, %v9526
      %v9531 = vadd.f32 %v9509, %v9526
      %v9532 = vadd.f32 %v9510, %v9526
      %v9533 = vadd.f32 %v9511, %v9526
      %v9534 = vadd.f32 %v9512, %v9526
      %v9535 = vadd.f32 %v9513, %v9526
      %v9536 = vadd.f32 %v9514, %v9526
      %v9537 = vadd.f32 %v9515, %v9526
      %v9538 = vadd.f32 %v9516, %v9526
      %v9539 = vadd.f32 %v9517, %v9526
      %v9540 = vadd.f32 %v9518, %v9526
      %v9541 = vadd.f32 %v9519, %v9526
      %v9542 = vadd.f32 %v9520, %v9526
      %v9543 = vadd.f32 %v9521, %v9526
      %s9544 = scalar_lea.vmem %s11, 16
      %v9545 = vld [vmem:[%s9544] sm:$0xf]
      %v9546 = vld [vmem:[%s9544 + $0x4] sm:$0xf]
      %v9547 = vld [vmem:[%s9544 + $0x8] sm:$0xf]
      %v9548 = vld [vmem:[%s9544 + $0xc] sm:$0xf]
      %v9549 = vpack.c.bf16 %v9529, %v9528
      %v9550 = vpack.c.bf16 %v9531, %v9530
      %v9551 = vpack.c.bf16 %v9533, %v9532
      %v9552 = vpack.c.bf16 %v9535, %v9534
      %v9553 = vpack.c.bf16 %v9537, %v9536
      %v9554 = vpack.c.bf16 %v9539, %v9538
      %v9555 = vpack.c.bf16 %v9541, %v9540
      %v9556 = vpack.c.bf16 %v9543, %v9542
      %s9557 = scalar_lea.vmem %s12, 1
      %v9558 = vld [vmem:[%s9557] sm:$0x1]
      %v9560 = vlaneseq
      %v9561 = vshrl.u32 %v9560, 7
      %v9562 = vsub.s32 0, %v9561
      %v9563 = vrot.slane %v9558, %v9562
      %v9569 = vunpack.c.l.b16 %v9545
      %v9570 = vunpack.c.l.b16 %v9546
      %v9571 = vunpack.c.l.b16 %v9547
      %v9572 = vunpack.c.l.b16 %v9548
      %v9573 = vpack.c.b16 %v9570, %v9569
      %v9574 = vpack.c.b16 %v9572, %v9571
      %v9578 = vsel %vm878, %v9549, 0
      %v9581 = vsel %vm878, %v9550, 0
      %v9584 = vsel %vm878, %v9551, 0
      %v9587 = vsel %vm878, %v9552, 0
      %v9590 = vsel %vm878, %v9553, 0
      %v9593 = vsel %vm878, %v9554, 0
      %v9596 = vsel %vm878, %v9555, 0
      %v9599 = vsel %vm878, %v9556, 0
      %9601 = vmatprep.subr.bf16.mxu0 0
      %9602 = vmatpush1.bf16.msra.mxu0 0
      %9603 = vmatprep.subr.bf16.mxu0 0
      %9604 = vmatpush1.bf16.msra.mxu0 0
      %9605 = vmatprep.subr.bf16.mxu0 0
      %9606 = vmatpush1.bf16.msra.mxu0 0
      %9607 = vmatprep.subr.bf16.mxu0 0
      %9608 = vmatpush1.bf16.msra.mxu0 0
      %9609 = vmatprep.subr.bf16.mxu0 0
      %9610 = vmatpush1.bf16.msra.mxu0 0
      %9611 = vmatprep.subr.bf16.mxu0 0
      %9612 = vmatpush1.bf16.msra.mxu0 0
      %9613 = vmatprep.subr.bf16.mxu0 0
      %9614 = vmatpush1.bf16.msra.mxu0 %v9574
      %9615 = vmatprep.subr.bf16.mxu0 0
      %9616 = vmatpush1.bf16.msra.mxu0 %v9573
      %9617 = vmatprep.subr.bf16.mxu0 0
      %9618 = vmatpush2.bf16.msra.mxu0 0
      %9619 = vmatprep.subr.bf16.mxu0 0
      %9620 = vmatpush2.bf16.msra.mxu0 0
      %9621 = vmatprep.subr.bf16.mxu0 0
      %9622 = vmatpush2.bf16.msra.mxu0 0
      %9623 = vmatprep.subr.bf16.mxu0 0
      %9624 = vmatpush2.bf16.msra.mxu0 0
      %9625 = vmatprep.subr.bf16.mxu0 0
      %9626 = vmatpush2.bf16.msra.mxu0 0
      %9627 = vmatprep.subr.bf16.mxu0 0
      %9628 = vmatpush2.bf16.msra.mxu0 0
      %9629 = vmatprep.subr.bf16.mxu0 0
      %9630 = vmatpush2.bf16.msra.mxu0 0
      %9631 = vmatprep.subr.bf16.mxu0 0
      %9632 = vmatpush2.bf16.msra.mxu0 0
      %9633 = vmatprep.mubr.bf16.mxu0 0
      %9634 = vmatmul.mubr.bf16.gmra.mxu0 %v9578
      %v9635 = vpop.f32.mrf.mxu0
      %v9636 = vadd.f32 %v9563, %v9635
      %v9637 = vpop.f32.mrf.mxu0
      %v9638 = vpop.f32.mrf.mxu0
      %v9639 = vadd.f32 %v9563, %v9638
      %v9640 = vpop.f32.mrf.mxu0
      %9641 = vmatprep.mubr.bf16.mxu0 0
      %9642 = vmatmul.mubr.bf16.gmra.mxu0 %v9581
      %v9643 = vpop.f32.mrf.mxu0
      %v9644 = vadd.f32 %v9563, %v9643
      %v9645 = vpop.f32.mrf.mxu0
      %v9646 = vpop.f32.mrf.mxu0
      %v9647 = vadd.f32 %v9563, %v9646
      %v9648 = vpop.f32.mrf.mxu0
      %9649 = vmatprep.mubr.bf16.mxu0 0
      %9650 = vmatmul.mubr.bf16.gmra.mxu0 %v9584
      %v9651 = vpop.f32.mrf.mxu0
      %v9652 = vadd.f32 %v9563, %v9651
      %v9653 = vpop.f32.mrf.mxu0
      %v9654 = vpop.f32.mrf.mxu0
      %v9655 = vadd.f32 %v9563, %v9654
      %v9656 = vpop.f32.mrf.mxu0
      %9657 = vmatprep.mubr.bf16.mxu0 0
      %9658 = vmatmul.mubr.bf16.gmra.mxu0 %v9587
      %v9659 = vpop.f32.mrf.mxu0
      %v9660 = vadd.f32 %v9563, %v9659
      %v9661 = vpop.f32.mrf.mxu0
      %v9662 = vpop.f32.mrf.mxu0
      %v9663 = vadd.f32 %v9563, %v9662
      %v9664 = vpop.f32.mrf.mxu0
      %9665 = vmatprep.mubr.bf16.mxu0 0
      %9666 = vmatmul.mubr.bf16.gmra.mxu0 %v9590
      %v9667 = vpop.f32.mrf.mxu0
      %v9668 = vadd.f32 %v9563, %v9667
      %v9669 = vpop.f32.mrf.mxu0
      %v9670 = vpop.f32.mrf.mxu0
      %v9671 = vadd.f32 %v9563, %v9670
      %v9672 = vpop.f32.mrf.mxu0
      %9673 = vmatprep.mubr.bf16.mxu0 0
      %9674 = vmatmul.mubr.bf16.gmra.mxu0 %v9593
      %v9675 = vpop.f32.mrf.mxu0
      %v9676 = vadd.f32 %v9563, %v9675
      %v9677 = vpop.f32.mrf.mxu0
      %v9678 = vpop.f32.mrf.mxu0
      %v9679 = vadd.f32 %v9563, %v9678
      %v9680 = vpop.f32.mrf.mxu0
      %9681 = vmatprep.mubr.bf16.mxu0 0
      %9682 = vmatmul.mubr.bf16.gmra.mxu0 %v9596
      %v9683 = vpop.f32.mrf.mxu0
      %v9684 = vadd.f32 %v9563, %v9683
      %v9685 = vpop.f32.mrf.mxu0
      %v9686 = vpop.f32.mrf.mxu0
      %v9687 = vadd.f32 %v9563, %v9686
      %v9688 = vpop.f32.mrf.mxu0
      %9689 = vmatprep.mubr.bf16.mxu0 0
      %9690 = vmatmul.mubr.bf16.gmra.mxu0 %v9599
      %v9691 = vpop.f32.mrf.mxu0
      %v9692 = vadd.f32 %v9563, %v9691
      %v9693 = vpop.f32.mrf.mxu0
      %v9694 = vpop.f32.mrf.mxu0
      %v9695 = vadd.f32 %v9563, %v9694
      %v9696 = vpop.f32.mrf.mxu0
      %9697 = vdwg.mxu0
      %v9698 = vmax.f32 %v9636, 0.0
      %v9699 = vmax.f32 %v9639, 0.0
      %v9700 = vmax.f32 %v9644, 0.0
      %v9701 = vmax.f32 %v9647, 0.0
      %v9702 = vmax.f32 %v9652, 0.0
      %v9703 = vmax.f32 %v9655, 0.0
      %v9704 = vmax.f32 %v9660, 0.0
      %v9705 = vmax.f32 %v9663, 0.0
      %v9706 = vmax.f32 %v9668, 0.0
      %v9707 = vmax.f32 %v9671, 0.0
      %v9708 = vmax.f32 %v9676, 0.0
      %v9709 = vmax.f32 %v9679, 0.0
      %v9710 = vmax.f32 %v9684, 0.0
      %v9711 = vmax.f32 %v9687, 0.0
      %v9712 = vmax.f32 %v9692, 0.0
      %v9713 = vmax.f32 %v9695, 0.0
      %s9714 = scalar_lea.vmem %s13, 64
      %v9715 = vld [vmem:[%s9714] sm:$0xf]
      %v9716 = vld [vmem:[%s9714 + $0x4] sm:$0xf]
      %v9717 = vld [vmem:[%s9714 + $0x8] sm:$0xf]
      %v9718 = vld [vmem:[%s9714 + $0xc] sm:$0xf]
      %v9719 = vld [vmem:[%s9714 + $0x10] sm:$0xf]
      %v9720 = vld [vmem:[%s9714 + $0x14] sm:$0xf]
      %v9721 = vld [vmem:[%s9714 + $0x18] sm:$0xf]
      %v9722 = vld [vmem:[%s9714 + $0x1c] sm:$0xf]
      %v9723 = vld [vmem:[%s9714 + $0x20] sm:$0xf]
      %v9724 = vld [vmem:[%s9714 + $0x24] sm:$0xf]
      %v9725 = vld [vmem:[%s9714 + $0x28] sm:$0xf]
      %v9726 = vld [vmem:[%s9714 + $0x2c] sm:$0xf]
      %v9727 = vld [vmem:[%s9714 + $0x30] sm:$0xf]
      %v9728 = vld [vmem:[%s9714 + $0x34] sm:$0xf]
      %v9729 = vld [vmem:[%s9714 + $0x38] sm:$0xf]
      %v9730 = vld [vmem:[%s9714 + $0x3c] sm:$0xf]
      %v9731 = vpack.c.bf16 %v9699, %v9698
      %v9732 = vpack.c.bf16 %v9701, %v9700
      %v9733 = vpack.c.bf16 %v9703, %v9702
      %v9734 = vpack.c.bf16 %v9705, %v9704
      %v9735 = vpack.c.bf16 %v9707, %v9706
      %v9736 = vpack.c.bf16 %v9709, %v9708
      %v9737 = vpack.c.bf16 %v9711, %v9710
      %v9738 = vpack.c.bf16 %v9713, %v9712
      %s9739 = scalar_lea.vmem %s14, 1
      %v9740 = vld [vmem:[%s9739] sm:$0x1]
      %v9742 = vlaneseq
      %v9743 = vshrl.u32 %v9742, 7
      %v9744 = vsub.s32 0, %v9743
      %v9745 = vrot.slane %v9740, %v9744
      %v9763 = vunpack.c.l.b16 %v9715
      %v9764 = vunpack.c.l.b16 %v9716
      %v9765 = vunpack.c.l.b16 %v9717
      %v9766 = vunpack.c.l.b16 %v9718
      %v9767 = vunpack.c.l.b16 %v9719
      %v9768 = vunpack.c.l.b16 %v9720
      %v9769 = vunpack.c.l.b16 %v9721
      %v9770 = vunpack.c.l.b16 %v9722
      %v9771 = vunpack.c.l.b16 %v9723
      %v9772 = vunpack.c.l.b16 %v9724
      %v9773 = vunpack.c.l.b16 %v9725
      %v9774 = vunpack.c.l.b16 %v9726
      %v9775 = vunpack.c.l.b16 %v9727
      %v9776 = vunpack.c.l.b16 %v9728
      %v9777 = vunpack.c.l.b16 %v9729
      %v9778 = vunpack.c.l.b16 %v9730
      %v9779 = vpack.c.b16 %v9764, %v9763
      %v9780 = vpack.c.b16 %v9766, %v9765
      %v9781 = vpack.c.b16 %v9768, %v9767
      %v9782 = vpack.c.b16 %v9770, %v9769
      %v9783 = vpack.c.b16 %v9772, %v9771
      %v9784 = vpack.c.b16 %v9774, %v9773
      %v9785 = vpack.c.b16 %v9776, %v9775
      %v9786 = vpack.c.b16 %v9778, %v9777
      %9795 = vmatprep.subr.bf16.mxu0 0
      %9796 = vmatpush1.bf16.msra.mxu0 %v9786
      %9797 = vmatprep.subr.bf16.mxu0 0
      %9798 = vmatpush1.bf16.msra.mxu0 %v9785
      %9799 = vmatprep.subr.bf16.mxu0 0
      %9800 = vmatpush1.bf16.msra.mxu0 %v9784
      %9801 = vmatprep.subr.bf16.mxu0 0
      %9802 = vmatpush1.bf16.msra.mxu0 %v9783
      %9803 = vmatprep.subr.bf16.mxu0 0
      %9804 = vmatpush1.bf16.msra.mxu0 %v9782
      %9805 = vmatprep.subr.bf16.mxu0 0
      %9806 = vmatpush1.bf16.msra.mxu0 %v9781
      %9807 = vmatprep.subr.bf16.mxu0 0
      %9808 = vmatpush1.bf16.msra.mxu0 %v9780
      %9809 = vmatprep.subr.bf16.mxu0 0
      %9810 = vmatpush1.bf16.msra.mxu0 %v9779
      %9811 = vmatprep.subr.bf16.mxu0 0
      %9812 = vmatpush2.bf16.msra.mxu0 0
      %9813 = vmatprep.subr.bf16.mxu0 0
      %9814 = vmatpush2.bf16.msra.mxu0 0
      %9815 = vmatprep.subr.bf16.mxu0 0
      %9816 = vmatpush2.bf16.msra.mxu0 0
      %9817 = vmatprep.subr.bf16.mxu0 0
      %9818 = vmatpush2.bf16.msra.mxu0 0
      %9819 = vmatprep.subr.bf16.mxu0 0
      %9820 = vmatpush2.bf16.msra.mxu0 0
      %9821 = vmatprep.subr.bf16.mxu0 0
      %9822 = vmatpush2.bf16.msra.mxu0 0
      %9823 = vmatprep.subr.bf16.mxu0 0
      %9824 = vmatpush2.bf16.msra.mxu0 0
      %9825 = vmatprep.subr.bf16.mxu0 0
      %9826 = vmatpush2.bf16.msra.mxu0 0
      %9827 = vmatprep.mubr.bf16.mxu0 0
      %9828 = vmatmul.mubr.bf16.gmra.mxu0 %v9731
      %v9829 = vpop.f32.mrf.mxu0
      %v9830 = vadd.f32 %v9745, %v9829
      %v9831 = vpop.f32.mrf.mxu0
      %v9832 = vpop.f32.mrf.mxu0
      %v9833 = vadd.f32 %v9745, %v9832
      %v9834 = vpop.f32.mrf.mxu0
      %9835 = vmatprep.mubr.bf16.mxu0 0
      %9836 = vmatmul.mubr.bf16.gmra.mxu0 %v9732
      %v9837 = vpop.f32.mrf.mxu0
      %v9838 = vadd.f32 %v9745, %v9837
      %v9839 = vpop.f32.mrf.mxu0
      %v9840 = vpop.f32.mrf.mxu0
      %v9841 = vadd.f32 %v9745, %v9840
      %v9842 = vpop.f32.mrf.mxu0
      %9843 = vmatprep.mubr.bf16.mxu0 0
      %9844 = vmatmul.mubr.bf16.gmra.mxu0 %v9733
      %v9845 = vpop.f32.mrf.mxu0
      %v9846 = vadd.f32 %v9745, %v9845
      %v9847 = vpop.f32.mrf.mxu0
      %v9848 = vpop.f32.mrf.mxu0
      %v9849 = vadd.f32 %v9745, %v9848
      %v9850 = vpop.f32.mrf.mxu0
      %9851 = vmatprep.mubr.bf16.mxu0 0
      %9852 = vmatmul.mubr.bf16.gmra.mxu0 %v9734
      %v9853 = vpop.f32.mrf.mxu0
      %v9854 = vadd.f32 %v9745, %v9853
      %v9855 = vpop.f32.mrf.mxu0
      %v9856 = vpop.f32.mrf.mxu0
      %v9857 = vadd.f32 %v9745, %v9856
      %v9858 = vpop.f32.mrf.mxu0
      %9859 = vmatprep.mubr.bf16.mxu0 0
      %9860 = vmatmul.mubr.bf16.gmra.mxu0 %v9735
      %v9861 = vpop.f32.mrf.mxu0
      %v9862 = vadd.f32 %v9745, %v9861
      %v9863 = vpop.f32.mrf.mxu0
      %v9864 = vpop.f32.mrf.mxu0
      %v9865 = vadd.f32 %v9745, %v9864
      %v9866 = vpop.f32.mrf.mxu0
      %9867 = vmatprep.mubr.bf16.mxu0 0
      %9868 = vmatmul.mubr.bf16.gmra.mxu0 %v9736
      %v9869 = vpop.f32.mrf.mxu0
      %v9870 = vadd.f32 %v9745, %v9869
      %v9871 = vpop.f32.mrf.mxu0
      %v9872 = vpop.f32.mrf.mxu0
      %v9873 = vadd.f32 %v9745, %v9872
      %v9874 = vpop.f32.mrf.mxu0
      %9875 = vmatprep.mubr.bf16.mxu0 0
      %9876 = vmatmul.mubr.bf16.gmra.mxu0 %v9737
      %v9877 = vpop.f32.mrf.mxu0
      %v9878 = vadd.f32 %v9745, %v9877
      %v9879 = vpop.f32.mrf.mxu0
      %v9880 = vpop.f32.mrf.mxu0
      %v9881 = vadd.f32 %v9745, %v9880
      %v9882 = vpop.f32.mrf.mxu0
      %9883 = vmatprep.mubr.bf16.mxu0 0
      %9884 = vmatmul.mubr.bf16.gmra.mxu0 %v9738
      %v9885 = vpop.f32.mrf.mxu0
      %v9886 = vadd.f32 %v9745, %v9885
      %v9887 = vpop.f32.mrf.mxu0
      %v9888 = vpop.f32.mrf.mxu0
      %v9889 = vadd.f32 %v9745, %v9888
      %v9890 = vpop.f32.mrf.mxu0
      %9891 = vdwg.mxu0
      %v9892 = vadd.f32 %v9528, %v9830
      %v9893 = vadd.f32 %v9529, %v9833
      %v9894 = vadd.f32 %v9530, %v9838
      %v9895 = vadd.f32 %v9531, %v9841
      %v9896 = vadd.f32 %v9532, %v9846
      %v9897 = vadd.f32 %v9533, %v9849
      %v9898 = vadd.f32 %v9534, %v9854
      %v9899 = vadd.f32 %v9535, %v9857
      %v9900 = vadd.f32 %v9536, %v9862
      %v9901 = vadd.f32 %v9537, %v9865
      %v9902 = vadd.f32 %v9538, %v9870
      %v9903 = vadd.f32 %v9539, %v9873
      %v9904 = vadd.f32 %v9540, %v9878
      %v9905 = vadd.f32 %v9541, %v9881
      %v9906 = vadd.f32 %v9542, %v9886
      %v9907 = vadd.f32 %v9543, %v9889
      %s9908 = scalar_lea.vmem %s15, 1
      %v9909 = vld [vmem:[%s9908] sm:$0x1]
      %s9910 = scalar_lea.vmem %s16, 1
      %v9911 = vld [vmem:[%s9910] sm:$0x1]
      %v9912 = vsel %vm878, %v9892, 0.0
      %9913 = vadd.xlane.f32.xlu0 %v9912
      %v9914 = vpop.xlane.xlu0 %9913
      %v9915 = vsel %vm878, %v9893, 0.0
      %9916 = vadd.xlane.f32.xlu0 %v9915
      %v9917 = vpop.xlane.xlu0 %9916
      %v9918 = vsel %vm878, %v9894, 0.0
      %9919 = vadd.xlane.f32.xlu0 %v9918
      %v9920 = vpop.xlane.xlu0 %9919
      %v9921 = vsel %vm878, %v9895, 0.0
      %9922 = vadd.xlane.f32.xlu0 %v9921
      %v9923 = vpop.xlane.xlu0 %9922
      %v9924 = vsel %vm878, %v9896, 0.0
      %9925 = vadd.xlane.f32.xlu0 %v9924
      %v9926 = vpop.xlane.xlu0 %9925
      %v9927 = vsel %vm878, %v9897, 0.0
      %9928 = vadd.xlane.f32.xlu0 %v9927
      %v9929 = vpop.xlane.xlu0 %9928
      %v9930 = vsel %vm878, %v9898, 0.0
      %9931 = vadd.xlane.f32.xlu0 %v9930
      %v9932 = vpop.xlane.xlu0 %9931
      %v9933 = vsel %vm878, %v9899, 0.0
      %9934 = vadd.xlane.f32.xlu0 %v9933
      %v9935 = vpop.xlane.xlu0 %9934
      %v9936 = vsel %vm878, %v9900, 0.0
      %9937 = vadd.xlane.f32.xlu0 %v9936
      %v9938 = vpop.xlane.xlu0 %9937
      %v9939 = vsel %vm878, %v9901, 0.0
      %9940 = vadd.xlane.f32.xlu0 %v9939
      %v9941 = vpop.xlane.xlu0 %9940
      %v9942 = vsel %vm878, %v9902, 0.0
      %9943 = vadd.xlane.f32.xlu0 %v9942
      %v9944 = vpop.xlane.xlu0 %9943
      %v9945 = vsel %vm878, %v9903, 0.0
      %9946 = vadd.xlane.f32.xlu0 %v9945
      %v9947 = vpop.xlane.xlu0 %9946
      %v9948 = vsel %vm878, %v9904, 0.0
      %9949 = vadd.xlane.f32.xlu0 %v9948
      %v9950 = vpop.xlane.xlu0 %9949
      %v9951 = vsel %vm878, %v9905, 0.0
      %9952 = vadd.xlane.f32.xlu0 %v9951
      %v9953 = vpop.xlane.xlu0 %9952
      %v9954 = vsel %vm878, %v9906, 0.0
      %9955 = vadd.xlane.f32.xlu0 %v9954
      %v9956 = vpop.xlane.xlu0 %9955
      %v9957 = vsel %vm878, %v9907, 0.0
      %9958 = vadd.xlane.f32.xlu0 %v9957
      %v9959 = vpop.xlane.xlu0 %9958
      %v9960 = vmul.f32 %v9914, %v4685
      %v9961 = vmul.f32 %v9917, %v4685
      %v9962 = vmul.f32 %v9920, %v4685
      %v9963 = vmul.f32 %v9923, %v4685
      %v9964 = vmul.f32 %v9926, %v4685
      %v9965 = vmul.f32 %v9929, %v4685
      %v9966 = vmul.f32 %v9932, %v4685
      %v9967 = vmul.f32 %v9935, %v4685
      %v9968 = vmul.f32 %v9938, %v4685
      %v9969 = vmul.f32 %v9941, %v4685
      %v9970 = vmul.f32 %v9944, %v4685
      %v9971 = vmul.f32 %v9947, %v4685
      %v9972 = vmul.f32 %v9950, %v4685
      %v9973 = vmul.f32 %v9953, %v4685
      %v9974 = vmul.f32 %v9956, %v4685
      %v9975 = vmul.f32 %v9959, %v4685
      %v9976 = vsub.f32 %v9892, %v9960
      %v9977 = vsub.f32 %v9893, %v9961
      %v9978 = vsub.f32 %v9894, %v9962
      %v9979 = vsub.f32 %v9895, %v9963
      %v9980 = vsub.f32 %v9896, %v9964
      %v9981 = vsub.f32 %v9897, %v9965
      %v9982 = vsub.f32 %v9898, %v9966
      %v9983 = vsub.f32 %v9899, %v9967
      %v9984 = vsub.f32 %v9900, %v9968
      %v9985 = vsub.f32 %v9901, %v9969
      %v9986 = vsub.f32 %v9902, %v9970
      %v9987 = vsub.f32 %v9903, %v9971
      %v9988 = vsub.f32 %v9904, %v9972
      %v9989 = vsub.f32 %v9905, %v9973
      %v9990 = vsub.f32 %v9906, %v9974
      %v9991 = vsub.f32 %v9907, %v9975
      %v9992 = vmul.f32 %v9976, %v9976
      %v9993 = vmul.f32 %v9977, %v9977
      %v9994 = vmul.f32 %v9978, %v9978
      %v9995 = vmul.f32 %v9979, %v9979
      %v9996 = vmul.f32 %v9980, %v9980
      %v9997 = vmul.f32 %v9981, %v9981
      %v9998 = vmul.f32 %v9982, %v9982
      %v9999 = vmul.f32 %v9983, %v9983
      %v10000 = vmul.f32 %v9984, %v9984
      %v10001 = vmul.f32 %v9985, %v9985
      %v10002 = vmul.f32 %v9986, %v9986
      %v10003 = vmul.f32 %v9987, %v9987
      %v10004 = vmul.f32 %v9988, %v9988
      %v10005 = vmul.f32 %v9989, %v9989
      %v10006 = vmul.f32 %v9990, %v9990
      %v10007 = vmul.f32 %v9991, %v9991
      %v10008 = vsel %vm878, %v9992, 0.0
      %10009 = vadd.xlane.f32.xlu0 %v10008
      %v10010 = vpop.xlane.xlu0 %10009
      %v10011 = vsel %vm878, %v9993, 0.0
      %10012 = vadd.xlane.f32.xlu0 %v10011
      %v10013 = vpop.xlane.xlu0 %10012
      %v10014 = vsel %vm878, %v9994, 0.0
      %10015 = vadd.xlane.f32.xlu0 %v10014
      %v10016 = vpop.xlane.xlu0 %10015
      %v10017 = vsel %vm878, %v9995, 0.0
      %10018 = vadd.xlane.f32.xlu0 %v10017
      %v10019 = vpop.xlane.xlu0 %10018
      %v10020 = vsel %vm878, %v9996, 0.0
      %10021 = vadd.xlane.f32.xlu0 %v10020
      %v10022 = vpop.xlane.xlu0 %10021
      %v10023 = vsel %vm878, %v9997, 0.0
      %10024 = vadd.xlane.f32.xlu0 %v10023
      %v10025 = vpop.xlane.xlu0 %10024
      %v10026 = vsel %vm878, %v9998, 0.0
      %10027 = vadd.xlane.f32.xlu0 %v10026
      %v10028 = vpop.xlane.xlu0 %10027
      %v10029 = vsel %vm878, %v9999, 0.0
      %10030 = vadd.xlane.f32.xlu0 %v10029
      %v10031 = vpop.xlane.xlu0 %10030
      %v10032 = vsel %vm878, %v10000, 0.0
      %10033 = vadd.xlane.f32.xlu0 %v10032
      %v10034 = vpop.xlane.xlu0 %10033
      %v10035 = vsel %vm878, %v10001, 0.0
      %10036 = vadd.xlane.f32.xlu0 %v10035
      %v10037 = vpop.xlane.xlu0 %10036
      %v10038 = vsel %vm878, %v10002, 0.0
      %10039 = vadd.xlane.f32.xlu0 %v10038
      %v10040 = vpop.xlane.xlu0 %10039
      %v10041 = vsel %vm878, %v10003, 0.0
      %10042 = vadd.xlane.f32.xlu0 %v10041
      %v10043 = vpop.xlane.xlu0 %10042
      %v10044 = vsel %vm878, %v10004, 0.0
      %10045 = vadd.xlane.f32.xlu0 %v10044
      %v10046 = vpop.xlane.xlu0 %10045
      %v10047 = vsel %vm878, %v10005, 0.0
      %10048 = vadd.xlane.f32.xlu0 %v10047
      %v10049 = vpop.xlane.xlu0 %10048
      %v10050 = vsel %vm878, %v10006, 0.0
      %10051 = vadd.xlane.f32.xlu0 %v10050
      %v10052 = vpop.xlane.xlu0 %10051
      %v10053 = vsel %vm878, %v10007, 0.0
      %10054 = vadd.xlane.f32.xlu0 %v10053
      %v10055 = vpop.xlane.xlu0 %10054
      %v10056 = vmul.f32 %v10010, %v4685
      %v10057 = vmul.f32 %v10013, %v4685
      %v10058 = vmul.f32 %v10016, %v4685
      %v10059 = vmul.f32 %v10019, %v4685
      %v10060 = vmul.f32 %v10022, %v4685
      %v10061 = vmul.f32 %v10025, %v4685
      %v10062 = vmul.f32 %v10028, %v4685
      %v10063 = vmul.f32 %v10031, %v4685
      %v10064 = vmul.f32 %v10034, %v4685
      %v10065 = vmul.f32 %v10037, %v4685
      %v10066 = vmul.f32 %v10040, %v4685
      %v10067 = vmul.f32 %v10043, %v4685
      %v10068 = vmul.f32 %v10046, %v4685
      %v10069 = vmul.f32 %v10049, %v4685
      %v10070 = vmul.f32 %v10052, %v4685
      %v10071 = vmul.f32 %v10055, %v4685
      %v10072 = vadd.f32 %v10056, 1e-05
      %v10073 = vadd.f32 %v10057, 1e-05
      %v10074 = vadd.f32 %v10058, 1e-05
      %v10075 = vadd.f32 %v10059, 1e-05
      %v10076 = vadd.f32 %v10060, 1e-05
      %v10077 = vadd.f32 %v10061, 1e-05
      %v10078 = vadd.f32 %v10062, 1e-05
      %v10079 = vadd.f32 %v10063, 1e-05
      %v10080 = vadd.f32 %v10064, 1e-05
      %v10081 = vadd.f32 %v10065, 1e-05
      %v10082 = vadd.f32 %v10066, 1e-05
      %v10083 = vadd.f32 %v10067, 1e-05
      %v10084 = vadd.f32 %v10068, 1e-05
      %v10085 = vadd.f32 %v10069, 1e-05
      %v10086 = vadd.f32 %v10070, 1e-05
      %v10087 = vadd.f32 %v10071, 1e-05
      %v10088 = vrsqrt.pop %v10072
      %v10089 = vrsqrt.pop %v10073
      %v10090 = vrsqrt.pop %v10074
      %v10091 = vrsqrt.pop %v10075
      %v10092 = vrsqrt.pop %v10076
      %v10093 = vrsqrt.pop %v10077
      %v10094 = vrsqrt.pop %v10078
      %v10095 = vrsqrt.pop %v10079
      %v10096 = vrsqrt.pop %v10080
      %v10097 = vrsqrt.pop %v10081
      %v10098 = vrsqrt.pop %v10082
      %v10099 = vrsqrt.pop %v10083
      %v10100 = vrsqrt.pop %v10084
      %v10101 = vrsqrt.pop %v10085
      %v10102 = vrsqrt.pop %v10086
      %v10103 = vrsqrt.pop %v10087
      %v10104 = vmul.f32 %v9976, %v10088
      %v10105 = vmul.f32 %v9977, %v10089
      %v10106 = vmul.f32 %v9978, %v10090
      %v10107 = vmul.f32 %v9979, %v10091
      %v10108 = vmul.f32 %v9980, %v10092
      %v10109 = vmul.f32 %v9981, %v10093
      %v10110 = vmul.f32 %v9982, %v10094
      %v10111 = vmul.f32 %v9983, %v10095
      %v10112 = vmul.f32 %v9984, %v10096
      %v10113 = vmul.f32 %v9985, %v10097
      %v10114 = vmul.f32 %v9986, %v10098
      %v10115 = vmul.f32 %v9987, %v10099
      %v10116 = vmul.f32 %v9988, %v10100
      %v10117 = vmul.f32 %v9989, %v10101
      %v10118 = vmul.f32 %v9990, %v10102
      %v10119 = vmul.f32 %v9991, %v10103
      %v10121 = vlaneseq
      %v10122 = vshrl.u32 %v10121, 7
      %v10123 = vsub.s32 0, %v10122
      %v10124 = vrot.slane %v9909, %v10123
      %v10126 = vmul.f32 %v10104, %v10124
      %v10127 = vmul.f32 %v10105, %v10124
      %v10128 = vmul.f32 %v10106, %v10124
      %v10129 = vmul.f32 %v10107, %v10124
      %v10130 = vmul.f32 %v10108, %v10124
      %v10131 = vmul.f32 %v10109, %v10124
      %v10132 = vmul.f32 %v10110, %v10124
      %v10133 = vmul.f32 %v10111, %v10124
      %v10134 = vmul.f32 %v10112, %v10124
      %v10135 = vmul.f32 %v10113, %v10124
      %v10136 = vmul.f32 %v10114, %v10124
      %v10137 = vmul.f32 %v10115, %v10124
      %v10138 = vmul.f32 %v10116, %v10124
      %v10139 = vmul.f32 %v10117, %v10124
      %v10140 = vmul.f32 %v10118, %v10124
      %v10141 = vmul.f32 %v10119, %v10124
      %v10143 = vlaneseq
      %v10144 = vshrl.u32 %v10143, 7
      %v10145 = vsub.s32 0, %v10144
      %v10146 = vrot.slane %v9911, %v10145
      %v10148 = vadd.f32 %v10126, %v10146
      %v10149 = vadd.f32 %v10127, %v10146
      %v10150 = vadd.f32 %v10128, %v10146
      %v10151 = vadd.f32 %v10129, %v10146
      %v10152 = vadd.f32 %v10130, %v10146
      %v10153 = vadd.f32 %v10131, %v10146
      %v10154 = vadd.f32 %v10132, %v10146
      %v10155 = vadd.f32 %v10133, %v10146
      %v10156 = vadd.f32 %v10134, %v10146
      %v10157 = vadd.f32 %v10135, %v10146
      %v10158 = vadd.f32 %v10136, %v10146
      %v10159 = vadd.f32 %v10137, %v10146
      %v10160 = vadd.f32 %v10138, %v10146
      %v10161 = vadd.f32 %v10139, %v10146
      %v10162 = vadd.f32 %v10140, %v10146
      %v10163 = vadd.f32 %v10141, %v10146
      %v10164 = vld [vmem:[%s2] sm:$0xff]
      %v10165 = vpack.c.bf16 %v10164, %v10164
      %v10166 = vpack.c.bf16 %v10149, %v10148
      %v10167 = vpack.c.bf16 %v10151, %v10150
      %v10168 = vpack.c.bf16 %v10153, %v10152
      %v10169 = vpack.c.bf16 %v10155, %v10154
      %v10170 = vpack.c.bf16 %v10157, %v10156
      %v10171 = vpack.c.bf16 %v10159, %v10158
      %v10172 = vpack.c.bf16 %v10161, %v10160
      %v10173 = vpack.c.bf16 %v10163, %v10162
      %10174 = vmatprep.subr.bf16.mxu0 0
      %10175 = vmatpush1.bf16.msra.mxu0 %v10173
      %10176 = vmatprep.subr.bf16.mxu0 0
      %10177 = vmatpush1.bf16.msra.mxu0 %v10172
      %10178 = vmatprep.subr.bf16.mxu0 0
      %10179 = vmatpush1.bf16.msra.mxu0 %v10171
      %10180 = vmatprep.subr.bf16.mxu0 0
      %10181 = vmatpush1.bf16.msra.mxu0 %v10170
      %10182 = vmatprep.subr.bf16.mxu0 0
      %10183 = vmatpush1.bf16.msra.mxu0 %v10169
      %10184 = vmatprep.subr.bf16.mxu0 0
      %10185 = vmatpush1.bf16.msra.mxu0 %v10168
      %10186 = vmatprep.subr.bf16.mxu0 0
      %10187 = vmatpush1.bf16.msra.mxu0 %v10167
      %10188 = vmatprep.subr.bf16.mxu0 0
      %10189 = vmatpush1.bf16.msra.mxu0 %v10166
      %10190 = vmatprep.subr.bf16.mxu0 0
      %10191 = vmatpush2.bf16.msra.mxu0 0
      %10192 = vmatprep.subr.bf16.mxu0 0
      %10193 = vmatpush2.bf16.msra.mxu0 0
      %10194 = vmatprep.subr.bf16.mxu0 0
      %10195 = vmatpush2.bf16.msra.mxu0 0
      %10196 = vmatprep.subr.bf16.mxu0 0
      %10197 = vmatpush2.bf16.msra.mxu0 0
      %10198 = vmatprep.subr.bf16.mxu0 0
      %10199 = vmatpush2.bf16.msra.mxu0 0
      %10200 = vmatprep.subr.bf16.mxu0 0
      %10201 = vmatpush2.bf16.msra.mxu0 0
      %10202 = vmatprep.subr.bf16.mxu0 0
      %10203 = vmatpush2.bf16.msra.mxu0 0
      %10204 = vmatprep.subr.bf16.mxu0 0
      %10205 = vmatpush2.bf16.msra.mxu0 0
      %10206 = vmatprep.mubr.bf16.mxu0 0
      %10207 = vmatmul.mubr.bf16.gmra.mxu0 %v10165
      %v10208 = vpop.f32.mrf.mxu0
      %v10209 = vadd.f32 0.0, %v10208
      %v10210 = vpop.f32.mrf.mxu0
      %v10211 = vpop.f32.mrf.mxu0
      %v10212 = vpop.f32.mrf.mxu0
      %10213 = vdwg.mxu0
      %v10214 = vld [vmem:[%s17] sm:$0xf]
      %v10215 = vld [vmem:[%s17 + $0x4] sm:$0xf]
      %v10216 = vld [vmem:[%s17 + $0x8] sm:$0xf]
      %v10217 = vld [vmem:[%s17 + $0xc] sm:$0xf]
      %v10218 = vpack.c.bf16 %v10209, %v10209
      %v10219 = vld [vmem:[%s18] sm:$0x1]
      %v10221 = vlaneseq
      %v10222 = vshrl.u32 %v10221, 7
      %v10223 = vsub.s32 0, %v10222
      %v10224 = vrot.slane %v10219, %v10223
      %v10230 = vunpack.c.l.b16 %v10214
      %v10231 = vunpack.c.l.b16 %v10215
      %v10232 = vunpack.c.l.b16 %v10216
      %v10233 = vunpack.c.l.b16 %v10217
      %v10234 = vpack.c.b16 %v10231, %v10230
      %v10235 = vpack.c.b16 %v10233, %v10232
      %v10239 = vsel %vm878, %v10218, 0
      %10241 = vmatprep.subr.bf16.mxu0 0
      %10242 = vmatpush1.bf16.msra.mxu0 0
      %10243 = vmatprep.subr.bf16.mxu0 0
      %10244 = vmatpush1.bf16.msra.mxu0 0
      %10245 = vmatprep.subr.bf16.mxu0 0
      %10246 = vmatpush1.bf16.msra.mxu0 0
      %10247 = vmatprep.subr.bf16.mxu0 0
      %10248 = vmatpush1.bf16.msra.mxu0 0
      %10249 = vmatprep.subr.bf16.mxu0 0
      %10250 = vmatpush1.bf16.msra.mxu0 0
      %10251 = vmatprep.subr.bf16.mxu0 0
      %10252 = vmatpush1.bf16.msra.mxu0 0
      %10253 = vmatprep.subr.bf16.mxu0 0
      %10254 = vmatpush1.bf16.msra.mxu0 %v10235
      %10255 = vmatprep.subr.bf16.mxu0 0
      %10256 = vmatpush1.bf16.msra.mxu0 %v10234
      %10257 = vmatprep.subr.bf16.mxu0 0
      %10258 = vmatpush2.bf16.msra.mxu0 0
      %10259 = vmatprep.subr.bf16.mxu0 0
      %10260 = vmatpush2.bf16.msra.mxu0 0
      %10261 = vmatprep.subr.bf16.mxu0 0
      %10262 = vmatpush2.bf16.msra.mxu0 0
      %10263 = vmatprep.subr.bf16.mxu0 0
      %10264 = vmatpush2.bf16.msra.mxu0 0
      %10265 = vmatprep.subr.bf16.mxu0 0
      %10266 = vmatpush2.bf16.msra.mxu0 0
      %10267 = vmatprep.subr.bf16.mxu0 0
      %10268 = vmatpush2.bf16.msra.mxu0 0
      %10269 = vmatprep.subr.bf16.mxu0 0
      %10270 = vmatpush2.bf16.msra.mxu0 0
      %10271 = vmatprep.subr.bf16.mxu0 0
      %10272 = vmatpush2.bf16.msra.mxu0 0
      %10273 = vmatprep.mubr.bf16.mxu0 0
      %10274 = vmatmul.mubr.bf16.gmra.mxu0 %v10239
      %v10275 = vpop.f32.mrf.mxu0
      %v10276 = vadd.f32 %v10224, %v10275
      %v10277 = vpop.f32.mrf.mxu0
      %v10278 = vpop.f32.mrf.mxu0
      %v10279 = vpop.f32.mrf.mxu0
      %10280 = vdwg.mxu0
      %v10281 = vmax.f32 %v10276, 0.0
      %v10282 = vld [vmem:[%s19] sm:$0xf]
      %v10283 = vld [vmem:[%s19 + $0x4] sm:$0xf]
      %v10284 = vpack.c.bf16 %v10281, %v10281
      %v10285 = vld [vmem:[#allocation2] sm:$0x1]
      %v10287 = vlaneseq
      %v10288 = vshrl.u32 %v10287, 7
      %v10289 = vsub.s32 0, %v10288
      %v10290 = vrot.slane %v10285, %v10289
      %v10294 = vunpack.c.l.b16 %v10282
      %v10295 = vunpack.c.l.b16 %v10283
      %v10296 = vpack.c.b16 %v10295, %v10294
      %vm10298 = vcmask 130048
      %v10300 = vsel %vm10298, %v10284, 0
      %10302 = vmatprep.subr.bf16.mxu0 0
      %10303 = vmatpush1.bf16.msra.mxu0 0
      %10304 = vmatprep.subr.bf16.mxu0 0
      %10305 = vmatpush1.bf16.msra.mxu0 0
      %10306 = vmatprep.subr.bf16.mxu0 0
      %10307 = vmatpush1.bf16.msra.mxu0 0
      %10308 = vmatprep.subr.bf16.mxu0 0
      %10309 = vmatpush1.bf16.msra.mxu0 0
      %10310 = vmatprep.subr.bf16.mxu0 0
      %10311 = vmatpush1.bf16.msra.mxu0 0
      %10312 = vmatprep.subr.bf16.mxu0 0
      %10313 = vmatpush1.bf16.msra.mxu0 0
      %10314 = vmatprep.subr.bf16.mxu0 0
      %10315 = vmatpush1.bf16.msra.mxu0 0
      %10316 = vmatprep.subr.bf16.mxu0 0
      %10317 = vmatpush1.bf16.msra.mxu0 %v10296
      %10318 = vmatprep.subr.bf16.mxu0 0
      %10319 = vmatpush2.bf16.msra.mxu0 0
      %10320 = vmatprep.subr.bf16.mxu0 0
      %10321 = vmatpush2.bf16.msra.mxu0 0
      %10322 = vmatprep.subr.bf16.mxu0 0
      %10323 = vmatpush2.bf16.msra.mxu0 0
      %10324 = vmatprep.subr.bf16.mxu0 0
      %10325 = vmatpush2.bf16.msra.mxu0 0
      %10326 = vmatprep.subr.bf16.mxu0 0
      %10327 = vmatpush2.bf16.msra.mxu0 0
      %10328 = vmatprep.subr.bf16.mxu0 0
      %10329 = vmatpush2.bf16.msra.mxu0 0
      %10330 = vmatprep.subr.bf16.mxu0 0
      %10331 = vmatpush2.bf16.msra.mxu0 0
      %10332 = vmatprep.subr.bf16.mxu0 0
      %10333 = vmatpush2.bf16.msra.mxu0 0
      %10334 = vmatprep.mubr.bf16.mxu0 0
      %10335 = vmatmul.mubr.bf16.gmra.mxu0 %v10300
      %v10336 = vpop.f32.mrf.mxu0
      %v10337 = vadd.f32 %v10290, %v10336
      %v10338 = vpop.f32.mrf.mxu0
      %v10339 = vpop.f32.mrf.mxu0
      %v10340 = vpop.f32.mrf.mxu0
      %10341 = vdwg.mxu0
      %vm10342 = vcmask 7168
      %10343 = vst.msk [vmem:[%s678] sm:$0xff] %vm10342, %v10337
      %p10344 = scmp.lt.s32.totalorder %s34, 1
      %s10345 = scalar_select %p10344, %s34, 1
      %s10346 = smul.addr %s10345, 8
      %s10347 = scalar_lea.vmem %s21, %s10346
      // Predicated region
      $region105: #{graph_transformer_forward.1} parent=103 // pred_check
        %p10348 = pneg %p503
      $region106: #{graph_transformer_forward.1} parent=103 // pred_check_branch
        %10350 = sbr.rel (%p10348) target = $region108
      $region107: #{graph_transformer_forward.1} parent=103 // pred_region
        _
      $region108: #{graph_transformer_forward.1} parent=103 // pred_fallthru
        _
    $region104: #{graph_transformer_forward.1} parent=5 // pred_fallthru
      _
    %p10351 = scmp.le.s32.totalorder 2, %s29
    // Predicated region
    $region109: #{graph_transformer_forward.1} parent=5 // pred_check
      %p10352 = pneg %p10351
    $region110: #{graph_transformer_forward.1} parent=5 // pred_check_branch
      %10354 = sbr.rel (%p10352) target = $region112
    $region111: #{graph_transformer_forward.1} parent=5 // pred_region
      %s10355 = ssub.s32 %s29, 2
      // Predicated region
      $region113: #{graph_transformer_forward.1} parent=111 // pred_check
        %p10356 = pneg %p509
      $region114: #{graph_transformer_forward.1} parent=111 // pred_check_branch
        %10358 = sbr.rel (%p10356) target = $region116
      $region115: #{graph_transformer_forward.1} parent=111 // pred_region
        %p10359 = scmp.lt.s32.totalorder %s35, 1
        %s10360 = scalar_select %p10359, %s35, 1
        %s10361 = smul.addr %s10360, 8
        %s10362 = scalar_lea.vmem %s21, %s10361
      $region116: #{graph_transformer_forward.1} parent=111 // pred_fallthru
        _
    $region112: #{graph_transformer_forward.1} parent=5 // pred_fallthru
      _
  $region6: #{graph_transformer_forward.1} parent=0 // loop_footer
    %s33 = sadd.s32 1, %s29
  $region7: #{graph_transformer_forward.1} parent=0 // loop_footer_branch
    %28 = sbr.rel target = $region3
  $region8: #{graph_transformer_forward.1} parent=0 // loop_exit
    _

</llo_original>
